<compile_context>
chip_gen: v5e
topology: v5e:2x2
jax: 0.10.0
libtpu: 0.0.40
codegen_flags: <defaults>
</compile_context>

<pallas_src>
import functools
import numpy as np
import jax
import jax.numpy as jnp
from jax import lax
from jax.experimental import pallas as pl
from jax.experimental.pallas import tpu as pltpu

EPS = 1e-5
C_PAD = 128          # channel lane padding (n_chans1=32 -> 128 lanes)


def _full_spec(shape):
    nd = len(shape)
    return pl.BlockSpec(shape, lambda i, _nd=nd: (0,) * _nd)


def _pcall(kernel, out_shape, out_dtype, args, scratch_shapes=()):
    return pl.pallas_call(
        kernel,
        out_shape=jax.ShapeDtypeStruct(out_shape, out_dtype),
        grid=(1,),
        in_specs=[_full_spec(a.shape) for a in args],
        out_specs=_full_spec(out_shape),
        scratch_shapes=list(scratch_shapes),
        compiler_params=pltpu.CompilerParams(dimension_semantics=("arbitrary",)),
    )(*args)


# ----------------------------- Pallas kernels ------------------------------

def fused_front_kernel(n_blocks, cols_e_ref, cols_o_ref, w1_ref, b1_ref,
                       wres_ref, gamma_ref, beta_ref, out_ref, pad_ref):
    """conv1(+bias+relu) -> 2x2 max-pool -> n_blocks weight-shared ResBlocks.

    cols_{e,o}: (N*H1*W, K) bf16 3x3 input patches for even/odd output columns,
                rows ordered (n, h1, w_half).
    w1: (K, C) bf16; b1/gamma/beta: (1, C) f32; wres: (9, C, C) bf16.
    out: (N*H*W, C) f32 post-resblock activation (NHWC row order).
    pad_ref: VMEM scratch (N, H+2, W+2, C) f32 zero-padded activation.
    """
    N, HP, WP, C = pad_ref.shape
    H, W = HP - 2, WP - 2              # post-pool spatial (16, 16)
    M = N * H * W

    # ---- conv1 + bias + relu (output columns pre-split by parity) ----
    act_e = jnp.maximum(
        jnp.dot(cols_e_ref[...], w1_ref[...],
                preferred_element_type=jnp.float32) + b1_ref[...], 0.0)
    act_o = jnp.maximum(
        jnp.dot(cols_o_ref[...], w1_ref[...],
                preferred_element_type=jnp.float32) + b1_ref[...], 0.0)

    # ---- 2x2 max-pool: W pairs are the (even, odd) parity planes,
    #      H pairs are adjacent rows (major-dim split -> elementwise max) ----
    wpool = jnp.maximum(act_e, act_o).reshape(N * H, 2, W, C)
    pooled = jnp.maximum(wpool[:, 0], wpool[:, 1]).reshape(N, H, W, C)

    # ---- stash into the zero-padded scratch (borders stay zero) ----
    pad_ref[...] = jnp.zeros_like(pad_ref)
    pad_ref[:, 1:H + 1, 1:W + 1, :] = pooled

    gamma = gamma_ref[...]
    beta = beta_ref[...]

    def res_block(_, carry):
        # 3x3 conv (no bias) as 9 accumulated matmuls over shifted VMEM views.
        acc = jnp.zeros((M, C), jnp.float32)
        for dy in range(3):
            for dx in range(3):
                xs = pad_ref[:, dy:dy + H, dx:dx + W, :].reshape(M, C)
                acc = acc + jnp.dot(xs.astype(jnp.bfloat16),
                                    wres_ref[dy * 3 + dx],
                                    preferred_element_type=jnp.float32)
        # BatchNorm2d (training mode): biased batch stats over (N, H, W).
        mean = jnp.mean(acc, axis=0, keepdims=True)
        var = jnp.mean((acc - mean) ** 2, axis=0, keepdims=True)
        normed = (acc - mean) * (gamma * lax.rsqrt(var + EPS)) + beta
        residual = pad_ref[:, 1:H + 1, 1:W + 1, :].reshape(M, C)
        new_act = jnp.maximum(normed, 0.0) + residual
        pad_ref[:, 1:H + 1, 1:W + 1, :] = new_act.reshape(N, H, W, C)
        return carry

    lax.fori_loop(0, n_blocks, res_block, 0)

    out_ref[...] = pad_ref[:, 1:H + 1, 1:W + 1, :].reshape(M, C)


def mlp_kernel(x_ref, w1_ref, b1_ref, w2_ref, b2_ref, o_ref):
    """fc1 + relu + fc2 (channel-padded; NCHW flatten folded into w1 at init)."""
    h = jnp.maximum(
        jnp.dot(x_ref[...], w1_ref[...],
                preferred_element_type=jnp.float32) + b1_ref[...], 0.0)
    o_ref[...] = jnp.dot(h.astype(jnp.bfloat16), w2_ref[...],
                         preferred_element_type=jnp.float32) + b2_ref[...]


# --------------------------- parameters & forward ----------------------------

def init_params(n_chans1=32, key=jax.random.PRNGKey(42)):
    ks = jax.random.split(key, 8)
    f32, bf16 = jnp.float32, jnp.bfloat16
    C = C_PAD

    # conv1: Conv2d(3, 32, 3, padding=1) in matmul form (kh*kw*cin, cout);
    # K padded 27 -> 32, Cout padded 32 -> 128 (zero columns).
    w1 = (jax.random.normal(ks[0], (3, 3, 3, n_chans1), f32)
          * np.sqrt(2.0 / 27.0)).reshape(27, n_chans1)
    w1p = jnp.zeros((32, C), f32).at[:27, :n_chans1].set(w1)
    b1 = jnp.zeros((1, C), f32).at[0, :n_chans1].set(
        jax.random.normal(ks[1], (n_chans1,), f32) * 0.01)

    # Shared ResBlock conv (bias=False), kaiming_normal(relu); (9, cin, cout) padded.
    wr = (jax.random.normal(ks[2], (3, 3, n_chans1, n_chans1), f32)
          * np.sqrt(2.0 / (9.0 * n_chans1))).reshape(9, n_chans1, n_chans1)
    wrp = jnp.zeros((9, C, C), f32).at[:, :n_chans1, :n_chans1].set(wr)

    gamma = jnp.zeros((1, C), f32).at[0, :n_chans1].set(0.5)   # BN weight = 0.5
    beta = jnp.zeros((1, C), f32)                              # BN bias = 0

    # fc1: Linear(8*8*32, 32). PyTorch flattens NCHW (c, h, w); re-order rows into
    # the kernel's NHWC channel-padded order (h, w, c_pad); pad out-features -> 128.
    wfc1_t = (jax.random.normal(ks[3], (n_chans1 * 8 * 8, 32), f32)
              * np.sqrt(1.0 / (n_chans1 * 64.0)))
    wfc1_hwc = jnp.transpose(wfc1_t.reshape(n_chans1, 8, 8, 32), (1, 2, 0, 3))
    wfc1 = (jnp.zeros((8, 8, C, 32), f32).at[:, :, :n_chans1, :].set(wfc1_hwc)
            ).reshape(8 * 8 * C, 32)
    wfc1 = jnp.zeros((8 * 8 * C, 128), f32).at[:, :32].set(wfc1)
    b_fc1 = jnp.zeros((1, 128), f32).at[0, :32].set(
        jax.random.normal(ks[4], (32,), f32) * 0.01)

    # fc2: Linear(32, 2), padded to (128, 128).
    wfc2 = jax.random.normal(ks[5], (32, 2), f32) * np.sqrt(1.0 / 32.0)
    wfc2p = jnp.zeros((128, 128), f32).at[:32, :2].set(wfc2)
    b_fc2 = jnp.zeros((1, 128), f32).at[0, :2].set(
        jax.random.normal(ks[6], (2,), f32) * 0.01)

    return dict(w1=w1p.astype(bf16), b1=b1,
                w_res=wrp.astype(bf16), gamma=gamma, beta=beta,
                w_fc1=wfc1.astype(bf16), b_fc1=b_fc1,
                w_fc2=wfc2p.astype(bf16), b_fc2=b_fc2)


def net_res_deep_forward(x_nchw, params, n_blocks=7):
    N, _, Hin, Win = x_nchw.shape
    C = C_PAD
    H2, W2 = Hin // 2, Win // 2          # after first pool  (16, 16)
    H4, W4 = H2 // 2, W2 // 2            # after second pool (8, 8)

    # NCHW -> NHWC; 3x3 patches for conv1 only (tiny, K = 27 -> 32), pre-split by
    # output-column parity so the first 2x2 pool is pure elementwise max in-kernel.
    x = jnp.transpose(x_nchw, (0, 2, 3, 1)).astype(jnp.float32)
    xp = jnp.pad(x, ((0, 0), (1, 1), (1, 1), (0, 0)))
    cols = jnp.concatenate(
        [xp[:, dy:dy + Hin, dx:dx + Win, :] for dy in range(3) for dx in range(3)],
        axis=-1)                                               # (N, Hin, Win, 27)
    cols = jnp.pad(cols, ((0, 0), (0, 0), (0, 0), (0, 5)))     # K 27 -> 32
    cols_e = cols[:, :, 0::2, :].reshape(N * Hin * W2, 32).astype(jnp.bfloat16)
    cols_o = cols[:, :, 1::2, :].reshape(N * Hin * W2, 32).astype(jnp.bfloat16)

    # Kernel A: conv1 + relu + pool + 7 VMEM-resident weight-shared ResBlocks.
    act = _pcall(
        functools.partial(fused_front_kernel, n_blocks),
        (N * H2 * W2, C), jnp.float32,
        (cols_e, cols_o, params["w1"], params["b1"], params["w_res"],
         params["gamma"], params["beta"]),
        scratch_shapes=[pltpu.VMEM((N, H2 + 2, W2 + 2, C), jnp.float32)],
    )

    # Second 2x2 max-pool + NHWC flatten (tiny, left to XLA by design).
    a = act.reshape(N, H2, W2, C)
    pooled = jnp.maximum(
        jnp.maximum(a[:, 0::2, 0::2, :], a[:, 0::2, 1::2, :]),
        jnp.maximum(a[:, 1::2, 0::2, :], a[:, 1::2, 1::2, :]))   # (N, 8, 8, C)
    flat = pooled.reshape(N, H4 * W4 * C).astype(jnp.bfloat16)

    # Kernel B: fc1 + relu + fc2 (padded to 128 output lanes; slice real logits).
    out = _pcall(mlp_kernel, (N, 128), jnp.float32,
                 (flat, params["w_fc1"], params["b_fc1"],
                  params["w_fc2"], params["b_fc2"]))
    return out[:, :2]


if __name__ == "__main__":
    n_chans1, n_blocks = 32, 7
    x = jax.random.normal(jax.random.PRNGKey(0), (2, 3, 32, 32), jnp.float32)
    params = init_params(n_chans1)

    fwd = jax.jit(lambda xx: net_res_deep_forward(xx, params, n_blocks))
    y = jax.block_until_ready(fwd(x))

    assert y.shape == (2, 2), y.shape
    assert bool(jnp.all(jnp.isfinite(y)))
    print("KERNEL_OK")
</pallas_src>

<mosaic_0001>
module attributes {stable_mosaic.version = 11 : i64} {
  func.func @fused_front_kernel(%arg0: i32, %arg1: memref<1024x32xbf16, #tpu.memory_space<vmem>>, %arg2: memref<1024x32xbf16, #tpu.memory_space<vmem>>, %arg3: memref<32x128xbf16, #tpu.memory_space<vmem>>, %arg4: memref<1x128xf32, #tpu.memory_space<vmem>>, %arg5: memref<9x128x128xbf16, #tpu.memory_space<vmem>>, %arg6: memref<1x128xf32, #tpu.memory_space<vmem>>, %arg7: memref<1x128xf32, #tpu.memory_space<vmem>>, %arg8: memref<512x128xf32, #tpu.memory_space<vmem>>, %arg9: memref<2x18x18x128xf32, #tpu.memory_space<vmem>>) attributes {dimension_semantics = [#tpu.dimension_semantics<arbitrary>], iteration_bounds = array<i64: 1>, scalar_prefetch = 0 : i64, scratch_operands = 1 : i64, tpu.core_type = #tpu.core_type<tc>, window_params = [{pipeline_mode = #tpu.pipeline_mode<synchronous>, transform_indices = @transform_0, window_bounds = array<i64: 1024, 32>}, {pipeline_mode = #tpu.pipeline_mode<synchronous>, transform_indices = @transform_1, window_bounds = array<i64: 1024, 32>}, {pipeline_mode = #tpu.pipeline_mode<synchronous>, transform_indices = @transform_2, window_bounds = array<i64: 32, 128>}, {pipeline_mode = #tpu.pipeline_mode<synchronous>, transform_indices = @transform_3, window_bounds = array<i64: 1, 128>}, {pipeline_mode = #tpu.pipeline_mode<synchronous>, transform_indices = @transform_4, window_bounds = array<i64: 9, 128, 128>}, {pipeline_mode = #tpu.pipeline_mode<synchronous>, transform_indices = @transform_5, window_bounds = array<i64: 1, 128>}, {pipeline_mode = #tpu.pipeline_mode<synchronous>, transform_indices = @transform_6, window_bounds = array<i64: 1, 128>}, {pipeline_mode = #tpu.pipeline_mode<synchronous>, transform_indices = @transform_7, window_bounds = array<i64: 512, 128>}]} {
    %c0 = arith.constant 0 : index
    %c0_0 = arith.constant 0 : index
    %0 = vector.load %arg1[%c0, %c0_0] : memref<1024x32xbf16, #tpu.memory_space<vmem>>, vector<1024x32xbf16>
    %c0_1 = arith.constant 0 : index
    %c0_2 = arith.constant 0 : index
    %1 = vector.load %arg3[%c0_1, %c0_2] : memref<32x128xbf16, #tpu.memory_space<vmem>>, vector<32x128xbf16>
    %cst = arith.constant dense<0.000000e+00> : vector<1024x128xf32>
    %2 = tpu.matmul %0, %1, %cst {dimension_numbers = #tpu.dot_dimension_numbers<[1], [0], [0], [1], [0, 0, 1, 1], [], []>} : vector<1024x32xbf16>, vector<32x128xbf16>, vector<1024x128xf32> -> vector<1024x128xf32>
    %c0_3 = arith.constant 0 : index
    %c0_4 = arith.constant 0 : index
    %3 = vector.load %arg4[%c0_3, %c0_4] : memref<1x128xf32, #tpu.memory_space<vmem>>, vector<1x128xf32>
    %4 = vector.broadcast %3 : vector<1x128xf32> to vector<1024x128xf32>
    %5 = arith.addf %2, %4 : vector<1024x128xf32>
    %cst_5 = arith.constant 0.000000e+00 : f32
    %6 = vector.broadcast %cst_5 : f32 to vector<1024x128xf32>
    %7 = arith.maximumf %5, %6 : vector<1024x128xf32>
    %c0_6 = arith.constant 0 : index
    %c0_7 = arith.constant 0 : index
    %8 = vector.load %arg2[%c0_6, %c0_7] : memref<1024x32xbf16, #tpu.memory_space<vmem>>, vector<1024x32xbf16>
    %c0_8 = arith.constant 0 : index
    %c0_9 = arith.constant 0 : index
    %9 = vector.load %arg3[%c0_8, %c0_9] : memref<32x128xbf16, #tpu.memory_space<vmem>>, vector<32x128xbf16>
    %cst_10 = arith.constant dense<0.000000e+00> : vector<1024x128xf32>
    %10 = tpu.matmul %8, %9, %cst_10 {dimension_numbers = #tpu.dot_dimension_numbers<[1], [0], [0], [1], [0, 0, 1, 1], [], []>} : vector<1024x32xbf16>, vector<32x128xbf16>, vector<1024x128xf32> -> vector<1024x128xf32>
    %c0_11 = arith.constant 0 : index
    %c0_12 = arith.constant 0 : index
    %11 = vector.load %arg4[%c0_11, %c0_12] : memref<1x128xf32, #tpu.memory_space<vmem>>, vector<1x128xf32>
    %12 = vector.broadcast %11 : vector<1x128xf32> to vector<1024x128xf32>
    %13 = arith.addf %10, %12 : vector<1024x128xf32>
    %cst_13 = arith.constant 0.000000e+00 : f32
    %14 = vector.broadcast %cst_13 : f32 to vector<1024x128xf32>
    %15 = arith.maximumf %13, %14 : vector<1024x128xf32>
    %16 = arith.maximumf %7, %15 : vector<1024x128xf32>
    %17 = vector.shape_cast %16 : vector<1024x128xf32> to vector<32x2x16x128xf32>
    %18 = vector.extract_strided_slice %17 {offsets = [0, 0, 0, 0], sizes = [32, 1, 16, 128], strides = [1, 1, 1, 1]} : vector<32x2x16x128xf32> to vector<32x1x16x128xf32>
    %19 = vector.shape_cast %18 : vector<32x1x16x128xf32> to vector<32x16x128xf32>
    %20 = vector.extract_strided_slice %17 {offsets = [0, 1, 0, 0], sizes = [32, 1, 16, 128], strides = [1, 1, 1, 1]} : vector<32x2x16x128xf32> to vector<32x1x16x128xf32>
    %21 = vector.shape_cast %20 : vector<32x1x16x128xf32> to vector<32x16x128xf32>
    %22 = arith.maximumf %19, %21 : vector<32x16x128xf32>
    %23 = vector.shape_cast %22 : vector<32x16x128xf32> to vector<2x16x16x128xf32>
    %cst_14 = arith.constant 0.000000e+00 : f32
    %24 = vector.broadcast %cst_14 : f32 to vector<2x18x18x128xf32>
    %c0_15 = arith.constant 0 : index
    %c0_16 = arith.constant 0 : index
    %c0_17 = arith.constant 0 : index
    %c0_18 = arith.constant 0 : index
    %25 = vector.load %arg9[%c0_15, %c0_16, %c0_17, %c0_18] : memref<2x18x18x128xf32, #tpu.memory_space<vmem>>, vector<2x18x18x128xf32>
    tpu.vector_store %arg9[%c0_15, %c0_16, %c0_17, %c0_18], %24 {strides = array<i32>} : memref<2x18x18x128xf32, #tpu.memory_space<vmem>>, vector<2x18x18x128xf32>,
    %c0_19 = arith.constant 0 : index
    %c1 = arith.constant 1 : index
    %c1_20 = arith.constant 1 : index
    %c0_21 = arith.constant 0 : index
    %26 = vector.load %arg9[%c0_19, %c1, %c1_20, %c0_21] : memref<2x18x18x128xf32, #tpu.memory_space<vmem>>, vector<2x16x16x128xf32>
    tpu.vector_store %arg9[%c0_19, %c1, %c1_20, %c0_21], %23 {strides = array<i32>} : memref<2x18x18x128xf32, #tpu.memory_space<vmem>>, vector<2x16x16x128xf32>,
    %c0_22 = arith.constant 0 : index
    %c0_23 = arith.constant 0 : index
    %27 = vector.load %arg6[%c0_22, %c0_23] : memref<1x128xf32, #tpu.memory_space<vmem>>, vector<1x128xf32>
    %c0_24 = arith.constant 0 : index
    %c0_25 = arith.constant 0 : index
    %28 = vector.load %arg7[%c0_24, %c0_25] : memref<1x128xf32, #tpu.memory_space<vmem>>, vector<1x128xf32>
    %c0_i32 = arith.constant 0 : i32
    %c7_i32 = arith.constant 7 : i32
    %29 = arith.addi %c0_i32, %c7_i32 : i32
    %c1_i32 = arith.constant 1 : i32
    scf.for %arg10 = %c0_i32 to %29 step %c1_i32  : i32 {
      %cst_32 = arith.constant 0.000000e+00 : f32
      %33 = vector.broadcast %cst_32 : f32 to vector<512x128xf32>
      %c0_33 = arith.constant 0 : index
      %c0_34 = arith.constant 0 : index
      %c0_35 = arith.constant 0 : index
      %c0_36 = arith.constant 0 : index
      %34 = vector.load %arg9[%c0_33, %c0_34, %c0_35, %c0_36] : memref<2x18x18x128xf32, #tpu.memory_space<vmem>>, vector<2x16x16x128xf32>
      %35 = vector.shape_cast %34 : vector<2x16x16x128xf32> to vector<512x128xf32>
      %36 = arith.truncf %35 : vector<512x128xf32> to vector<512x128xbf16>
      %c0_37 = arith.constant 0 : index
      %c0_38 = arith.constant 0 : index
      %c0_39 = arith.constant 0 : index
      %37 = vector.load %arg5[%c0_37, %c0_38, %c0_39] : memref<9x128x128xbf16, #tpu.memory_space<vmem>>, vector<1x128x128xbf16>
      %38 = vector.shape_cast %37 : vector<1x128x128xbf16> to vector<128x128xbf16>
      %cst_40 = arith.constant dense<0.000000e+00> : vector<512x128xf32>
      %39 = tpu.matmul %36, %38, %cst_40 {dimension_numbers = #tpu.dot_dimension_numbers<[1], [0], [0], [1], [0, 0, 1, 1], [], []>} : vector<512x128xbf16>, vector<128x128xbf16>, vector<512x128xf32> -> vector<512x128xf32>
      %40 = arith.addf %33, %39 : vector<512x128xf32>
      %c0_41 = arith.constant 0 : index
      %c0_42 = arith.constant 0 : index
      %c1_43 = arith.constant 1 : index
      %c0_44 = arith.constant 0 : index
      %41 = vector.load %arg9[%c0_41, %c0_42, %c1_43, %c0_44] : memref<2x18x18x128xf32, #tpu.memory_space<vmem>>, vector<2x16x16x128xf32>
      %42 = vector.shape_cast %41 : vector<2x16x16x128xf32> to vector<512x128xf32>
      %43 = arith.truncf %42 : vector<512x128xf32> to vector<512x128xbf16>
      %c1_45 = arith.constant 1 : index
      %c0_46 = arith.constant 0 : index
      %c0_47 = arith.constant 0 : index
      %44 = vector.load %arg5[%c1_45, %c0_46, %c0_47] : memref<9x128x128xbf16, #tpu.memory_space<vmem>>, vector<1x128x128xbf16>
      %45 = vector.shape_cast %44 : vector<1x128x128xbf16> to vector<128x128xbf16>
      %cst_48 = arith.constant dense<0.000000e+00> : vector<512x128xf32>
      %46 = tpu.matmul %43, %45, %cst_48 {dimension_numbers = #tpu.dot_dimension_numbers<[1], [0], [0], [1], [0, 0, 1, 1], [], []>} : vector<512x128xbf16>, vector<128x128xbf16>, vector<512x128xf32> -> vector<512x128xf32>
      %47 = arith.addf %40, %46 : vector<512x128xf32>
      %c0_49 = arith.constant 0 : index
      %c0_50 = arith.constant 0 : index
      %c2 = arith.constant 2 : index
      %c0_51 = arith.constant 0 : index
      %48 = vector.load %arg9[%c0_49, %c0_50, %c2, %c0_51] : memref<2x18x18x128xf32, #tpu.memory_space<vmem>>, vector<2x16x16x128xf32>
      %49 = vector.shape_cast %48 : vector<2x16x16x128xf32> to vector<512x128xf32>
      %50 = arith.truncf %49 : vector<512x128xf32> to vector<512x128xbf16>
      %c2_52 = arith.constant 2 : index
      %c0_53 = arith.constant 0 : index
      %c0_54 = arith.constant 0 : index
      %51 = vector.load %arg5[%c2_52, %c0_53, %c0_54] : memref<9x128x128xbf16, #tpu.memory_space<vmem>>, vector<1x128x128xbf16>
      %52 = vector.shape_cast %51 : vector<1x128x128xbf16> to vector<128x128xbf16>
      %cst_55 = arith.constant dense<0.000000e+00> : vector<512x128xf32>
      %53 = tpu.matmul %50, %52, %cst_55 {dimension_numbers = #tpu.dot_dimension_numbers<[1], [0], [0], [1], [0, 0, 1, 1], [], []>} : vector<512x128xbf16>, vector<128x128xbf16>, vector<512x128xf32> -> vector<512x128xf32>
      %54 = arith.addf %47, %53 : vector<512x128xf32>
      %c0_56 = arith.constant 0 : index
      %c1_57 = arith.constant 1 : index
      %c0_58 = arith.constant 0 : index
      %c0_59 = arith.constant 0 : index
      %55 = vector.load %arg9[%c0_56, %c1_57, %c0_58, %c0_59] : memref<2x18x18x128xf32, #tpu.memory_space<vmem>>, vector<2x16x16x128xf32>
      %56 = vector.shape_cast %55 : vector<2x16x16x128xf32> to vector<512x128xf32>
      %57 = arith.truncf %56 : vector<512x128xf32> to vector<512x128xbf16>
      %c3 = arith.constant 3 : index
      %c0_60 = arith.constant 0 : index
      %c0_61 = arith.constant 0 : index
      %58 = vector.load %arg5[%c3, %c0_60, %c0_61] : memref<9x128x128xbf16, #tpu.memory_space<vmem>>, vector<1x128x128xbf16>
      %59 = vector.shape_cast %58 : vector<1x128x128xbf16> to vector<128x128xbf16>
      %cst_62 = arith.constant dense<0.000000e+00> : vector<512x128xf32>
      %60 = tpu.matmul %57, %59, %cst_62 {dimension_numbers = #tpu.dot_dimension_numbers<[1], [0], [0], [1], [0, 0, 1, 1], [], []>} : vector<512x128xbf16>, vector<128x128xbf16>, vector<512x128xf32> -> vector<512x128xf32>
      %61 = arith.addf %54, %60 : vector<512x128xf32>
      %c0_63 = arith.constant 0 : index
      %c1_64 = arith.constant 1 : index
      %c1_65 = arith.constant 1 : index
      %c0_66 = arith.constant 0 : index
      %62 = vector.load %arg9[%c0_63, %c1_64, %c1_65, %c0_66] : memref<2x18x18x128xf32, #tpu.memory_space<vmem>>, vector<2x16x16x128xf32>
      %63 = vector.shape_cast %62 : vector<2x16x16x128xf32> to vector<512x128xf32>
      %64 = arith.truncf %63 : vector<512x128xf32> to vector<512x128xbf16>
      %c4 = arith.constant 4 : index
      %c0_67 = arith.constant 0 : index
      %c0_68 = arith.constant 0 : index
      %65 = vector.load %arg5[%c4, %c0_67, %c0_68] : memref<9x128x128xbf16, #tpu.memory_space<vmem>>, vector<1x128x128xbf16>
      %66 = vector.shape_cast %65 : vector<1x128x128xbf16> to vector<128x128xbf16>
      %cst_69 = arith.constant dense<0.000000e+00> : vector<512x128xf32>
      %67 = tpu.matmul %64, %66, %cst_69 {dimension_numbers = #tpu.dot_dimension_numbers<[1], [0], [0], [1], [0, 0, 1, 1], [], []>} : vector<512x128xbf16>, vector<128x128xbf16>, vector<512x128xf32> -> vector<512x128xf32>
      %68 = arith.addf %61, %67 : vector<512x128xf32>
      %c0_70 = arith.constant 0 : index
      %c1_71 = arith.constant 1 : index
      %c2_72 = arith.constant 2 : index
      %c0_73 = arith.constant 0 : index
      %69 = vector.load %arg9[%c0_70, %c1_71, %c2_72, %c0_73] : memref<2x18x18x128xf32, #tpu.memory_space<vmem>>, vector<2x16x16x128xf32>
      %70 = vector.shape_cast %69 : vector<2x16x16x128xf32> to vector<512x128xf32>
      %71 = arith.truncf %70 : vector<512x128xf32> to vector<512x128xbf16>
      %c5 = arith.constant 5 : index
      %c0_74 = arith.constant 0 : index
      %c0_75 = arith.constant 0 : index
      %72 = vector.load %arg5[%c5, %c0_74, %c0_75] : memref<9x128x128xbf16, #tpu.memory_space<vmem>>, vector<1x128x128xbf16>
      %73 = vector.shape_cast %72 : vector<1x128x128xbf16> to vector<128x128xbf16>
      %cst_76 = arith.constant dense<0.000000e+00> : vector<512x128xf32>
      %74 = tpu.matmul %71, %73, %cst_76 {dimension_numbers = #tpu.dot_dimension_numbers<[1], [0], [0], [1], [0, 0, 1, 1], [], []>} : vector<512x128xbf16>, vector<128x128xbf16>, vector<512x128xf32> -> vector<512x128xf32>
      %75 = arith.addf %68, %74 : vector<512x128xf32>
      %c0_77 = arith.constant 0 : index
      %c2_78 = arith.constant 2 : index
      %c0_79 = arith.constant 0 : index
      %c0_80 = arith.constant 0 : index
      %76 = vector.load %arg9[%c0_77, %c2_78, %c0_79, %c0_80] : memref<2x18x18x128xf32, #tpu.memory_space<vmem>>, vector<2x16x16x128xf32>
      %77 = vector.shape_cast %76 : vector<2x16x16x128xf32> to vector<512x128xf32>
      %78 = arith.truncf %77 : vector<512x128xf32> to vector<512x128xbf16>
      %c6 = arith.constant 6 : index
      %c0_81 = arith.constant 0 : index
      %c0_82 = arith.constant 0 : index
      %79 = vector.load %arg5[%c6, %c0_81, %c0_82] : memref<9x128x128xbf16, #tpu.memory_space<vmem>>, vector<1x128x128xbf16>
      %80 = vector.shape_cast %79 : vector<1x128x128xbf16> to vector<128x128xbf16>
      %cst_83 = arith.constant dense<0.000000e+00> : vector<512x128xf32>
      %81 = tpu.matmul %78, %80, %cst_83 {dimension_numbers = #tpu.dot_dimension_numbers<[1], [0], [0], [1], [0, 0, 1, 1], [], []>} : vector<512x128xbf16>, vector<128x128xbf16>, vector<512x128xf32> -> vector<512x128xf32>
      %82 = arith.addf %75, %81 : vector<512x128xf32>
      %c0_84 = arith.constant 0 : index
      %c2_85 = arith.constant 2 : index
      %c1_86 = arith.constant 1 : index
      %c0_87 = arith.constant 0 : index
      %83 = vector.load %arg9[%c0_84, %c2_85, %c1_86, %c0_87] : memref<2x18x18x128xf32, #tpu.memory_space<vmem>>, vector<2x16x16x128xf32>
      %84 = vector.shape_cast %83 : vector<2x16x16x128xf32> to vector<512x128xf32>
      %85 = arith.truncf %84 : vector<512x128xf32> to vector<512x128xbf16>
      %c7 = arith.constant 7 : index
      %c0_88 = arith.constant 0 : index
      %c0_89 = arith.constant 0 : index
      %86 = vector.load %arg5[%c7, %c0_88, %c0_89] : memref<9x128x128xbf16, #tpu.memory_space<vmem>>, vector<1x128x128xbf16>
      %87 = vector.shape_cast %86 : vector<1x128x128xbf16> to vector<128x128xbf16>
      %cst_90 = arith.constant dense<0.000000e+00> : vector<512x128xf32>
      %88 = tpu.matmul %85, %87, %cst_90 {dimension_numbers = #tpu.dot_dimension_numbers<[1], [0], [0], [1], [0, 0, 1, 1], [], []>} : vector<512x128xbf16>, vector<128x128xbf16>, vector<512x128xf32> -> vector<512x128xf32>
      %89 = arith.addf %82, %88 : vector<512x128xf32>
      %c0_91 = arith.constant 0 : index
      %c2_92 = arith.constant 2 : index
      %c2_93 = arith.constant 2 : index
      %c0_94 = arith.constant 0 : index
      %90 = vector.load %arg9[%c0_91, %c2_92, %c2_93, %c0_94] : memref<2x18x18x128xf32, #tpu.memory_space<vmem>>, vector<2x16x16x128xf32>
      %91 = vector.shape_cast %90 : vector<2x16x16x128xf32> to vector<512x128xf32>
      %92 = arith.truncf %91 : vector<512x128xf32> to vector<512x128xbf16>
      %c8 = arith.constant 8 : index
      %c0_95 = arith.constant 0 : index
      %c0_96 = arith.constant 0 : index
      %93 = vector.load %arg5[%c8, %c0_95, %c0_96] : memref<9x128x128xbf16, #tpu.memory_space<vmem>>, vector<1x128x128xbf16>
      %94 = vector.shape_cast %93 : vector<1x128x128xbf16> to vector<128x128xbf16>
      %cst_97 = arith.constant dense<0.000000e+00> : vector<512x128xf32>
      %95 = tpu.matmul %92, %94, %cst_97 {dimension_numbers = #tpu.dot_dimension_numbers<[1], [0], [0], [1], [0, 0, 1, 1], [], []>} : vector<512x128xbf16>, vector<128x128xbf16>, vector<512x128xf32> -> vector<512x128xf32>
      %96 = arith.addf %89, %95 : vector<512x128xf32>
      %cst_98 = arith.constant dense<0.000000e+00> : vector<128xf32>
      %97 = vector.multi_reduction <add>, %96, %cst_98 [0] : vector<512x128xf32> to vector<128xf32>
      %98 = vector.shape_cast %97 : vector<128xf32> to vector<1x128xf32>
      %cst_99 = arith.constant 5.120000e+02 : f32
      %99 = vector.broadcast %cst_99 : f32 to vector<1x128xf32>
      %100 = arith.divf %98, %99 : vector<1x128xf32>
      %101 = vector.broadcast %100 : vector<1x128xf32> to vector<512x128xf32>
      %102 = arith.subf %96, %101 : vector<512x128xf32>
      %103 = arith.mulf %102, %102 : vector<512x128xf32>
      %cst_100 = arith.constant dense<0.000000e+00> : vector<128xf32>
      %104 = vector.multi_reduction <add>, %103, %cst_100 [0] : vector<512x128xf32> to vector<128xf32>
      %105 = vector.shape_cast %104 : vector<128xf32> to vector<1x128xf32>
      %cst_101 = arith.constant 5.120000e+02 : f32
      %106 = vector.broadcast %cst_101 : f32 to vector<1x128xf32>
      %107 = arith.divf %105, %106 : vector<1x128xf32>
      %108 = vector.broadcast %100 : vector<1x128xf32> to vector<512x128xf32>
      %109 = arith.subf %96, %108 : vector<512x128xf32>
      %cst_102 = arith.constant 9.99999974E-6 : f32
      %110 = vector.broadcast %cst_102 : f32 to vector<1x128xf32>
      %111 = arith.addf %107, %110 : vector<1x128xf32>
      %112 = math.rsqrt %111 : vector<1x128xf32>
      %113 = arith.mulf %27, %112 : vector<1x128xf32>
      %114 = vector.broadcast %113 : vector<1x128xf32> to vector<512x128xf32>
      %115 = arith.mulf %109, %114 : vector<512x128xf32>
      %116 = vector.broadcast %28 : vector<1x128xf32> to vector<512x128xf32>
      %117 = arith.addf %115, %116 : vector<512x128xf32>
      %c0_103 = arith.constant 0 : index
      %c1_104 = arith.constant 1 : index
      %c1_105 = arith.constant 1 : index
      %c0_106 = arith.constant 0 : index
      %118 = vector.load %arg9[%c0_103, %c1_104, %c1_105, %c0_106] : memref<2x18x18x128xf32, #tpu.memory_space<vmem>>, vector<2x16x16x128xf32>
      %119 = vector.shape_cast %118 : vector<2x16x16x128xf32> to vector<512x128xf32>
      %cst_107 = arith.constant 0.000000e+00 : f32
      %120 = vector.broadcast %cst_107 : f32 to vector<512x128xf32>
      %121 = arith.maximumf %117, %120 : vector<512x128xf32>
      %122 = arith.addf %121, %119 : vector<512x128xf32>
      %123 = vector.shape_cast %122 : vector<512x128xf32> to vector<2x16x16x128xf32>
      %c0_108 = arith.constant 0 : index
      %c1_109 = arith.constant 1 : index
      %c1_110 = arith.constant 1 : index
      %c0_111 = arith.constant 0 : index
      %124 = vector.load %arg9[%c0_108, %c1_109, %c1_110, %c0_111] : memref<2x18x18x128xf32, #tpu.memory_space<vmem>>, vector<2x16x16x128xf32>
      tpu.vector_store %arg9[%c0_108, %c1_109, %c1_110, %c0_111], %123 {strides = array<i32>} : memref<2x18x18x128xf32, #tpu.memory_space<vmem>>, vector<2x16x16x128xf32>,
    }
    %c0_26 = arith.constant 0 : index
    %c1_27 = arith.constant 1 : index
    %c1_28 = arith.constant 1 : index
    %c0_29 = arith.constant 0 : index
    %30 = vector.load %arg9[%c0_26, %c1_27, %c1_28, %c0_29] : memref<2x18x18x128xf32, #tpu.memory_space<vmem>>, vector<2x16x16x128xf32>
    %31 = vector.shape_cast %30 : vector<2x16x16x128xf32> to vector<512x128xf32>
    %c0_30 = arith.constant 0 : index
    %c0_31 = arith.constant 0 : index
    %32 = vector.load %arg8[%c0_30, %c0_31] : memref<512x128xf32, #tpu.memory_space<vmem>>, vector<512x128xf32>
    tpu.vector_store %arg8[%c0_30, %c0_31], %31 {strides = array<i32>} : memref<512x128xf32, #tpu.memory_space<vmem>>, vector<512x128xf32>,
    return
  }
  func.func @transform_0(%arg0: i32) -> (i32, i32) {
    %c0_i32 = arith.constant 0 : i32
    %c0_i32_0 = arith.constant 0 : i32
    %c0_i32_1 = arith.constant 0 : i32
    return %c0_i32, %c0_i32_0 : i32, i32
  }
  func.func @transform_1(%arg0: i32) -> (i32, i32) {
    %c0_i32 = arith.constant 0 : i32
    %c0_i32_0 = arith.constant 0 : i32
    %c0_i32_1 = arith.constant 0 : i32
    return %c0_i32, %c0_i32_0 : i32, i32
  }
  func.func @transform_2(%arg0: i32) -> (i32, i32) {
    %c0_i32 = arith.constant 0 : i32
    %c0_i32_0 = arith.constant 0 : i32
    %c0_i32_1 = arith.constant 0 : i32
    return %c0_i32, %c0_i32_0 : i32, i32
  }
  func.func @transform_3(%arg0: i32) -> (i32, i32) {
    %c0_i32 = arith.constant 0 : i32
    %c0_i32_0 = arith.constant 0 : i32
    %c0_i32_1 = arith.constant 0 : i32
    return %c0_i32, %c0_i32_0 : i32, i32
  }
  func.func @transform_4(%arg0: i32) -> (i32, i32, i32) {
    %c0_i32 = arith.constant 0 : i32
    %c0_i32_0 = arith.constant 0 : i32
    %c0_i32_1 = arith.constant 0 : i32
    %c0_i32_2 = arith.constant 0 : i32
    return %c0_i32, %c0_i32_0, %c0_i32_1 : i32, i32, i32
  }
  func.func @transform_5(%arg0: i32) -> (i32, i32) {
    %c0_i32 = arith.constant 0 : i32
    %c0_i32_0 = arith.constant 0 : i32
    %c0_i32_1 = arith.constant 0 : i32
    return %c0_i32, %c0_i32_0 : i32, i32
  }
  func.func @transform_6(%arg0: i32) -> (i32, i32) {
    %c0_i32 = arith.constant 0 : i32
    %c0_i32_0 = arith.constant 0 : i32
    %c0_i32_1 = arith.constant 0 : i32
    return %c0_i32, %c0_i32_0 : i32, i32
  }
  func.func @transform_7(%arg0: i32) -> (i32, i32) {
    %c0_i32 = arith.constant 0 : i32
    %c0_i32_0 = arith.constant 0 : i32
    %c0_i32_1 = arith.constant 0 : i32
    return %c0_i32, %c0_i32_0 : i32, i32
  }
}

module attributes {stable_mosaic.version = 11 : i64} {
  func.func @mlp_kernel(%arg0: i32, %arg1: memref<2x8192xbf16, #tpu.memory_space<vmem>>, %arg2: memref<8192x128xbf16, #tpu.memory_space<vmem>>, %arg3: memref<1x128xf32, #tpu.memory_space<vmem>>, %arg4: memref<128x128xbf16, #tpu.memory_space<vmem>>, %arg5: memref<1x128xf32, #tpu.memory_space<vmem>>, %arg6: memref<2x128xf32, #tpu.memory_space<vmem>>) attributes {dimension_semantics = [#tpu.dimension_semantics<arbitrary>], iteration_bounds = array<i64: 1>, scalar_prefetch = 0 : i64, scratch_operands = 0 : i64, tpu.core_type = #tpu.core_type<tc>, window_params = [{pipeline_mode = #tpu.pipeline_mode<synchronous>, transform_indices = @transform_0, window_bounds = array<i64: 2, 8192>}, {pipeline_mode = #tpu.pipeline_mode<synchronous>, transform_indices = @transform_1, window_bounds = array<i64: 8192, 128>}, {pipeline_mode = #tpu.pipeline_mode<synchronous>, transform_indices = @transform_2, window_bounds = array<i64: 1, 128>}, {pipeline_mode = #tpu.pipeline_mode<synchronous>, transform_indices = @transform_3, window_bounds = array<i64: 128, 128>}, {pipeline_mode = #tpu.pipeline_mode<synchronous>, transform_indices = @transform_4, window_bounds = array<i64: 1, 128>}, {pipeline_mode = #tpu.pipeline_mode<synchronous>, transform_indices = @transform_5, window_bounds = array<i64: 2, 128>}]} {
    %c0 = arith.constant 0 : index
    %c0_0 = arith.constant 0 : index
    %0 = vector.load %arg1[%c0, %c0_0] : memref<2x8192xbf16, #tpu.memory_space<vmem>>, vector<2x8192xbf16>
    %c0_1 = arith.constant 0 : index
    %c0_2 = arith.constant 0 : index
    %1 = vector.load %arg2[%c0_1, %c0_2] : memref<8192x128xbf16, #tpu.memory_space<vmem>>, vector<8192x128xbf16>
    %cst = arith.constant dense<0.000000e+00> : vector<2x128xf32>
    %2 = tpu.matmul %0, %1, %cst {dimension_numbers = #tpu.dot_dimension_numbers<[1], [0], [0], [1], [0, 0, 1, 1], [], []>} : vector<2x8192xbf16>, vector<8192x128xbf16>, vector<2x128xf32> -> vector<2x128xf32>
    %c0_3 = arith.constant 0 : index
    %c0_4 = arith.constant 0 : index
    %3 = vector.load %arg3[%c0_3, %c0_4] : memref<1x128xf32, #tpu.memory_space<vmem>>, vector<1x128xf32>
    %4 = vector.broadcast %3 : vector<1x128xf32> to vector<2x128xf32>
    %5 = arith.addf %2, %4 : vector<2x128xf32>
    %cst_5 = arith.constant 0.000000e+00 : f32
    %6 = vector.broadcast %cst_5 : f32 to vector<2x128xf32>
    %7 = arith.maximumf %5, %6 : vector<2x128xf32>
    %8 = arith.truncf %7 : vector<2x128xf32> to vector<2x128xbf16>
    %c0_6 = arith.constant 0 : index
    %c0_7 = arith.constant 0 : index
    %9 = vector.load %arg4[%c0_6, %c0_7] : memref<128x128xbf16, #tpu.memory_space<vmem>>, vector<128x128xbf16>
    %cst_8 = arith.constant dense<0.000000e+00> : vector<2x128xf32>
    %10 = tpu.matmul %8, %9, %cst_8 {dimension_numbers = #tpu.dot_dimension_numbers<[1], [0], [0], [1], [0, 0, 1, 1], [], []>} : vector<2x128xbf16>, vector<128x128xbf16>, vector<2x128xf32> -> vector<2x128xf32>
    %c0_9 = arith.constant 0 : index
    %c0_10 = arith.constant 0 : index
    %11 = vector.load %arg5[%c0_9, %c0_10] : memref<1x128xf32, #tpu.memory_space<vmem>>, vector<1x128xf32>
    %12 = vector.broadcast %11 : vector<1x128xf32> to vector<2x128xf32>
    %13 = arith.addf %10, %12 : vector<2x128xf32>
    %c0_11 = arith.constant 0 : index
    %c0_12 = arith.constant 0 : index
    %14 = vector.load %arg6[%c0_11, %c0_12] : memref<2x128xf32, #tpu.memory_space<vmem>>, vector<2x128xf32>
    tpu.vector_store %arg6[%c0_11, %c0_12], %13 {strides = array<i32>} : memref<2x128xf32, #tpu.memory_space<vmem>>, vector<2x128xf32>,
    return
  }
  func.func @transform_0(%arg0: i32) -> (i32, i32) {
    %c0_i32 = arith.constant 0 : i32
    %c0_i32_0 = arith.constant 0 : i32
    %c0_i32_1 = arith.constant 0 : i32
    return %c0_i32, %c0_i32_0 : i32, i32
  }
  func.func @transform_1(%arg0: i32) -> (i32, i32) {
    %c0_i32 = arith.constant 0 : i32
    %c0_i32_0 = arith.constant 0 : i32
    %c0_i32_1 = arith.constant 0 : i32
    return %c0_i32, %c0_i32_0 : i32, i32
  }
  func.func @transform_2(%arg0: i32) -> (i32, i32) {
    %c0_i32 = arith.constant 0 : i32
    %c0_i32_0 = arith.constant 0 : i32
    %c0_i32_1 = arith.constant 0 : i32
    return %c0_i32, %c0_i32_0 : i32, i32
  }
  func.func @transform_3(%arg0: i32) -> (i32, i32) {
    %c0_i32 = arith.constant 0 : i32
    %c0_i32_0 = arith.constant 0 : i32
    %c0_i32_1 = arith.constant 0 : i32
    return %c0_i32, %c0_i32_0 : i32, i32
  }
  func.func @transform_4(%arg0: i32) -> (i32, i32) {
    %c0_i32 = arith.constant 0 : i32
    %c0_i32_0 = arith.constant 0 : i32
    %c0_i32_1 = arith.constant 0 : i32
    return %c0_i32, %c0_i32_0 : i32, i32
  }
  func.func @transform_5(%arg0: i32) -> (i32, i32) {
    %c0_i32 = arith.constant 0 : i32
    %c0_i32_0 = arith.constant 0 : i32
    %c0_i32_1 = arith.constant 0 : i32
    return %c0_i32, %c0_i32_0 : i32, i32
  }
}

</mosaic_0001>

<llo_original>
// kernel: _lambda_.2
$region0: #{_lambda_.2}
  #allocation0 [shape = 'u32[]', space=smem, size = 0x4, offset = 0x4, fixed_abs, tag = 'smem constant byte address 0x4 - core index']
  #allocation1 [shape = 'u32[72,128]{1,0:T(1,128)}', space=vmem, size = 0x9000, scoped, tag = 'internal scratch']
  #allocation2 [shape = 'f32[2,18,18,128]{3,2,1,0:T(8,128)}', space=vmem, size = 0x6c000, scoped, tag = 'scratch operand']
  %s0 = inlined_call_operand.vmem [shape: bf16[1024,32], index: 0, kind: input, shape index: {}]
  %s1 = inlined_call_operand.vmem [shape: bf16[1024,32], index: 1, kind: input, shape index: {}]
  %s2 = inlined_call_operand.vmem [shape: bf16[32,128], index: 2, kind: input, shape index: {}]
  %s3 = inlined_call_operand.vmem [shape: f32[1,128], index: 3, kind: input, shape index: {}]
  %s4 = inlined_call_operand.vmem [shape: bf16[9,128,128], index: 4, kind: input, shape index: {}]
  %s5 = inlined_call_operand.vmem [shape: f32[1,128], index: 5, kind: input, shape index: {}]
  %s6 = inlined_call_operand.vmem [shape: f32[1,128], index: 6, kind: input, shape index: {}]
  %s7 = inlined_call_operand.vmem [shape: f32[512,128], index: 7, kind: output, shape index: {}]
  %s8 = sld [smem:[#allocation0]]
  $region45: #{_lambda_.2} parent=0
    _
  %s10 = ssub.s32 1, %s8
  %s11 = scalar_select 0, %s10, %s8
  // Predicated region
  $region2: #{_lambda_.2} parent=0 // pred_check
    _
  $region3: #{_lambda_.2} parent=0 // pred_check_branch
    %13 = sbr.rel (0) target = $region5
  $region4: #{_lambda_.2} parent=0 // pred_region
    _
  $region5: #{_lambda_.2} parent=0 // pred_fallthru
    _
  // Predicated region
  $region6: #{_lambda_.2} parent=0 // pred_check
    _
  $region7: #{_lambda_.2} parent=0 // pred_check_branch
    %15 = sbr.rel (0) target = $region9
  $region8: #{_lambda_.2} parent=0 // pred_region
    _
  $region9: #{_lambda_.2} parent=0 // pred_fallthru
    _
  // Predicated region
  $region10: #{_lambda_.2} parent=0 // pred_check
    _
  $region11: #{_lambda_.2} parent=0 // pred_check_branch
    %17 = sbr.rel (0) target = $region13
  $region12: #{_lambda_.2} parent=0 // pred_region
    _
  $region13: #{_lambda_.2} parent=0 // pred_fallthru
    _
  // Predicated region
  $region14: #{_lambda_.2} parent=0 // pred_check
    _
  $region15: #{_lambda_.2} parent=0 // pred_check_branch
    %19 = sbr.rel (0) target = $region17
  $region16: #{_lambda_.2} parent=0 // pred_region
    _
  $region17: #{_lambda_.2} parent=0 // pred_fallthru
    _
  // Predicated region
  $region18: #{_lambda_.2} parent=0 // pred_check
    _
  $region19: #{_lambda_.2} parent=0 // pred_check_branch
    %21 = sbr.rel (0) target = $region21
  $region20: #{_lambda_.2} parent=0 // pred_region
    _
  $region21: #{_lambda_.2} parent=0 // pred_fallthru
    _
  // Predicated region
  $region22: #{_lambda_.2} parent=0 // pred_check
    _
  $region23: #{_lambda_.2} parent=0 // pred_check_branch
    %23 = sbr.rel (0) target = $region25
  $region24: #{_lambda_.2} parent=0 // pred_region
    _
  $region25: #{_lambda_.2} parent=0 // pred_fallthru
    _
  // Predicated region
  $region26: #{_lambda_.2} parent=0 // pred_check
    _
  $region27: #{_lambda_.2} parent=0 // pred_check_branch
    %25 = sbr.rel (0) target = $region29
  $region28: #{_lambda_.2} parent=0 // pred_region
    _
  $region29: #{_lambda_.2} parent=0 // pred_fallthru
    _
  %v27 = vld [vmem:[%s0] sm:$0xf]
  %v28 = vld [vmem:[%s0 + $0x4] sm:$0xf]
  %v29 = vld [vmem:[%s0 + $0x8] sm:$0xf]
  %v30 = vld [vmem:[%s0 + $0xc] sm:$0xf]
  %v31 = vld [vmem:[%s0 + $0x10] sm:$0xf]
  %v32 = vld [vmem:[%s0 + $0x14] sm:$0xf]
  %v33 = vld [vmem:[%s0 + $0x18] sm:$0xf]
  %v34 = vld [vmem:[%s0 + $0x1c] sm:$0xf]
  %v35 = vld [vmem:[%s0 + $0x20] sm:$0xf]
  %v36 = vld [vmem:[%s0 + $0x24] sm:$0xf]
  %v37 = vld [vmem:[%s0 + $0x28] sm:$0xf]
  %v38 = vld [vmem:[%s0 + $0x2c] sm:$0xf]
  %v39 = vld [vmem:[%s0 + $0x30] sm:$0xf]
  %v40 = vld [vmem:[%s0 + $0x34] sm:$0xf]
  %v41 = vld [vmem:[%s0 + $0x38] sm:$0xf]
  %v42 = vld [vmem:[%s0 + $0x3c] sm:$0xf]
  %v43 = vld [vmem:[%s0 + $0x40] sm:$0xf]
  %v44 = vld [vmem:[%s0 + $0x44] sm:$0xf]
  %v45 = vld [vmem:[%s0 + $0x48] sm:$0xf]
  %v46 = vld [vmem:[%s0 + $0x4c] sm:$0xf]
  %v47 = vld [vmem:[%s0 + $0x50] sm:$0xf]
  %v48 = vld [vmem:[%s0 + $0x54] sm:$0xf]
  %v49 = vld [vmem:[%s0 + $0x58] sm:$0xf]
  %v50 = vld [vmem:[%s0 + $0x5c] sm:$0xf]
  %v51 = vld [vmem:[%s0 + $0x60] sm:$0xf]
  %v52 = vld [vmem:[%s0 + $0x64] sm:$0xf]
  %v53 = vld [vmem:[%s0 + $0x68] sm:$0xf]
  %v54 = vld [vmem:[%s0 + $0x6c] sm:$0xf]
  %v55 = vld [vmem:[%s0 + $0x70] sm:$0xf]
  %v56 = vld [vmem:[%s0 + $0x74] sm:$0xf]
  %v57 = vld [vmem:[%s0 + $0x78] sm:$0xf]
  %v58 = vld [vmem:[%s0 + $0x7c] sm:$0xf]
  %v59 = vld [vmem:[%s0 + $0x80] sm:$0xf]
  %v60 = vld [vmem:[%s0 + $0x84] sm:$0xf]
  %v61 = vld [vmem:[%s0 + $0x88] sm:$0xf]
  %v62 = vld [vmem:[%s0 + $0x8c] sm:$0xf]
  %v63 = vld [vmem:[%s0 + $0x90] sm:$0xf]
  %v64 = vld [vmem:[%s0 + $0x94] sm:$0xf]
  %v65 = vld [vmem:[%s0 + $0x98] sm:$0xf]
  %v66 = vld [vmem:[%s0 + $0x9c] sm:$0xf]
  %v67 = vld [vmem:[%s0 + $0xa0] sm:$0xf]
  %v68 = vld [vmem:[%s0 + $0xa4] sm:$0xf]
  %v69 = vld [vmem:[%s0 + $0xa8] sm:$0xf]
  %v70 = vld [vmem:[%s0 + $0xac] sm:$0xf]
  %v71 = vld [vmem:[%s0 + $0xb0] sm:$0xf]
  %v72 = vld [vmem:[%s0 + $0xb4] sm:$0xf]
  %v73 = vld [vmem:[%s0 + $0xb8] sm:$0xf]
  %v74 = vld [vmem:[%s0 + $0xbc] sm:$0xf]
  %v75 = vld [vmem:[%s0 + $0xc0] sm:$0xf]
  %v76 = vld [vmem:[%s0 + $0xc4] sm:$0xf]
  %v77 = vld [vmem:[%s0 + $0xc8] sm:$0xf]
  %v78 = vld [vmem:[%s0 + $0xcc] sm:$0xf]
  %v79 = vld [vmem:[%s0 + $0xd0] sm:$0xf]
  %v80 = vld [vmem:[%s0 + $0xd4] sm:$0xf]
  %v81 = vld [vmem:[%s0 + $0xd8] sm:$0xf]
  %v82 = vld [vmem:[%s0 + $0xdc] sm:$0xf]
  %v83 = vld [vmem:[%s0 + $0xe0] sm:$0xf]
  %v84 = vld [vmem:[%s0 + $0xe4] sm:$0xf]
  %v85 = vld [vmem:[%s0 + $0xe8] sm:$0xf]
  %v86 = vld [vmem:[%s0 + $0xec] sm:$0xf]
  %v87 = vld [vmem:[%s0 + $0xf0] sm:$0xf]
  %v88 = vld [vmem:[%s0 + $0xf4] sm:$0xf]
  %v89 = vld [vmem:[%s0 + $0xf8] sm:$0xf]
  %v90 = vld [vmem:[%s0 + $0xfc] sm:$0xf]
  %v91 = vld [vmem:[%s0 + $0x100] sm:$0xf]
  %v92 = vld [vmem:[%s0 + $0x104] sm:$0xf]
  %v93 = vld [vmem:[%s0 + $0x108] sm:$0xf]
  %v94 = vld [vmem:[%s0 + $0x10c] sm:$0xf]
  %v95 = vld [vmem:[%s0 + $0x110] sm:$0xf]
  %v96 = vld [vmem:[%s0 + $0x114] sm:$0xf]
  %v97 = vld [vmem:[%s0 + $0x118] sm:$0xf]
  %v98 = vld [vmem:[%s0 + $0x11c] sm:$0xf]
  %v99 = vld [vmem:[%s0 + $0x120] sm:$0xf]
  %v100 = vld [vmem:[%s0 + $0x124] sm:$0xf]
  %v101 = vld [vmem:[%s0 + $0x128] sm:$0xf]
  %v102 = vld [vmem:[%s0 + $0x12c] sm:$0xf]
  %v103 = vld [vmem:[%s0 + $0x130] sm:$0xf]
  %v104 = vld [vmem:[%s0 + $0x134] sm:$0xf]
  %v105 = vld [vmem:[%s0 + $0x138] sm:$0xf]
  %v106 = vld [vmem:[%s0 + $0x13c] sm:$0xf]
  %v107 = vld [vmem:[%s0 + $0x140] sm:$0xf]
  %v108 = vld [vmem:[%s0 + $0x144] sm:$0xf]
  %v109 = vld [vmem:[%s0 + $0x148] sm:$0xf]
  %v110 = vld [vmem:[%s0 + $0x14c] sm:$0xf]
  %v111 = vld [vmem:[%s0 + $0x150] sm:$0xf]
  %v112 = vld [vmem:[%s0 + $0x154] sm:$0xf]
  %v113 = vld [vmem:[%s0 + $0x158] sm:$0xf]
  %v114 = vld [vmem:[%s0 + $0x15c] sm:$0xf]
  %v115 = vld [vmem:[%s0 + $0x160] sm:$0xf]
  %v116 = vld [vmem:[%s0 + $0x164] sm:$0xf]
  %v117 = vld [vmem:[%s0 + $0x168] sm:$0xf]
  %v118 = vld [vmem:[%s0 + $0x16c] sm:$0xf]
  %v119 = vld [vmem:[%s0 + $0x170] sm:$0xf]
  %v120 = vld [vmem:[%s0 + $0x174] sm:$0xf]
  %v121 = vld [vmem:[%s0 + $0x178] sm:$0xf]
  %v122 = vld [vmem:[%s0 + $0x17c] sm:$0xf]
  %v123 = vld [vmem:[%s0 + $0x180] sm:$0xf]
  %v124 = vld [vmem:[%s0 + $0x184] sm:$0xf]
  %v125 = vld [vmem:[%s0 + $0x188] sm:$0xf]
  %v126 = vld [vmem:[%s0 + $0x18c] sm:$0xf]
  %v127 = vld [vmem:[%s0 + $0x190] sm:$0xf]
  %v128 = vld [vmem:[%s0 + $0x194] sm:$0xf]
  %v129 = vld [vmem:[%s0 + $0x198] sm:$0xf]
  %v130 = vld [vmem:[%s0 + $0x19c] sm:$0xf]
  %v131 = vld [vmem:[%s0 + $0x1a0] sm:$0xf]
  %v132 = vld [vmem:[%s0 + $0x1a4] sm:$0xf]
  %v133 = vld [vmem:[%s0 + $0x1a8] sm:$0xf]
  %v134 = vld [vmem:[%s0 + $0x1ac] sm:$0xf]
  %v135 = vld [vmem:[%s0 + $0x1b0] sm:$0xf]
  %v136 = vld [vmem:[%s0 + $0x1b4] sm:$0xf]
  %v137 = vld [vmem:[%s0 + $0x1b8] sm:$0xf]
  %v138 = vld [vmem:[%s0 + $0x1bc] sm:$0xf]
  %v139 = vld [vmem:[%s0 + $0x1c0] sm:$0xf]
  %v140 = vld [vmem:[%s0 + $0x1c4] sm:$0xf]
  %v141 = vld [vmem:[%s0 + $0x1c8] sm:$0xf]
  %v142 = vld [vmem:[%s0 + $0x1cc] sm:$0xf]
  %v143 = vld [vmem:[%s0 + $0x1d0] sm:$0xf]
  %v144 = vld [vmem:[%s0 + $0x1d4] sm:$0xf]
  %v145 = vld [vmem:[%s0 + $0x1d8] sm:$0xf]
  %v146 = vld [vmem:[%s0 + $0x1dc] sm:$0xf]
  %v147 = vld [vmem:[%s0 + $0x1e0] sm:$0xf]
  %v148 = vld [vmem:[%s0 + $0x1e4] sm:$0xf]
  %v149 = vld [vmem:[%s0 + $0x1e8] sm:$0xf]
  %v150 = vld [vmem:[%s0 + $0x1ec] sm:$0xf]
  %v151 = vld [vmem:[%s0 + $0x1f0] sm:$0xf]
  %v152 = vld [vmem:[%s0 + $0x1f4] sm:$0xf]
  %v153 = vld [vmem:[%s0 + $0x1f8] sm:$0xf]
  %v154 = vld [vmem:[%s0 + $0x1fc] sm:$0xf]
  %v155 = vld [vmem:[%s2] sm:$0xf]
  %v156 = vld [vmem:[%s2 + $0x4] sm:$0xf]
  %v157 = vld [vmem:[%s2 + $0x8] sm:$0xf]
  %v158 = vld [vmem:[%s2 + $0xc] sm:$0xf]
  %v159 = vld [vmem:[%s3] sm:$0x1]
  %v161 = vperm.slane %v159, 0
  %v291 = vunpack.c.l.b16 %v27
  %v292 = vunpack.c.l.b16 %v28
  %v293 = vunpack.c.l.b16 %v29
  %v294 = vunpack.c.l.b16 %v30
  %v295 = vunpack.c.l.b16 %v31
  %v296 = vunpack.c.l.b16 %v32
  %v297 = vunpack.c.l.b16 %v33
  %v298 = vunpack.c.l.b16 %v34
  %v299 = vunpack.c.l.b16 %v35
  %v300 = vunpack.c.l.b16 %v36
  %v301 = vunpack.c.l.b16 %v37
  %v302 = vunpack.c.l.b16 %v38
  %v303 = vunpack.c.l.b16 %v39
  %v304 = vunpack.c.l.b16 %v40
  %v305 = vunpack.c.l.b16 %v41
  %v306 = vunpack.c.l.b16 %v42
  %v307 = vunpack.c.l.b16 %v43
  %v308 = vunpack.c.l.b16 %v44
  %v309 = vunpack.c.l.b16 %v45
  %v310 = vunpack.c.l.b16 %v46
  %v311 = vunpack.c.l.b16 %v47
  %v312 = vunpack.c.l.b16 %v48
  %v313 = vunpack.c.l.b16 %v49
  %v314 = vunpack.c.l.b16 %v50
  %v315 = vunpack.c.l.b16 %v51
  %v316 = vunpack.c.l.b16 %v52
  %v317 = vunpack.c.l.b16 %v53
  %v318 = vunpack.c.l.b16 %v54
  %v319 = vunpack.c.l.b16 %v55
  %v320 = vunpack.c.l.b16 %v56
  %v321 = vunpack.c.l.b16 %v57
  %v322 = vunpack.c.l.b16 %v58
  %v323 = vunpack.c.l.b16 %v59
  %v324 = vunpack.c.l.b16 %v60
  %v325 = vunpack.c.l.b16 %v61
  %v326 = vunpack.c.l.b16 %v62
  %v327 = vunpack.c.l.b16 %v63
  %v328 = vunpack.c.l.b16 %v64
  %v329 = vunpack.c.l.b16 %v65
  %v330 = vunpack.c.l.b16 %v66
  %v331 = vunpack.c.l.b16 %v67
  %v332 = vunpack.c.l.b16 %v68
  %v333 = vunpack.c.l.b16 %v69
  %v334 = vunpack.c.l.b16 %v70
  %v335 = vunpack.c.l.b16 %v71
  %v336 = vunpack.c.l.b16 %v72
  %v337 = vunpack.c.l.b16 %v73
  %v338 = vunpack.c.l.b16 %v74
  %v339 = vunpack.c.l.b16 %v75
  %v340 = vunpack.c.l.b16 %v76
  %v341 = vunpack.c.l.b16 %v77
  %v342 = vunpack.c.l.b16 %v78
  %v343 = vunpack.c.l.b16 %v79
  %v344 = vunpack.c.l.b16 %v80
  %v345 = vunpack.c.l.b16 %v81
  %v346 = vunpack.c.l.b16 %v82
  %v347 = vunpack.c.l.b16 %v83
  %v348 = vunpack.c.l.b16 %v84
  %v349 = vunpack.c.l.b16 %v85
  %v350 = vunpack.c.l.b16 %v86
  %v351 = vunpack.c.l.b16 %v87
  %v352 = vunpack.c.l.b16 %v88
  %v353 = vunpack.c.l.b16 %v89
  %v354 = vunpack.c.l.b16 %v90
  %v355 = vunpack.c.l.b16 %v91
  %v356 = vunpack.c.l.b16 %v92
  %v357 = vunpack.c.l.b16 %v93
  %v358 = vunpack.c.l.b16 %v94
  %v359 = vunpack.c.l.b16 %v95
  %v360 = vunpack.c.l.b16 %v96
  %v361 = vunpack.c.l.b16 %v97
  %v362 = vunpack.c.l.b16 %v98
  %v363 = vunpack.c.l.b16 %v99
  %v364 = vunpack.c.l.b16 %v100
  %v365 = vunpack.c.l.b16 %v101
  %v366 = vunpack.c.l.b16 %v102
  %v367 = vunpack.c.l.b16 %v103
  %v368 = vunpack.c.l.b16 %v104
  %v369 = vunpack.c.l.b16 %v105
  %v370 = vunpack.c.l.b16 %v106
  %v371 = vunpack.c.l.b16 %v107
  %v372 = vunpack.c.l.b16 %v108
  %v373 = vunpack.c.l.b16 %v109
  %v374 = vunpack.c.l.b16 %v110
  %v375 = vunpack.c.l.b16 %v111
  %v376 = vunpack.c.l.b16 %v112
  %v377 = vunpack.c.l.b16 %v113
  %v378 = vunpack.c.l.b16 %v114
  %v379 = vunpack.c.l.b16 %v115
  %v380 = vunpack.c.l.b16 %v116
  %v381 = vunpack.c.l.b16 %v117
  %v382 = vunpack.c.l.b16 %v118
  %v383 = vunpack.c.l.b16 %v119
  %v384 = vunpack.c.l.b16 %v120
  %v385 = vunpack.c.l.b16 %v121
  %v386 = vunpack.c.l.b16 %v122
  %v387 = vunpack.c.l.b16 %v123
  %v388 = vunpack.c.l.b16 %v124
  %v389 = vunpack.c.l.b16 %v125
  %v390 = vunpack.c.l.b16 %v126
  %v391 = vunpack.c.l.b16 %v127
  %v392 = vunpack.c.l.b16 %v128
  %v393 = vunpack.c.l.b16 %v129
  %v394 = vunpack.c.l.b16 %v130
  %v395 = vunpack.c.l.b16 %v131
  %v396 = vunpack.c.l.b16 %v132
  %v397 = vunpack.c.l.b16 %v133
  %v398 = vunpack.c.l.b16 %v134
  %v399 = vunpack.c.l.b16 %v135
  %v400 = vunpack.c.l.b16 %v136
  %v401 = vunpack.c.l.b16 %v137
  %v402 = vunpack.c.l.b16 %v138
  %v403 = vunpack.c.l.b16 %v139
  %v404 = vunpack.c.l.b16 %v140
  %v405 = vunpack.c.l.b16 %v141
  %v406 = vunpack.c.l.b16 %v142
  %v407 = vunpack.c.l.b16 %v143
  %v408 = vunpack.c.l.b16 %v144
  %v409 = vunpack.c.l.b16 %v145
  %v410 = vunpack.c.l.b16 %v146
  %v411 = vunpack.c.l.b16 %v147
  %v412 = vunpack.c.l.b16 %v148
  %v413 = vunpack.c.l.b16 %v149
  %v414 = vunpack.c.l.b16 %v150
  %v415 = vunpack.c.l.b16 %v151
  %v416 = vunpack.c.l.b16 %v152
  %v417 = vunpack.c.l.b16 %v153
  %v418 = vunpack.c.l.b16 %v154
  %v419 = vpack.c.b16 %v292, %v291
  %v420 = vpack.c.b16 %v294, %v293
  %v421 = vpack.c.b16 %v296, %v295
  %v422 = vpack.c.b16 %v298, %v297
  %v423 = vpack.c.b16 %v300, %v299
  %v424 = vpack.c.b16 %v302, %v301
  %v425 = vpack.c.b16 %v304, %v303
  %v426 = vpack.c.b16 %v306, %v305
  %v427 = vpack.c.b16 %v308, %v307
  %v428 = vpack.c.b16 %v310, %v309
  %v429 = vpack.c.b16 %v312, %v311
  %v430 = vpack.c.b16 %v314, %v313
  %v431 = vpack.c.b16 %v316, %v315
  %v432 = vpack.c.b16 %v318, %v317
  %v433 = vpack.c.b16 %v320, %v319
  %v434 = vpack.c.b16 %v322, %v321
  %v435 = vpack.c.b16 %v324, %v323
  %v436 = vpack.c.b16 %v326, %v325
  %v437 = vpack.c.b16 %v328, %v327
  %v438 = vpack.c.b16 %v330, %v329
  %v439 = vpack.c.b16 %v332, %v331
  %v440 = vpack.c.b16 %v334, %v333
  %v441 = vpack.c.b16 %v336, %v335
  %v442 = vpack.c.b16 %v338, %v337
  %v443 = vpack.c.b16 %v340, %v339
  %v444 = vpack.c.b16 %v342, %v341
  %v445 = vpack.c.b16 %v344, %v343
  %v446 = vpack.c.b16 %v346, %v345
  %v447 = vpack.c.b16 %v348, %v347
  %v448 = vpack.c.b16 %v350, %v349
  %v449 = vpack.c.b16 %v352, %v351
  %v450 = vpack.c.b16 %v354, %v353
  %v451 = vpack.c.b16 %v356, %v355
  %v452 = vpack.c.b16 %v358, %v357
  %v453 = vpack.c.b16 %v360, %v359
  %v454 = vpack.c.b16 %v362, %v361
  %v455 = vpack.c.b16 %v364, %v363
  %v456 = vpack.c.b16 %v366, %v365
  %v457 = vpack.c.b16 %v368, %v367
  %v458 = vpack.c.b16 %v370, %v369
  %v459 = vpack.c.b16 %v372, %v371
  %v460 = vpack.c.b16 %v374, %v373
  %v461 = vpack.c.b16 %v376, %v375
  %v462 = vpack.c.b16 %v378, %v377
  %v463 = vpack.c.b16 %v380, %v379
  %v464 = vpack.c.b16 %v382, %v381
  %v465 = vpack.c.b16 %v384, %v383
  %v466 = vpack.c.b16 %v386, %v385
  %v467 = vpack.c.b16 %v388, %v387
  %v468 = vpack.c.b16 %v390, %v389
  %v469 = vpack.c.b16 %v392, %v391
  %v470 = vpack.c.b16 %v394, %v393
  %v471 = vpack.c.b16 %v396, %v395
  %v472 = vpack.c.b16 %v398, %v397
  %v473 = vpack.c.b16 %v400, %v399
  %v474 = vpack.c.b16 %v402, %v401
  %v475 = vpack.c.b16 %v404, %v403
  %v476 = vpack.c.b16 %v406, %v405
  %v477 = vpack.c.b16 %v408, %v407
  %v478 = vpack.c.b16 %v410, %v409
  %v479 = vpack.c.b16 %v412, %v411
  %v480 = vpack.c.b16 %v414, %v413
  %v481 = vpack.c.b16 %v416, %v415
  %v482 = vpack.c.b16 %v418, %v417
  %v487 = vunpack.c.l.b16 %v155
  %v488 = vunpack.c.l.b16 %v156
  %v489 = vunpack.c.l.b16 %v157
  %v490 = vunpack.c.l.b16 %v158
  %v491 = vpack.c.b16 %v488, %v487
  %v492 = vpack.c.b16 %v490, %v489
  %vm495 = vcmask 261120
  %v497 = vsel %vm495, %v419, 0
  %v500 = vsel %vm495, %v420, 0
  %v503 = vsel %vm495, %v421, 0
  %v506 = vsel %vm495, %v422, 0
  %v509 = vsel %vm495, %v423, 0
  %v512 = vsel %vm495, %v424, 0
  %v515 = vsel %vm495, %v425, 0
  %v518 = vsel %vm495, %v426, 0
  %v521 = vsel %vm495, %v427, 0
  %v524 = vsel %vm495, %v428, 0
  %v527 = vsel %vm495, %v429, 0
  %v530 = vsel %vm495, %v430, 0
  %v533 = vsel %vm495, %v431, 0
  %v536 = vsel %vm495, %v432, 0
  %v539 = vsel %vm495, %v433, 0
  %v542 = vsel %vm495, %v434, 0
  %v545 = vsel %vm495, %v435, 0
  %v548 = vsel %vm495, %v436, 0
  %v551 = vsel %vm495, %v437, 0
  %v554 = vsel %vm495, %v438, 0
  %v557 = vsel %vm495, %v439, 0
  %v560 = vsel %vm495, %v440, 0
  %v563 = vsel %vm495, %v441, 0
  %v566 = vsel %vm495, %v442, 0
  %v569 = vsel %vm495, %v443, 0
  %v572 = vsel %vm495, %v444, 0
  %v575 = vsel %vm495, %v445, 0
  %v578 = vsel %vm495, %v446, 0
  %v581 = vsel %vm495, %v447, 0
  %v584 = vsel %vm495, %v448, 0
  %v587 = vsel %vm495, %v449, 0
  %v590 = vsel %vm495, %v450, 0
  %v593 = vsel %vm495, %v451, 0
  %v596 = vsel %vm495, %v452, 0
  %v599 = vsel %vm495, %v453, 0
  %v602 = vsel %vm495, %v454, 0
  %v605 = vsel %vm495, %v455, 0
  %v608 = vsel %vm495, %v456, 0
  %v611 = vsel %vm495, %v457, 0
  %v614 = vsel %vm495, %v458, 0
  %v617 = vsel %vm495, %v459, 0
  %v620 = vsel %vm495, %v460, 0
  %v623 = vsel %vm495, %v461, 0
  %v626 = vsel %vm495, %v462, 0
  %v629 = vsel %vm495, %v463, 0
  %v632 = vsel %vm495, %v464, 0
  %v635 = vsel %vm495, %v465, 0
  %v638 = vsel %vm495, %v466, 0
  %v641 = vsel %vm495, %v467, 0
  %v644 = vsel %vm495, %v468, 0
  %v647 = vsel %vm495, %v469, 0
  %v650 = vsel %vm495, %v470, 0
  %v653 = vsel %vm495, %v471, 0
  %v656 = vsel %vm495, %v472, 0
  %v659 = vsel %vm495, %v473, 0
  %v662 = vsel %vm495, %v474, 0
  %v665 = vsel %vm495, %v475, 0
  %v668 = vsel %vm495, %v476, 0
  %v671 = vsel %vm495, %v477, 0
  %v674 = vsel %vm495, %v478, 0
  %v677 = vsel %vm495, %v479, 0
  %v680 = vsel %vm495, %v480, 0
  %v683 = vsel %vm495, %v481, 0
  %v686 = vsel %vm495, %v482, 0
  %688 = vmatpush.bf16.msra.mxu0 0
  %689 = vmatpush.bf16.msra.mxu0 0
  %690 = vmatpush.bf16.msra.mxu0 0
  %691 = vmatpush.bf16.msra.mxu0 0
  %692 = vmatpush.bf16.msra.mxu0 0
  %693 = vmatpush.bf16.msra.mxu0 0
  %694 = vmatpush.bf16.msra.mxu0 %v492
  %695 = vmatpush.bf16.msra.mxu0 %v491
  %696 = vmatmul.bf16.gmra.mxu0 %v497
  %v697 = vpop.f32.mrf.mxu0
  %v698 = vadd.f32 %v161, %v697
  %v699 = vpop.f32.mrf.mxu0
  %v700 = vadd.f32 %v161, %v699
  %701 = vmatmul.bf16.gmra.mxu0 %v500
  %v702 = vpop.f32.mrf.mxu0
  %v703 = vadd.f32 %v161, %v702
  %v704 = vpop.f32.mrf.mxu0
  %v705 = vadd.f32 %v161, %v704
  %706 = vmatmul.bf16.gmra.mxu0 %v503
  %v707 = vpop.f32.mrf.mxu0
  %v708 = vadd.f32 %v161, %v707
  %v709 = vpop.f32.mrf.mxu0
  %v710 = vadd.f32 %v161, %v709
  %711 = vmatmul.bf16.gmra.mxu0 %v506
  %v712 = vpop.f32.mrf.mxu0
  %v713 = vadd.f32 %v161, %v712
  %v714 = vpop.f32.mrf.mxu0
  %v715 = vadd.f32 %v161, %v714
  %716 = vmatmul.bf16.gmra.mxu0 %v509
  %v717 = vpop.f32.mrf.mxu0
  %v718 = vadd.f32 %v161, %v717
  %v719 = vpop.f32.mrf.mxu0
  %v720 = vadd.f32 %v161, %v719
  %721 = vmatmul.bf16.gmra.mxu0 %v512
  %v722 = vpop.f32.mrf.mxu0
  %v723 = vadd.f32 %v161, %v722
  %v724 = vpop.f32.mrf.mxu0
  %v725 = vadd.f32 %v161, %v724
  %726 = vmatmul.bf16.gmra.mxu0 %v515
  %v727 = vpop.f32.mrf.mxu0
  %v728 = vadd.f32 %v161, %v727
  %v729 = vpop.f32.mrf.mxu0
  %v730 = vadd.f32 %v161, %v729
  %731 = vmatmul.bf16.gmra.mxu0 %v518
  %v732 = vpop.f32.mrf.mxu0
  %v733 = vadd.f32 %v161, %v732
  %v734 = vpop.f32.mrf.mxu0
  %v735 = vadd.f32 %v161, %v734
  %736 = vmatmul.bf16.gmra.mxu0 %v521
  %v737 = vpop.f32.mrf.mxu0
  %v738 = vadd.f32 %v161, %v737
  %v739 = vpop.f32.mrf.mxu0
  %v740 = vadd.f32 %v161, %v739
  %741 = vmatmul.bf16.gmra.mxu0 %v524
  %v742 = vpop.f32.mrf.mxu0
  %v743 = vadd.f32 %v161, %v742
  %v744 = vpop.f32.mrf.mxu0
  %v745 = vadd.f32 %v161, %v744
  %746 = vmatmul.bf16.gmra.mxu0 %v527
  %v747 = vpop.f32.mrf.mxu0
  %v748 = vadd.f32 %v161, %v747
  %v749 = vpop.f32.mrf.mxu0
  %v750 = vadd.f32 %v161, %v749
  %751 = vmatmul.bf16.gmra.mxu0 %v530
  %v752 = vpop.f32.mrf.mxu0
  %v753 = vadd.f32 %v161, %v752
  %v754 = vpop.f32.mrf.mxu0
  %v755 = vadd.f32 %v161, %v754
  %756 = vmatmul.bf16.gmra.mxu0 %v533
  %v757 = vpop.f32.mrf.mxu0
  %v758 = vadd.f32 %v161, %v757
  %v759 = vpop.f32.mrf.mxu0
  %v760 = vadd.f32 %v161, %v759
  %761 = vmatmul.bf16.gmra.mxu0 %v536
  %v762 = vpop.f32.mrf.mxu0
  %v763 = vadd.f32 %v161, %v762
  %v764 = vpop.f32.mrf.mxu0
  %v765 = vadd.f32 %v161, %v764
  %766 = vmatmul.bf16.gmra.mxu0 %v539
  %v767 = vpop.f32.mrf.mxu0
  %v768 = vadd.f32 %v161, %v767
  %v769 = vpop.f32.mrf.mxu0
  %v770 = vadd.f32 %v161, %v769
  %771 = vmatmul.bf16.gmra.mxu0 %v542
  %v772 = vpop.f32.mrf.mxu0
  %v773 = vadd.f32 %v161, %v772
  %v774 = vpop.f32.mrf.mxu0
  %v775 = vadd.f32 %v161, %v774
  %776 = vmatmul.bf16.gmra.mxu0 %v545
  %v777 = vpop.f32.mrf.mxu0
  %v778 = vadd.f32 %v161, %v777
  %v779 = vpop.f32.mrf.mxu0
  %v780 = vadd.f32 %v161, %v779
  %781 = vmatmul.bf16.gmra.mxu0 %v548
  %v782 = vpop.f32.mrf.mxu0
  %v783 = vadd.f32 %v161, %v782
  %v784 = vpop.f32.mrf.mxu0
  %v785 = vadd.f32 %v161, %v784
  %786 = vmatmul.bf16.gmra.mxu0 %v551
  %v787 = vpop.f32.mrf.mxu0
  %v788 = vadd.f32 %v161, %v787
  %v789 = vpop.f32.mrf.mxu0
  %v790 = vadd.f32 %v161, %v789
  %791 = vmatmul.bf16.gmra.mxu0 %v554
  %v792 = vpop.f32.mrf.mxu0
  %v793 = vadd.f32 %v161, %v792
  %v794 = vpop.f32.mrf.mxu0
  %v795 = vadd.f32 %v161, %v794
  %796 = vmatmul.bf16.gmra.mxu0 %v557
  %v797 = vpop.f32.mrf.mxu0
  %v798 = vadd.f32 %v161, %v797
  %v799 = vpop.f32.mrf.mxu0
  %v800 = vadd.f32 %v161, %v799
  %801 = vmatmul.bf16.gmra.mxu0 %v560
  %v802 = vpop.f32.mrf.mxu0
  %v803 = vadd.f32 %v161, %v802
  %v804 = vpop.f32.mrf.mxu0
  %v805 = vadd.f32 %v161, %v804
  %806 = vmatmul.bf16.gmra.mxu0 %v563
  %v807 = vpop.f32.mrf.mxu0
  %v808 = vadd.f32 %v161, %v807
  %v809 = vpop.f32.mrf.mxu0
  %v810 = vadd.f32 %v161, %v809
  %811 = vmatmul.bf16.gmra.mxu0 %v566
  %v812 = vpop.f32.mrf.mxu0
  %v813 = vadd.f32 %v161, %v812
  %v814 = vpop.f32.mrf.mxu0
  %v815 = vadd.f32 %v161, %v814
  %816 = vmatmul.bf16.gmra.mxu0 %v569
  %v817 = vpop.f32.mrf.mxu0
  %v818 = vadd.f32 %v161, %v817
  %v819 = vpop.f32.mrf.mxu0
  %v820 = vadd.f32 %v161, %v819
  %821 = vmatmul.bf16.gmra.mxu0 %v572
  %v822 = vpop.f32.mrf.mxu0
  %v823 = vadd.f32 %v161, %v822
  %v824 = vpop.f32.mrf.mxu0
  %v825 = vadd.f32 %v161, %v824
  %826 = vmatmul.bf16.gmra.mxu0 %v575
  %v827 = vpop.f32.mrf.mxu0
  %v828 = vadd.f32 %v161, %v827
  %v829 = vpop.f32.mrf.mxu0
  %v830 = vadd.f32 %v161, %v829
  %831 = vmatmul.bf16.gmra.mxu0 %v578
  %v832 = vpop.f32.mrf.mxu0
  %v833 = vadd.f32 %v161, %v832
  %v834 = vpop.f32.mrf.mxu0
  %v835 = vadd.f32 %v161, %v834
  %836 = vmatmul.bf16.gmra.mxu0 %v581
  %v837 = vpop.f32.mrf.mxu0
  %v838 = vadd.f32 %v161, %v837
  %v839 = vpop.f32.mrf.mxu0
  %v840 = vadd.f32 %v161, %v839
  %841 = vmatmul.bf16.gmra.mxu0 %v584
  %v842 = vpop.f32.mrf.mxu0
  %v843 = vadd.f32 %v161, %v842
  %v844 = vpop.f32.mrf.mxu0
  %v845 = vadd.f32 %v161, %v844
  %846 = vmatmul.bf16.gmra.mxu0 %v587
  %v847 = vpop.f32.mrf.mxu0
  %v848 = vadd.f32 %v161, %v847
  %v849 = vpop.f32.mrf.mxu0
  %v850 = vadd.f32 %v161, %v849
  %851 = vmatmul.bf16.gmra.mxu0 %v590
  %v852 = vpop.f32.mrf.mxu0
  %v853 = vadd.f32 %v161, %v852
  %v854 = vpop.f32.mrf.mxu0
  %v855 = vadd.f32 %v161, %v854
  %856 = vmatmul.bf16.gmra.mxu0 %v593
  %v857 = vpop.f32.mrf.mxu0
  %v858 = vadd.f32 %v161, %v857
  %v859 = vpop.f32.mrf.mxu0
  %v860 = vadd.f32 %v161, %v859
  %861 = vmatmul.bf16.gmra.mxu0 %v596
  %v862 = vpop.f32.mrf.mxu0
  %v863 = vadd.f32 %v161, %v862
  %v864 = vpop.f32.mrf.mxu0
  %v865 = vadd.f32 %v161, %v864
  %866 = vmatmul.bf16.gmra.mxu0 %v599
  %v867 = vpop.f32.mrf.mxu0
  %v868 = vadd.f32 %v161, %v867
  %v869 = vpop.f32.mrf.mxu0
  %v870 = vadd.f32 %v161, %v869
  %871 = vmatmul.bf16.gmra.mxu0 %v602
  %v872 = vpop.f32.mrf.mxu0
  %v873 = vadd.f32 %v161, %v872
  %v874 = vpop.f32.mrf.mxu0
  %v875 = vadd.f32 %v161, %v874
  %876 = vmatmul.bf16.gmra.mxu0 %v605
  %v877 = vpop.f32.mrf.mxu0
  %v878 = vadd.f32 %v161, %v877
  %v879 = vpop.f32.mrf.mxu0
  %v880 = vadd.f32 %v161, %v879
  %881 = vmatmul.bf16.gmra.mxu0 %v608
  %v882 = vpop.f32.mrf.mxu0
  %v883 = vadd.f32 %v161, %v882
  %v884 = vpop.f32.mrf.mxu0
  %v885 = vadd.f32 %v161, %v884
  %886 = vmatmul.bf16.gmra.mxu0 %v611
  %v887 = vpop.f32.mrf.mxu0
  %v888 = vadd.f32 %v161, %v887
  %v889 = vpop.f32.mrf.mxu0
  %v890 = vadd.f32 %v161, %v889
  %891 = vmatmul.bf16.gmra.mxu0 %v614
  %v892 = vpop.f32.mrf.mxu0
  %v893 = vadd.f32 %v161, %v892
  %v894 = vpop.f32.mrf.mxu0
  %v895 = vadd.f32 %v161, %v894
  %896 = vmatmul.bf16.gmra.mxu0 %v617
  %v897 = vpop.f32.mrf.mxu0
  %v898 = vadd.f32 %v161, %v897
  %v899 = vpop.f32.mrf.mxu0
  %v900 = vadd.f32 %v161, %v899
  %901 = vmatmul.bf16.gmra.mxu0 %v620
  %v902 = vpop.f32.mrf.mxu0
  %v903 = vadd.f32 %v161, %v902
  %v904 = vpop.f32.mrf.mxu0
  %v905 = vadd.f32 %v161, %v904
  %906 = vmatmul.bf16.gmra.mxu0 %v623
  %v907 = vpop.f32.mrf.mxu0
  %v908 = vadd.f32 %v161, %v907
  %v909 = vpop.f32.mrf.mxu0
  %v910 = vadd.f32 %v161, %v909
  %911 = vmatmul.bf16.gmra.mxu0 %v626
  %v912 = vpop.f32.mrf.mxu0
  %v913 = vadd.f32 %v161, %v912
  %v914 = vpop.f32.mrf.mxu0
  %v915 = vadd.f32 %v161, %v914
  %916 = vmatmul.bf16.gmra.mxu0 %v629
  %v917 = vpop.f32.mrf.mxu0
  %v918 = vadd.f32 %v161, %v917
  %v919 = vpop.f32.mrf.mxu0
  %v920 = vadd.f32 %v161, %v919
  %921 = vmatmul.bf16.gmra.mxu0 %v632
  %v922 = vpop.f32.mrf.mxu0
  %v923 = vadd.f32 %v161, %v922
  %v924 = vpop.f32.mrf.mxu0
  %v925 = vadd.f32 %v161, %v924
  %926 = vmatmul.bf16.gmra.mxu0 %v635
  %v927 = vpop.f32.mrf.mxu0
  %v928 = vadd.f32 %v161, %v927
  %v929 = vpop.f32.mrf.mxu0
  %v930 = vadd.f32 %v161, %v929
  %931 = vmatmul.bf16.gmra.mxu0 %v638
  %v932 = vpop.f32.mrf.mxu0
  %v933 = vadd.f32 %v161, %v932
  %v934 = vpop.f32.mrf.mxu0
  %v935 = vadd.f32 %v161, %v934
  %936 = vmatmul.bf16.gmra.mxu0 %v641
  %v937 = vpop.f32.mrf.mxu0
  %v938 = vadd.f32 %v161, %v937
  %v939 = vpop.f32.mrf.mxu0
  %v940 = vadd.f32 %v161, %v939
  %941 = vmatmul.bf16.gmra.mxu0 %v644
  %v942 = vpop.f32.mrf.mxu0
  %v943 = vadd.f32 %v161, %v942
  %v944 = vpop.f32.mrf.mxu0
  %v945 = vadd.f32 %v161, %v944
  %946 = vmatmul.bf16.gmra.mxu0 %v647
  %v947 = vpop.f32.mrf.mxu0
  %v948 = vadd.f32 %v161, %v947
  %v949 = vpop.f32.mrf.mxu0
  %v950 = vadd.f32 %v161, %v949
  %951 = vmatmul.bf16.gmra.mxu0 %v650
  %v952 = vpop.f32.mrf.mxu0
  %v953 = vadd.f32 %v161, %v952
  %v954 = vpop.f32.mrf.mxu0
  %v955 = vadd.f32 %v161, %v954
  %956 = vmatmul.bf16.gmra.mxu0 %v653
  %v957 = vpop.f32.mrf.mxu0
  %v958 = vadd.f32 %v161, %v957
  %v959 = vpop.f32.mrf.mxu0
  %v960 = vadd.f32 %v161, %v959
  %961 = vmatmul.bf16.gmra.mxu0 %v656
  %v962 = vpop.f32.mrf.mxu0
  %v963 = vadd.f32 %v161, %v962
  %v964 = vpop.f32.mrf.mxu0
  %v965 = vadd.f32 %v161, %v964
  %966 = vmatmul.bf16.gmra.mxu0 %v659
  %v967 = vpop.f32.mrf.mxu0
  %v968 = vadd.f32 %v161, %v967
  %v969 = vpop.f32.mrf.mxu0
  %v970 = vadd.f32 %v161, %v969
  %971 = vmatmul.bf16.gmra.mxu0 %v662
  %v972 = vpop.f32.mrf.mxu0
  %v973 = vadd.f32 %v161, %v972
  %v974 = vpop.f32.mrf.mxu0
  %v975 = vadd.f32 %v161, %v974
  %976 = vmatmul.bf16.gmra.mxu0 %v665
  %v977 = vpop.f32.mrf.mxu0
  %v978 = vadd.f32 %v161, %v977
  %v979 = vpop.f32.mrf.mxu0
  %v980 = vadd.f32 %v161, %v979
  %981 = vmatmul.bf16.gmra.mxu0 %v668
  %v982 = vpop.f32.mrf.mxu0
  %v983 = vadd.f32 %v161, %v982
  %v984 = vpop.f32.mrf.mxu0
  %v985 = vadd.f32 %v161, %v984
  %986 = vmatmul.bf16.gmra.mxu0 %v671
  %v987 = vpop.f32.mrf.mxu0
  %v988 = vadd.f32 %v161, %v987
  %v989 = vpop.f32.mrf.mxu0
  %v990 = vadd.f32 %v161, %v989
  %991 = vmatmul.bf16.gmra.mxu0 %v674
  %v992 = vpop.f32.mrf.mxu0
  %v993 = vadd.f32 %v161, %v992
  %v994 = vpop.f32.mrf.mxu0
  %v995 = vadd.f32 %v161, %v994
  %996 = vmatmul.bf16.gmra.mxu0 %v677
  %v997 = vpop.f32.mrf.mxu0
  %v998 = vadd.f32 %v161, %v997
  %v999 = vpop.f32.mrf.mxu0
  %v1000 = vadd.f32 %v161, %v999
  %1001 = vmatmul.bf16.gmra.mxu0 %v680
  %v1002 = vpop.f32.mrf.mxu0
  %v1003 = vadd.f32 %v161, %v1002
  %v1004 = vpop.f32.mrf.mxu0
  %v1005 = vadd.f32 %v161, %v1004
  %1006 = vmatmul.bf16.gmra.mxu0 %v683
  %v1007 = vpop.f32.mrf.mxu0
  %v1008 = vadd.f32 %v161, %v1007
  %v1009 = vpop.f32.mrf.mxu0
  %v1010 = vadd.f32 %v161, %v1009
  %1011 = vmatmul.bf16.gmra.mxu0 %v686
  %v1012 = vpop.f32.mrf.mxu0
  %v1013 = vadd.f32 %v161, %v1012
  %v1014 = vpop.f32.mrf.mxu0
  %v1015 = vadd.f32 %v161, %v1014
  %1016 = vdwg.mxu0
  %v1017 = vmax.f32 %v698, 0.0
  %v1018 = vmax.f32 %v700, 0.0
  %v1019 = vmax.f32 %v703, 0.0
  %v1020 = vmax.f32 %v705, 0.0
  %v1021 = vmax.f32 %v708, 0.0
  %v1022 = vmax.f32 %v710, 0.0
  %v1023 = vmax.f32 %v713, 0.0
  %v1024 = vmax.f32 %v715, 0.0
  %v1025 = vmax.f32 %v718, 0.0
  %v1026 = vmax.f32 %v720, 0.0
  %v1027 = vmax.f32 %v723, 0.0
  %v1028 = vmax.f32 %v725, 0.0
  %v1029 = vmax.f32 %v728, 0.0
  %v1030 = vmax.f32 %v730, 0.0
  %v1031 = vmax.f32 %v733, 0.0
  %v1032 = vmax.f32 %v735, 0.0
  %v1033 = vmax.f32 %v738, 0.0
  %v1034 = vmax.f32 %v740, 0.0
  %v1035 = vmax.f32 %v743, 0.0
  %v1036 = vmax.f32 %v745, 0.0
  %v1037 = vmax.f32 %v748, 0.0
  %v1038 = vmax.f32 %v750, 0.0
  %v1039 = vmax.f32 %v753, 0.0
  %v1040 = vmax.f32 %v755, 0.0
  %v1041 = vmax.f32 %v758, 0.0
  %v1042 = vmax.f32 %v760, 0.0
  %v1043 = vmax.f32 %v763, 0.0
  %v1044 = vmax.f32 %v765, 0.0
  %v1045 = vmax.f32 %v768, 0.0
  %v1046 = vmax.f32 %v770, 0.0
  %v1047 = vmax.f32 %v773, 0.0
  %v1048 = vmax.f32 %v775, 0.0
  %v1049 = vmax.f32 %v778, 0.0
  %v1050 = vmax.f32 %v780, 0.0
  %v1051 = vmax.f32 %v783, 0.0
  %v1052 = vmax.f32 %v785, 0.0
  %v1053 = vmax.f32 %v788, 0.0
  %v1054 = vmax.f32 %v790, 0.0
  %v1055 = vmax.f32 %v793, 0.0
  %v1056 = vmax.f32 %v795, 0.0
  %v1057 = vmax.f32 %v798, 0.0
  %v1058 = vmax.f32 %v800, 0.0
  %v1059 = vmax.f32 %v803, 0.0
  %v1060 = vmax.f32 %v805, 0.0
  %v1061 = vmax.f32 %v808, 0.0
  %v1062 = vmax.f32 %v810, 0.0
  %v1063 = vmax.f32 %v813, 0.0
  %v1064 = vmax.f32 %v815, 0.0
  %v1065 = vmax.f32 %v818, 0.0
  %v1066 = vmax.f32 %v820, 0.0
  %v1067 = vmax.f32 %v823, 0.0
  %v1068 = vmax.f32 %v825, 0.0
  %v1069 = vmax.f32 %v828, 0.0
  %v1070 = vmax.f32 %v830, 0.0
  %v1071 = vmax.f32 %v833, 0.0
  %v1072 = vmax.f32 %v835, 0.0
  %v1073 = vmax.f32 %v838, 0.0
  %v1074 = vmax.f32 %v840, 0.0
  %v1075 = vmax.f32 %v843, 0.0
  %v1076 = vmax.f32 %v845, 0.0
  %v1077 = vmax.f32 %v848, 0.0
  %v1078 = vmax.f32 %v850, 0.0
  %v1079 = vmax.f32 %v853, 0.0
  %v1080 = vmax.f32 %v855, 0.0
  %v1081 = vmax.f32 %v858, 0.0
  %v1082 = vmax.f32 %v860, 0.0
  %v1083 = vmax.f32 %v863, 0.0
  %v1084 = vmax.f32 %v865, 0.0
  %v1085 = vmax.f32 %v868, 0.0
  %v1086 = vmax.f32 %v870, 0.0
  %v1087 = vmax.f32 %v873, 0.0
  %v1088 = vmax.f32 %v875, 0.0
  %v1089 = vmax.f32 %v878, 0.0
  %v1090 = vmax.f32 %v880, 0.0
  %v1091 = vmax.f32 %v883, 0.0
  %v1092 = vmax.f32 %v885, 0.0
  %v1093 = vmax.f32 %v888, 0.0
  %v1094 = vmax.f32 %v890, 0.0
  %v1095 = vmax.f32 %v893, 0.0
  %v1096 = vmax.f32 %v895, 0.0
  %v1097 = vmax.f32 %v898, 0.0
  %v1098 = vmax.f32 %v900, 0.0
  %v1099 = vmax.f32 %v903, 0.0
  %v1100 = vmax.f32 %v905, 0.0
  %v1101 = vmax.f32 %v908, 0.0
  %v1102 = vmax.f32 %v910, 0.0
  %v1103 = vmax.f32 %v913, 0.0
  %v1104 = vmax.f32 %v915, 0.0
  %v1105 = vmax.f32 %v918, 0.0
  %v1106 = vmax.f32 %v920, 0.0
  %v1107 = vmax.f32 %v923, 0.0
  %v1108 = vmax.f32 %v925, 0.0
  %v1109 = vmax.f32 %v928, 0.0
  %v1110 = vmax.f32 %v930, 0.0
  %v1111 = vmax.f32 %v933, 0.0
  %v1112 = vmax.f32 %v935, 0.0
  %v1113 = vmax.f32 %v938, 0.0
  %v1114 = vmax.f32 %v940, 0.0
  %v1115 = vmax.f32 %v943, 0.0
  %v1116 = vmax.f32 %v945, 0.0
  %v1117 = vmax.f32 %v948, 0.0
  %v1118 = vmax.f32 %v950, 0.0
  %v1119 = vmax.f32 %v953, 0.0
  %v1120 = vmax.f32 %v955, 0.0
  %v1121 = vmax.f32 %v958, 0.0
  %v1122 = vmax.f32 %v960, 0.0
  %v1123 = vmax.f32 %v963, 0.0
  %v1124 = vmax.f32 %v965, 0.0
  %v1125 = vmax.f32 %v968, 0.0
  %v1126 = vmax.f32 %v970, 0.0
  %v1127 = vmax.f32 %v973, 0.0
  %v1128 = vmax.f32 %v975, 0.0
  %v1129 = vmax.f32 %v978, 0.0
  %v1130 = vmax.f32 %v980, 0.0
  %v1131 = vmax.f32 %v983, 0.0
  %v1132 = vmax.f32 %v985, 0.0
  %v1133 = vmax.f32 %v988, 0.0
  %v1134 = vmax.f32 %v990, 0.0
  %v1135 = vmax.f32 %v993, 0.0
  %v1136 = vmax.f32 %v995, 0.0
  %v1137 = vmax.f32 %v998, 0.0
  %v1138 = vmax.f32 %v1000, 0.0
  %v1139 = vmax.f32 %v1003, 0.0
  %v1140 = vmax.f32 %v1005, 0.0
  %v1141 = vmax.f32 %v1008, 0.0
  %v1142 = vmax.f32 %v1010, 0.0
  %v1143 = vmax.f32 %v1013, 0.0
  %v1144 = vmax.f32 %v1015, 0.0
  %v1145 = vld [vmem:[%s1] sm:$0xf]
  %v1146 = vld [vmem:[%s1 + $0x4] sm:$0xf]
  %v1147 = vld [vmem:[%s1 + $0x8] sm:$0xf]
  %v1148 = vld [vmem:[%s1 + $0xc] sm:$0xf]
  %v1149 = vld [vmem:[%s1 + $0x10] sm:$0xf]
  %v1150 = vld [vmem:[%s1 + $0x14] sm:$0xf]
  %v1151 = vld [vmem:[%s1 + $0x18] sm:$0xf]
  %v1152 = vld [vmem:[%s1 + $0x1c] sm:$0xf]
  %v1153 = vld [vmem:[%s1 + $0x20] sm:$0xf]
  %v1154 = vld [vmem:[%s1 + $0x24] sm:$0xf]
  %v1155 = vld [vmem:[%s1 + $0x28] sm:$0xf]
  %v1156 = vld [vmem:[%s1 + $0x2c] sm:$0xf]
  %v1157 = vld [vmem:[%s1 + $0x30] sm:$0xf]
  %v1158 = vld [vmem:[%s1 + $0x34] sm:$0xf]
  %v1159 = vld [vmem:[%s1 + $0x38] sm:$0xf]
  %v1160 = vld [vmem:[%s1 + $0x3c] sm:$0xf]
  %v1161 = vld [vmem:[%s1 + $0x40] sm:$0xf]
  %v1162 = vld [vmem:[%s1 + $0x44] sm:$0xf]
  %v1163 = vld [vmem:[%s1 + $0x48] sm:$0xf]
  %v1164 = vld [vmem:[%s1 + $0x4c] sm:$0xf]
  %v1165 = vld [vmem:[%s1 + $0x50] sm:$0xf]
  %v1166 = vld [vmem:[%s1 + $0x54] sm:$0xf]
  %v1167 = vld [vmem:[%s1 + $0x58] sm:$0xf]
  %v1168 = vld [vmem:[%s1 + $0x5c] sm:$0xf]
  %v1169 = vld [vmem:[%s1 + $0x60] sm:$0xf]
  %v1170 = vld [vmem:[%s1 + $0x64] sm:$0xf]
  %v1171 = vld [vmem:[%s1 + $0x68] sm:$0xf]
  %v1172 = vld [vmem:[%s1 + $0x6c] sm:$0xf]
  %v1173 = vld [vmem:[%s1 + $0x70] sm:$0xf]
  %v1174 = vld [vmem:[%s1 + $0x74] sm:$0xf]
  %v1175 = vld [vmem:[%s1 + $0x78] sm:$0xf]
  %v1176 = vld [vmem:[%s1 + $0x7c] sm:$0xf]
  %v1177 = vld [vmem:[%s1 + $0x80] sm:$0xf]
  %v1178 = vld [vmem:[%s1 + $0x84] sm:$0xf]
  %v1179 = vld [vmem:[%s1 + $0x88] sm:$0xf]
  %v1180 = vld [vmem:[%s1 + $0x8c] sm:$0xf]
  %v1181 = vld [vmem:[%s1 + $0x90] sm:$0xf]
  %v1182 = vld [vmem:[%s1 + $0x94] sm:$0xf]
  %v1183 = vld [vmem:[%s1 + $0x98] sm:$0xf]
  %v1184 = vld [vmem:[%s1 + $0x9c] sm:$0xf]
  %v1185 = vld [vmem:[%s1 + $0xa0] sm:$0xf]
  %v1186 = vld [vmem:[%s1 + $0xa4] sm:$0xf]
  %v1187 = vld [vmem:[%s1 + $0xa8] sm:$0xf]
  %v1188 = vld [vmem:[%s1 + $0xac] sm:$0xf]
  %v1189 = vld [vmem:[%s1 + $0xb0] sm:$0xf]
  %v1190 = vld [vmem:[%s1 + $0xb4] sm:$0xf]
  %v1191 = vld [vmem:[%s1 + $0xb8] sm:$0xf]
  %v1192 = vld [vmem:[%s1 + $0xbc] sm:$0xf]
  %v1193 = vld [vmem:[%s1 + $0xc0] sm:$0xf]
  %v1194 = vld [vmem:[%s1 + $0xc4] sm:$0xf]
  %v1195 = vld [vmem:[%s1 + $0xc8] sm:$0xf]
  %v1196 = vld [vmem:[%s1 + $0xcc] sm:$0xf]
  %v1197 = vld [vmem:[%s1 + $0xd0] sm:$0xf]
  %v1198 = vld [vmem:[%s1 + $0xd4] sm:$0xf]
  %v1199 = vld [vmem:[%s1 + $0xd8] sm:$0xf]
  %v1200 = vld [vmem:[%s1 + $0xdc] sm:$0xf]
  %v1201 = vld [vmem:[%s1 + $0xe0] sm:$0xf]
  %v1202 = vld [vmem:[%s1 + $0xe4] sm:$0xf]
  %v1203 = vld [vmem:[%s1 + $0xe8] sm:$0xf]
  %v1204 = vld [vmem:[%s1 + $0xec] sm:$0xf]
  %v1205 = vld [vmem:[%s1 + $0xf0] sm:$0xf]
  %v1206 = vld [vmem:[%s1 + $0xf4] sm:$0xf]
  %v1207 = vld [vmem:[%s1 + $0xf8] sm:$0xf]
  %v1208 = vld [vmem:[%s1 + $0xfc] sm:$0xf]
  %v1209 = vld [vmem:[%s1 + $0x100] sm:$0xf]
  %v1210 = vld [vmem:[%s1 + $0x104] sm:$0xf]
  %v1211 = vld [vmem:[%s1 + $0x108] sm:$0xf]
  %v1212 = vld [vmem:[%s1 + $0x10c] sm:$0xf]
  %v1213 = vld [vmem:[%s1 + $0x110] sm:$0xf]
  %v1214 = vld [vmem:[%s1 + $0x114] sm:$0xf]
  %v1215 = vld [vmem:[%s1 + $0x118] sm:$0xf]
  %v1216 = vld [vmem:[%s1 + $0x11c] sm:$0xf]
  %v1217 = vld [vmem:[%s1 + $0x120] sm:$0xf]
  %v1218 = vld [vmem:[%s1 + $0x124] sm:$0xf]
  %v1219 = vld [vmem:[%s1 + $0x128] sm:$0xf]
  %v1220 = vld [vmem:[%s1 + $0x12c] sm:$0xf]
  %v1221 = vld [vmem:[%s1 + $0x130] sm:$0xf]
  %v1222 = vld [vmem:[%s1 + $0x134] sm:$0xf]
  %v1223 = vld [vmem:[%s1 + $0x138] sm:$0xf]
  %v1224 = vld [vmem:[%s1 + $0x13c] sm:$0xf]
  %v1225 = vld [vmem:[%s1 + $0x140] sm:$0xf]
  %v1226 = vld [vmem:[%s1 + $0x144] sm:$0xf]
  %v1227 = vld [vmem:[%s1 + $0x148] sm:$0xf]
  %v1228 = vld [vmem:[%s1 + $0x14c] sm:$0xf]
  %v1229 = vld [vmem:[%s1 + $0x150] sm:$0xf]
  %v1230 = vld [vmem:[%s1 + $0x154] sm:$0xf]
  %v1231 = vld [vmem:[%s1 + $0x158] sm:$0xf]
  %v1232 = vld [vmem:[%s1 + $0x15c] sm:$0xf]
  %v1233 = vld [vmem:[%s1 + $0x160] sm:$0xf]
  %v1234 = vld [vmem:[%s1 + $0x164] sm:$0xf]
  %v1235 = vld [vmem:[%s1 + $0x168] sm:$0xf]
  %v1236 = vld [vmem:[%s1 + $0x16c] sm:$0xf]
  %v1237 = vld [vmem:[%s1 + $0x170] sm:$0xf]
  %v1238 = vld [vmem:[%s1 + $0x174] sm:$0xf]
  %v1239 = vld [vmem:[%s1 + $0x178] sm:$0xf]
  %v1240 = vld [vmem:[%s1 + $0x17c] sm:$0xf]
  %v1241 = vld [vmem:[%s1 + $0x180] sm:$0xf]
  %v1242 = vld [vmem:[%s1 + $0x184] sm:$0xf]
  %v1243 = vld [vmem:[%s1 + $0x188] sm:$0xf]
  %v1244 = vld [vmem:[%s1 + $0x18c] sm:$0xf]
  %v1245 = vld [vmem:[%s1 + $0x190] sm:$0xf]
  %v1246 = vld [vmem:[%s1 + $0x194] sm:$0xf]
  %v1247 = vld [vmem:[%s1 + $0x198] sm:$0xf]
  %v1248 = vld [vmem:[%s1 + $0x19c] sm:$0xf]
  %v1249 = vld [vmem:[%s1 + $0x1a0] sm:$0xf]
  %v1250 = vld [vmem:[%s1 + $0x1a4] sm:$0xf]
  %v1251 = vld [vmem:[%s1 + $0x1a8] sm:$0xf]
  %v1252 = vld [vmem:[%s1 + $0x1ac] sm:$0xf]
  %v1253 = vld [vmem:[%s1 + $0x1b0] sm:$0xf]
  %v1254 = vld [vmem:[%s1 + $0x1b4] sm:$0xf]
  %v1255 = vld [vmem:[%s1 + $0x1b8] sm:$0xf]
  %v1256 = vld [vmem:[%s1 + $0x1bc] sm:$0xf]
  %v1257 = vld [vmem:[%s1 + $0x1c0] sm:$0xf]
  %v1258 = vld [vmem:[%s1 + $0x1c4] sm:$0xf]
  %v1259 = vld [vmem:[%s1 + $0x1c8] sm:$0xf]
  %v1260 = vld [vmem:[%s1 + $0x1cc] sm:$0xf]
  %v1261 = vld [vmem:[%s1 + $0x1d0] sm:$0xf]
  %v1262 = vld [vmem:[%s1 + $0x1d4] sm:$0xf]
  %v1263 = vld [vmem:[%s1 + $0x1d8] sm:$0xf]
  %v1264 = vld [vmem:[%s1 + $0x1dc] sm:$0xf]
  %v1265 = vld [vmem:[%s1 + $0x1e0] sm:$0xf]
  %v1266 = vld [vmem:[%s1 + $0x1e4] sm:$0xf]
  %v1267 = vld [vmem:[%s1 + $0x1e8] sm:$0xf]
  %v1268 = vld [vmem:[%s1 + $0x1ec] sm:$0xf]
  %v1269 = vld [vmem:[%s1 + $0x1f0] sm:$0xf]
  %v1270 = vld [vmem:[%s1 + $0x1f4] sm:$0xf]
  %v1271 = vld [vmem:[%s1 + $0x1f8] sm:$0xf]
  %v1272 = vld [vmem:[%s1 + $0x1fc] sm:$0xf]
  %v1401 = vunpack.c.l.b16 %v1145
  %v1402 = vunpack.c.l.b16 %v1146
  %v1403 = vunpack.c.l.b16 %v1147
  %v1404 = vunpack.c.l.b16 %v1148
  %v1405 = vunpack.c.l.b16 %v1149
  %v1406 = vunpack.c.l.b16 %v1150
  %v1407 = vunpack.c.l.b16 %v1151
  %v1408 = vunpack.c.l.b16 %v1152
  %v1409 = vunpack.c.l.b16 %v1153
  %v1410 = vunpack.c.l.b16 %v1154
  %v1411 = vunpack.c.l.b16 %v1155
  %v1412 = vunpack.c.l.b16 %v1156
  %v1413 = vunpack.c.l.b16 %v1157
  %v1414 = vunpack.c.l.b16 %v1158
  %v1415 = vunpack.c.l.b16 %v1159
  %v1416 = vunpack.c.l.b16 %v1160
  %v1417 = vunpack.c.l.b16 %v1161
  %v1418 = vunpack.c.l.b16 %v1162
  %v1419 = vunpack.c.l.b16 %v1163
  %v1420 = vunpack.c.l.b16 %v1164
  %v1421 = vunpack.c.l.b16 %v1165
  %v1422 = vunpack.c.l.b16 %v1166
  %v1423 = vunpack.c.l.b16 %v1167
  %v1424 = vunpack.c.l.b16 %v1168
  %v1425 = vunpack.c.l.b16 %v1169
  %v1426 = vunpack.c.l.b16 %v1170
  %v1427 = vunpack.c.l.b16 %v1171
  %v1428 = vunpack.c.l.b16 %v1172
  %v1429 = vunpack.c.l.b16 %v1173
  %v1430 = vunpack.c.l.b16 %v1174
  %v1431 = vunpack.c.l.b16 %v1175
  %v1432 = vunpack.c.l.b16 %v1176
  %v1433 = vunpack.c.l.b16 %v1177
  %v1434 = vunpack.c.l.b16 %v1178
  %v1435 = vunpack.c.l.b16 %v1179
  %v1436 = vunpack.c.l.b16 %v1180
  %v1437 = vunpack.c.l.b16 %v1181
  %v1438 = vunpack.c.l.b16 %v1182
  %v1439 = vunpack.c.l.b16 %v1183
  %v1440 = vunpack.c.l.b16 %v1184
  %v1441 = vunpack.c.l.b16 %v1185
  %v1442 = vunpack.c.l.b16 %v1186
  %v1443 = vunpack.c.l.b16 %v1187
  %v1444 = vunpack.c.l.b16 %v1188
  %v1445 = vunpack.c.l.b16 %v1189
  %v1446 = vunpack.c.l.b16 %v1190
  %v1447 = vunpack.c.l.b16 %v1191
  %v1448 = vunpack.c.l.b16 %v1192
  %v1449 = vunpack.c.l.b16 %v1193
  %v1450 = vunpack.c.l.b16 %v1194
  %v1451 = vunpack.c.l.b16 %v1195
  %v1452 = vunpack.c.l.b16 %v1196
  %v1453 = vunpack.c.l.b16 %v1197
  %v1454 = vunpack.c.l.b16 %v1198
  %v1455 = vunpack.c.l.b16 %v1199
  %v1456 = vunpack.c.l.b16 %v1200
  %v1457 = vunpack.c.l.b16 %v1201
  %v1458 = vunpack.c.l.b16 %v1202
  %v1459 = vunpack.c.l.b16 %v1203
  %v1460 = vunpack.c.l.b16 %v1204
  %v1461 = vunpack.c.l.b16 %v1205
  %v1462 = vunpack.c.l.b16 %v1206
  %v1463 = vunpack.c.l.b16 %v1207
  %v1464 = vunpack.c.l.b16 %v1208
  %v1465 = vunpack.c.l.b16 %v1209
  %v1466 = vunpack.c.l.b16 %v1210
  %v1467 = vunpack.c.l.b16 %v1211
  %v1468 = vunpack.c.l.b16 %v1212
  %v1469 = vunpack.c.l.b16 %v1213
  %v1470 = vunpack.c.l.b16 %v1214
  %v1471 = vunpack.c.l.b16 %v1215
  %v1472 = vunpack.c.l.b16 %v1216
  %v1473 = vunpack.c.l.b16 %v1217
  %v1474 = vunpack.c.l.b16 %v1218
  %v1475 = vunpack.c.l.b16 %v1219
  %v1476 = vunpack.c.l.b16 %v1220
  %v1477 = vunpack.c.l.b16 %v1221
  %v1478 = vunpack.c.l.b16 %v1222
  %v1479 = vunpack.c.l.b16 %v1223
  %v1480 = vunpack.c.l.b16 %v1224
  %v1481 = vunpack.c.l.b16 %v1225
  %v1482 = vunpack.c.l.b16 %v1226
  %v1483 = vunpack.c.l.b16 %v1227
  %v1484 = vunpack.c.l.b16 %v1228
  %v1485 = vunpack.c.l.b16 %v1229
  %v1486 = vunpack.c.l.b16 %v1230
  %v1487 = vunpack.c.l.b16 %v1231
  %v1488 = vunpack.c.l.b16 %v1232
  %v1489 = vunpack.c.l.b16 %v1233
  %v1490 = vunpack.c.l.b16 %v1234
  %v1491 = vunpack.c.l.b16 %v1235
  %v1492 = vunpack.c.l.b16 %v1236
  %v1493 = vunpack.c.l.b16 %v1237
  %v1494 = vunpack.c.l.b16 %v1238
  %v1495 = vunpack.c.l.b16 %v1239
  %v1496 = vunpack.c.l.b16 %v1240
  %v1497 = vunpack.c.l.b16 %v1241
  %v1498 = vunpack.c.l.b16 %v1242
  %v1499 = vunpack.c.l.b16 %v1243
  %v1500 = vunpack.c.l.b16 %v1244
  %v1501 = vunpack.c.l.b16 %v1245
  %v1502 = vunpack.c.l.b16 %v1246
  %v1503 = vunpack.c.l.b16 %v1247
  %v1504 = vunpack.c.l.b16 %v1248
  %v1505 = vunpack.c.l.b16 %v1249
  %v1506 = vunpack.c.l.b16 %v1250
  %v1507 = vunpack.c.l.b16 %v1251
  %v1508 = vunpack.c.l.b16 %v1252
  %v1509 = vunpack.c.l.b16 %v1253
  %v1510 = vunpack.c.l.b16 %v1254
  %v1511 = vunpack.c.l.b16 %v1255
  %v1512 = vunpack.c.l.b16 %v1256
  %v1513 = vunpack.c.l.b16 %v1257
  %v1514 = vunpack.c.l.b16 %v1258
  %v1515 = vunpack.c.l.b16 %v1259
  %v1516 = vunpack.c.l.b16 %v1260
  %v1517 = vunpack.c.l.b16 %v1261
  %v1518 = vunpack.c.l.b16 %v1262
  %v1519 = vunpack.c.l.b16 %v1263
  %v1520 = vunpack.c.l.b16 %v1264
  %v1521 = vunpack.c.l.b16 %v1265
  %v1522 = vunpack.c.l.b16 %v1266
  %v1523 = vunpack.c.l.b16 %v1267
  %v1524 = vunpack.c.l.b16 %v1268
  %v1525 = vunpack.c.l.b16 %v1269
  %v1526 = vunpack.c.l.b16 %v1270
  %v1527 = vunpack.c.l.b16 %v1271
  %v1528 = vunpack.c.l.b16 %v1272
  %v1529 = vpack.c.b16 %v1402, %v1401
  %v1530 = vpack.c.b16 %v1404, %v1403
  %v1531 = vpack.c.b16 %v1406, %v1405
  %v1532 = vpack.c.b16 %v1408, %v1407
  %v1533 = vpack.c.b16 %v1410, %v1409
  %v1534 = vpack.c.b16 %v1412, %v1411
  %v1535 = vpack.c.b16 %v1414, %v1413
  %v1536 = vpack.c.b16 %v1416, %v1415
  %v1537 = vpack.c.b16 %v1418, %v1417
  %v1538 = vpack.c.b16 %v1420, %v1419
  %v1539 = vpack.c.b16 %v1422, %v1421
  %v1540 = vpack.c.b16 %v1424, %v1423
  %v1541 = vpack.c.b16 %v1426, %v1425
  %v1542 = vpack.c.b16 %v1428, %v1427
  %v1543 = vpack.c.b16 %v1430, %v1429
  %v1544 = vpack.c.b16 %v1432, %v1431
  %v1545 = vpack.c.b16 %v1434, %v1433
  %v1546 = vpack.c.b16 %v1436, %v1435
  %v1547 = vpack.c.b16 %v1438, %v1437
  %v1548 = vpack.c.b16 %v1440, %v1439
  %v1549 = vpack.c.b16 %v1442, %v1441
  %v1550 = vpack.c.b16 %v1444, %v1443
  %v1551 = vpack.c.b16 %v1446, %v1445
  %v1552 = vpack.c.b16 %v1448, %v1447
  %v1553 = vpack.c.b16 %v1450, %v1449
  %v1554 = vpack.c.b16 %v1452, %v1451
  %v1555 = vpack.c.b16 %v1454, %v1453
  %v1556 = vpack.c.b16 %v1456, %v1455
  %v1557 = vpack.c.b16 %v1458, %v1457
  %v1558 = vpack.c.b16 %v1460, %v1459
  %v1559 = vpack.c.b16 %v1462, %v1461
  %v1560 = vpack.c.b16 %v1464, %v1463
  %v1561 = vpack.c.b16 %v1466, %v1465
  %v1562 = vpack.c.b16 %v1468, %v1467
  %v1563 = vpack.c.b16 %v1470, %v1469
  %v1564 = vpack.c.b16 %v1472, %v1471
  %v1565 = vpack.c.b16 %v1474, %v1473
  %v1566 = vpack.c.b16 %v1476, %v1475
  %v1567 = vpack.c.b16 %v1478, %v1477
  %v1568 = vpack.c.b16 %v1480, %v1479
  %v1569 = vpack.c.b16 %v1482, %v1481
  %v1570 = vpack.c.b16 %v1484, %v1483
  %v1571 = vpack.c.b16 %v1486, %v1485
  %v1572 = vpack.c.b16 %v1488, %v1487
  %v1573 = vpack.c.b16 %v1490, %v1489
  %v1574 = vpack.c.b16 %v1492, %v1491
  %v1575 = vpack.c.b16 %v1494, %v1493
  %v1576 = vpack.c.b16 %v1496, %v1495
  %v1577 = vpack.c.b16 %v1498, %v1497
  %v1578 = vpack.c.b16 %v1500, %v1499
  %v1579 = vpack.c.b16 %v1502, %v1501
  %v1580 = vpack.c.b16 %v1504, %v1503
  %v1581 = vpack.c.b16 %v1506, %v1505
  %v1582 = vpack.c.b16 %v1508, %v1507
  %v1583 = vpack.c.b16 %v1510, %v1509
  %v1584 = vpack.c.b16 %v1512, %v1511
  %v1585 = vpack.c.b16 %v1514, %v1513
  %v1586 = vpack.c.b16 %v1516, %v1515
  %v1587 = vpack.c.b16 %v1518, %v1517
  %v1588 = vpack.c.b16 %v1520, %v1519
  %v1589 = vpack.c.b16 %v1522, %v1521
  %v1590 = vpack.c.b16 %v1524, %v1523
  %v1591 = vpack.c.b16 %v1526, %v1525
  %v1592 = vpack.c.b16 %v1528, %v1527
  %v1594 = vsel %vm495, %v1529, 0
  %v1597 = vsel %vm495, %v1530, 0
  %v1600 = vsel %vm495, %v1531, 0
  %v1603 = vsel %vm495, %v1532, 0
  %v1606 = vsel %vm495, %v1533, 0
  %v1609 = vsel %vm495, %v1534, 0
  %v1612 = vsel %vm495, %v1535, 0
  %v1615 = vsel %vm495, %v1536, 0
  %v1618 = vsel %vm495, %v1537, 0
  %v1621 = vsel %vm495, %v1538, 0
  %v1624 = vsel %vm495, %v1539, 0
  %v1627 = vsel %vm495, %v1540, 0
  %v1630 = vsel %vm495, %v1541, 0
  %v1633 = vsel %vm495, %v1542, 0
  %v1636 = vsel %vm495, %v1543, 0
  %v1639 = vsel %vm495, %v1544, 0
  %v1642 = vsel %vm495, %v1545, 0
  %v1645 = vsel %vm495, %v1546, 0
  %v1648 = vsel %vm495, %v1547, 0
  %v1651 = vsel %vm495, %v1548, 0
  %v1654 = vsel %vm495, %v1549, 0
  %v1657 = vsel %vm495, %v1550, 0
  %v1660 = vsel %vm495, %v1551, 0
  %v1663 = vsel %vm495, %v1552, 0
  %v1666 = vsel %vm495, %v1553, 0
  %v1669 = vsel %vm495, %v1554, 0
  %v1672 = vsel %vm495, %v1555, 0
  %v1675 = vsel %vm495, %v1556, 0
  %v1678 = vsel %vm495, %v1557, 0
  %v1681 = vsel %vm495, %v1558, 0
  %v1684 = vsel %vm495, %v1559, 0
  %v1687 = vsel %vm495, %v1560, 0
  %v1690 = vsel %vm495, %v1561, 0
  %v1693 = vsel %vm495, %v1562, 0
  %v1696 = vsel %vm495, %v1563, 0
  %v1699 = vsel %vm495, %v1564, 0
  %v1702 = vsel %vm495, %v1565, 0
  %v1705 = vsel %vm495, %v1566, 0
  %v1708 = vsel %vm495, %v1567, 0
  %v1711 = vsel %vm495, %v1568, 0
  %v1714 = vsel %vm495, %v1569, 0
  %v1717 = vsel %vm495, %v1570, 0
  %v1720 = vsel %vm495, %v1571, 0
  %v1723 = vsel %vm495, %v1572, 0
  %v1726 = vsel %vm495, %v1573, 0
  %v1729 = vsel %vm495, %v1574, 0
  %v1732 = vsel %vm495, %v1575, 0
  %v1735 = vsel %vm495, %v1576, 0
  %v1738 = vsel %vm495, %v1577, 0
  %v1741 = vsel %vm495, %v1578, 0
  %v1744 = vsel %vm495, %v1579, 0
  %v1747 = vsel %vm495, %v1580, 0
  %v1750 = vsel %vm495, %v1581, 0
  %v1753 = vsel %vm495, %v1582, 0
  %v1756 = vsel %vm495, %v1583, 0
  %v1759 = vsel %vm495, %v1584, 0
  %v1762 = vsel %vm495, %v1585, 0
  %v1765 = vsel %vm495, %v1586, 0
  %v1768 = vsel %vm495, %v1587, 0
  %v1771 = vsel %vm495, %v1588, 0
  %v1774 = vsel %vm495, %v1589, 0
  %v1777 = vsel %vm495, %v1590, 0
  %v1780 = vsel %vm495, %v1591, 0
  %v1783 = vsel %vm495, %v1592, 0
  %1785 = vmatpush.bf16.msra.mxu0 0
  %1786 = vmatpush.bf16.msra.mxu0 0
  %1787 = vmatpush.bf16.msra.mxu0 0
  %1788 = vmatpush.bf16.msra.mxu0 0
  %1789 = vmatpush.bf16.msra.mxu0 0
  %1790 = vmatpush.bf16.msra.mxu0 0
  %1791 = vmatpush.bf16.msra.mxu0 %v492
  %1792 = vmatpush.bf16.msra.mxu0 %v491
  %1793 = vmatmul.bf16.gmra.mxu0 %v1594
  %v1794 = vpop.f32.mrf.mxu0
  %v1795 = vadd.f32 %v161, %v1794
  %v1796 = vpop.f32.mrf.mxu0
  %v1797 = vadd.f32 %v161, %v1796
  %1798 = vmatmul.bf16.gmra.mxu0 %v1597
  %v1799 = vpop.f32.mrf.mxu0
  %v1800 = vadd.f32 %v161, %v1799
  %v1801 = vpop.f32.mrf.mxu0
  %v1802 = vadd.f32 %v161, %v1801
  %1803 = vmatmul.bf16.gmra.mxu0 %v1600
  %v1804 = vpop.f32.mrf.mxu0
  %v1805 = vadd.f32 %v161, %v1804
  %v1806 = vpop.f32.mrf.mxu0
  %v1807 = vadd.f32 %v161, %v1806
  %1808 = vmatmul.bf16.gmra.mxu0 %v1603
  %v1809 = vpop.f32.mrf.mxu0
  %v1810 = vadd.f32 %v161, %v1809
  %v1811 = vpop.f32.mrf.mxu0
  %v1812 = vadd.f32 %v161, %v1811
  %1813 = vmatmul.bf16.gmra.mxu0 %v1606
  %v1814 = vpop.f32.mrf.mxu0
  %v1815 = vadd.f32 %v161, %v1814
  %v1816 = vpop.f32.mrf.mxu0
  %v1817 = vadd.f32 %v161, %v1816
  %1818 = vmatmul.bf16.gmra.mxu0 %v1609
  %v1819 = vpop.f32.mrf.mxu0
  %v1820 = vadd.f32 %v161, %v1819
  %v1821 = vpop.f32.mrf.mxu0
  %v1822 = vadd.f32 %v161, %v1821
  %1823 = vmatmul.bf16.gmra.mxu0 %v1612
  %v1824 = vpop.f32.mrf.mxu0
  %v1825 = vadd.f32 %v161, %v1824
  %v1826 = vpop.f32.mrf.mxu0
  %v1827 = vadd.f32 %v161, %v1826
  %1828 = vmatmul.bf16.gmra.mxu0 %v1615
  %v1829 = vpop.f32.mrf.mxu0
  %v1830 = vadd.f32 %v161, %v1829
  %v1831 = vpop.f32.mrf.mxu0
  %v1832 = vadd.f32 %v161, %v1831
  %1833 = vmatmul.bf16.gmra.mxu0 %v1618
  %v1834 = vpop.f32.mrf.mxu0
  %v1835 = vadd.f32 %v161, %v1834
  %v1836 = vpop.f32.mrf.mxu0
  %v1837 = vadd.f32 %v161, %v1836
  %1838 = vmatmul.bf16.gmra.mxu0 %v1621
  %v1839 = vpop.f32.mrf.mxu0
  %v1840 = vadd.f32 %v161, %v1839
  %v1841 = vpop.f32.mrf.mxu0
  %v1842 = vadd.f32 %v161, %v1841
  %1843 = vmatmul.bf16.gmra.mxu0 %v1624
  %v1844 = vpop.f32.mrf.mxu0
  %v1845 = vadd.f32 %v161, %v1844
  %v1846 = vpop.f32.mrf.mxu0
  %v1847 = vadd.f32 %v161, %v1846
  %1848 = vmatmul.bf16.gmra.mxu0 %v1627
  %v1849 = vpop.f32.mrf.mxu0
  %v1850 = vadd.f32 %v161, %v1849
  %v1851 = vpop.f32.mrf.mxu0
  %v1852 = vadd.f32 %v161, %v1851
  %1853 = vmatmul.bf16.gmra.mxu0 %v1630
  %v1854 = vpop.f32.mrf.mxu0
  %v1855 = vadd.f32 %v161, %v1854
  %v1856 = vpop.f32.mrf.mxu0
  %v1857 = vadd.f32 %v161, %v1856
  %1858 = vmatmul.bf16.gmra.mxu0 %v1633
  %v1859 = vpop.f32.mrf.mxu0
  %v1860 = vadd.f32 %v161, %v1859
  %v1861 = vpop.f32.mrf.mxu0
  %v1862 = vadd.f32 %v161, %v1861
  %1863 = vmatmul.bf16.gmra.mxu0 %v1636
  %v1864 = vpop.f32.mrf.mxu0
  %v1865 = vadd.f32 %v161, %v1864
  %v1866 = vpop.f32.mrf.mxu0
  %v1867 = vadd.f32 %v161, %v1866
  %1868 = vmatmul.bf16.gmra.mxu0 %v1639
  %v1869 = vpop.f32.mrf.mxu0
  %v1870 = vadd.f32 %v161, %v1869
  %v1871 = vpop.f32.mrf.mxu0
  %v1872 = vadd.f32 %v161, %v1871
  %1873 = vmatmul.bf16.gmra.mxu0 %v1642
  %v1874 = vpop.f32.mrf.mxu0
  %v1875 = vadd.f32 %v161, %v1874
  %v1876 = vpop.f32.mrf.mxu0
  %v1877 = vadd.f32 %v161, %v1876
  %1878 = vmatmul.bf16.gmra.mxu0 %v1645
  %v1879 = vpop.f32.mrf.mxu0
  %v1880 = vadd.f32 %v161, %v1879
  %v1881 = vpop.f32.mrf.mxu0
  %v1882 = vadd.f32 %v161, %v1881
  %1883 = vmatmul.bf16.gmra.mxu0 %v1648
  %v1884 = vpop.f32.mrf.mxu0
  %v1885 = vadd.f32 %v161, %v1884
  %v1886 = vpop.f32.mrf.mxu0
  %v1887 = vadd.f32 %v161, %v1886
  %1888 = vmatmul.bf16.gmra.mxu0 %v1651
  %v1889 = vpop.f32.mrf.mxu0
  %v1890 = vadd.f32 %v161, %v1889
  %v1891 = vpop.f32.mrf.mxu0
  %v1892 = vadd.f32 %v161, %v1891
  %1893 = vmatmul.bf16.gmra.mxu0 %v1654
  %v1894 = vpop.f32.mrf.mxu0
  %v1895 = vadd.f32 %v161, %v1894
  %v1896 = vpop.f32.mrf.mxu0
  %v1897 = vadd.f32 %v161, %v1896
  %1898 = vmatmul.bf16.gmra.mxu0 %v1657
  %v1899 = vpop.f32.mrf.mxu0
  %v1900 = vadd.f32 %v161, %v1899
  %v1901 = vpop.f32.mrf.mxu0
  %v1902 = vadd.f32 %v161, %v1901
  %1903 = vmatmul.bf16.gmra.mxu0 %v1660
  %v1904 = vpop.f32.mrf.mxu0
  %v1905 = vadd.f32 %v161, %v1904
  %v1906 = vpop.f32.mrf.mxu0
  %v1907 = vadd.f32 %v161, %v1906
  %1908 = vmatmul.bf16.gmra.mxu0 %v1663
  %v1909 = vpop.f32.mrf.mxu0
  %v1910 = vadd.f32 %v161, %v1909
  %v1911 = vpop.f32.mrf.mxu0
  %v1912 = vadd.f32 %v161, %v1911
  %1913 = vmatmul.bf16.gmra.mxu0 %v1666
  %v1914 = vpop.f32.mrf.mxu0
  %v1915 = vadd.f32 %v161, %v1914
  %v1916 = vpop.f32.mrf.mxu0
  %v1917 = vadd.f32 %v161, %v1916
  %1918 = vmatmul.bf16.gmra.mxu0 %v1669
  %v1919 = vpop.f32.mrf.mxu0
  %v1920 = vadd.f32 %v161, %v1919
  %v1921 = vpop.f32.mrf.mxu0
  %v1922 = vadd.f32 %v161, %v1921
  %1923 = vmatmul.bf16.gmra.mxu0 %v1672
  %v1924 = vpop.f32.mrf.mxu0
  %v1925 = vadd.f32 %v161, %v1924
  %v1926 = vpop.f32.mrf.mxu0
  %v1927 = vadd.f32 %v161, %v1926
  %1928 = vmatmul.bf16.gmra.mxu0 %v1675
  %v1929 = vpop.f32.mrf.mxu0
  %v1930 = vadd.f32 %v161, %v1929
  %v1931 = vpop.f32.mrf.mxu0
  %v1932 = vadd.f32 %v161, %v1931
  %1933 = vmatmul.bf16.gmra.mxu0 %v1678
  %v1934 = vpop.f32.mrf.mxu0
  %v1935 = vadd.f32 %v161, %v1934
  %v1936 = vpop.f32.mrf.mxu0
  %v1937 = vadd.f32 %v161, %v1936
  %1938 = vmatmul.bf16.gmra.mxu0 %v1681
  %v1939 = vpop.f32.mrf.mxu0
  %v1940 = vadd.f32 %v161, %v1939
  %v1941 = vpop.f32.mrf.mxu0
  %v1942 = vadd.f32 %v161, %v1941
  %1943 = vmatmul.bf16.gmra.mxu0 %v1684
  %v1944 = vpop.f32.mrf.mxu0
  %v1945 = vadd.f32 %v161, %v1944
  %v1946 = vpop.f32.mrf.mxu0
  %v1947 = vadd.f32 %v161, %v1946
  %1948 = vmatmul.bf16.gmra.mxu0 %v1687
  %v1949 = vpop.f32.mrf.mxu0
  %v1950 = vadd.f32 %v161, %v1949
  %v1951 = vpop.f32.mrf.mxu0
  %v1952 = vadd.f32 %v161, %v1951
  %1953 = vmatmul.bf16.gmra.mxu0 %v1690
  %v1954 = vpop.f32.mrf.mxu0
  %v1955 = vadd.f32 %v161, %v1954
  %v1956 = vpop.f32.mrf.mxu0
  %v1957 = vadd.f32 %v161, %v1956
  %1958 = vmatmul.bf16.gmra.mxu0 %v1693
  %v1959 = vpop.f32.mrf.mxu0
  %v1960 = vadd.f32 %v161, %v1959
  %v1961 = vpop.f32.mrf.mxu0
  %v1962 = vadd.f32 %v161, %v1961
  %1963 = vmatmul.bf16.gmra.mxu0 %v1696
  %v1964 = vpop.f32.mrf.mxu0
  %v1965 = vadd.f32 %v161, %v1964
  %v1966 = vpop.f32.mrf.mxu0
  %v1967 = vadd.f32 %v161, %v1966
  %1968 = vmatmul.bf16.gmra.mxu0 %v1699
  %v1969 = vpop.f32.mrf.mxu0
  %v1970 = vadd.f32 %v161, %v1969
  %v1971 = vpop.f32.mrf.mxu0
  %v1972 = vadd.f32 %v161, %v1971
  %1973 = vmatmul.bf16.gmra.mxu0 %v1702
  %v1974 = vpop.f32.mrf.mxu0
  %v1975 = vadd.f32 %v161, %v1974
  %v1976 = vpop.f32.mrf.mxu0
  %v1977 = vadd.f32 %v161, %v1976
  %1978 = vmatmul.bf16.gmra.mxu0 %v1705
  %v1979 = vpop.f32.mrf.mxu0
  %v1980 = vadd.f32 %v161, %v1979
  %v1981 = vpop.f32.mrf.mxu0
  %v1982 = vadd.f32 %v161, %v1981
  %1983 = vmatmul.bf16.gmra.mxu0 %v1708
  %v1984 = vpop.f32.mrf.mxu0
  %v1985 = vadd.f32 %v161, %v1984
  %v1986 = vpop.f32.mrf.mxu0
  %v1987 = vadd.f32 %v161, %v1986
  %1988 = vmatmul.bf16.gmra.mxu0 %v1711
  %v1989 = vpop.f32.mrf.mxu0
  %v1990 = vadd.f32 %v161, %v1989
  %v1991 = vpop.f32.mrf.mxu0
  %v1992 = vadd.f32 %v161, %v1991
  %1993 = vmatmul.bf16.gmra.mxu0 %v1714
  %v1994 = vpop.f32.mrf.mxu0
  %v1995 = vadd.f32 %v161, %v1994
  %v1996 = vpop.f32.mrf.mxu0
  %v1997 = vadd.f32 %v161, %v1996
  %1998 = vmatmul.bf16.gmra.mxu0 %v1717
  %v1999 = vpop.f32.mrf.mxu0
  %v2000 = vadd.f32 %v161, %v1999
  %v2001 = vpop.f32.mrf.mxu0
  %v2002 = vadd.f32 %v161, %v2001
  %2003 = vmatmul.bf16.gmra.mxu0 %v1720
  %v2004 = vpop.f32.mrf.mxu0
  %v2005 = vadd.f32 %v161, %v2004
  %v2006 = vpop.f32.mrf.mxu0
  %v2007 = vadd.f32 %v161, %v2006
  %2008 = vmatmul.bf16.gmra.mxu0 %v1723
  %v2009 = vpop.f32.mrf.mxu0
  %v2010 = vadd.f32 %v161, %v2009
  %v2011 = vpop.f32.mrf.mxu0
  %v2012 = vadd.f32 %v161, %v2011
  %2013 = vmatmul.bf16.gmra.mxu0 %v1726
  %v2014 = vpop.f32.mrf.mxu0
  %v2015 = vadd.f32 %v161, %v2014
  %v2016 = vpop.f32.mrf.mxu0
  %v2017 = vadd.f32 %v161, %v2016
  %2018 = vmatmul.bf16.gmra.mxu0 %v1729
  %v2019 = vpop.f32.mrf.mxu0
  %v2020 = vadd.f32 %v161, %v2019
  %v2021 = vpop.f32.mrf.mxu0
  %v2022 = vadd.f32 %v161, %v2021
  %2023 = vmatmul.bf16.gmra.mxu0 %v1732
  %v2024 = vpop.f32.mrf.mxu0
  %v2025 = vadd.f32 %v161, %v2024
  %v2026 = vpop.f32.mrf.mxu0
  %v2027 = vadd.f32 %v161, %v2026
  %2028 = vmatmul.bf16.gmra.mxu0 %v1735
  %v2029 = vpop.f32.mrf.mxu0
  %v2030 = vadd.f32 %v161, %v2029
  %v2031 = vpop.f32.mrf.mxu0
  %v2032 = vadd.f32 %v161, %v2031
  %2033 = vmatmul.bf16.gmra.mxu0 %v1738
  %v2034 = vpop.f32.mrf.mxu0
  %v2035 = vadd.f32 %v161, %v2034
  %v2036 = vpop.f32.mrf.mxu0
  %v2037 = vadd.f32 %v161, %v2036
  %2038 = vmatmul.bf16.gmra.mxu0 %v1741
  %v2039 = vpop.f32.mrf.mxu0
  %v2040 = vadd.f32 %v161, %v2039
  %v2041 = vpop.f32.mrf.mxu0
  %v2042 = vadd.f32 %v161, %v2041
  %2043 = vmatmul.bf16.gmra.mxu0 %v1744
  %v2044 = vpop.f32.mrf.mxu0
  %v2045 = vadd.f32 %v161, %v2044
  %v2046 = vpop.f32.mrf.mxu0
  %v2047 = vadd.f32 %v161, %v2046
  %2048 = vmatmul.bf16.gmra.mxu0 %v1747
  %v2049 = vpop.f32.mrf.mxu0
  %v2050 = vadd.f32 %v161, %v2049
  %v2051 = vpop.f32.mrf.mxu0
  %v2052 = vadd.f32 %v161, %v2051
  %2053 = vmatmul.bf16.gmra.mxu0 %v1750
  %v2054 = vpop.f32.mrf.mxu0
  %v2055 = vadd.f32 %v161, %v2054
  %v2056 = vpop.f32.mrf.mxu0
  %v2057 = vadd.f32 %v161, %v2056
  %2058 = vmatmul.bf16.gmra.mxu0 %v1753
  %v2059 = vpop.f32.mrf.mxu0
  %v2060 = vadd.f32 %v161, %v2059
  %v2061 = vpop.f32.mrf.mxu0
  %v2062 = vadd.f32 %v161, %v2061
  %2063 = vmatmul.bf16.gmra.mxu0 %v1756
  %v2064 = vpop.f32.mrf.mxu0
  %v2065 = vadd.f32 %v161, %v2064
  %v2066 = vpop.f32.mrf.mxu0
  %v2067 = vadd.f32 %v161, %v2066
  %2068 = vmatmul.bf16.gmra.mxu0 %v1759
  %v2069 = vpop.f32.mrf.mxu0
  %v2070 = vadd.f32 %v161, %v2069
  %v2071 = vpop.f32.mrf.mxu0
  %v2072 = vadd.f32 %v161, %v2071
  %2073 = vmatmul.bf16.gmra.mxu0 %v1762
  %v2074 = vpop.f32.mrf.mxu0
  %v2075 = vadd.f32 %v161, %v2074
  %v2076 = vpop.f32.mrf.mxu0
  %v2077 = vadd.f32 %v161, %v2076
  %2078 = vmatmul.bf16.gmra.mxu0 %v1765
  %v2079 = vpop.f32.mrf.mxu0
  %v2080 = vadd.f32 %v161, %v2079
  %v2081 = vpop.f32.mrf.mxu0
  %v2082 = vadd.f32 %v161, %v2081
  %2083 = vmatmul.bf16.gmra.mxu0 %v1768
  %v2084 = vpop.f32.mrf.mxu0
  %v2085 = vadd.f32 %v161, %v2084
  %v2086 = vpop.f32.mrf.mxu0
  %v2087 = vadd.f32 %v161, %v2086
  %2088 = vmatmul.bf16.gmra.mxu0 %v1771
  %v2089 = vpop.f32.mrf.mxu0
  %v2090 = vadd.f32 %v161, %v2089
  %v2091 = vpop.f32.mrf.mxu0
  %v2092 = vadd.f32 %v161, %v2091
  %2093 = vmatmul.bf16.gmra.mxu0 %v1774
  %v2094 = vpop.f32.mrf.mxu0
  %v2095 = vadd.f32 %v161, %v2094
  %v2096 = vpop.f32.mrf.mxu0
  %v2097 = vadd.f32 %v161, %v2096
  %2098 = vmatmul.bf16.gmra.mxu0 %v1777
  %v2099 = vpop.f32.mrf.mxu0
  %v2100 = vadd.f32 %v161, %v2099
  %v2101 = vpop.f32.mrf.mxu0
  %v2102 = vadd.f32 %v161, %v2101
  %2103 = vmatmul.bf16.gmra.mxu0 %v1780
  %v2104 = vpop.f32.mrf.mxu0
  %v2105 = vadd.f32 %v161, %v2104
  %v2106 = vpop.f32.mrf.mxu0
  %v2107 = vadd.f32 %v161, %v2106
  %2108 = vmatmul.bf16.gmra.mxu0 %v1783
  %v2109 = vpop.f32.mrf.mxu0
  %v2110 = vadd.f32 %v161, %v2109
  %v2111 = vpop.f32.mrf.mxu0
  %v2112 = vadd.f32 %v161, %v2111
  %2113 = vdwg.mxu0
  %v2114 = vmax.f32 %v1795, 0.0
  %v2115 = vmax.f32 %v1797, 0.0
  %v2116 = vmax.f32 %v1800, 0.0
  %v2117 = vmax.f32 %v1802, 0.0
  %v2118 = vmax.f32 %v1805, 0.0
  %v2119 = vmax.f32 %v1807, 0.0
  %v2120 = vmax.f32 %v1810, 0.0
  %v2121 = vmax.f32 %v1812, 0.0
  %v2122 = vmax.f32 %v1815, 0.0
  %v2123 = vmax.f32 %v1817, 0.0
  %v2124 = vmax.f32 %v1820, 0.0
  %v2125 = vmax.f32 %v1822, 0.0
  %v2126 = vmax.f32 %v1825, 0.0
  %v2127 = vmax.f32 %v1827, 0.0
  %v2128 = vmax.f32 %v1830, 0.0
  %v2129 = vmax.f32 %v1832, 0.0
  %v2130 = vmax.f32 %v1835, 0.0
  %v2131 = vmax.f32 %v1837, 0.0
  %v2132 = vmax.f32 %v1840, 0.0
  %v2133 = vmax.f32 %v1842, 0.0
  %v2134 = vmax.f32 %v1845, 0.0
  %v2135 = vmax.f32 %v1847, 0.0
  %v2136 = vmax.f32 %v1850, 0.0
  %v2137 = vmax.f32 %v1852, 0.0
  %v2138 = vmax.f32 %v1855, 0.0
  %v2139 = vmax.f32 %v1857, 0.0
  %v2140 = vmax.f32 %v1860, 0.0
  %v2141 = vmax.f32 %v1862, 0.0
  %v2142 = vmax.f32 %v1865, 0.0
  %v2143 = vmax.f32 %v1867, 0.0
  %v2144 = vmax.f32 %v1870, 0.0
  %v2145 = vmax.f32 %v1872, 0.0
  %v2146 = vmax.f32 %v1875, 0.0
  %v2147 = vmax.f32 %v1877, 0.0
  %v2148 = vmax.f32 %v1880, 0.0
  %v2149 = vmax.f32 %v1882, 0.0
  %v2150 = vmax.f32 %v1885, 0.0
  %v2151 = vmax.f32 %v1887, 0.0
  %v2152 = vmax.f32 %v1890, 0.0
  %v2153 = vmax.f32 %v1892, 0.0
  %v2154 = vmax.f32 %v1895, 0.0
  %v2155 = vmax.f32 %v1897, 0.0
  %v2156 = vmax.f32 %v1900, 0.0
  %v2157 = vmax.f32 %v1902, 0.0
  %v2158 = vmax.f32 %v1905, 0.0
  %v2159 = vmax.f32 %v1907, 0.0
  %v2160 = vmax.f32 %v1910, 0.0
  %v2161 = vmax.f32 %v1912, 0.0
  %v2162 = vmax.f32 %v1915, 0.0
  %v2163 = vmax.f32 %v1917, 0.0
  %v2164 = vmax.f32 %v1920, 0.0
  %v2165 = vmax.f32 %v1922, 0.0
  %v2166 = vmax.f32 %v1925, 0.0
  %v2167 = vmax.f32 %v1927, 0.0
  %v2168 = vmax.f32 %v1930, 0.0
  %v2169 = vmax.f32 %v1932, 0.0
  %v2170 = vmax.f32 %v1935, 0.0
  %v2171 = vmax.f32 %v1937, 0.0
  %v2172 = vmax.f32 %v1940, 0.0
  %v2173 = vmax.f32 %v1942, 0.0
  %v2174 = vmax.f32 %v1945, 0.0
  %v2175 = vmax.f32 %v1947, 0.0
  %v2176 = vmax.f32 %v1950, 0.0
  %v2177 = vmax.f32 %v1952, 0.0
  %v2178 = vmax.f32 %v1955, 0.0
  %v2179 = vmax.f32 %v1957, 0.0
  %v2180 = vmax.f32 %v1960, 0.0
  %v2181 = vmax.f32 %v1962, 0.0
  %v2182 = vmax.f32 %v1965, 0.0
  %v2183 = vmax.f32 %v1967, 0.0
  %v2184 = vmax.f32 %v1970, 0.0
  %v2185 = vmax.f32 %v1972, 0.0
  %v2186 = vmax.f32 %v1975, 0.0
  %v2187 = vmax.f32 %v1977, 0.0
  %v2188 = vmax.f32 %v1980, 0.0
  %v2189 = vmax.f32 %v1982, 0.0
  %v2190 = vmax.f32 %v1985, 0.0
  %v2191 = vmax.f32 %v1987, 0.0
  %v2192 = vmax.f32 %v1990, 0.0
  %v2193 = vmax.f32 %v1992, 0.0
  %v2194 = vmax.f32 %v1995, 0.0
  %v2195 = vmax.f32 %v1997, 0.0
  %v2196 = vmax.f32 %v2000, 0.0
  %v2197 = vmax.f32 %v2002, 0.0
  %v2198 = vmax.f32 %v2005, 0.0
  %v2199 = vmax.f32 %v2007, 0.0
  %v2200 = vmax.f32 %v2010, 0.0
  %v2201 = vmax.f32 %v2012, 0.0
  %v2202 = vmax.f32 %v2015, 0.0
  %v2203 = vmax.f32 %v2017, 0.0
  %v2204 = vmax.f32 %v2020, 0.0
  %v2205 = vmax.f32 %v2022, 0.0
  %v2206 = vmax.f32 %v2025, 0.0
  %v2207 = vmax.f32 %v2027, 0.0
  %v2208 = vmax.f32 %v2030, 0.0
  %v2209 = vmax.f32 %v2032, 0.0
  %v2210 = vmax.f32 %v2035, 0.0
  %v2211 = vmax.f32 %v2037, 0.0
  %v2212 = vmax.f32 %v2040, 0.0
  %v2213 = vmax.f32 %v2042, 0.0
  %v2214 = vmax.f32 %v2045, 0.0
  %v2215 = vmax.f32 %v2047, 0.0
  %v2216 = vmax.f32 %v2050, 0.0
  %v2217 = vmax.f32 %v2052, 0.0
  %v2218 = vmax.f32 %v2055, 0.0
  %v2219 = vmax.f32 %v2057, 0.0
  %v2220 = vmax.f32 %v2060, 0.0
  %v2221 = vmax.f32 %v2062, 0.0
  %v2222 = vmax.f32 %v2065, 0.0
  %v2223 = vmax.f32 %v2067, 0.0
  %v2224 = vmax.f32 %v2070, 0.0
  %v2225 = vmax.f32 %v2072, 0.0
  %v2226 = vmax.f32 %v2075, 0.0
  %v2227 = vmax.f32 %v2077, 0.0
  %v2228 = vmax.f32 %v2080, 0.0
  %v2229 = vmax.f32 %v2082, 0.0
  %v2230 = vmax.f32 %v2085, 0.0
  %v2231 = vmax.f32 %v2087, 0.0
  %v2232 = vmax.f32 %v2090, 0.0
  %v2233 = vmax.f32 %v2092, 0.0
  %v2234 = vmax.f32 %v2095, 0.0
  %v2235 = vmax.f32 %v2097, 0.0
  %v2236 = vmax.f32 %v2100, 0.0
  %v2237 = vmax.f32 %v2102, 0.0
  %v2238 = vmax.f32 %v2105, 0.0
  %v2239 = vmax.f32 %v2107, 0.0
  %v2240 = vmax.f32 %v2110, 0.0
  %v2241 = vmax.f32 %v2112, 0.0
  %v2242 = vmax.f32 %v1017, %v2114
  %v2243 = vmax.f32 %v1018, %v2115
  %v2244 = vmax.f32 %v1019, %v2116
  %v2245 = vmax.f32 %v1020, %v2117
  %v2246 = vmax.f32 %v1021, %v2118
  %v2247 = vmax.f32 %v1022, %v2119
  %v2248 = vmax.f32 %v1023, %v2120
  %v2249 = vmax.f32 %v1024, %v2121
  %v2250 = vmax.f32 %v1025, %v2122
  %v2251 = vmax.f32 %v1026, %v2123
  %v2252 = vmax.f32 %v1027, %v2124
  %v2253 = vmax.f32 %v1028, %v2125
  %v2254 = vmax.f32 %v1029, %v2126
  %v2255 = vmax.f32 %v1030, %v2127
  %v2256 = vmax.f32 %v1031, %v2128
  %v2257 = vmax.f32 %v1032, %v2129
  %v2258 = vmax.f32 %v1033, %v2130
  %v2259 = vmax.f32 %v1034, %v2131
  %v2260 = vmax.f32 %v1035, %v2132
  %v2261 = vmax.f32 %v1036, %v2133
  %v2262 = vmax.f32 %v1037, %v2134
  %v2263 = vmax.f32 %v1038, %v2135
  %v2264 = vmax.f32 %v1039, %v2136
  %v2265 = vmax.f32 %v1040, %v2137
  %v2266 = vmax.f32 %v1041, %v2138
  %v2267 = vmax.f32 %v1042, %v2139
  %v2268 = vmax.f32 %v1043, %v2140
  %v2269 = vmax.f32 %v1044, %v2141
  %v2270 = vmax.f32 %v1045, %v2142
  %v2271 = vmax.f32 %v1046, %v2143
  %v2272 = vmax.f32 %v1047, %v2144
  %v2273 = vmax.f32 %v1048, %v2145
  %v2274 = vmax.f32 %v1049, %v2146
  %v2275 = vmax.f32 %v1050, %v2147
  %v2276 = vmax.f32 %v1051, %v2148
  %v2277 = vmax.f32 %v1052, %v2149
  %v2278 = vmax.f32 %v1053, %v2150
  %v2279 = vmax.f32 %v1054, %v2151
  %v2280 = vmax.f32 %v1055, %v2152
  %v2281 = vmax.f32 %v1056, %v2153
  %v2282 = vmax.f32 %v1057, %v2154
  %v2283 = vmax.f32 %v1058, %v2155
  %v2284 = vmax.f32 %v1059, %v2156
  %v2285 = vmax.f32 %v1060, %v2157
  %v2286 = vmax.f32 %v1061, %v2158
  %v2287 = vmax.f32 %v1062, %v2159
  %v2288 = vmax.f32 %v1063, %v2160
  %v2289 = vmax.f32 %v1064, %v2161
  %v2290 = vmax.f32 %v1065, %v2162
  %v2291 = vmax.f32 %v1066, %v2163
  %v2292 = vmax.f32 %v1067, %v2164
  %v2293 = vmax.f32 %v1068, %v2165
  %v2294 = vmax.f32 %v1069, %v2166
  %v2295 = vmax.f32 %v1070, %v2167
  %v2296 = vmax.f32 %v1071, %v2168
  %v2297 = vmax.f32 %v1072, %v2169
  %v2298 = vmax.f32 %v1073, %v2170
  %v2299 = vmax.f32 %v1074, %v2171
  %v2300 = vmax.f32 %v1075, %v2172
  %v2301 = vmax.f32 %v1076, %v2173
  %v2302 = vmax.f32 %v1077, %v2174
  %v2303 = vmax.f32 %v1078, %v2175
  %v2304 = vmax.f32 %v1079, %v2176
  %v2305 = vmax.f32 %v1080, %v2177
  %v2306 = vmax.f32 %v1081, %v2178
  %v2307 = vmax.f32 %v1082, %v2179
  %v2308 = vmax.f32 %v1083, %v2180
  %v2309 = vmax.f32 %v1084, %v2181
  %v2310 = vmax.f32 %v1085, %v2182
  %v2311 = vmax.f32 %v1086, %v2183
  %v2312 = vmax.f32 %v1087, %v2184
  %v2313 = vmax.f32 %v1088, %v2185
  %v2314 = vmax.f32 %v1089, %v2186
  %v2315 = vmax.f32 %v1090, %v2187
  %v2316 = vmax.f32 %v1091, %v2188
  %v2317 = vmax.f32 %v1092, %v2189
  %v2318 = vmax.f32 %v1093, %v2190
  %v2319 = vmax.f32 %v1094, %v2191
  %v2320 = vmax.f32 %v1095, %v2192
  %v2321 = vmax.f32 %v1096, %v2193
  %v2322 = vmax.f32 %v1097, %v2194
  %v2323 = vmax.f32 %v1098, %v2195
  %v2324 = vmax.f32 %v1099, %v2196
  %v2325 = vmax.f32 %v1100, %v2197
  %v2326 = vmax.f32 %v1101, %v2198
  %v2327 = vmax.f32 %v1102, %v2199
  %v2328 = vmax.f32 %v1103, %v2200
  %v2329 = vmax.f32 %v1104, %v2201
  %v2330 = vmax.f32 %v1105, %v2202
  %v2331 = vmax.f32 %v1106, %v2203
  %v2332 = vmax.f32 %v1107, %v2204
  %v2333 = vmax.f32 %v1108, %v2205
  %v2334 = vmax.f32 %v1109, %v2206
  %v2335 = vmax.f32 %v1110, %v2207
  %v2336 = vmax.f32 %v1111, %v2208
  %v2337 = vmax.f32 %v1112, %v2209
  %v2338 = vmax.f32 %v1113, %v2210
  %v2339 = vmax.f32 %v1114, %v2211
  %v2340 = vmax.f32 %v1115, %v2212
  %v2341 = vmax.f32 %v1116, %v2213
  %v2342 = vmax.f32 %v1117, %v2214
  %v2343 = vmax.f32 %v1118, %v2215
  %v2344 = vmax.f32 %v1119, %v2216
  %v2345 = vmax.f32 %v1120, %v2217
  %v2346 = vmax.f32 %v1121, %v2218
  %v2347 = vmax.f32 %v1122, %v2219
  %v2348 = vmax.f32 %v1123, %v2220
  %v2349 = vmax.f32 %v1124, %v2221
  %v2350 = vmax.f32 %v1125, %v2222
  %v2351 = vmax.f32 %v1126, %v2223
  %v2352 = vmax.f32 %v1127, %v2224
  %v2353 = vmax.f32 %v1128, %v2225
  %v2354 = vmax.f32 %v1129, %v2226
  %v2355 = vmax.f32 %v1130, %v2227
  %v2356 = vmax.f32 %v1131, %v2228
  %v2357 = vmax.f32 %v1132, %v2229
  %v2358 = vmax.f32 %v1133, %v2230
  %v2359 = vmax.f32 %v1134, %v2231
  %v2360 = vmax.f32 %v1135, %v2232
  %v2361 = vmax.f32 %v1136, %v2233
  %v2362 = vmax.f32 %v1137, %v2234
  %v2363 = vmax.f32 %v1138, %v2235
  %v2364 = vmax.f32 %v1139, %v2236
  %v2365 = vmax.f32 %v1140, %v2237
  %v2366 = vmax.f32 %v1141, %v2238
  %v2367 = vmax.f32 %v1142, %v2239
  %v2368 = vmax.f32 %v1143, %v2240
  %v2369 = vmax.f32 %v1144, %v2241
  %v2370 = vmax.f32 %v2242, %v2244
  %v2371 = vmax.f32 %v2243, %v2245
  %v2372 = vmax.f32 %v2246, %v2248
  %v2373 = vmax.f32 %v2247, %v2249
  %v2374 = vmax.f32 %v2250, %v2252
  %v2375 = vmax.f32 %v2251, %v2253
  %v2376 = vmax.f32 %v2254, %v2256
  %v2377 = vmax.f32 %v2255, %v2257
  %v2378 = vmax.f32 %v2258, %v2260
  %v2379 = vmax.f32 %v2259, %v2261
  %v2380 = vmax.f32 %v2262, %v2264
  %v2381 = vmax.f32 %v2263, %v2265
  %v2382 = vmax.f32 %v2266, %v2268
  %v2383 = vmax.f32 %v2267, %v2269
  %v2384 = vmax.f32 %v2270, %v2272
  %v2385 = vmax.f32 %v2271, %v2273
  %v2386 = vmax.f32 %v2274, %v2276
  %v2387 = vmax.f32 %v2275, %v2277
  %v2388 = vmax.f32 %v2278, %v2280
  %v2389 = vmax.f32 %v2279, %v2281
  %v2390 = vmax.f32 %v2282, %v2284
  %v2391 = vmax.f32 %v2283, %v2285
  %v2392 = vmax.f32 %v2286, %v2288
  %v2393 = vmax.f32 %v2287, %v2289
  %v2394 = vmax.f32 %v2290, %v2292
  %v2395 = vmax.f32 %v2291, %v2293
  %v2396 = vmax.f32 %v2294, %v2296
  %v2397 = vmax.f32 %v2295, %v2297
  %v2398 = vmax.f32 %v2298, %v2300
  %v2399 = vmax.f32 %v2299, %v2301
  %v2400 = vmax.f32 %v2302, %v2304
  %v2401 = vmax.f32 %v2303, %v2305
  %v2402 = vmax.f32 %v2306, %v2308
  %v2403 = vmax.f32 %v2307, %v2309
  %v2404 = vmax.f32 %v2310, %v2312
  %v2405 = vmax.f32 %v2311, %v2313
  %v2406 = vmax.f32 %v2314, %v2316
  %v2407 = vmax.f32 %v2315, %v2317
  %v2408 = vmax.f32 %v2318, %v2320
  %v2409 = vmax.f32 %v2319, %v2321
  %v2410 = vmax.f32 %v2322, %v2324
  %v2411 = vmax.f32 %v2323, %v2325
  %v2412 = vmax.f32 %v2326, %v2328
  %v2413 = vmax.f32 %v2327, %v2329
  %v2414 = vmax.f32 %v2330, %v2332
  %v2415 = vmax.f32 %v2331, %v2333
  %v2416 = vmax.f32 %v2334, %v2336
  %v2417 = vmax.f32 %v2335, %v2337
  %v2418 = vmax.f32 %v2338, %v2340
  %v2419 = vmax.f32 %v2339, %v2341
  %v2420 = vmax.f32 %v2342, %v2344
  %v2421 = vmax.f32 %v2343, %v2345
  %v2422 = vmax.f32 %v2346, %v2348
  %v2423 = vmax.f32 %v2347, %v2349
  %v2424 = vmax.f32 %v2350, %v2352
  %v2425 = vmax.f32 %v2351, %v2353
  %v2426 = vmax.f32 %v2354, %v2356
  %v2427 = vmax.f32 %v2355, %v2357
  %v2428 = vmax.f32 %v2358, %v2360
  %v2429 = vmax.f32 %v2359, %v2361
  %v2430 = vmax.f32 %v2362, %v2364
  %v2431 = vmax.f32 %v2363, %v2365
  %v2432 = vmax.f32 %v2366, %v2368
  %v2433 = vmax.f32 %v2367, %v2369
  %2434 = vst [vmem:[#allocation2] sm:$0xff] 0.0
  %2435 = vst [vmem:[#allocation2 + $0x8] sm:$0xff] 0.0
  %2436 = vst [vmem:[#allocation2 + $0x10] sm:$0x3] 0.0
  %2437 = vst [vmem:[#allocation2 + $0x18] sm:$0xff] 0.0
  %2438 = vst [vmem:[#allocation2 + $0x20] sm:$0xff] 0.0
  %2439 = vst [vmem:[#allocation2 + $0x28] sm:$0x3] 0.0
  %2440 = vst [vmem:[#allocation2 + $0x30] sm:$0xff] 0.0
  %2441 = vst [vmem:[#allocation2 + $0x38] sm:$0xff] 0.0
  %2442 = vst [vmem:[#allocation2 + $0x40] sm:$0x3] 0.0
  %2443 = vst [vmem:[#allocation2 + $0x48] sm:$0xff] 0.0
  %2444 = vst [vmem:[#allocation2 + $0x50] sm:$0xff] 0.0
  %2445 = vst [vmem:[#allocation2 + $0x58] sm:$0x3] 0.0
  %2446 = vst [vmem:[#allocation2 + $0x60] sm:$0xff] 0.0
  %2447 = vst [vmem:[#allocation2 + $0x68] sm:$0xff] 0.0
  %2448 = vst [vmem:[#allocation2 + $0x70] sm:$0x3] 0.0
  %2449 = vst [vmem:[#allocation2 + $0x78] sm:$0xff] 0.0
  %2450 = vst [vmem:[#allocation2 + $0x80] sm:$0xff] 0.0
  %2451 = vst [vmem:[#allocation2 + $0x88] sm:$0x3] 0.0
  %2452 = vst [vmem:[#allocation2 + $0x90] sm:$0xff] 0.0
  %2453 = vst [vmem:[#allocation2 + $0x98] sm:$0xff] 0.0
  %2454 = vst [vmem:[#allocation2 + $0xa0] sm:$0x3] 0.0
  %2455 = vst [vmem:[#allocation2 + $0xa8] sm:$0xff] 0.0
  %2456 = vst [vmem:[#allocation2 + $0xb0] sm:$0xff] 0.0
  %2457 = vst [vmem:[#allocation2 + $0xb8] sm:$0x3] 0.0
  %2458 = vst [vmem:[#allocation2 + $0xc0] sm:$0xff] 0.0
  %2459 = vst [vmem:[#allocation2 + $0xc8] sm:$0xff] 0.0
  %2460 = vst [vmem:[#allocation2 + $0xd0] sm:$0x3] 0.0
  %2461 = vst [vmem:[#allocation2 + $0xd8] sm:$0xff] 0.0
  %2462 = vst [vmem:[#allocation2 + $0xe0] sm:$0xff] 0.0
  %2463 = vst [vmem:[#allocation2 + $0xe8] sm:$0x3] 0.0
  %2464 = vst [vmem:[#allocation2 + $0xf0] sm:$0xff] 0.0
  %2465 = vst [vmem:[#allocation2 + $0xf8] sm:$0xff] 0.0
  %2466 = vst [vmem:[#allocation2 + $0x100] sm:$0x3] 0.0
  %2467 = vst [vmem:[#allocation2 + $0x108] sm:$0xff] 0.0
  %2468 = vst [vmem:[#allocation2 + $0x110] sm:$0xff] 0.0
  %2469 = vst [vmem:[#allocation2 + $0x118] sm:$0x3] 0.0
  %2470 = vst [vmem:[#allocation2 + $0x120] sm:$0xff] 0.0
  %2471 = vst [vmem:[#allocation2 + $0x128] sm:$0xff] 0.0
  %2472 = vst [vmem:[#allocation2 + $0x130] sm:$0x3] 0.0
  %2473 = vst [vmem:[#allocation2 + $0x138] sm:$0xff] 0.0
  %2474 = vst [vmem:[#allocation2 + $0x140] sm:$0xff] 0.0
  %2475 = vst [vmem:[#allocation2 + $0x148] sm:$0x3] 0.0
  %2476 = vst [vmem:[#allocation2 + $0x150] sm:$0xff] 0.0
  %2477 = vst [vmem:[#allocation2 + $0x158] sm:$0xff] 0.0
  %2478 = vst [vmem:[#allocation2 + $0x160] sm:$0x3] 0.0
  %2479 = vst [vmem:[#allocation2 + $0x168] sm:$0xff] 0.0
  %2480 = vst [vmem:[#allocation2 + $0x170] sm:$0xff] 0.0
  %2481 = vst [vmem:[#allocation2 + $0x178] sm:$0x3] 0.0
  %2482 = vst [vmem:[#allocation2 + $0x180] sm:$0xff] 0.0
  %2483 = vst [vmem:[#allocation2 + $0x188] sm:$0xff] 0.0
  %2484 = vst [vmem:[#allocation2 + $0x190] sm:$0x3] 0.0
  %2485 = vst [vmem:[#allocation2 + $0x198] sm:$0xff] 0.0
  %2486 = vst [vmem:[#allocation2 + $0x1a0] sm:$0xff] 0.0
  %2487 = vst [vmem:[#allocation2 + $0x1a8] sm:$0x3] 0.0
  %2488 = vst [vmem:[#allocation2 + $0x1b0] sm:$0xff] 0.0
  %2489 = vst [vmem:[#allocation2 + $0x1b8] sm:$0xff] 0.0
  %2490 = vst [vmem:[#allocation2 + $0x1c0] sm:$0x3] 0.0
  %2491 = vst [vmem:[#allocation2 + $0x1c8] sm:$0xff] 0.0
  %2492 = vst [vmem:[#allocation2 + $0x1d0] sm:$0xff] 0.0
  %2493 = vst [vmem:[#allocation2 + $0x1d8] sm:$0x3] 0.0
  %2494 = vst [vmem:[#allocation2 + $0x1e0] sm:$0xff] 0.0
  %2495 = vst [vmem:[#allocation2 + $0x1e8] sm:$0xff] 0.0
  %2496 = vst [vmem:[#allocation2 + $0x1f0] sm:$0x3] 0.0
  %2497 = vst [vmem:[#allocation2 + $0x1f8] sm:$0xff] 0.0
  %2498 = vst [vmem:[#allocation2 + $0x200] sm:$0xff] 0.0
  %2499 = vst [vmem:[#allocation2 + $0x208] sm:$0x3] 0.0
  %2500 = vst [vmem:[#allocation2 + $0x210] sm:$0xff] 0.0
  %2501 = vst [vmem:[#allocation2 + $0x218] sm:$0xff] 0.0
  %2502 = vst [vmem:[#allocation2 + $0x220] sm:$0x3] 0.0
  %2503 = vst [vmem:[#allocation2 + $0x228] sm:$0xff] 0.0
  %2504 = vst [vmem:[#allocation2 + $0x230] sm:$0xff] 0.0
  %2505 = vst [vmem:[#allocation2 + $0x238] sm:$0x3] 0.0
  %2506 = vst [vmem:[#allocation2 + $0x240] sm:$0xff] 0.0
  %2507 = vst [vmem:[#allocation2 + $0x248] sm:$0xff] 0.0
  %2508 = vst [vmem:[#allocation2 + $0x250] sm:$0x3] 0.0
  %2509 = vst [vmem:[#allocation2 + $0x258] sm:$0xff] 0.0
  %2510 = vst [vmem:[#allocation2 + $0x260] sm:$0xff] 0.0
  %2511 = vst [vmem:[#allocation2 + $0x268] sm:$0x3] 0.0
  %2512 = vst [vmem:[#allocation2 + $0x270] sm:$0xff] 0.0
  %2513 = vst [vmem:[#allocation2 + $0x278] sm:$0xff] 0.0
  %2514 = vst [vmem:[#allocation2 + $0x280] sm:$0x3] 0.0
  %2515 = vst [vmem:[#allocation2 + $0x288] sm:$0xff] 0.0
  %2516 = vst [vmem:[#allocation2 + $0x290] sm:$0xff] 0.0
  %2517 = vst [vmem:[#allocation2 + $0x298] sm:$0x3] 0.0
  %2518 = vst [vmem:[#allocation2 + $0x2a0] sm:$0xff] 0.0
  %2519 = vst [vmem:[#allocation2 + $0x2a8] sm:$0xff] 0.0
  %2520 = vst [vmem:[#allocation2 + $0x2b0] sm:$0x3] 0.0
  %2521 = vst [vmem:[#allocation2 + $0x2b8] sm:$0xff] 0.0
  %2522 = vst [vmem:[#allocation2 + $0x2c0] sm:$0xff] 0.0
  %2523 = vst [vmem:[#allocation2 + $0x2c8] sm:$0x3] 0.0
  %2524 = vst [vmem:[#allocation2 + $0x2d0] sm:$0xff] 0.0
  %2525 = vst [vmem:[#allocation2 + $0x2d8] sm:$0xff] 0.0
  %2526 = vst [vmem:[#allocation2 + $0x2e0] sm:$0x3] 0.0
  %2527 = vst [vmem:[#allocation2 + $0x2e8] sm:$0xff] 0.0
  %2528 = vst [vmem:[#allocation2 + $0x2f0] sm:$0xff] 0.0
  %2529 = vst [vmem:[#allocation2 + $0x2f8] sm:$0x3] 0.0
  %2530 = vst [vmem:[#allocation2 + $0x300] sm:$0xff] 0.0
  %2531 = vst [vmem:[#allocation2 + $0x308] sm:$0xff] 0.0
  %2532 = vst [vmem:[#allocation2 + $0x310] sm:$0x3] 0.0
  %2533 = vst [vmem:[#allocation2 + $0x318] sm:$0xff] 0.0
  %2534 = vst [vmem:[#allocation2 + $0x320] sm:$0xff] 0.0
  %2535 = vst [vmem:[#allocation2 + $0x328] sm:$0x3] 0.0
  %2536 = vst [vmem:[#allocation2 + $0x330] sm:$0xff] 0.0
  %2537 = vst [vmem:[#allocation2 + $0x338] sm:$0xff] 0.0
  %2538 = vst [vmem:[#allocation2 + $0x340] sm:$0x3] 0.0
  %2539 = vst [vmem:[#allocation2 + $0x348] sm:$0xff] 0.0
  %2540 = vst [vmem:[#allocation2 + $0x350] sm:$0xff] 0.0
  %2541 = vst [vmem:[#allocation2 + $0x358] sm:$0x3] 0.0
  %s2542 = scalar_lea.vmem [#allocation2], 24
  %2543 = vst [vmem:[%s2542 + $0x1] sm:$0xff] %v2370
  %2544 = vst [vmem:[%s2542 + $0x9] sm:$0xff] %v2371
  %2545 = vst [vmem:[%s2542 + $0x19] sm:$0xff] %v2372
  %2546 = vst [vmem:[%s2542 + $0x21] sm:$0xff] %v2373
  %2547 = vst [vmem:[%s2542 + $0x31] sm:$0xff] %v2374
  %2548 = vst [vmem:[%s2542 + $0x39] sm:$0xff] %v2375
  %2549 = vst [vmem:[%s2542 + $0x49] sm:$0xff] %v2376
  %2550 = vst [vmem:[%s2542 + $0x51] sm:$0xff] %v2377
  %2551 = vst [vmem:[%s2542 + $0x61] sm:$0xff] %v2378
  %2552 = vst [vmem:[%s2542 + $0x69] sm:$0xff] %v2379
  %2553 = vst [vmem:[%s2542 + $0x79] sm:$0xff] %v2380
  %2554 = vst [vmem:[%s2542 + $0x81] sm:$0xff] %v2381
  %2555 = vst [vmem:[%s2542 + $0x91] sm:$0xff] %v2382
  %2556 = vst [vmem:[%s2542 + $0x99] sm:$0xff] %v2383
  %2557 = vst [vmem:[%s2542 + $0xa9] sm:$0xff] %v2384
  %2558 = vst [vmem:[%s2542 + $0xb1] sm:$0xff] %v2385
  %2559 = vst [vmem:[%s2542 + $0xc1] sm:$0xff] %v2386
  %2560 = vst [vmem:[%s2542 + $0xc9] sm:$0xff] %v2387
  %2561 = vst [vmem:[%s2542 + $0xd9] sm:$0xff] %v2388
  %2562 = vst [vmem:[%s2542 + $0xe1] sm:$0xff] %v2389
  %2563 = vst [vmem:[%s2542 + $0xf1] sm:$0xff] %v2390
  %2564 = vst [vmem:[%s2542 + $0xf9] sm:$0xff] %v2391
  %2565 = vst [vmem:[%s2542 + $0x109] sm:$0xff] %v2392
  %2566 = vst [vmem:[%s2542 + $0x111] sm:$0xff] %v2393
  %2567 = vst [vmem:[%s2542 + $0x121] sm:$0xff] %v2394
  %2568 = vst [vmem:[%s2542 + $0x129] sm:$0xff] %v2395
  %2569 = vst [vmem:[%s2542 + $0x139] sm:$0xff] %v2396
  %2570 = vst [vmem:[%s2542 + $0x141] sm:$0xff] %v2397
  %2571 = vst [vmem:[%s2542 + $0x151] sm:$0xff] %v2398
  %2572 = vst [vmem:[%s2542 + $0x159] sm:$0xff] %v2399
  %2573 = vst [vmem:[%s2542 + $0x169] sm:$0xff] %v2400
  %2574 = vst [vmem:[%s2542 + $0x171] sm:$0xff] %v2401
  %2575 = vst [vmem:[%s2542 + $0x1b1] sm:$0xff] %v2402
  %2576 = vst [vmem:[%s2542 + $0x1b9] sm:$0xff] %v2403
  %2577 = vst [vmem:[%s2542 + $0x1c9] sm:$0xff] %v2404
  %2578 = vst [vmem:[%s2542 + $0x1d1] sm:$0xff] %v2405
  %2579 = vst [vmem:[%s2542 + $0x1e1] sm:$0xff] %v2406
  %2580 = vst [vmem:[%s2542 + $0x1e9] sm:$0xff] %v2407
  %2581 = vst [vmem:[%s2542 + $0x1f9] sm:$0xff] %v2408
  %2582 = vst [vmem:[%s2542 + $0x201] sm:$0xff] %v2409
  %2583 = vst [vmem:[%s2542 + $0x211] sm:$0xff] %v2410
  %2584 = vst [vmem:[%s2542 + $0x219] sm:$0xff] %v2411
  %2585 = vst [vmem:[%s2542 + $0x229] sm:$0xff] %v2412
  %2586 = vst [vmem:[%s2542 + $0x231] sm:$0xff] %v2413
  %2587 = vst [vmem:[%s2542 + $0x241] sm:$0xff] %v2414
  %2588 = vst [vmem:[%s2542 + $0x249] sm:$0xff] %v2415
  %2589 = vst [vmem:[%s2542 + $0x259] sm:$0xff] %v2416
  %2590 = vst [vmem:[%s2542 + $0x261] sm:$0xff] %v2417
  %2591 = vst [vmem:[%s2542 + $0x271] sm:$0xff] %v2418
  %2592 = vst [vmem:[%s2542 + $0x279] sm:$0xff] %v2419
  %2593 = vst [vmem:[%s2542 + $0x289] sm:$0xff] %v2420
  %2594 = vst [vmem:[%s2542 + $0x291] sm:$0xff] %v2421
  %2595 = vst [vmem:[%s2542 + $0x2a1] sm:$0xff] %v2422
  %2596 = vst [vmem:[%s2542 + $0x2a9] sm:$0xff] %v2423
  %2597 = vst [vmem:[%s2542 + $0x2b9] sm:$0xff] %v2424
  %2598 = vst [vmem:[%s2542 + $0x2c1] sm:$0xff] %v2425
  %2599 = vst [vmem:[%s2542 + $0x2d1] sm:$0xff] %v2426
  %2600 = vst [vmem:[%s2542 + $0x2d9] sm:$0xff] %v2427
  %2601 = vst [vmem:[%s2542 + $0x2e9] sm:$0xff] %v2428
  %2602 = vst [vmem:[%s2542 + $0x2f1] sm:$0xff] %v2429
  %2603 = vst [vmem:[%s2542 + $0x301] sm:$0xff] %v2430
  %2604 = vst [vmem:[%s2542 + $0x309] sm:$0xff] %v2431
  %2605 = vst [vmem:[%s2542 + $0x319] sm:$0xff] %v2432
  %2606 = vst [vmem:[%s2542 + $0x321] sm:$0xff] %v2433
  %v2607 = vld [vmem:[%s5] sm:$0x1]
  %v2608 = vld [vmem:[%s6] sm:$0x1]
  loop: start=0, step=1, limit=7
  $region30: #{_lambda_.2} parent=0 // loop_pre_header
    _
  $region31: #{_lambda_.2} parent=0 // loop_header
    %s2610 = sphi 0, %s2614
    %p2611 = scmp.ge.s32.totalorder %s2610, 7
  $region32: #{_lambda_.2} parent=0 // loop_header_branch
    %2613 = sbr.rel (%p2611) target = $region36
  $region33: #{_lambda_.2} parent=0 // loop_body
    %v2615 = vld [vmem:[#allocation2] sm:$0xff]
    %v2616 = vld [vmem:[#allocation2 + $0x8] sm:$0xff]
    %v2617 = vld [vmem:[#allocation2 + $0x18] sm:$0xff]
    %v2618 = vld [vmem:[#allocation2 + $0x20] sm:$0xff]
    %v2619 = vld [vmem:[#allocation2 + $0x30] sm:$0xff]
    %v2620 = vld [vmem:[#allocation2 + $0x38] sm:$0xff]
    %v2621 = vld [vmem:[#allocation2 + $0x48] sm:$0xff]
    %v2622 = vld [vmem:[#allocation2 + $0x50] sm:$0xff]
    %v2623 = vld [vmem:[#allocation2 + $0x60] sm:$0xff]
    %v2624 = vld [vmem:[#allocation2 + $0x68] sm:$0xff]
    %v2625 = vld [vmem:[#allocation2 + $0x78] sm:$0xff]
    %v2626 = vld [vmem:[#allocation2 + $0x80] sm:$0xff]
    %v2627 = vld [vmem:[#allocation2 + $0x90] sm:$0xff]
    %v2628 = vld [vmem:[#allocation2 + $0x98] sm:$0xff]
    %v2629 = vld [vmem:[#allocation2 + $0xa8] sm:$0xff]
    %v2630 = vld [vmem:[#allocation2 + $0xb0] sm:$0xff]
    %v2631 = vld [vmem:[#allocation2 + $0xc0] sm:$0xff]
    %v2632 = vld [vmem:[#allocation2 + $0xc8] sm:$0xff]
    %v2633 = vld [vmem:[#allocation2 + $0xd8] sm:$0xff]
    %v2634 = vld [vmem:[#allocation2 + $0xe0] sm:$0xff]
    %v2635 = vld [vmem:[#allocation2 + $0xf0] sm:$0xff]
    %v2636 = vld [vmem:[#allocation2 + $0xf8] sm:$0xff]
    %v2637 = vld [vmem:[#allocation2 + $0x108] sm:$0xff]
    %v2638 = vld [vmem:[#allocation2 + $0x110] sm:$0xff]
    %v2639 = vld [vmem:[#allocation2 + $0x120] sm:$0xff]
    %v2640 = vld [vmem:[#allocation2 + $0x128] sm:$0xff]
    %v2641 = vld [vmem:[#allocation2 + $0x138] sm:$0xff]
    %v2642 = vld [vmem:[#allocation2 + $0x140] sm:$0xff]
    %v2643 = vld [vmem:[#allocation2 + $0x150] sm:$0xff]
    %v2644 = vld [vmem:[#allocation2 + $0x158] sm:$0xff]
    %v2645 = vld [vmem:[#allocation2 + $0x168] sm:$0xff]
    %v2646 = vld [vmem:[#allocation2 + $0x170] sm:$0xff]
    %v2647 = vld [vmem:[#allocation2 + $0x1b0] sm:$0xff]
    %v2648 = vld [vmem:[#allocation2 + $0x1b8] sm:$0xff]
    %v2649 = vld [vmem:[#allocation2 + $0x1c8] sm:$0xff]
    %v2650 = vld [vmem:[#allocation2 + $0x1d0] sm:$0xff]
    %v2651 = vld [vmem:[#allocation2 + $0x1e0] sm:$0xff]
    %v2652 = vld [vmem:[#allocation2 + $0x1e8] sm:$0xff]
    %v2653 = vld [vmem:[#allocation2 + $0x1f8] sm:$0xff]
    %v2654 = vld [vmem:[#allocation2 + $0x200] sm:$0xff]
    %v2655 = vld [vmem:[#allocation2 + $0x210] sm:$0xff]
    %v2656 = vld [vmem:[#allocation2 + $0x218] sm:$0xff]
    %v2657 = vld [vmem:[#allocation2 + $0x228] sm:$0xff]
    %v2658 = vld [vmem:[#allocation2 + $0x230] sm:$0xff]
    %v2659 = vld [vmem:[#allocation2 + $0x240] sm:$0xff]
    %v2660 = vld [vmem:[#allocation2 + $0x248] sm:$0xff]
    %v2661 = vld [vmem:[#allocation2 + $0x258] sm:$0xff]
    %v2662 = vld [vmem:[#allocation2 + $0x260] sm:$0xff]
    %v2663 = vld [vmem:[#allocation2 + $0x270] sm:$0xff]
    %v2664 = vld [vmem:[#allocation2 + $0x278] sm:$0xff]
    %v2665 = vld [vmem:[#allocation2 + $0x288] sm:$0xff]
    %v2666 = vld [vmem:[#allocation2 + $0x290] sm:$0xff]
    %v2667 = vld [vmem:[#allocation2 + $0x2a0] sm:$0xff]
    %v2668 = vld [vmem:[#allocation2 + $0x2a8] sm:$0xff]
    %v2669 = vld [vmem:[#allocation2 + $0x2b8] sm:$0xff]
    %v2670 = vld [vmem:[#allocation2 + $0x2c0] sm:$0xff]
    %v2671 = vld [vmem:[#allocation2 + $0x2d0] sm:$0xff]
    %v2672 = vld [vmem:[#allocation2 + $0x2d8] sm:$0xff]
    %v2673 = vld [vmem:[#allocation2 + $0x2e8] sm:$0xff]
    %v2674 = vld [vmem:[#allocation2 + $0x2f0] sm:$0xff]
    %v2675 = vld [vmem:[#allocation2 + $0x300] sm:$0xff]
    %v2676 = vld [vmem:[#allocation2 + $0x308] sm:$0xff]
    %v2677 = vld [vmem:[#allocation2 + $0x318] sm:$0xff]
    %v2678 = vld [vmem:[#allocation2 + $0x320] sm:$0xff]
    %v2679 = vpack.c.bf16 %v2616, %v2615
    %v2680 = vpack.c.bf16 %v2618, %v2617
    %v2681 = vpack.c.bf16 %v2620, %v2619
    %v2682 = vpack.c.bf16 %v2622, %v2621
    %v2683 = vpack.c.bf16 %v2624, %v2623
    %v2684 = vpack.c.bf16 %v2626, %v2625
    %v2685 = vpack.c.bf16 %v2628, %v2627
    %v2686 = vpack.c.bf16 %v2630, %v2629
    %v2687 = vpack.c.bf16 %v2632, %v2631
    %v2688 = vpack.c.bf16 %v2634, %v2633
    %v2689 = vpack.c.bf16 %v2636, %v2635
    %v2690 = vpack.c.bf16 %v2638, %v2637
    %v2691 = vpack.c.bf16 %v2640, %v2639
    %v2692 = vpack.c.bf16 %v2642, %v2641
    %v2693 = vpack.c.bf16 %v2644, %v2643
    %v2694 = vpack.c.bf16 %v2646, %v2645
    %v2695 = vpack.c.bf16 %v2648, %v2647
    %v2696 = vpack.c.bf16 %v2650, %v2649
    %v2697 = vpack.c.bf16 %v2652, %v2651
    %v2698 = vpack.c.bf16 %v2654, %v2653
    %v2699 = vpack.c.bf16 %v2656, %v2655
    %v2700 = vpack.c.bf16 %v2658, %v2657
    %v2701 = vpack.c.bf16 %v2660, %v2659
    %v2702 = vpack.c.bf16 %v2662, %v2661
    %v2703 = vpack.c.bf16 %v2664, %v2663
    %v2704 = vpack.c.bf16 %v2666, %v2665
    %v2705 = vpack.c.bf16 %v2668, %v2667
    %v2706 = vpack.c.bf16 %v2670, %v2669
    %v2707 = vpack.c.bf16 %v2672, %v2671
    %v2708 = vpack.c.bf16 %v2674, %v2673
    %v2709 = vpack.c.bf16 %v2676, %v2675
    %v2710 = vpack.c.bf16 %v2678, %v2677
    %v2711 = vld [vmem:[%s4] sm:$0xf]
    %v2712 = vld [vmem:[%s4 + $0x4] sm:$0xf]
    %v2713 = vld [vmem:[%s4 + $0x8] sm:$0xf]
    %v2714 = vld [vmem:[%s4 + $0xc] sm:$0xf]
    %v2715 = vld [vmem:[%s4 + $0x10] sm:$0xf]
    %v2716 = vld [vmem:[%s4 + $0x14] sm:$0xf]
    %v2717 = vld [vmem:[%s4 + $0x18] sm:$0xf]
    %v2718 = vld [vmem:[%s4 + $0x1c] sm:$0xf]
    %v2719 = vld [vmem:[%s4 + $0x20] sm:$0xf]
    %v2720 = vld [vmem:[%s4 + $0x24] sm:$0xf]
    %v2721 = vld [vmem:[%s4 + $0x28] sm:$0xf]
    %v2722 = vld [vmem:[%s4 + $0x2c] sm:$0xf]
    %v2723 = vld [vmem:[%s4 + $0x30] sm:$0xf]
    %v2724 = vld [vmem:[%s4 + $0x34] sm:$0xf]
    %v2725 = vld [vmem:[%s4 + $0x38] sm:$0xf]
    %v2726 = vld [vmem:[%s4 + $0x3c] sm:$0xf]
    %v2727 = vld [vmem:[#allocation2 + $0x1] sm:$0xff]
    %v2728 = vld [vmem:[#allocation2 + $0x9] sm:$0xff]
    %v2729 = vld [vmem:[#allocation2 + $0x19] sm:$0xff]
    %v2730 = vld [vmem:[#allocation2 + $0x21] sm:$0xff]
    %v2731 = vld [vmem:[#allocation2 + $0x31] sm:$0xff]
    %v2732 = vld [vmem:[#allocation2 + $0x39] sm:$0xff]
    %v2733 = vld [vmem:[#allocation2 + $0x49] sm:$0xff]
    %v2734 = vld [vmem:[#allocation2 + $0x51] sm:$0xff]
    %v2735 = vld [vmem:[#allocation2 + $0x61] sm:$0xff]
    %v2736 = vld [vmem:[#allocation2 + $0x69] sm:$0xff]
    %v2737 = vld [vmem:[#allocation2 + $0x79] sm:$0xff]
    %v2738 = vld [vmem:[#allocation2 + $0x81] sm:$0xff]
    %v2739 = vld [vmem:[#allocation2 + $0x91] sm:$0xff]
    %v2740 = vld [vmem:[#allocation2 + $0x99] sm:$0xff]
    %v2741 = vld [vmem:[#allocation2 + $0xa9] sm:$0xff]
    %v2742 = vld [vmem:[#allocation2 + $0xb1] sm:$0xff]
    %v2743 = vld [vmem:[#allocation2 + $0xc1] sm:$0xff]
    %v2744 = vld [vmem:[#allocation2 + $0xc9] sm:$0xff]
    %v2745 = vld [vmem:[#allocation2 + $0xd9] sm:$0xff]
    %v2746 = vld [vmem:[#allocation2 + $0xe1] sm:$0xff]
    %v2747 = vld [vmem:[#allocation2 + $0xf1] sm:$0xff]
    %v2748 = vld [vmem:[#allocation2 + $0xf9] sm:$0xff]
    %v2749 = vld [vmem:[#allocation2 + $0x109] sm:$0xff]
    %v2750 = vld [vmem:[#allocation2 + $0x111] sm:$0xff]
    %v2751 = vld [vmem:[#allocation2 + $0x121] sm:$0xff]
    %v2752 = vld [vmem:[#allocation2 + $0x129] sm:$0xff]
    %v2753 = vld [vmem:[#allocation2 + $0x139] sm:$0xff]
    %v2754 = vld [vmem:[#allocation2 + $0x141] sm:$0xff]
    %v2755 = vld [vmem:[#allocation2 + $0x151] sm:$0xff]
    %v2756 = vld [vmem:[#allocation2 + $0x159] sm:$0xff]
    %v2757 = vld [vmem:[#allocation2 + $0x169] sm:$0xff]
    %v2758 = vld [vmem:[#allocation2 + $0x171] sm:$0xff]
    %v2759 = vld [vmem:[#allocation2 + $0x1b1] sm:$0xff]
    %v2760 = vld [vmem:[#allocation2 + $0x1b9] sm:$0xff]
    %v2761 = vld [vmem:[#allocation2 + $0x1c9] sm:$0xff]
    %v2762 = vld [vmem:[#allocation2 + $0x1d1] sm:$0xff]
    %v2763 = vld [vmem:[#allocation2 + $0x1e1] sm:$0xff]
    %v2764 = vld [vmem:[#allocation2 + $0x1e9] sm:$0xff]
    %v2765 = vld [vmem:[#allocation2 + $0x1f9] sm:$0xff]
    %v2766 = vld [vmem:[#allocation2 + $0x201] sm:$0xff]
    %v2767 = vld [vmem:[#allocation2 + $0x211] sm:$0xff]
    %v2768 = vld [vmem:[#allocation2 + $0x219] sm:$0xff]
    %v2769 = vld [vmem:[#allocation2 + $0x229] sm:$0xff]
    %v2770 = vld [vmem:[#allocation2 + $0x231] sm:$0xff]
    %v2771 = vld [vmem:[#allocation2 + $0x241] sm:$0xff]
    %v2772 = vld [vmem:[#allocation2 + $0x249] sm:$0xff]
    %v2773 = vld [vmem:[#allocation2 + $0x259] sm:$0xff]
    %v2774 = vld [vmem:[#allocation2 + $0x261] sm:$0xff]
    %v2775 = vld [vmem:[#allocation2 + $0x271] sm:$0xff]
    %v2776 = vld [vmem:[#allocation2 + $0x279] sm:$0xff]
    %v2777 = vld [vmem:[#allocation2 + $0x289] sm:$0xff]
    %v2778 = vld [vmem:[#allocation2 + $0x291] sm:$0xff]
    %v2779 = vld [vmem:[#allocation2 + $0x2a1] sm:$0xff]
    %v2780 = vld [vmem:[#allocation2 + $0x2a9] sm:$0xff]
    %v2781 = vld [vmem:[#allocation2 + $0x2b9] sm:$0xff]
    %v2782 = vld [vmem:[#allocation2 + $0x2c1] sm:$0xff]
    %v2783 = vld [vmem:[#allocation2 + $0x2d1] sm:$0xff]
    %v2784 = vld [vmem:[#allocation2 + $0x2d9] sm:$0xff]
    %v2785 = vld [vmem:[#allocation2 + $0x2e9] sm:$0xff]
    %v2786 = vld [vmem:[#allocation2 + $0x2f1] sm:$0xff]
    %v2787 = vld [vmem:[#allocation2 + $0x301] sm:$0xff]
    %v2788 = vld [vmem:[#allocation2 + $0x309] sm:$0xff]
    %v2789 = vld [vmem:[#allocation2 + $0x319] sm:$0xff]
    %v2790 = vld [vmem:[#allocation2 + $0x321] sm:$0xff]
    %v2791 = vpack.c.bf16 %v2728, %v2727
    %v2792 = vpack.c.bf16 %v2730, %v2729
    %v2793 = vpack.c.bf16 %v2732, %v2731
    %v2794 = vpack.c.bf16 %v2734, %v2733
    %v2795 = vpack.c.bf16 %v2736, %v2735
    %v2796 = vpack.c.bf16 %v2738, %v2737
    %v2797 = vpack.c.bf16 %v2740, %v2739
    %v2798 = vpack.c.bf16 %v2742, %v2741
    %v2799 = vpack.c.bf16 %v2744, %v2743
    %v2800 = vpack.c.bf16 %v2746, %v2745
    %v2801 = vpack.c.bf16 %v2748, %v2747
    %v2802 = vpack.c.bf16 %v2750, %v2749
    %v2803 = vpack.c.bf16 %v2752, %v2751
    %v2804 = vpack.c.bf16 %v2754, %v2753
    %v2805 = vpack.c.bf16 %v2756, %v2755
    %v2806 = vpack.c.bf16 %v2758, %v2757
    %v2807 = vpack.c.bf16 %v2760, %v2759
    %v2808 = vpack.c.bf16 %v2762, %v2761
    %v2809 = vpack.c.bf16 %v2764, %v2763
    %v2810 = vpack.c.bf16 %v2766, %v2765
    %v2811 = vpack.c.bf16 %v2768, %v2767
    %v2812 = vpack.c.bf16 %v2770, %v2769
    %v2813 = vpack.c.bf16 %v2772, %v2771
    %v2814 = vpack.c.bf16 %v2774, %v2773
    %v2815 = vpack.c.bf16 %v2776, %v2775
    %v2816 = vpack.c.bf16 %v2778, %v2777
    %v2817 = vpack.c.bf16 %v2780, %v2779
    %v2818 = vpack.c.bf16 %v2782, %v2781
    %v2819 = vpack.c.bf16 %v2784, %v2783
    %v2820 = vpack.c.bf16 %v2786, %v2785
    %v2821 = vpack.c.bf16 %v2788, %v2787
    %v2822 = vpack.c.bf16 %v2790, %v2789
    %s2823 = scalar_lea.vmem %s4, 64
    %v2824 = vld [vmem:[%s2823] sm:$0xf]
    %v2825 = vld [vmem:[%s2823 + $0x4] sm:$0xf]
    %v2826 = vld [vmem:[%s2823 + $0x8] sm:$0xf]
    %v2827 = vld [vmem:[%s2823 + $0xc] sm:$0xf]
    %v2828 = vld [vmem:[%s2823 + $0x10] sm:$0xf]
    %v2829 = vld [vmem:[%s2823 + $0x14] sm:$0xf]
    %v2830 = vld [vmem:[%s2823 + $0x18] sm:$0xf]
    %v2831 = vld [vmem:[%s2823 + $0x1c] sm:$0xf]
    %v2832 = vld [vmem:[%s2823 + $0x20] sm:$0xf]
    %v2833 = vld [vmem:[%s2823 + $0x24] sm:$0xf]
    %v2834 = vld [vmem:[%s2823 + $0x28] sm:$0xf]
    %v2835 = vld [vmem:[%s2823 + $0x2c] sm:$0xf]
    %v2836 = vld [vmem:[%s2823 + $0x30] sm:$0xf]
    %v2837 = vld [vmem:[%s2823 + $0x34] sm:$0xf]
    %v2838 = vld [vmem:[%s2823 + $0x38] sm:$0xf]
    %v2839 = vld [vmem:[%s2823 + $0x3c] sm:$0xf]
    %v2856 = vunpack.c.l.b16 %v2824
    %v2857 = vunpack.c.l.b16 %v2825
    %v2858 = vunpack.c.l.b16 %v2826
    %v2859 = vunpack.c.l.b16 %v2827
    %v2860 = vunpack.c.l.b16 %v2828
    %v2861 = vunpack.c.l.b16 %v2829
    %v2862 = vunpack.c.l.b16 %v2830
    %v2863 = vunpack.c.l.b16 %v2831
    %v2864 = vunpack.c.l.b16 %v2832
    %v2865 = vunpack.c.l.b16 %v2833
    %v2866 = vunpack.c.l.b16 %v2834
    %v2867 = vunpack.c.l.b16 %v2835
    %v2868 = vunpack.c.l.b16 %v2836
    %v2869 = vunpack.c.l.b16 %v2837
    %v2870 = vunpack.c.l.b16 %v2838
    %v2871 = vunpack.c.l.b16 %v2839
    %v2872 = vpack.c.b16 %v2857, %v2856
    %v2873 = vpack.c.b16 %v2859, %v2858
    %v2874 = vpack.c.b16 %v2861, %v2860
    %v2875 = vpack.c.b16 %v2863, %v2862
    %v2876 = vpack.c.b16 %v2865, %v2864
    %v2877 = vpack.c.b16 %v2867, %v2866
    %v2878 = vpack.c.b16 %v2869, %v2868
    %v2879 = vpack.c.b16 %v2871, %v2870
    %2888 = vmatpush.bf16.msra.mxu0 %v2879
    %2889 = vmatpush.bf16.msra.mxu0 %v2878
    %2890 = vmatpush.bf16.msra.mxu0 %v2877
    %2891 = vmatpush.bf16.msra.mxu0 %v2876
    %2892 = vmatpush.bf16.msra.mxu0 %v2875
    %2893 = vmatpush.bf16.msra.mxu0 %v2874
    %2894 = vmatpush.bf16.msra.mxu0 %v2873
    %2895 = vmatpush.bf16.msra.mxu0 %v2872
    %2896 = vmatmul.bf16.gmra.mxu0 %v2791
    %v2897 = vpop.f32.mrf.mxu0
    %v2898 = vadd.f32 0.0, %v2897
    %v2899 = vpop.f32.mrf.mxu0
    %v2900 = vadd.f32 0.0, %v2899
    %2901 = vmatmul.bf16.gmra.mxu0 %v2792
    %v2902 = vpop.f32.mrf.mxu0
    %v2903 = vadd.f32 0.0, %v2902
    %v2904 = vpop.f32.mrf.mxu0
    %v2905 = vadd.f32 0.0, %v2904
    %2906 = vmatmul.bf16.gmra.mxu0 %v2793
    %v2907 = vpop.f32.mrf.mxu0
    %v2908 = vadd.f32 0.0, %v2907
    %v2909 = vpop.f32.mrf.mxu0
    %v2910 = vadd.f32 0.0, %v2909
    %2911 = vmatmul.bf16.gmra.mxu0 %v2794
    %v2912 = vpop.f32.mrf.mxu0
    %v2913 = vadd.f32 0.0, %v2912
    %v2914 = vpop.f32.mrf.mxu0
    %v2915 = vadd.f32 0.0, %v2914
    %2916 = vmatmul.bf16.gmra.mxu0 %v2795
    %v2917 = vpop.f32.mrf.mxu0
    %v2918 = vadd.f32 0.0, %v2917
    %v2919 = vpop.f32.mrf.mxu0
    %v2920 = vadd.f32 0.0, %v2919
    %2921 = vmatmul.bf16.gmra.mxu0 %v2796
    %v2922 = vpop.f32.mrf.mxu0
    %v2923 = vadd.f32 0.0, %v2922
    %v2924 = vpop.f32.mrf.mxu0
    %v2925 = vadd.f32 0.0, %v2924
    %2926 = vmatmul.bf16.gmra.mxu0 %v2797
    %v2927 = vpop.f32.mrf.mxu0
    %v2928 = vadd.f32 0.0, %v2927
    %v2929 = vpop.f32.mrf.mxu0
    %v2930 = vadd.f32 0.0, %v2929
    %2931 = vmatmul.bf16.gmra.mxu0 %v2798
    %v2932 = vpop.f32.mrf.mxu0
    %v2933 = vadd.f32 0.0, %v2932
    %v2934 = vpop.f32.mrf.mxu0
    %v2935 = vadd.f32 0.0, %v2934
    %2936 = vmatmul.bf16.gmra.mxu0 %v2799
    %v2937 = vpop.f32.mrf.mxu0
    %v2938 = vadd.f32 0.0, %v2937
    %v2939 = vpop.f32.mrf.mxu0
    %v2940 = vadd.f32 0.0, %v2939
    %2941 = vmatmul.bf16.gmra.mxu0 %v2800
    %v2942 = vpop.f32.mrf.mxu0
    %v2943 = vadd.f32 0.0, %v2942
    %v2944 = vpop.f32.mrf.mxu0
    %v2945 = vadd.f32 0.0, %v2944
    %2946 = vmatmul.bf16.gmra.mxu0 %v2801
    %v2947 = vpop.f32.mrf.mxu0
    %v2948 = vadd.f32 0.0, %v2947
    %v2949 = vpop.f32.mrf.mxu0
    %v2950 = vadd.f32 0.0, %v2949
    %2951 = vmatmul.bf16.gmra.mxu0 %v2802
    %v2952 = vpop.f32.mrf.mxu0
    %v2953 = vadd.f32 0.0, %v2952
    %v2954 = vpop.f32.mrf.mxu0
    %v2955 = vadd.f32 0.0, %v2954
    %2956 = vmatmul.bf16.gmra.mxu0 %v2803
    %v2957 = vpop.f32.mrf.mxu0
    %v2958 = vadd.f32 0.0, %v2957
    %v2959 = vpop.f32.mrf.mxu0
    %v2960 = vadd.f32 0.0, %v2959
    %2961 = vmatmul.bf16.gmra.mxu0 %v2804
    %v2962 = vpop.f32.mrf.mxu0
    %v2963 = vadd.f32 0.0, %v2962
    %v2964 = vpop.f32.mrf.mxu0
    %v2965 = vadd.f32 0.0, %v2964
    %2966 = vmatmul.bf16.gmra.mxu0 %v2805
    %v2967 = vpop.f32.mrf.mxu0
    %v2968 = vadd.f32 0.0, %v2967
    %v2969 = vpop.f32.mrf.mxu0
    %v2970 = vadd.f32 0.0, %v2969
    %2971 = vmatmul.bf16.gmra.mxu0 %v2806
    %v2972 = vpop.f32.mrf.mxu0
    %v2973 = vadd.f32 0.0, %v2972
    %v2974 = vpop.f32.mrf.mxu0
    %v2975 = vadd.f32 0.0, %v2974
    %2976 = vmatmul.bf16.gmra.mxu0 %v2807
    %v2977 = vpop.f32.mrf.mxu0
    %v2978 = vadd.f32 0.0, %v2977
    %v2979 = vpop.f32.mrf.mxu0
    %v2980 = vadd.f32 0.0, %v2979
    %2981 = vmatmul.bf16.gmra.mxu0 %v2808
    %v2982 = vpop.f32.mrf.mxu0
    %v2983 = vadd.f32 0.0, %v2982
    %v2984 = vpop.f32.mrf.mxu0
    %v2985 = vadd.f32 0.0, %v2984
    %2986 = vmatmul.bf16.gmra.mxu0 %v2809
    %v2987 = vpop.f32.mrf.mxu0
    %v2988 = vadd.f32 0.0, %v2987
    %v2989 = vpop.f32.mrf.mxu0
    %v2990 = vadd.f32 0.0, %v2989
    %2991 = vmatmul.bf16.gmra.mxu0 %v2810
    %v2992 = vpop.f32.mrf.mxu0
    %v2993 = vadd.f32 0.0, %v2992
    %v2994 = vpop.f32.mrf.mxu0
    %v2995 = vadd.f32 0.0, %v2994
    %2996 = vmatmul.bf16.gmra.mxu0 %v2811
    %v2997 = vpop.f32.mrf.mxu0
    %v2998 = vadd.f32 0.0, %v2997
    %v2999 = vpop.f32.mrf.mxu0
    %v3000 = vadd.f32 0.0, %v2999
    %3001 = vmatmul.bf16.gmra.mxu0 %v2812
    %v3002 = vpop.f32.mrf.mxu0
    %v3003 = vadd.f32 0.0, %v3002
    %v3004 = vpop.f32.mrf.mxu0
    %v3005 = vadd.f32 0.0, %v3004
    %3006 = vmatmul.bf16.gmra.mxu0 %v2813
    %v3007 = vpop.f32.mrf.mxu0
    %v3008 = vadd.f32 0.0, %v3007
    %v3009 = vpop.f32.mrf.mxu0
    %v3010 = vadd.f32 0.0, %v3009
    %3011 = vmatmul.bf16.gmra.mxu0 %v2814
    %v3012 = vpop.f32.mrf.mxu0
    %v3013 = vadd.f32 0.0, %v3012
    %v3014 = vpop.f32.mrf.mxu0
    %v3015 = vadd.f32 0.0, %v3014
    %3016 = vmatmul.bf16.gmra.mxu0 %v2815
    %v3017 = vpop.f32.mrf.mxu0
    %v3018 = vadd.f32 0.0, %v3017
    %v3019 = vpop.f32.mrf.mxu0
    %v3020 = vadd.f32 0.0, %v3019
    %3021 = vmatmul.bf16.gmra.mxu0 %v2816
    %v3022 = vpop.f32.mrf.mxu0
    %v3023 = vadd.f32 0.0, %v3022
    %v3024 = vpop.f32.mrf.mxu0
    %v3025 = vadd.f32 0.0, %v3024
    %3026 = vmatmul.bf16.gmra.mxu0 %v2817
    %v3027 = vpop.f32.mrf.mxu0
    %v3028 = vadd.f32 0.0, %v3027
    %v3029 = vpop.f32.mrf.mxu0
    %v3030 = vadd.f32 0.0, %v3029
    %3031 = vmatmul.bf16.gmra.mxu0 %v2818
    %v3032 = vpop.f32.mrf.mxu0
    %v3033 = vadd.f32 0.0, %v3032
    %v3034 = vpop.f32.mrf.mxu0
    %v3035 = vadd.f32 0.0, %v3034
    %3036 = vmatmul.bf16.gmra.mxu0 %v2819
    %v3037 = vpop.f32.mrf.mxu0
    %v3038 = vadd.f32 0.0, %v3037
    %v3039 = vpop.f32.mrf.mxu0
    %v3040 = vadd.f32 0.0, %v3039
    %3041 = vmatmul.bf16.gmra.mxu0 %v2820
    %v3042 = vpop.f32.mrf.mxu0
    %v3043 = vadd.f32 0.0, %v3042
    %v3044 = vpop.f32.mrf.mxu0
    %v3045 = vadd.f32 0.0, %v3044
    %3046 = vmatmul.bf16.gmra.mxu0 %v2821
    %v3047 = vpop.f32.mrf.mxu0
    %v3048 = vadd.f32 0.0, %v3047
    %v3049 = vpop.f32.mrf.mxu0
    %v3050 = vadd.f32 0.0, %v3049
    %3051 = vmatmul.bf16.gmra.mxu0 %v2822
    %v3052 = vpop.f32.mrf.mxu0
    %v3053 = vadd.f32 0.0, %v3052
    %v3054 = vpop.f32.mrf.mxu0
    %v3055 = vadd.f32 0.0, %v3054
    %3056 = vdwg.mxu0
    %v3073 = vunpack.c.l.b16 %v2711
    %v3074 = vunpack.c.l.b16 %v2712
    %v3075 = vunpack.c.l.b16 %v2713
    %v3076 = vunpack.c.l.b16 %v2714
    %v3077 = vunpack.c.l.b16 %v2715
    %v3078 = vunpack.c.l.b16 %v2716
    %v3079 = vunpack.c.l.b16 %v2717
    %v3080 = vunpack.c.l.b16 %v2718
    %v3081 = vunpack.c.l.b16 %v2719
    %v3082 = vunpack.c.l.b16 %v2720
    %v3083 = vunpack.c.l.b16 %v2721
    %v3084 = vunpack.c.l.b16 %v2722
    %v3085 = vunpack.c.l.b16 %v2723
    %v3086 = vunpack.c.l.b16 %v2724
    %v3087 = vunpack.c.l.b16 %v2725
    %v3088 = vunpack.c.l.b16 %v2726
    %v3089 = vpack.c.b16 %v3074, %v3073
    %v3090 = vpack.c.b16 %v3076, %v3075
    %v3091 = vpack.c.b16 %v3078, %v3077
    %v3092 = vpack.c.b16 %v3080, %v3079
    %v3093 = vpack.c.b16 %v3082, %v3081
    %v3094 = vpack.c.b16 %v3084, %v3083
    %v3095 = vpack.c.b16 %v3086, %v3085
    %v3096 = vpack.c.b16 %v3088, %v3087
    %3105 = vmatpush.bf16.msra.mxu0 %v3096
    %3106 = vmatpush.bf16.msra.mxu0 %v3095
    %3107 = vmatpush.bf16.msra.mxu0 %v3094
    %3108 = vmatpush.bf16.msra.mxu0 %v3093
    %3109 = vmatpush.bf16.msra.mxu0 %v3092
    %3110 = vmatpush.bf16.msra.mxu0 %v3091
    %3111 = vmatpush.bf16.msra.mxu0 %v3090
    %3112 = vmatpush.bf16.msra.mxu0 %v3089
    %3113 = vmatmul.bf16.gmra.mxu0 %v2679
    %v3114 = vpop.f32.mrf.mxu0
    %v3115 = vadd.f32 %v2898, %v3114
    %v3116 = vpop.f32.mrf.mxu0
    %v3117 = vadd.f32 %v2900, %v3116
    %3118 = vmatmul.bf16.gmra.mxu0 %v2680
    %v3119 = vpop.f32.mrf.mxu0
    %v3120 = vadd.f32 %v2903, %v3119
    %v3121 = vpop.f32.mrf.mxu0
    %v3122 = vadd.f32 %v2905, %v3121
    %3123 = vmatmul.bf16.gmra.mxu0 %v2681
    %v3124 = vpop.f32.mrf.mxu0
    %v3125 = vadd.f32 %v2908, %v3124
    %v3126 = vpop.f32.mrf.mxu0
    %v3127 = vadd.f32 %v2910, %v3126
    %3128 = vmatmul.bf16.gmra.mxu0 %v2682
    %v3129 = vpop.f32.mrf.mxu0
    %v3130 = vadd.f32 %v2913, %v3129
    %v3131 = vpop.f32.mrf.mxu0
    %v3132 = vadd.f32 %v2915, %v3131
    %3133 = vmatmul.bf16.gmra.mxu0 %v2683
    %v3134 = vpop.f32.mrf.mxu0
    %v3135 = vadd.f32 %v2918, %v3134
    %v3136 = vpop.f32.mrf.mxu0
    %v3137 = vadd.f32 %v2920, %v3136
    %3138 = vmatmul.bf16.gmra.mxu0 %v2684
    %v3139 = vpop.f32.mrf.mxu0
    %v3140 = vadd.f32 %v2923, %v3139
    %v3141 = vpop.f32.mrf.mxu0
    %v3142 = vadd.f32 %v2925, %v3141
    %3143 = vmatmul.bf16.gmra.mxu0 %v2685
    %v3144 = vpop.f32.mrf.mxu0
    %v3145 = vadd.f32 %v2928, %v3144
    %v3146 = vpop.f32.mrf.mxu0
    %v3147 = vadd.f32 %v2930, %v3146
    %3148 = vmatmul.bf16.gmra.mxu0 %v2686
    %v3149 = vpop.f32.mrf.mxu0
    %v3150 = vadd.f32 %v2933, %v3149
    %v3151 = vpop.f32.mrf.mxu0
    %v3152 = vadd.f32 %v2935, %v3151
    %3153 = vmatmul.bf16.gmra.mxu0 %v2687
    %v3154 = vpop.f32.mrf.mxu0
    %v3155 = vadd.f32 %v2938, %v3154
    %v3156 = vpop.f32.mrf.mxu0
    %v3157 = vadd.f32 %v2940, %v3156
    %3158 = vmatmul.bf16.gmra.mxu0 %v2688
    %v3159 = vpop.f32.mrf.mxu0
    %v3160 = vadd.f32 %v2943, %v3159
    %v3161 = vpop.f32.mrf.mxu0
    %v3162 = vadd.f32 %v2945, %v3161
    %3163 = vmatmul.bf16.gmra.mxu0 %v2689
    %v3164 = vpop.f32.mrf.mxu0
    %v3165 = vadd.f32 %v2948, %v3164
    %v3166 = vpop.f32.mrf.mxu0
    %v3167 = vadd.f32 %v2950, %v3166
    %3168 = vmatmul.bf16.gmra.mxu0 %v2690
    %v3169 = vpop.f32.mrf.mxu0
    %v3170 = vadd.f32 %v2953, %v3169
    %v3171 = vpop.f32.mrf.mxu0
    %v3172 = vadd.f32 %v2955, %v3171
    %3173 = vmatmul.bf16.gmra.mxu0 %v2691
    %v3174 = vpop.f32.mrf.mxu0
    %v3175 = vadd.f32 %v2958, %v3174
    %v3176 = vpop.f32.mrf.mxu0
    %v3177 = vadd.f32 %v2960, %v3176
    %3178 = vmatmul.bf16.gmra.mxu0 %v2692
    %v3179 = vpop.f32.mrf.mxu0
    %v3180 = vadd.f32 %v2963, %v3179
    %v3181 = vpop.f32.mrf.mxu0
    %v3182 = vadd.f32 %v2965, %v3181
    %3183 = vmatmul.bf16.gmra.mxu0 %v2693
    %v3184 = vpop.f32.mrf.mxu0
    %v3185 = vadd.f32 %v2968, %v3184
    %v3186 = vpop.f32.mrf.mxu0
    %v3187 = vadd.f32 %v2970, %v3186
    %3188 = vmatmul.bf16.gmra.mxu0 %v2694
    %v3189 = vpop.f32.mrf.mxu0
    %v3190 = vadd.f32 %v2973, %v3189
    %v3191 = vpop.f32.mrf.mxu0
    %v3192 = vadd.f32 %v2975, %v3191
    %3193 = vmatmul.bf16.gmra.mxu0 %v2695
    %v3194 = vpop.f32.mrf.mxu0
    %v3195 = vadd.f32 %v2978, %v3194
    %v3196 = vpop.f32.mrf.mxu0
    %v3197 = vadd.f32 %v2980, %v3196
    %3198 = vmatmul.bf16.gmra.mxu0 %v2696
    %v3199 = vpop.f32.mrf.mxu0
    %v3200 = vadd.f32 %v2983, %v3199
    %v3201 = vpop.f32.mrf.mxu0
    %v3202 = vadd.f32 %v2985, %v3201
    %3203 = vmatmul.bf16.gmra.mxu0 %v2697
    %v3204 = vpop.f32.mrf.mxu0
    %v3205 = vadd.f32 %v2988, %v3204
    %v3206 = vpop.f32.mrf.mxu0
    %v3207 = vadd.f32 %v2990, %v3206
    %3208 = vmatmul.bf16.gmra.mxu0 %v2698
    %v3209 = vpop.f32.mrf.mxu0
    %v3210 = vadd.f32 %v2993, %v3209
    %v3211 = vpop.f32.mrf.mxu0
    %v3212 = vadd.f32 %v2995, %v3211
    %3213 = vmatmul.bf16.gmra.mxu0 %v2699
    %v3214 = vpop.f32.mrf.mxu0
    %v3215 = vadd.f32 %v2998, %v3214
    %v3216 = vpop.f32.mrf.mxu0
    %v3217 = vadd.f32 %v3000, %v3216
    %3218 = vmatmul.bf16.gmra.mxu0 %v2700
    %v3219 = vpop.f32.mrf.mxu0
    %v3220 = vadd.f32 %v3003, %v3219
    %v3221 = vpop.f32.mrf.mxu0
    %v3222 = vadd.f32 %v3005, %v3221
    %3223 = vmatmul.bf16.gmra.mxu0 %v2701
    %v3224 = vpop.f32.mrf.mxu0
    %v3225 = vadd.f32 %v3008, %v3224
    %v3226 = vpop.f32.mrf.mxu0
    %v3227 = vadd.f32 %v3010, %v3226
    %3228 = vmatmul.bf16.gmra.mxu0 %v2702
    %v3229 = vpop.f32.mrf.mxu0
    %v3230 = vadd.f32 %v3013, %v3229
    %v3231 = vpop.f32.mrf.mxu0
    %v3232 = vadd.f32 %v3015, %v3231
    %3233 = vmatmul.bf16.gmra.mxu0 %v2703
    %v3234 = vpop.f32.mrf.mxu0
    %v3235 = vadd.f32 %v3018, %v3234
    %v3236 = vpop.f32.mrf.mxu0
    %v3237 = vadd.f32 %v3020, %v3236
    %3238 = vmatmul.bf16.gmra.mxu0 %v2704
    %v3239 = vpop.f32.mrf.mxu0
    %v3240 = vadd.f32 %v3023, %v3239
    %v3241 = vpop.f32.mrf.mxu0
    %v3242 = vadd.f32 %v3025, %v3241
    %3243 = vmatmul.bf16.gmra.mxu0 %v2705
    %v3244 = vpop.f32.mrf.mxu0
    %v3245 = vadd.f32 %v3028, %v3244
    %v3246 = vpop.f32.mrf.mxu0
    %v3247 = vadd.f32 %v3030, %v3246
    %3248 = vmatmul.bf16.gmra.mxu0 %v2706
    %v3249 = vpop.f32.mrf.mxu0
    %v3250 = vadd.f32 %v3033, %v3249
    %v3251 = vpop.f32.mrf.mxu0
    %v3252 = vadd.f32 %v3035, %v3251
    %3253 = vmatmul.bf16.gmra.mxu0 %v2707
    %v3254 = vpop.f32.mrf.mxu0
    %v3255 = vadd.f32 %v3038, %v3254
    %v3256 = vpop.f32.mrf.mxu0
    %v3257 = vadd.f32 %v3040, %v3256
    %3258 = vmatmul.bf16.gmra.mxu0 %v2708
    %v3259 = vpop.f32.mrf.mxu0
    %v3260 = vadd.f32 %v3043, %v3259
    %v3261 = vpop.f32.mrf.mxu0
    %v3262 = vadd.f32 %v3045, %v3261
    %3263 = vmatmul.bf16.gmra.mxu0 %v2709
    %v3264 = vpop.f32.mrf.mxu0
    %v3265 = vadd.f32 %v3048, %v3264
    %v3266 = vpop.f32.mrf.mxu0
    %v3267 = vadd.f32 %v3050, %v3266
    %3268 = vmatmul.bf16.gmra.mxu0 %v2710
    %v3269 = vpop.f32.mrf.mxu0
    %v3270 = vadd.f32 %v3053, %v3269
    %v3271 = vpop.f32.mrf.mxu0
    %v3272 = vadd.f32 %v3055, %v3271
    %3273 = vdwg.mxu0
    %v3274 = vld [vmem:[#allocation2 + $0x2] sm:$0xff]
    %v3275 = vld [vmem:[#allocation2 + $0xa] sm:$0xff]
    %v3276 = vld [vmem:[#allocation2 + $0x1a] sm:$0xff]
    %v3277 = vld [vmem:[#allocation2 + $0x22] sm:$0xff]
    %v3278 = vld [vmem:[#allocation2 + $0x32] sm:$0xff]
    %v3279 = vld [vmem:[#allocation2 + $0x3a] sm:$0xff]
    %v3280 = vld [vmem:[#allocation2 + $0x4a] sm:$0xff]
    %v3281 = vld [vmem:[#allocation2 + $0x52] sm:$0xff]
    %v3282 = vld [vmem:[#allocation2 + $0x62] sm:$0xff]
    %v3283 = vld [vmem:[#allocation2 + $0x6a] sm:$0xff]
    %v3284 = vld [vmem:[#allocation2 + $0x7a] sm:$0xff]
    %v3285 = vld [vmem:[#allocation2 + $0x82] sm:$0xff]
    %v3286 = vld [vmem:[#allocation2 + $0x92] sm:$0xff]
    %v3287 = vld [vmem:[#allocation2 + $0x9a] sm:$0xff]
    %v3288 = vld [vmem:[#allocation2 + $0xaa] sm:$0xff]
    %v3289 = vld [vmem:[#allocation2 + $0xb2] sm:$0xff]
    %v3290 = vld [vmem:[#allocation2 + $0xc2] sm:$0xff]
    %v3291 = vld [vmem:[#allocation2 + $0xca] sm:$0xff]
    %v3292 = vld [vmem:[#allocation2 + $0xda] sm:$0xff]
    %v3293 = vld [vmem:[#allocation2 + $0xe2] sm:$0xff]
    %v3294 = vld [vmem:[#allocation2 + $0xf2] sm:$0xff]
    %v3295 = vld [vmem:[#allocation2 + $0xfa] sm:$0xff]
    %v3296 = vld [vmem:[#allocation2 + $0x10a] sm:$0xff]
    %v3297 = vld [vmem:[#allocation2 + $0x112] sm:$0xff]
    %v3298 = vld [vmem:[#allocation2 + $0x122] sm:$0xff]
    %v3299 = vld [vmem:[#allocation2 + $0x12a] sm:$0xff]
    %v3300 = vld [vmem:[#allocation2 + $0x13a] sm:$0xff]
    %v3301 = vld [vmem:[#allocation2 + $0x142] sm:$0xff]
    %v3302 = vld [vmem:[#allocation2 + $0x152] sm:$0xff]
    %v3303 = vld [vmem:[#allocation2 + $0x15a] sm:$0xff]
    %v3304 = vld [vmem:[#allocation2 + $0x16a] sm:$0xff]
    %v3305 = vld [vmem:[#allocation2 + $0x172] sm:$0xff]
    %v3306 = vld [vmem:[#allocation2 + $0x1b2] sm:$0xff]
    %v3307 = vld [vmem:[#allocation2 + $0x1ba] sm:$0xff]
    %v3308 = vld [vmem:[#allocation2 + $0x1ca] sm:$0xff]
    %v3309 = vld [vmem:[#allocation2 + $0x1d2] sm:$0xff]
    %v3310 = vld [vmem:[#allocation2 + $0x1e2] sm:$0xff]
    %v3311 = vld [vmem:[#allocation2 + $0x1ea] sm:$0xff]
    %v3312 = vld [vmem:[#allocation2 + $0x1fa] sm:$0xff]
    %v3313 = vld [vmem:[#allocation2 + $0x202] sm:$0xff]
    %v3314 = vld [vmem:[#allocation2 + $0x212] sm:$0xff]
    %v3315 = vld [vmem:[#allocation2 + $0x21a] sm:$0xff]
    %v3316 = vld [vmem:[#allocation2 + $0x22a] sm:$0xff]
    %v3317 = vld [vmem:[#allocation2 + $0x232] sm:$0xff]
    %v3318 = vld [vmem:[#allocation2 + $0x242] sm:$0xff]
    %v3319 = vld [vmem:[#allocation2 + $0x24a] sm:$0xff]
    %v3320 = vld [vmem:[#allocation2 + $0x25a] sm:$0xff]
    %v3321 = vld [vmem:[#allocation2 + $0x262] sm:$0xff]
    %v3322 = vld [vmem:[#allocation2 + $0x272] sm:$0xff]
    %v3323 = vld [vmem:[#allocation2 + $0x27a] sm:$0xff]
    %v3324 = vld [vmem:[#allocation2 + $0x28a] sm:$0xff]
    %v3325 = vld [vmem:[#allocation2 + $0x292] sm:$0xff]
    %v3326 = vld [vmem:[#allocation2 + $0x2a2] sm:$0xff]
    %v3327 = vld [vmem:[#allocation2 + $0x2aa] sm:$0xff]
    %v3328 = vld [vmem:[#allocation2 + $0x2ba] sm:$0xff]
    %v3329 = vld [vmem:[#allocation2 + $0x2c2] sm:$0xff]
    %v3330 = vld [vmem:[#allocation2 + $0x2d2] sm:$0xff]
    %v3331 = vld [vmem:[#allocation2 + $0x2da] sm:$0xff]
    %v3332 = vld [vmem:[#allocation2 + $0x2ea] sm:$0xff]
    %v3333 = vld [vmem:[#allocation2 + $0x2f2] sm:$0xff]
    %v3334 = vld [vmem:[#allocation2 + $0x302] sm:$0xff]
    %v3335 = vld [vmem:[#allocation2 + $0x30a] sm:$0xff]
    %v3336 = vld [vmem:[#allocation2 + $0x31a] sm:$0xff]
    %v3337 = vld [vmem:[#allocation2 + $0x322] sm:$0xff]
    %v3338 = vpack.c.bf16 %v3275, %v3274
    %v3339 = vpack.c.bf16 %v3277, %v3276
    %v3340 = vpack.c.bf16 %v3279, %v3278
    %v3341 = vpack.c.bf16 %v3281, %v3280
    %v3342 = vpack.c.bf16 %v3283, %v3282
    %v3343 = vpack.c.bf16 %v3285, %v3284
    %v3344 = vpack.c.bf16 %v3287, %v3286
    %v3345 = vpack.c.bf16 %v3289, %v3288
    %v3346 = vpack.c.bf16 %v3291, %v3290
    %v3347 = vpack.c.bf16 %v3293, %v3292
    %v3348 = vpack.c.bf16 %v3295, %v3294
    %v3349 = vpack.c.bf16 %v3297, %v3296
    %v3350 = vpack.c.bf16 %v3299, %v3298
    %v3351 = vpack.c.bf16 %v3301, %v3300
    %v3352 = vpack.c.bf16 %v3303, %v3302
    %v3353 = vpack.c.bf16 %v3305, %v3304
    %v3354 = vpack.c.bf16 %v3307, %v3306
    %v3355 = vpack.c.bf16 %v3309, %v3308
    %v3356 = vpack.c.bf16 %v3311, %v3310
    %v3357 = vpack.c.bf16 %v3313, %v3312
    %v3358 = vpack.c.bf16 %v3315, %v3314
    %v3359 = vpack.c.bf16 %v3317, %v3316
    %v3360 = vpack.c.bf16 %v3319, %v3318
    %v3361 = vpack.c.bf16 %v3321, %v3320
    %v3362 = vpack.c.bf16 %v3323, %v3322
    %v3363 = vpack.c.bf16 %v3325, %v3324
    %v3364 = vpack.c.bf16 %v3327, %v3326
    %v3365 = vpack.c.bf16 %v3329, %v3328
    %v3366 = vpack.c.bf16 %v3331, %v3330
    %v3367 = vpack.c.bf16 %v3333, %v3332
    %v3368 = vpack.c.bf16 %v3335, %v3334
    %v3369 = vpack.c.bf16 %v3337, %v3336
    %s3370 = scalar_lea.vmem %s4, 128
    %v3371 = vld [vmem:[%s3370] sm:$0xf]
    %v3372 = vld [vmem:[%s3370 + $0x4] sm:$0xf]
    %v3373 = vld [vmem:[%s3370 + $0x8] sm:$0xf]
    %v3374 = vld [vmem:[%s3370 + $0xc] sm:$0xf]
    %v3375 = vld [vmem:[%s3370 + $0x10] sm:$0xf]
    %v3376 = vld [vmem:[%s3370 + $0x14] sm:$0xf]
    %v3377 = vld [vmem:[%s3370 + $0x18] sm:$0xf]
    %v3378 = vld [vmem:[%s3370 + $0x1c] sm:$0xf]
    %v3379 = vld [vmem:[%s3370 + $0x20] sm:$0xf]
    %v3380 = vld [vmem:[%s3370 + $0x24] sm:$0xf]
    %v3381 = vld [vmem:[%s3370 + $0x28] sm:$0xf]
    %v3382 = vld [vmem:[%s3370 + $0x2c] sm:$0xf]
    %v3383 = vld [vmem:[%s3370 + $0x30] sm:$0xf]
    %v3384 = vld [vmem:[%s3370 + $0x34] sm:$0xf]
    %v3385 = vld [vmem:[%s3370 + $0x38] sm:$0xf]
    %v3386 = vld [vmem:[%s3370 + $0x3c] sm:$0xf]
    %v3403 = vunpack.c.l.b16 %v3371
    %v3404 = vunpack.c.l.b16 %v3372
    %v3405 = vunpack.c.l.b16 %v3373
    %v3406 = vunpack.c.l.b16 %v3374
    %v3407 = vunpack.c.l.b16 %v3375
    %v3408 = vunpack.c.l.b16 %v3376
    %v3409 = vunpack.c.l.b16 %v3377
    %v3410 = vunpack.c.l.b16 %v3378
    %v3411 = vunpack.c.l.b16 %v3379
    %v3412 = vunpack.c.l.b16 %v3380
    %v3413 = vunpack.c.l.b16 %v3381
    %v3414 = vunpack.c.l.b16 %v3382
    %v3415 = vunpack.c.l.b16 %v3383
    %v3416 = vunpack.c.l.b16 %v3384
    %v3417 = vunpack.c.l.b16 %v3385
    %v3418 = vunpack.c.l.b16 %v3386
    %v3419 = vpack.c.b16 %v3404, %v3403
    %v3420 = vpack.c.b16 %v3406, %v3405
    %v3421 = vpack.c.b16 %v3408, %v3407
    %v3422 = vpack.c.b16 %v3410, %v3409
    %v3423 = vpack.c.b16 %v3412, %v3411
    %v3424 = vpack.c.b16 %v3414, %v3413
    %v3425 = vpack.c.b16 %v3416, %v3415
    %v3426 = vpack.c.b16 %v3418, %v3417
    %3435 = vmatpush.bf16.msra.mxu0 %v3426
    %3436 = vmatpush.bf16.msra.mxu0 %v3425
    %3437 = vmatpush.bf16.msra.mxu0 %v3424
    %3438 = vmatpush.bf16.msra.mxu0 %v3423
    %3439 = vmatpush.bf16.msra.mxu0 %v3422
    %3440 = vmatpush.bf16.msra.mxu0 %v3421
    %3441 = vmatpush.bf16.msra.mxu0 %v3420
    %3442 = vmatpush.bf16.msra.mxu0 %v3419
    %3443 = vmatmul.bf16.gmra.mxu0 %v3338
    %v3444 = vpop.f32.mrf.mxu0
    %v3445 = vadd.f32 0.0, %v3444
    %v3446 = vpop.f32.mrf.mxu0
    %v3447 = vadd.f32 0.0, %v3446
    %3448 = vmatmul.bf16.gmra.mxu0 %v3339
    %v3449 = vpop.f32.mrf.mxu0
    %v3450 = vadd.f32 0.0, %v3449
    %v3451 = vpop.f32.mrf.mxu0
    %v3452 = vadd.f32 0.0, %v3451
    %3453 = vmatmul.bf16.gmra.mxu0 %v3340
    %v3454 = vpop.f32.mrf.mxu0
    %v3455 = vadd.f32 0.0, %v3454
    %v3456 = vpop.f32.mrf.mxu0
    %v3457 = vadd.f32 0.0, %v3456
    %3458 = vmatmul.bf16.gmra.mxu0 %v3341
    %v3459 = vpop.f32.mrf.mxu0
    %v3460 = vadd.f32 0.0, %v3459
    %v3461 = vpop.f32.mrf.mxu0
    %v3462 = vadd.f32 0.0, %v3461
    %3463 = vmatmul.bf16.gmra.mxu0 %v3342
    %v3464 = vpop.f32.mrf.mxu0
    %v3465 = vadd.f32 0.0, %v3464
    %v3466 = vpop.f32.mrf.mxu0
    %v3467 = vadd.f32 0.0, %v3466
    %3468 = vmatmul.bf16.gmra.mxu0 %v3343
    %v3469 = vpop.f32.mrf.mxu0
    %v3470 = vadd.f32 0.0, %v3469
    %v3471 = vpop.f32.mrf.mxu0
    %v3472 = vadd.f32 0.0, %v3471
    %3473 = vmatmul.bf16.gmra.mxu0 %v3344
    %v3474 = vpop.f32.mrf.mxu0
    %v3475 = vadd.f32 0.0, %v3474
    %v3476 = vpop.f32.mrf.mxu0
    %v3477 = vadd.f32 0.0, %v3476
    %3478 = vmatmul.bf16.gmra.mxu0 %v3345
    %v3479 = vpop.f32.mrf.mxu0
    %v3480 = vadd.f32 0.0, %v3479
    %v3481 = vpop.f32.mrf.mxu0
    %v3482 = vadd.f32 0.0, %v3481
    %3483 = vmatmul.bf16.gmra.mxu0 %v3346
    %v3484 = vpop.f32.mrf.mxu0
    %v3485 = vadd.f32 0.0, %v3484
    %v3486 = vpop.f32.mrf.mxu0
    %v3487 = vadd.f32 0.0, %v3486
    %3488 = vmatmul.bf16.gmra.mxu0 %v3347
    %v3489 = vpop.f32.mrf.mxu0
    %v3490 = vadd.f32 0.0, %v3489
    %v3491 = vpop.f32.mrf.mxu0
    %v3492 = vadd.f32 0.0, %v3491
    %3493 = vmatmul.bf16.gmra.mxu0 %v3348
    %v3494 = vpop.f32.mrf.mxu0
    %v3495 = vadd.f32 0.0, %v3494
    %v3496 = vpop.f32.mrf.mxu0
    %v3497 = vadd.f32 0.0, %v3496
    %3498 = vmatmul.bf16.gmra.mxu0 %v3349
    %v3499 = vpop.f32.mrf.mxu0
    %v3500 = vadd.f32 0.0, %v3499
    %v3501 = vpop.f32.mrf.mxu0
    %v3502 = vadd.f32 0.0, %v3501
    %3503 = vmatmul.bf16.gmra.mxu0 %v3350
    %v3504 = vpop.f32.mrf.mxu0
    %v3505 = vadd.f32 0.0, %v3504
    %v3506 = vpop.f32.mrf.mxu0
    %v3507 = vadd.f32 0.0, %v3506
    %3508 = vmatmul.bf16.gmra.mxu0 %v3351
    %v3509 = vpop.f32.mrf.mxu0
    %v3510 = vadd.f32 0.0, %v3509
    %v3511 = vpop.f32.mrf.mxu0
    %v3512 = vadd.f32 0.0, %v3511
    %3513 = vmatmul.bf16.gmra.mxu0 %v3352
    %v3514 = vpop.f32.mrf.mxu0
    %v3515 = vadd.f32 0.0, %v3514
    %v3516 = vpop.f32.mrf.mxu0
    %v3517 = vadd.f32 0.0, %v3516
    %3518 = vmatmul.bf16.gmra.mxu0 %v3353
    %v3519 = vpop.f32.mrf.mxu0
    %v3520 = vadd.f32 0.0, %v3519
    %v3521 = vpop.f32.mrf.mxu0
    %v3522 = vadd.f32 0.0, %v3521
    %3523 = vmatmul.bf16.gmra.mxu0 %v3354
    %v3524 = vpop.f32.mrf.mxu0
    %v3525 = vadd.f32 0.0, %v3524
    %v3526 = vpop.f32.mrf.mxu0
    %v3527 = vadd.f32 0.0, %v3526
    %3528 = vmatmul.bf16.gmra.mxu0 %v3355
    %v3529 = vpop.f32.mrf.mxu0
    %v3530 = vadd.f32 0.0, %v3529
    %v3531 = vpop.f32.mrf.mxu0
    %v3532 = vadd.f32 0.0, %v3531
    %3533 = vmatmul.bf16.gmra.mxu0 %v3356
    %v3534 = vpop.f32.mrf.mxu0
    %v3535 = vadd.f32 0.0, %v3534
    %v3536 = vpop.f32.mrf.mxu0
    %v3537 = vadd.f32 0.0, %v3536
    %3538 = vmatmul.bf16.gmra.mxu0 %v3357
    %v3539 = vpop.f32.mrf.mxu0
    %v3540 = vadd.f32 0.0, %v3539
    %v3541 = vpop.f32.mrf.mxu0
    %v3542 = vadd.f32 0.0, %v3541
    %3543 = vmatmul.bf16.gmra.mxu0 %v3358
    %v3544 = vpop.f32.mrf.mxu0
    %v3545 = vadd.f32 0.0, %v3544
    %v3546 = vpop.f32.mrf.mxu0
    %v3547 = vadd.f32 0.0, %v3546
    %3548 = vmatmul.bf16.gmra.mxu0 %v3359
    %v3549 = vpop.f32.mrf.mxu0
    %v3550 = vadd.f32 0.0, %v3549
    %v3551 = vpop.f32.mrf.mxu0
    %v3552 = vadd.f32 0.0, %v3551
    %3553 = vmatmul.bf16.gmra.mxu0 %v3360
    %v3554 = vpop.f32.mrf.mxu0
    %v3555 = vadd.f32 0.0, %v3554
    %v3556 = vpop.f32.mrf.mxu0
    %v3557 = vadd.f32 0.0, %v3556
    %3558 = vmatmul.bf16.gmra.mxu0 %v3361
    %v3559 = vpop.f32.mrf.mxu0
    %v3560 = vadd.f32 0.0, %v3559
    %v3561 = vpop.f32.mrf.mxu0
    %v3562 = vadd.f32 0.0, %v3561
    %3563 = vmatmul.bf16.gmra.mxu0 %v3362
    %v3564 = vpop.f32.mrf.mxu0
    %v3565 = vadd.f32 0.0, %v3564
    %v3566 = vpop.f32.mrf.mxu0
    %v3567 = vadd.f32 0.0, %v3566
    %3568 = vmatmul.bf16.gmra.mxu0 %v3363
    %v3569 = vpop.f32.mrf.mxu0
    %v3570 = vadd.f32 0.0, %v3569
    %v3571 = vpop.f32.mrf.mxu0
    %v3572 = vadd.f32 0.0, %v3571
    %3573 = vmatmul.bf16.gmra.mxu0 %v3364
    %v3574 = vpop.f32.mrf.mxu0
    %v3575 = vadd.f32 0.0, %v3574
    %v3576 = vpop.f32.mrf.mxu0
    %v3577 = vadd.f32 0.0, %v3576
    %3578 = vmatmul.bf16.gmra.mxu0 %v3365
    %v3579 = vpop.f32.mrf.mxu0
    %v3580 = vadd.f32 0.0, %v3579
    %v3581 = vpop.f32.mrf.mxu0
    %v3582 = vadd.f32 0.0, %v3581
    %3583 = vmatmul.bf16.gmra.mxu0 %v3366
    %v3584 = vpop.f32.mrf.mxu0
    %v3585 = vadd.f32 0.0, %v3584
    %v3586 = vpop.f32.mrf.mxu0
    %v3587 = vadd.f32 0.0, %v3586
    %3588 = vmatmul.bf16.gmra.mxu0 %v3367
    %v3589 = vpop.f32.mrf.mxu0
    %v3590 = vadd.f32 0.0, %v3589
    %v3591 = vpop.f32.mrf.mxu0
    %v3592 = vadd.f32 0.0, %v3591
    %3593 = vmatmul.bf16.gmra.mxu0 %v3368
    %v3594 = vpop.f32.mrf.mxu0
    %v3595 = vadd.f32 0.0, %v3594
    %v3596 = vpop.f32.mrf.mxu0
    %v3597 = vadd.f32 0.0, %v3596
    %3598 = vmatmul.bf16.gmra.mxu0 %v3369
    %v3599 = vpop.f32.mrf.mxu0
    %v3600 = vadd.f32 0.0, %v3599
    %v3601 = vpop.f32.mrf.mxu0
    %v3602 = vadd.f32 0.0, %v3601
    %3603 = vdwg.mxu0
    %v3604 = vadd.f32 %v3115, %v3445
    %v3605 = vadd.f32 %v3117, %v3447
    %v3606 = vadd.f32 %v3120, %v3450
    %v3607 = vadd.f32 %v3122, %v3452
    %v3608 = vadd.f32 %v3125, %v3455
    %v3609 = vadd.f32 %v3127, %v3457
    %v3610 = vadd.f32 %v3130, %v3460
    %v3611 = vadd.f32 %v3132, %v3462
    %v3612 = vadd.f32 %v3135, %v3465
    %v3613 = vadd.f32 %v3137, %v3467
    %v3614 = vadd.f32 %v3140, %v3470
    %v3615 = vadd.f32 %v3142, %v3472
    %v3616 = vadd.f32 %v3145, %v3475
    %v3617 = vadd.f32 %v3147, %v3477
    %v3618 = vadd.f32 %v3150, %v3480
    %v3619 = vadd.f32 %v3152, %v3482
    %v3620 = vadd.f32 %v3155, %v3485
    %v3621 = vadd.f32 %v3157, %v3487
    %v3622 = vadd.f32 %v3160, %v3490
    %v3623 = vadd.f32 %v3162, %v3492
    %v3624 = vadd.f32 %v3165, %v3495
    %v3625 = vadd.f32 %v3167, %v3497
    %v3626 = vadd.f32 %v3170, %v3500
    %v3627 = vadd.f32 %v3172, %v3502
    %v3628 = vadd.f32 %v3175, %v3505
    %v3629 = vadd.f32 %v3177, %v3507
    %v3630 = vadd.f32 %v3180, %v3510
    %v3631 = vadd.f32 %v3182, %v3512
    %v3632 = vadd.f32 %v3185, %v3515
    %v3633 = vadd.f32 %v3187, %v3517
    %v3634 = vadd.f32 %v3190, %v3520
    %v3635 = vadd.f32 %v3192, %v3522
    %v3636 = vadd.f32 %v3195, %v3525
    %v3637 = vadd.f32 %v3197, %v3527
    %v3638 = vadd.f32 %v3200, %v3530
    %v3639 = vadd.f32 %v3202, %v3532
    %v3640 = vadd.f32 %v3205, %v3535
    %v3641 = vadd.f32 %v3207, %v3537
    %v3642 = vadd.f32 %v3210, %v3540
    %v3643 = vadd.f32 %v3212, %v3542
    %v3644 = vadd.f32 %v3215, %v3545
    %v3645 = vadd.f32 %v3217, %v3547
    %v3646 = vadd.f32 %v3220, %v3550
    %v3647 = vadd.f32 %v3222, %v3552
    %v3648 = vadd.f32 %v3225, %v3555
    %v3649 = vadd.f32 %v3227, %v3557
    %v3650 = vadd.f32 %v3230, %v3560
    %v3651 = vadd.f32 %v3232, %v3562
    %v3652 = vadd.f32 %v3235, %v3565
    %v3653 = vadd.f32 %v3237, %v3567
    %v3654 = vadd.f32 %v3240, %v3570
    %v3655 = vadd.f32 %v3242, %v3572
    %v3656 = vadd.f32 %v3245, %v3575
    %v3657 = vadd.f32 %v3247, %v3577
    %v3658 = vadd.f32 %v3250, %v3580
    %v3659 = vadd.f32 %v3252, %v3582
    %v3660 = vadd.f32 %v3255, %v3585
    %v3661 = vadd.f32 %v3257, %v3587
    %v3662 = vadd.f32 %v3260, %v3590
    %v3663 = vadd.f32 %v3262, %v3592
    %v3664 = vadd.f32 %v3265, %v3595
    %v3665 = vadd.f32 %v3267, %v3597
    %v3666 = vadd.f32 %v3270, %v3600
    %v3667 = vadd.f32 %v3272, %v3602
    %v3668 = vld [vmem:[%s2542] sm:$0xff]
    %v3669 = vld [vmem:[%s2542 + $0x8] sm:$0xff]
    %v3670 = vld [vmem:[%s2542 + $0x18] sm:$0xff]
    %v3671 = vld [vmem:[%s2542 + $0x20] sm:$0xff]
    %v3672 = vld [vmem:[%s2542 + $0x30] sm:$0xff]
    %v3673 = vld [vmem:[%s2542 + $0x38] sm:$0xff]
    %v3674 = vld [vmem:[%s2542 + $0x48] sm:$0xff]
    %v3675 = vld [vmem:[%s2542 + $0x50] sm:$0xff]
    %v3676 = vld [vmem:[%s2542 + $0x60] sm:$0xff]
    %v3677 = vld [vmem:[%s2542 + $0x68] sm:$0xff]
    %v3678 = vld [vmem:[%s2542 + $0x78] sm:$0xff]
    %v3679 = vld [vmem:[%s2542 + $0x80] sm:$0xff]
    %v3680 = vld [vmem:[%s2542 + $0x90] sm:$0xff]
    %v3681 = vld [vmem:[%s2542 + $0x98] sm:$0xff]
    %v3682 = vld [vmem:[%s2542 + $0xa8] sm:$0xff]
    %v3683 = vld [vmem:[%s2542 + $0xb0] sm:$0xff]
    %v3684 = vld [vmem:[%s2542 + $0xc0] sm:$0xff]
    %v3685 = vld [vmem:[%s2542 + $0xc8] sm:$0xff]
    %v3686 = vld [vmem:[%s2542 + $0xd8] sm:$0xff]
    %v3687 = vld [vmem:[%s2542 + $0xe0] sm:$0xff]
    %v3688 = vld [vmem:[%s2542 + $0xf0] sm:$0xff]
    %v3689 = vld [vmem:[%s2542 + $0xf8] sm:$0xff]
    %v3690 = vld [vmem:[%s2542 + $0x108] sm:$0xff]
    %v3691 = vld [vmem:[%s2542 + $0x110] sm:$0xff]
    %v3692 = vld [vmem:[%s2542 + $0x120] sm:$0xff]
    %v3693 = vld [vmem:[%s2542 + $0x128] sm:$0xff]
    %v3694 = vld [vmem:[%s2542 + $0x138] sm:$0xff]
    %v3695 = vld [vmem:[%s2542 + $0x140] sm:$0xff]
    %v3696 = vld [vmem:[%s2542 + $0x150] sm:$0xff]
    %v3697 = vld [vmem:[%s2542 + $0x158] sm:$0xff]
    %v3698 = vld [vmem:[%s2542 + $0x168] sm:$0xff]
    %v3699 = vld [vmem:[%s2542 + $0x170] sm:$0xff]
    %v3700 = vld [vmem:[%s2542 + $0x1b0] sm:$0xff]
    %v3701 = vld [vmem:[%s2542 + $0x1b8] sm:$0xff]
    %v3702 = vld [vmem:[%s2542 + $0x1c8] sm:$0xff]
    %v3703 = vld [vmem:[%s2542 + $0x1d0] sm:$0xff]
    %v3704 = vld [vmem:[%s2542 + $0x1e0] sm:$0xff]
    %v3705 = vld [vmem:[%s2542 + $0x1e8] sm:$0xff]
    %v3706 = vld [vmem:[%s2542 + $0x1f8] sm:$0xff]
    %v3707 = vld [vmem:[%s2542 + $0x200] sm:$0xff]
    %v3708 = vld [vmem:[%s2542 + $0x210] sm:$0xff]
    %v3709 = vld [vmem:[%s2542 + $0x218] sm:$0xff]
    %v3710 = vld [vmem:[%s2542 + $0x228] sm:$0xff]
    %v3711 = vld [vmem:[%s2542 + $0x230] sm:$0xff]
    %v3712 = vld [vmem:[%s2542 + $0x240] sm:$0xff]
    %v3713 = vld [vmem:[%s2542 + $0x248] sm:$0xff]
    %v3714 = vld [vmem:[%s2542 + $0x258] sm:$0xff]
    %v3715 = vld [vmem:[%s2542 + $0x260] sm:$0xff]
    %v3716 = vld [vmem:[%s2542 + $0x270] sm:$0xff]
    %v3717 = vld [vmem:[%s2542 + $0x278] sm:$0xff]
    %v3718 = vld [vmem:[%s2542 + $0x288] sm:$0xff]
    %v3719 = vld [vmem:[%s2542 + $0x290] sm:$0xff]
    %v3720 = vld [vmem:[%s2542 + $0x2a0] sm:$0xff]
    %v3721 = vld [vmem:[%s2542 + $0x2a8] sm:$0xff]
    %v3722 = vld [vmem:[%s2542 + $0x2b8] sm:$0xff]
    %v3723 = vld [vmem:[%s2542 + $0x2c0] sm:$0xff]
    %v3724 = vld [vmem:[%s2542 + $0x2d0] sm:$0xff]
    %v3725 = vld [vmem:[%s2542 + $0x2d8] sm:$0xff]
    %v3726 = vld [vmem:[%s2542 + $0x2e8] sm:$0xff]
    %v3727 = vld [vmem:[%s2542 + $0x2f0] sm:$0xff]
    %v3728 = vld [vmem:[%s2542 + $0x300] sm:$0xff]
    %v3729 = vld [vmem:[%s2542 + $0x308] sm:$0xff]
    %v3730 = vld [vmem:[%s2542 + $0x318] sm:$0xff]
    %v3731 = vld [vmem:[%s2542 + $0x320] sm:$0xff]
    %v3732 = vpack.c.bf16 %v3669, %v3668
    %v3733 = vpack.c.bf16 %v3671, %v3670
    %v3734 = vpack.c.bf16 %v3673, %v3672
    %v3735 = vpack.c.bf16 %v3675, %v3674
    %v3736 = vpack.c.bf16 %v3677, %v3676
    %v3737 = vpack.c.bf16 %v3679, %v3678
    %v3738 = vpack.c.bf16 %v3681, %v3680
    %v3739 = vpack.c.bf16 %v3683, %v3682
    %v3740 = vpack.c.bf16 %v3685, %v3684
    %v3741 = vpack.c.bf16 %v3687, %v3686
    %v3742 = vpack.c.bf16 %v3689, %v3688
    %v3743 = vpack.c.bf16 %v3691, %v3690
    %v3744 = vpack.c.bf16 %v3693, %v3692
    %v3745 = vpack.c.bf16 %v3695, %v3694
    %v3746 = vpack.c.bf16 %v3697, %v3696
    %v3747 = vpack.c.bf16 %v3699, %v3698
    %v3748 = vpack.c.bf16 %v3701, %v3700
    %v3749 = vpack.c.bf16 %v3703, %v3702
    %v3750 = vpack.c.bf16 %v3705, %v3704
    %v3751 = vpack.c.bf16 %v3707, %v3706
    %v3752 = vpack.c.bf16 %v3709, %v3708
    %v3753 = vpack.c.bf16 %v3711, %v3710
    %v3754 = vpack.c.bf16 %v3713, %v3712
    %v3755 = vpack.c.bf16 %v3715, %v3714
    %v3756 = vpack.c.bf16 %v3717, %v3716
    %v3757 = vpack.c.bf16 %v3719, %v3718
    %v3758 = vpack.c.bf16 %v3721, %v3720
    %v3759 = vpack.c.bf16 %v3723, %v3722
    %v3760 = vpack.c.bf16 %v3725, %v3724
    %v3761 = vpack.c.bf16 %v3727, %v3726
    %v3762 = vpack.c.bf16 %v3729, %v3728
    %v3763 = vpack.c.bf16 %v3731, %v3730
    %s3764 = scalar_lea.vmem %s4, 192
    %v3765 = vld [vmem:[%s3764] sm:$0xf]
    %v3766 = vld [vmem:[%s3764 + $0x4] sm:$0xf]
    %v3767 = vld [vmem:[%s3764 + $0x8] sm:$0xf]
    %v3768 = vld [vmem:[%s3764 + $0xc] sm:$0xf]
    %v3769 = vld [vmem:[%s3764 + $0x10] sm:$0xf]
    %v3770 = vld [vmem:[%s3764 + $0x14] sm:$0xf]
    %v3771 = vld [vmem:[%s3764 + $0x18] sm:$0xf]
    %v3772 = vld [vmem:[%s3764 + $0x1c] sm:$0xf]
    %v3773 = vld [vmem:[%s3764 + $0x20] sm:$0xf]
    %v3774 = vld [vmem:[%s3764 + $0x24] sm:$0xf]
    %v3775 = vld [vmem:[%s3764 + $0x28] sm:$0xf]
    %v3776 = vld [vmem:[%s3764 + $0x2c] sm:$0xf]
    %v3777 = vld [vmem:[%s3764 + $0x30] sm:$0xf]
    %v3778 = vld [vmem:[%s3764 + $0x34] sm:$0xf]
    %v3779 = vld [vmem:[%s3764 + $0x38] sm:$0xf]
    %v3780 = vld [vmem:[%s3764 + $0x3c] sm:$0xf]
    %v3797 = vunpack.c.l.b16 %v3765
    %v3798 = vunpack.c.l.b16 %v3766
    %v3799 = vunpack.c.l.b16 %v3767
    %v3800 = vunpack.c.l.b16 %v3768
    %v3801 = vunpack.c.l.b16 %v3769
    %v3802 = vunpack.c.l.b16 %v3770
    %v3803 = vunpack.c.l.b16 %v3771
    %v3804 = vunpack.c.l.b16 %v3772
    %v3805 = vunpack.c.l.b16 %v3773
    %v3806 = vunpack.c.l.b16 %v3774
    %v3807 = vunpack.c.l.b16 %v3775
    %v3808 = vunpack.c.l.b16 %v3776
    %v3809 = vunpack.c.l.b16 %v3777
    %v3810 = vunpack.c.l.b16 %v3778
    %v3811 = vunpack.c.l.b16 %v3779
    %v3812 = vunpack.c.l.b16 %v3780
    %v3813 = vpack.c.b16 %v3798, %v3797
    %v3814 = vpack.c.b16 %v3800, %v3799
    %v3815 = vpack.c.b16 %v3802, %v3801
    %v3816 = vpack.c.b16 %v3804, %v3803
    %v3817 = vpack.c.b16 %v3806, %v3805
    %v3818 = vpack.c.b16 %v3808, %v3807
    %v3819 = vpack.c.b16 %v3810, %v3809
    %v3820 = vpack.c.b16 %v3812, %v3811
    %3829 = vmatpush.bf16.msra.mxu0 %v3820
    %3830 = vmatpush.bf16.msra.mxu0 %v3819
    %3831 = vmatpush.bf16.msra.mxu0 %v3818
    %3832 = vmatpush.bf16.msra.mxu0 %v3817
    %3833 = vmatpush.bf16.msra.mxu0 %v3816
    %3834 = vmatpush.bf16.msra.mxu0 %v3815
    %3835 = vmatpush.bf16.msra.mxu0 %v3814
    %3836 = vmatpush.bf16.msra.mxu0 %v3813
    %3837 = vmatmul.bf16.gmra.mxu0 %v3732
    %v3838 = vpop.f32.mrf.mxu0
    %v3839 = vadd.f32 0.0, %v3838
    %v3840 = vpop.f32.mrf.mxu0
    %v3841 = vadd.f32 0.0, %v3840
    %3842 = vmatmul.bf16.gmra.mxu0 %v3733
    %v3843 = vpop.f32.mrf.mxu0
    %v3844 = vadd.f32 0.0, %v3843
    %v3845 = vpop.f32.mrf.mxu0
    %v3846 = vadd.f32 0.0, %v3845
    %3847 = vmatmul.bf16.gmra.mxu0 %v3734
    %v3848 = vpop.f32.mrf.mxu0
    %v3849 = vadd.f32 0.0, %v3848
    %v3850 = vpop.f32.mrf.mxu0
    %v3851 = vadd.f32 0.0, %v3850
    %3852 = vmatmul.bf16.gmra.mxu0 %v3735
    %v3853 = vpop.f32.mrf.mxu0
    %v3854 = vadd.f32 0.0, %v3853
    %v3855 = vpop.f32.mrf.mxu0
    %v3856 = vadd.f32 0.0, %v3855
    %3857 = vmatmul.bf16.gmra.mxu0 %v3736
    %v3858 = vpop.f32.mrf.mxu0
    %v3859 = vadd.f32 0.0, %v3858
    %v3860 = vpop.f32.mrf.mxu0
    %v3861 = vadd.f32 0.0, %v3860
    %3862 = vmatmul.bf16.gmra.mxu0 %v3737
    %v3863 = vpop.f32.mrf.mxu0
    %v3864 = vadd.f32 0.0, %v3863
    %v3865 = vpop.f32.mrf.mxu0
    %v3866 = vadd.f32 0.0, %v3865
    %3867 = vmatmul.bf16.gmra.mxu0 %v3738
    %v3868 = vpop.f32.mrf.mxu0
    %v3869 = vadd.f32 0.0, %v3868
    %v3870 = vpop.f32.mrf.mxu0
    %v3871 = vadd.f32 0.0, %v3870
    %3872 = vmatmul.bf16.gmra.mxu0 %v3739
    %v3873 = vpop.f32.mrf.mxu0
    %v3874 = vadd.f32 0.0, %v3873
    %v3875 = vpop.f32.mrf.mxu0
    %v3876 = vadd.f32 0.0, %v3875
    %3877 = vmatmul.bf16.gmra.mxu0 %v3740
    %v3878 = vpop.f32.mrf.mxu0
    %v3879 = vadd.f32 0.0, %v3878
    %v3880 = vpop.f32.mrf.mxu0
    %v3881 = vadd.f32 0.0, %v3880
    %3882 = vmatmul.bf16.gmra.mxu0 %v3741
    %v3883 = vpop.f32.mrf.mxu0
    %v3884 = vadd.f32 0.0, %v3883
    %v3885 = vpop.f32.mrf.mxu0
    %v3886 = vadd.f32 0.0, %v3885
    %3887 = vmatmul.bf16.gmra.mxu0 %v3742
    %v3888 = vpop.f32.mrf.mxu0
    %v3889 = vadd.f32 0.0, %v3888
    %v3890 = vpop.f32.mrf.mxu0
    %v3891 = vadd.f32 0.0, %v3890
    %3892 = vmatmul.bf16.gmra.mxu0 %v3743
    %v3893 = vpop.f32.mrf.mxu0
    %v3894 = vadd.f32 0.0, %v3893
    %v3895 = vpop.f32.mrf.mxu0
    %v3896 = vadd.f32 0.0, %v3895
    %3897 = vmatmul.bf16.gmra.mxu0 %v3744
    %v3898 = vpop.f32.mrf.mxu0
    %v3899 = vadd.f32 0.0, %v3898
    %v3900 = vpop.f32.mrf.mxu0
    %v3901 = vadd.f32 0.0, %v3900
    %3902 = vmatmul.bf16.gmra.mxu0 %v3745
    %v3903 = vpop.f32.mrf.mxu0
    %v3904 = vadd.f32 0.0, %v3903
    %v3905 = vpop.f32.mrf.mxu0
    %v3906 = vadd.f32 0.0, %v3905
    %3907 = vmatmul.bf16.gmra.mxu0 %v3746
    %v3908 = vpop.f32.mrf.mxu0
    %v3909 = vadd.f32 0.0, %v3908
    %v3910 = vpop.f32.mrf.mxu0
    %v3911 = vadd.f32 0.0, %v3910
    %3912 = vmatmul.bf16.gmra.mxu0 %v3747
    %v3913 = vpop.f32.mrf.mxu0
    %v3914 = vadd.f32 0.0, %v3913
    %v3915 = vpop.f32.mrf.mxu0
    %v3916 = vadd.f32 0.0, %v3915
    %3917 = vmatmul.bf16.gmra.mxu0 %v3748
    %v3918 = vpop.f32.mrf.mxu0
    %v3919 = vadd.f32 0.0, %v3918
    %v3920 = vpop.f32.mrf.mxu0
    %v3921 = vadd.f32 0.0, %v3920
    %3922 = vmatmul.bf16.gmra.mxu0 %v3749
    %v3923 = vpop.f32.mrf.mxu0
    %v3924 = vadd.f32 0.0, %v3923
    %v3925 = vpop.f32.mrf.mxu0
    %v3926 = vadd.f32 0.0, %v3925
    %3927 = vmatmul.bf16.gmra.mxu0 %v3750
    %v3928 = vpop.f32.mrf.mxu0
    %v3929 = vadd.f32 0.0, %v3928
    %v3930 = vpop.f32.mrf.mxu0
    %v3931 = vadd.f32 0.0, %v3930
    %3932 = vmatmul.bf16.gmra.mxu0 %v3751
    %v3933 = vpop.f32.mrf.mxu0
    %v3934 = vadd.f32 0.0, %v3933
    %v3935 = vpop.f32.mrf.mxu0
    %v3936 = vadd.f32 0.0, %v3935
    %3937 = vmatmul.bf16.gmra.mxu0 %v3752
    %v3938 = vpop.f32.mrf.mxu0
    %v3939 = vadd.f32 0.0, %v3938
    %v3940 = vpop.f32.mrf.mxu0
    %v3941 = vadd.f32 0.0, %v3940
    %3942 = vmatmul.bf16.gmra.mxu0 %v3753
    %v3943 = vpop.f32.mrf.mxu0
    %v3944 = vadd.f32 0.0, %v3943
    %v3945 = vpop.f32.mrf.mxu0
    %v3946 = vadd.f32 0.0, %v3945
    %3947 = vmatmul.bf16.gmra.mxu0 %v3754
    %v3948 = vpop.f32.mrf.mxu0
    %v3949 = vadd.f32 0.0, %v3948
    %v3950 = vpop.f32.mrf.mxu0
    %v3951 = vadd.f32 0.0, %v3950
    %3952 = vmatmul.bf16.gmra.mxu0 %v3755
    %v3953 = vpop.f32.mrf.mxu0
    %v3954 = vadd.f32 0.0, %v3953
    %v3955 = vpop.f32.mrf.mxu0
    %v3956 = vadd.f32 0.0, %v3955
    %3957 = vmatmul.bf16.gmra.mxu0 %v3756
    %v3958 = vpop.f32.mrf.mxu0
    %v3959 = vadd.f32 0.0, %v3958
    %v3960 = vpop.f32.mrf.mxu0
    %v3961 = vadd.f32 0.0, %v3960
    %3962 = vmatmul.bf16.gmra.mxu0 %v3757
    %v3963 = vpop.f32.mrf.mxu0
    %v3964 = vadd.f32 0.0, %v3963
    %v3965 = vpop.f32.mrf.mxu0
    %v3966 = vadd.f32 0.0, %v3965
    %3967 = vmatmul.bf16.gmra.mxu0 %v3758
    %v3968 = vpop.f32.mrf.mxu0
    %v3969 = vadd.f32 0.0, %v3968
    %v3970 = vpop.f32.mrf.mxu0
    %v3971 = vadd.f32 0.0, %v3970
    %3972 = vmatmul.bf16.gmra.mxu0 %v3759
    %v3973 = vpop.f32.mrf.mxu0
    %v3974 = vadd.f32 0.0, %v3973
    %v3975 = vpop.f32.mrf.mxu0
    %v3976 = vadd.f32 0.0, %v3975
    %3977 = vmatmul.bf16.gmra.mxu0 %v3760
    %v3978 = vpop.f32.mrf.mxu0
    %v3979 = vadd.f32 0.0, %v3978
    %v3980 = vpop.f32.mrf.mxu0
    %v3981 = vadd.f32 0.0, %v3980
    %3982 = vmatmul.bf16.gmra.mxu0 %v3761
    %v3983 = vpop.f32.mrf.mxu0
    %v3984 = vadd.f32 0.0, %v3983
    %v3985 = vpop.f32.mrf.mxu0
    %v3986 = vadd.f32 0.0, %v3985
    %3987 = vmatmul.bf16.gmra.mxu0 %v3762
    %v3988 = vpop.f32.mrf.mxu0
    %v3989 = vadd.f32 0.0, %v3988
    %v3990 = vpop.f32.mrf.mxu0
    %v3991 = vadd.f32 0.0, %v3990
    %3992 = vmatmul.bf16.gmra.mxu0 %v3763
    %v3993 = vpop.f32.mrf.mxu0
    %v3994 = vadd.f32 0.0, %v3993
    %v3995 = vpop.f32.mrf.mxu0
    %v3996 = vadd.f32 0.0, %v3995
    %3997 = vdwg.mxu0
    %v3998 = vadd.f32 %v3604, %v3839
    %v3999 = vadd.f32 %v3605, %v3841
    %v4000 = vadd.f32 %v3606, %v3844
    %v4001 = vadd.f32 %v3607, %v3846
    %v4002 = vadd.f32 %v3608, %v3849
    %v4003 = vadd.f32 %v3609, %v3851
    %v4004 = vadd.f32 %v3610, %v3854
    %v4005 = vadd.f32 %v3611, %v3856
    %v4006 = vadd.f32 %v3612, %v3859
    %v4007 = vadd.f32 %v3613, %v3861
    %v4008 = vadd.f32 %v3614, %v3864
    %v4009 = vadd.f32 %v3615, %v3866
    %v4010 = vadd.f32 %v3616, %v3869
    %v4011 = vadd.f32 %v3617, %v3871
    %v4012 = vadd.f32 %v3618, %v3874
    %v4013 = vadd.f32 %v3619, %v3876
    %v4014 = vadd.f32 %v3620, %v3879
    %v4015 = vadd.f32 %v3621, %v3881
    %v4016 = vadd.f32 %v3622, %v3884
    %v4017 = vadd.f32 %v3623, %v3886
    %v4018 = vadd.f32 %v3624, %v3889
    %v4019 = vadd.f32 %v3625, %v3891
    %v4020 = vadd.f32 %v3626, %v3894
    %v4021 = vadd.f32 %v3627, %v3896
    %v4022 = vadd.f32 %v3628, %v3899
    %v4023 = vadd.f32 %v3629, %v3901
    %v4024 = vadd.f32 %v3630, %v3904
    %v4025 = vadd.f32 %v3631, %v3906
    %v4026 = vadd.f32 %v3632, %v3909
    %v4027 = vadd.f32 %v3633, %v3911
    %v4028 = vadd.f32 %v3634, %v3914
    %v4029 = vadd.f32 %v3635, %v3916
    %v4030 = vadd.f32 %v3636, %v3919
    %v4031 = vadd.f32 %v3637, %v3921
    %v4032 = vadd.f32 %v3638, %v3924
    %v4033 = vadd.f32 %v3639, %v3926
    %v4034 = vadd.f32 %v3640, %v3929
    %v4035 = vadd.f32 %v3641, %v3931
    %v4036 = vadd.f32 %v3642, %v3934
    %v4037 = vadd.f32 %v3643, %v3936
    %v4038 = vadd.f32 %v3644, %v3939
    %v4039 = vadd.f32 %v3645, %v3941
    %v4040 = vadd.f32 %v3646, %v3944
    %v4041 = vadd.f32 %v3647, %v3946
    %v4042 = vadd.f32 %v3648, %v3949
    %v4043 = vadd.f32 %v3649, %v3951
    %v4044 = vadd.f32 %v3650, %v3954
    %v4045 = vadd.f32 %v3651, %v3956
    %v4046 = vadd.f32 %v3652, %v3959
    %v4047 = vadd.f32 %v3653, %v3961
    %v4048 = vadd.f32 %v3654, %v3964
    %v4049 = vadd.f32 %v3655, %v3966
    %v4050 = vadd.f32 %v3656, %v3969
    %v4051 = vadd.f32 %v3657, %v3971
    %v4052 = vadd.f32 %v3658, %v3974
    %v4053 = vadd.f32 %v3659, %v3976
    %v4054 = vadd.f32 %v3660, %v3979
    %v4055 = vadd.f32 %v3661, %v3981
    %v4056 = vadd.f32 %v3662, %v3984
    %v4057 = vadd.f32 %v3663, %v3986
    %v4058 = vadd.f32 %v3664, %v3989
    %v4059 = vadd.f32 %v3665, %v3991
    %v4060 = vadd.f32 %v3666, %v3994
    %v4061 = vadd.f32 %v3667, %v3996
    %v4062 = vld [vmem:[%s2542 + $0x1] sm:$0xff]
    %v4063 = vld [vmem:[%s2542 + $0x9] sm:$0xff]
    %v4064 = vld [vmem:[%s2542 + $0x19] sm:$0xff]
    %v4065 = vld [vmem:[%s2542 + $0x21] sm:$0xff]
    %v4066 = vld [vmem:[%s2542 + $0x31] sm:$0xff]
    %v4067 = vld [vmem:[%s2542 + $0x39] sm:$0xff]
    %v4068 = vld [vmem:[%s2542 + $0x49] sm:$0xff]
    %v4069 = vld [vmem:[%s2542 + $0x51] sm:$0xff]
    %v4070 = vld [vmem:[%s2542 + $0x61] sm:$0xff]
    %v4071 = vld [vmem:[%s2542 + $0x69] sm:$0xff]
    %v4072 = vld [vmem:[%s2542 + $0x79] sm:$0xff]
    %v4073 = vld [vmem:[%s2542 + $0x81] sm:$0xff]
    %v4074 = vld [vmem:[%s2542 + $0x91] sm:$0xff]
    %v4075 = vld [vmem:[%s2542 + $0x99] sm:$0xff]
    %v4076 = vld [vmem:[%s2542 + $0xa9] sm:$0xff]
    %v4077 = vld [vmem:[%s2542 + $0xb1] sm:$0xff]
    %v4078 = vld [vmem:[%s2542 + $0xc1] sm:$0xff]
    %v4079 = vld [vmem:[%s2542 + $0xc9] sm:$0xff]
    %v4080 = vld [vmem:[%s2542 + $0xd9] sm:$0xff]
    %v4081 = vld [vmem:[%s2542 + $0xe1] sm:$0xff]
    %v4082 = vld [vmem:[%s2542 + $0xf1] sm:$0xff]
    %v4083 = vld [vmem:[%s2542 + $0xf9] sm:$0xff]
    %v4084 = vld [vmem:[%s2542 + $0x109] sm:$0xff]
    %v4085 = vld [vmem:[%s2542 + $0x111] sm:$0xff]
    %v4086 = vld [vmem:[%s2542 + $0x121] sm:$0xff]
    %v4087 = vld [vmem:[%s2542 + $0x129] sm:$0xff]
    %v4088 = vld [vmem:[%s2542 + $0x139] sm:$0xff]
    %v4089 = vld [vmem:[%s2542 + $0x141] sm:$0xff]
    %v4090 = vld [vmem:[%s2542 + $0x151] sm:$0xff]
    %v4091 = vld [vmem:[%s2542 + $0x159] sm:$0xff]
    %v4092 = vld [vmem:[%s2542 + $0x169] sm:$0xff]
    %v4093 = vld [vmem:[%s2542 + $0x171] sm:$0xff]
    %v4094 = vld [vmem:[%s2542 + $0x1b1] sm:$0xff]
    %v4095 = vld [vmem:[%s2542 + $0x1b9] sm:$0xff]
    %v4096 = vld [vmem:[%s2542 + $0x1c9] sm:$0xff]
    %v4097 = vld [vmem:[%s2542 + $0x1d1] sm:$0xff]
    %v4098 = vld [vmem:[%s2542 + $0x1e1] sm:$0xff]
    %v4099 = vld [vmem:[%s2542 + $0x1e9] sm:$0xff]
    %v4100 = vld [vmem:[%s2542 + $0x1f9] sm:$0xff]
    %v4101 = vld [vmem:[%s2542 + $0x201] sm:$0xff]
    %v4102 = vld [vmem:[%s2542 + $0x211] sm:$0xff]
    %v4103 = vld [vmem:[%s2542 + $0x219] sm:$0xff]
    %v4104 = vld [vmem:[%s2542 + $0x229] sm:$0xff]
    %v4105 = vld [vmem:[%s2542 + $0x231] sm:$0xff]
    %v4106 = vld [vmem:[%s2542 + $0x241] sm:$0xff]
    %v4107 = vld [vmem:[%s2542 + $0x249] sm:$0xff]
    %v4108 = vld [vmem:[%s2542 + $0x259] sm:$0xff]
    %v4109 = vld [vmem:[%s2542 + $0x261] sm:$0xff]
    %v4110 = vld [vmem:[%s2542 + $0x271] sm:$0xff]
    %v4111 = vld [vmem:[%s2542 + $0x279] sm:$0xff]
    %v4112 = vld [vmem:[%s2542 + $0x289] sm:$0xff]
    %v4113 = vld [vmem:[%s2542 + $0x291] sm:$0xff]
    %v4114 = vld [vmem:[%s2542 + $0x2a1] sm:$0xff]
    %v4115 = vld [vmem:[%s2542 + $0x2a9] sm:$0xff]
    %v4116 = vld [vmem:[%s2542 + $0x2b9] sm:$0xff]
    %v4117 = vld [vmem:[%s2542 + $0x2c1] sm:$0xff]
    %v4118 = vld [vmem:[%s2542 + $0x2d1] sm:$0xff]
    %v4119 = vld [vmem:[%s2542 + $0x2d9] sm:$0xff]
    %v4120 = vld [vmem:[%s2542 + $0x2e9] sm:$0xff]
    %v4121 = vld [vmem:[%s2542 + $0x2f1] sm:$0xff]
    %v4122 = vld [vmem:[%s2542 + $0x301] sm:$0xff]
    %v4123 = vld [vmem:[%s2542 + $0x309] sm:$0xff]
    %v4124 = vld [vmem:[%s2542 + $0x319] sm:$0xff]
    %v4125 = vld [vmem:[%s2542 + $0x321] sm:$0xff]
    %v4126 = vpack.c.bf16 %v4063, %v4062
    %v4127 = vpack.c.bf16 %v4065, %v4064
    %v4128 = vpack.c.bf16 %v4067, %v4066
    %v4129 = vpack.c.bf16 %v4069, %v4068
    %v4130 = vpack.c.bf16 %v4071, %v4070
    %v4131 = vpack.c.bf16 %v4073, %v4072
    %v4132 = vpack.c.bf16 %v4075, %v4074
    %v4133 = vpack.c.bf16 %v4077, %v4076
    %v4134 = vpack.c.bf16 %v4079, %v4078
    %v4135 = vpack.c.bf16 %v4081, %v4080
    %v4136 = vpack.c.bf16 %v4083, %v4082
    %v4137 = vpack.c.bf16 %v4085, %v4084
    %v4138 = vpack.c.bf16 %v4087, %v4086
    %v4139 = vpack.c.bf16 %v4089, %v4088
    %v4140 = vpack.c.bf16 %v4091, %v4090
    %v4141 = vpack.c.bf16 %v4093, %v4092
    %v4142 = vpack.c.bf16 %v4095, %v4094
    %v4143 = vpack.c.bf16 %v4097, %v4096
    %v4144 = vpack.c.bf16 %v4099, %v4098
    %v4145 = vpack.c.bf16 %v4101, %v4100
    %v4146 = vpack.c.bf16 %v4103, %v4102
    %v4147 = vpack.c.bf16 %v4105, %v4104
    %v4148 = vpack.c.bf16 %v4107, %v4106
    %v4149 = vpack.c.bf16 %v4109, %v4108
    %v4150 = vpack.c.bf16 %v4111, %v4110
    %v4151 = vpack.c.bf16 %v4113, %v4112
    %v4152 = vpack.c.bf16 %v4115, %v4114
    %v4153 = vpack.c.bf16 %v4117, %v4116
    %v4154 = vpack.c.bf16 %v4119, %v4118
    %v4155 = vpack.c.bf16 %v4121, %v4120
    %v4156 = vpack.c.bf16 %v4123, %v4122
    %v4157 = vpack.c.bf16 %v4125, %v4124
    %s4158 = scalar_lea.vmem %s4, 256
    %v4159 = vld [vmem:[%s4158] sm:$0xf]
    %v4160 = vld [vmem:[%s4158 + $0x4] sm:$0xf]
    %v4161 = vld [vmem:[%s4158 + $0x8] sm:$0xf]
    %v4162 = vld [vmem:[%s4158 + $0xc] sm:$0xf]
    %v4163 = vld [vmem:[%s4158 + $0x10] sm:$0xf]
    %v4164 = vld [vmem:[%s4158 + $0x14] sm:$0xf]
    %v4165 = vld [vmem:[%s4158 + $0x18] sm:$0xf]
    %v4166 = vld [vmem:[%s4158 + $0x1c] sm:$0xf]
    %v4167 = vld [vmem:[%s4158 + $0x20] sm:$0xf]
    %v4168 = vld [vmem:[%s4158 + $0x24] sm:$0xf]
    %v4169 = vld [vmem:[%s4158 + $0x28] sm:$0xf]
    %v4170 = vld [vmem:[%s4158 + $0x2c] sm:$0xf]
    %v4171 = vld [vmem:[%s4158 + $0x30] sm:$0xf]
    %v4172 = vld [vmem:[%s4158 + $0x34] sm:$0xf]
    %v4173 = vld [vmem:[%s4158 + $0x38] sm:$0xf]
    %v4174 = vld [vmem:[%s4158 + $0x3c] sm:$0xf]
    %v4191 = vunpack.c.l.b16 %v4159
    %v4192 = vunpack.c.l.b16 %v4160
    %v4193 = vunpack.c.l.b16 %v4161
    %v4194 = vunpack.c.l.b16 %v4162
    %v4195 = vunpack.c.l.b16 %v4163
    %v4196 = vunpack.c.l.b16 %v4164
    %v4197 = vunpack.c.l.b16 %v4165
    %v4198 = vunpack.c.l.b16 %v4166
    %v4199 = vunpack.c.l.b16 %v4167
    %v4200 = vunpack.c.l.b16 %v4168
    %v4201 = vunpack.c.l.b16 %v4169
    %v4202 = vunpack.c.l.b16 %v4170
    %v4203 = vunpack.c.l.b16 %v4171
    %v4204 = vunpack.c.l.b16 %v4172
    %v4205 = vunpack.c.l.b16 %v4173
    %v4206 = vunpack.c.l.b16 %v4174
    %v4207 = vpack.c.b16 %v4192, %v4191
    %v4208 = vpack.c.b16 %v4194, %v4193
    %v4209 = vpack.c.b16 %v4196, %v4195
    %v4210 = vpack.c.b16 %v4198, %v4197
    %v4211 = vpack.c.b16 %v4200, %v4199
    %v4212 = vpack.c.b16 %v4202, %v4201
    %v4213 = vpack.c.b16 %v4204, %v4203
    %v4214 = vpack.c.b16 %v4206, %v4205
    %4223 = vmatpush.bf16.msra.mxu0 %v4214
    %4224 = vmatpush.bf16.msra.mxu0 %v4213
    %4225 = vmatpush.bf16.msra.mxu0 %v4212
    %4226 = vmatpush.bf16.msra.mxu0 %v4211
    %4227 = vmatpush.bf16.msra.mxu0 %v4210
    %4228 = vmatpush.bf16.msra.mxu0 %v4209
    %4229 = vmatpush.bf16.msra.mxu0 %v4208
    %4230 = vmatpush.bf16.msra.mxu0 %v4207
    %4231 = vmatmul.bf16.gmra.mxu0 %v4126
    %v4232 = vpop.f32.mrf.mxu0
    %v4233 = vadd.f32 0.0, %v4232
    %v4234 = vpop.f32.mrf.mxu0
    %v4235 = vadd.f32 0.0, %v4234
    %4236 = vmatmul.bf16.gmra.mxu0 %v4127
    %v4237 = vpop.f32.mrf.mxu0
    %v4238 = vadd.f32 0.0, %v4237
    %v4239 = vpop.f32.mrf.mxu0
    %v4240 = vadd.f32 0.0, %v4239
    %4241 = vmatmul.bf16.gmra.mxu0 %v4128
    %v4242 = vpop.f32.mrf.mxu0
    %v4243 = vadd.f32 0.0, %v4242
    %v4244 = vpop.f32.mrf.mxu0
    %v4245 = vadd.f32 0.0, %v4244
    %4246 = vmatmul.bf16.gmra.mxu0 %v4129
    %v4247 = vpop.f32.mrf.mxu0
    %v4248 = vadd.f32 0.0, %v4247
    %v4249 = vpop.f32.mrf.mxu0
    %v4250 = vadd.f32 0.0, %v4249
    %4251 = vmatmul.bf16.gmra.mxu0 %v4130
    %v4252 = vpop.f32.mrf.mxu0
    %v4253 = vadd.f32 0.0, %v4252
    %v4254 = vpop.f32.mrf.mxu0
    %v4255 = vadd.f32 0.0, %v4254
    %4256 = vmatmul.bf16.gmra.mxu0 %v4131
    %v4257 = vpop.f32.mrf.mxu0
    %v4258 = vadd.f32 0.0, %v4257
    %v4259 = vpop.f32.mrf.mxu0
    %v4260 = vadd.f32 0.0, %v4259
    %4261 = vmatmul.bf16.gmra.mxu0 %v4132
    %v4262 = vpop.f32.mrf.mxu0
    %v4263 = vadd.f32 0.0, %v4262
    %v4264 = vpop.f32.mrf.mxu0
    %v4265 = vadd.f32 0.0, %v4264
    %4266 = vmatmul.bf16.gmra.mxu0 %v4133
    %v4267 = vpop.f32.mrf.mxu0
    %v4268 = vadd.f32 0.0, %v4267
    %v4269 = vpop.f32.mrf.mxu0
    %v4270 = vadd.f32 0.0, %v4269
    %4271 = vmatmul.bf16.gmra.mxu0 %v4134
    %v4272 = vpop.f32.mrf.mxu0
    %v4273 = vadd.f32 0.0, %v4272
    %v4274 = vpop.f32.mrf.mxu0
    %v4275 = vadd.f32 0.0, %v4274
    %4276 = vmatmul.bf16.gmra.mxu0 %v4135
    %v4277 = vpop.f32.mrf.mxu0
    %v4278 = vadd.f32 0.0, %v4277
    %v4279 = vpop.f32.mrf.mxu0
    %v4280 = vadd.f32 0.0, %v4279
    %4281 = vmatmul.bf16.gmra.mxu0 %v4136
    %v4282 = vpop.f32.mrf.mxu0
    %v4283 = vadd.f32 0.0, %v4282
    %v4284 = vpop.f32.mrf.mxu0
    %v4285 = vadd.f32 0.0, %v4284
    %4286 = vmatmul.bf16.gmra.mxu0 %v4137
    %v4287 = vpop.f32.mrf.mxu0
    %v4288 = vadd.f32 0.0, %v4287
    %v4289 = vpop.f32.mrf.mxu0
    %v4290 = vadd.f32 0.0, %v4289
    %4291 = vmatmul.bf16.gmra.mxu0 %v4138
    %v4292 = vpop.f32.mrf.mxu0
    %v4293 = vadd.f32 0.0, %v4292
    %v4294 = vpop.f32.mrf.mxu0
    %v4295 = vadd.f32 0.0, %v4294
    %4296 = vmatmul.bf16.gmra.mxu0 %v4139
    %v4297 = vpop.f32.mrf.mxu0
    %v4298 = vadd.f32 0.0, %v4297
    %v4299 = vpop.f32.mrf.mxu0
    %v4300 = vadd.f32 0.0, %v4299
    %4301 = vmatmul.bf16.gmra.mxu0 %v4140
    %v4302 = vpop.f32.mrf.mxu0
    %v4303 = vadd.f32 0.0, %v4302
    %v4304 = vpop.f32.mrf.mxu0
    %v4305 = vadd.f32 0.0, %v4304
    %4306 = vmatmul.bf16.gmra.mxu0 %v4141
    %v4307 = vpop.f32.mrf.mxu0
    %v4308 = vadd.f32 0.0, %v4307
    %v4309 = vpop.f32.mrf.mxu0
    %v4310 = vadd.f32 0.0, %v4309
    %4311 = vmatmul.bf16.gmra.mxu0 %v4142
    %v4312 = vpop.f32.mrf.mxu0
    %v4313 = vadd.f32 0.0, %v4312
    %v4314 = vpop.f32.mrf.mxu0
    %v4315 = vadd.f32 0.0, %v4314
    %4316 = vmatmul.bf16.gmra.mxu0 %v4143
    %v4317 = vpop.f32.mrf.mxu0
    %v4318 = vadd.f32 0.0, %v4317
    %v4319 = vpop.f32.mrf.mxu0
    %v4320 = vadd.f32 0.0, %v4319
    %4321 = vmatmul.bf16.gmra.mxu0 %v4144
    %v4322 = vpop.f32.mrf.mxu0
    %v4323 = vadd.f32 0.0, %v4322
    %v4324 = vpop.f32.mrf.mxu0
    %v4325 = vadd.f32 0.0, %v4324
    %4326 = vmatmul.bf16.gmra.mxu0 %v4145
    %v4327 = vpop.f32.mrf.mxu0
    %v4328 = vadd.f32 0.0, %v4327
    %v4329 = vpop.f32.mrf.mxu0
    %v4330 = vadd.f32 0.0, %v4329
    %4331 = vmatmul.bf16.gmra.mxu0 %v4146
    %v4332 = vpop.f32.mrf.mxu0
    %v4333 = vadd.f32 0.0, %v4332
    %v4334 = vpop.f32.mrf.mxu0
    %v4335 = vadd.f32 0.0, %v4334
    %4336 = vmatmul.bf16.gmra.mxu0 %v4147
    %v4337 = vpop.f32.mrf.mxu0
    %v4338 = vadd.f32 0.0, %v4337
    %v4339 = vpop.f32.mrf.mxu0
    %v4340 = vadd.f32 0.0, %v4339
    %4341 = vmatmul.bf16.gmra.mxu0 %v4148
    %v4342 = vpop.f32.mrf.mxu0
    %v4343 = vadd.f32 0.0, %v4342
    %v4344 = vpop.f32.mrf.mxu0
    %v4345 = vadd.f32 0.0, %v4344
    %4346 = vmatmul.bf16.gmra.mxu0 %v4149
    %v4347 = vpop.f32.mrf.mxu0
    %v4348 = vadd.f32 0.0, %v4347
    %v4349 = vpop.f32.mrf.mxu0
    %v4350 = vadd.f32 0.0, %v4349
    %4351 = vmatmul.bf16.gmra.mxu0 %v4150
    %v4352 = vpop.f32.mrf.mxu0
    %v4353 = vadd.f32 0.0, %v4352
    %v4354 = vpop.f32.mrf.mxu0
    %v4355 = vadd.f32 0.0, %v4354
    %4356 = vmatmul.bf16.gmra.mxu0 %v4151
    %v4357 = vpop.f32.mrf.mxu0
    %v4358 = vadd.f32 0.0, %v4357
    %v4359 = vpop.f32.mrf.mxu0
    %v4360 = vadd.f32 0.0, %v4359
    %4361 = vmatmul.bf16.gmra.mxu0 %v4152
    %v4362 = vpop.f32.mrf.mxu0
    %v4363 = vadd.f32 0.0, %v4362
    %v4364 = vpop.f32.mrf.mxu0
    %v4365 = vadd.f32 0.0, %v4364
    %4366 = vmatmul.bf16.gmra.mxu0 %v4153
    %v4367 = vpop.f32.mrf.mxu0
    %v4368 = vadd.f32 0.0, %v4367
    %v4369 = vpop.f32.mrf.mxu0
    %v4370 = vadd.f32 0.0, %v4369
    %4371 = vmatmul.bf16.gmra.mxu0 %v4154
    %v4372 = vpop.f32.mrf.mxu0
    %v4373 = vadd.f32 0.0, %v4372
    %v4374 = vpop.f32.mrf.mxu0
    %v4375 = vadd.f32 0.0, %v4374
    %4376 = vmatmul.bf16.gmra.mxu0 %v4155
    %v4377 = vpop.f32.mrf.mxu0
    %v4378 = vadd.f32 0.0, %v4377
    %v4379 = vpop.f32.mrf.mxu0
    %v4380 = vadd.f32 0.0, %v4379
    %4381 = vmatmul.bf16.gmra.mxu0 %v4156
    %v4382 = vpop.f32.mrf.mxu0
    %v4383 = vadd.f32 0.0, %v4382
    %v4384 = vpop.f32.mrf.mxu0
    %v4385 = vadd.f32 0.0, %v4384
    %4386 = vmatmul.bf16.gmra.mxu0 %v4157
    %v4387 = vpop.f32.mrf.mxu0
    %v4388 = vadd.f32 0.0, %v4387
    %v4389 = vpop.f32.mrf.mxu0
    %v4390 = vadd.f32 0.0, %v4389
    %4391 = vdwg.mxu0
    %v4392 = vadd.f32 %v3998, %v4233
    %v4393 = vadd.f32 %v3999, %v4235
    %v4394 = vadd.f32 %v4000, %v4238
    %v4395 = vadd.f32 %v4001, %v4240
    %v4396 = vadd.f32 %v4002, %v4243
    %v4397 = vadd.f32 %v4003, %v4245
    %v4398 = vadd.f32 %v4004, %v4248
    %v4399 = vadd.f32 %v4005, %v4250
    %v4400 = vadd.f32 %v4006, %v4253
    %v4401 = vadd.f32 %v4007, %v4255
    %v4402 = vadd.f32 %v4008, %v4258
    %v4403 = vadd.f32 %v4009, %v4260
    %v4404 = vadd.f32 %v4010, %v4263
    %v4405 = vadd.f32 %v4011, %v4265
    %v4406 = vadd.f32 %v4012, %v4268
    %v4407 = vadd.f32 %v4013, %v4270
    %v4408 = vadd.f32 %v4014, %v4273
    %v4409 = vadd.f32 %v4015, %v4275
    %v4410 = vadd.f32 %v4016, %v4278
    %v4411 = vadd.f32 %v4017, %v4280
    %v4412 = vadd.f32 %v4018, %v4283
    %v4413 = vadd.f32 %v4019, %v4285
    %v4414 = vadd.f32 %v4020, %v4288
    %v4415 = vadd.f32 %v4021, %v4290
    %v4416 = vadd.f32 %v4022, %v4293
    %v4417 = vadd.f32 %v4023, %v4295
    %v4418 = vadd.f32 %v4024, %v4298
    %v4419 = vadd.f32 %v4025, %v4300
    %v4420 = vadd.f32 %v4026, %v4303
    %v4421 = vadd.f32 %v4027, %v4305
    %v4422 = vadd.f32 %v4028, %v4308
    %v4423 = vadd.f32 %v4029, %v4310
    %v4424 = vadd.f32 %v4030, %v4313
    %v4425 = vadd.f32 %v4031, %v4315
    %v4426 = vadd.f32 %v4032, %v4318
    %v4427 = vadd.f32 %v4033, %v4320
    %v4428 = vadd.f32 %v4034, %v4323
    %v4429 = vadd.f32 %v4035, %v4325
    %v4430 = vadd.f32 %v4036, %v4328
    %v4431 = vadd.f32 %v4037, %v4330
    %v4432 = vadd.f32 %v4038, %v4333
    %v4433 = vadd.f32 %v4039, %v4335
    %v4434 = vadd.f32 %v4040, %v4338
    %v4435 = vadd.f32 %v4041, %v4340
    %v4436 = vadd.f32 %v4042, %v4343
    %v4437 = vadd.f32 %v4043, %v4345
    %v4438 = vadd.f32 %v4044, %v4348
    %v4439 = vadd.f32 %v4045, %v4350
    %v4440 = vadd.f32 %v4046, %v4353
    %v4441 = vadd.f32 %v4047, %v4355
    %v4442 = vadd.f32 %v4048, %v4358
    %v4443 = vadd.f32 %v4049, %v4360
    %v4444 = vadd.f32 %v4050, %v4363
    %v4445 = vadd.f32 %v4051, %v4365
    %v4446 = vadd.f32 %v4052, %v4368
    %v4447 = vadd.f32 %v4053, %v4370
    %v4448 = vadd.f32 %v4054, %v4373
    %v4449 = vadd.f32 %v4055, %v4375
    %v4450 = vadd.f32 %v4056, %v4378
    %v4451 = vadd.f32 %v4057, %v4380
    %v4452 = vadd.f32 %v4058, %v4383
    %v4453 = vadd.f32 %v4059, %v4385
    %v4454 = vadd.f32 %v4060, %v4388
    %v4455 = vadd.f32 %v4061, %v4390
    %v4456 = vld [vmem:[%s2542 + $0x2] sm:$0xff]
    %v4457 = vld [vmem:[%s2542 + $0xa] sm:$0xff]
    %v4458 = vld [vmem:[%s2542 + $0x1a] sm:$0xff]
    %v4459 = vld [vmem:[%s2542 + $0x22] sm:$0xff]
    %v4460 = vld [vmem:[%s2542 + $0x32] sm:$0xff]
    %v4461 = vld [vmem:[%s2542 + $0x3a] sm:$0xff]
    %v4462 = vld [vmem:[%s2542 + $0x4a] sm:$0xff]
    %v4463 = vld [vmem:[%s2542 + $0x52] sm:$0xff]
    %v4464 = vld [vmem:[%s2542 + $0x62] sm:$0xff]
    %v4465 = vld [vmem:[%s2542 + $0x6a] sm:$0xff]
    %v4466 = vld [vmem:[%s2542 + $0x7a] sm:$0xff]
    %v4467 = vld [vmem:[%s2542 + $0x82] sm:$0xff]
    %v4468 = vld [vmem:[%s2542 + $0x92] sm:$0xff]
    %v4469 = vld [vmem:[%s2542 + $0x9a] sm:$0xff]
    %v4470 = vld [vmem:[%s2542 + $0xaa] sm:$0xff]
    %v4471 = vld [vmem:[%s2542 + $0xb2] sm:$0xff]
    %v4472 = vld [vmem:[%s2542 + $0xc2] sm:$0xff]
    %v4473 = vld [vmem:[%s2542 + $0xca] sm:$0xff]
    %v4474 = vld [vmem:[%s2542 + $0xda] sm:$0xff]
    %v4475 = vld [vmem:[%s2542 + $0xe2] sm:$0xff]
    %v4476 = vld [vmem:[%s2542 + $0xf2] sm:$0xff]
    %v4477 = vld [vmem:[%s2542 + $0xfa] sm:$0xff]
    %v4478 = vld [vmem:[%s2542 + $0x10a] sm:$0xff]
    %v4479 = vld [vmem:[%s2542 + $0x112] sm:$0xff]
    %v4480 = vld [vmem:[%s2542 + $0x122] sm:$0xff]
    %v4481 = vld [vmem:[%s2542 + $0x12a] sm:$0xff]
    %v4482 = vld [vmem:[%s2542 + $0x13a] sm:$0xff]
    %v4483 = vld [vmem:[%s2542 + $0x142] sm:$0xff]
    %v4484 = vld [vmem:[%s2542 + $0x152] sm:$0xff]
    %v4485 = vld [vmem:[%s2542 + $0x15a] sm:$0xff]
    %v4486 = vld [vmem:[%s2542 + $0x16a] sm:$0xff]
    %v4487 = vld [vmem:[%s2542 + $0x172] sm:$0xff]
    %v4488 = vld [vmem:[%s2542 + $0x1b2] sm:$0xff]
    %v4489 = vld [vmem:[%s2542 + $0x1ba] sm:$0xff]
    %v4490 = vld [vmem:[%s2542 + $0x1ca] sm:$0xff]
    %v4491 = vld [vmem:[%s2542 + $0x1d2] sm:$0xff]
    %v4492 = vld [vmem:[%s2542 + $0x1e2] sm:$0xff]
    %v4493 = vld [vmem:[%s2542 + $0x1ea] sm:$0xff]
    %v4494 = vld [vmem:[%s2542 + $0x1fa] sm:$0xff]
    %v4495 = vld [vmem:[%s2542 + $0x202] sm:$0xff]
    %v4496 = vld [vmem:[%s2542 + $0x212] sm:$0xff]
    %v4497 = vld [vmem:[%s2542 + $0x21a] sm:$0xff]
    %v4498 = vld [vmem:[%s2542 + $0x22a] sm:$0xff]
    %v4499 = vld [vmem:[%s2542 + $0x232] sm:$0xff]
    %v4500 = vld [vmem:[%s2542 + $0x242] sm:$0xff]
    %v4501 = vld [vmem:[%s2542 + $0x24a] sm:$0xff]
    %v4502 = vld [vmem:[%s2542 + $0x25a] sm:$0xff]
    %v4503 = vld [vmem:[%s2542 + $0x262] sm:$0xff]
    %v4504 = vld [vmem:[%s2542 + $0x272] sm:$0xff]
    %v4505 = vld [vmem:[%s2542 + $0x27a] sm:$0xff]
    %v4506 = vld [vmem:[%s2542 + $0x28a] sm:$0xff]
    %v4507 = vld [vmem:[%s2542 + $0x292] sm:$0xff]
    %v4508 = vld [vmem:[%s2542 + $0x2a2] sm:$0xff]
    %v4509 = vld [vmem:[%s2542 + $0x2aa] sm:$0xff]
    %v4510 = vld [vmem:[%s2542 + $0x2ba] sm:$0xff]
    %v4511 = vld [vmem:[%s2542 + $0x2c2] sm:$0xff]
    %v4512 = vld [vmem:[%s2542 + $0x2d2] sm:$0xff]
    %v4513 = vld [vmem:[%s2542 + $0x2da] sm:$0xff]
    %v4514 = vld [vmem:[%s2542 + $0x2ea] sm:$0xff]
    %v4515 = vld [vmem:[%s2542 + $0x2f2] sm:$0xff]
    %v4516 = vld [vmem:[%s2542 + $0x302] sm:$0xff]
    %v4517 = vld [vmem:[%s2542 + $0x30a] sm:$0xff]
    %v4518 = vld [vmem:[%s2542 + $0x31a] sm:$0xff]
    %v4519 = vld [vmem:[%s2542 + $0x322] sm:$0xff]
    %v4520 = vpack.c.bf16 %v4457, %v4456
    %v4521 = vpack.c.bf16 %v4459, %v4458
    %v4522 = vpack.c.bf16 %v4461, %v4460
    %v4523 = vpack.c.bf16 %v4463, %v4462
    %v4524 = vpack.c.bf16 %v4465, %v4464
    %v4525 = vpack.c.bf16 %v4467, %v4466
    %v4526 = vpack.c.bf16 %v4469, %v4468
    %v4527 = vpack.c.bf16 %v4471, %v4470
    %v4528 = vpack.c.bf16 %v4473, %v4472
    %v4529 = vpack.c.bf16 %v4475, %v4474
    %v4530 = vpack.c.bf16 %v4477, %v4476
    %v4531 = vpack.c.bf16 %v4479, %v4478
    %v4532 = vpack.c.bf16 %v4481, %v4480
    %v4533 = vpack.c.bf16 %v4483, %v4482
    %v4534 = vpack.c.bf16 %v4485, %v4484
    %v4535 = vpack.c.bf16 %v4487, %v4486
    %v4536 = vpack.c.bf16 %v4489, %v4488
    %v4537 = vpack.c.bf16 %v4491, %v4490
    %v4538 = vpack.c.bf16 %v4493, %v4492
    %v4539 = vpack.c.bf16 %v4495, %v4494
    %v4540 = vpack.c.bf16 %v4497, %v4496
    %v4541 = vpack.c.bf16 %v4499, %v4498
    %v4542 = vpack.c.bf16 %v4501, %v4500
    %v4543 = vpack.c.bf16 %v4503, %v4502
    %v4544 = vpack.c.bf16 %v4505, %v4504
    %v4545 = vpack.c.bf16 %v4507, %v4506
    %v4546 = vpack.c.bf16 %v4509, %v4508
    %v4547 = vpack.c.bf16 %v4511, %v4510
    %v4548 = vpack.c.bf16 %v4513, %v4512
    %v4549 = vpack.c.bf16 %v4515, %v4514
    %v4550 = vpack.c.bf16 %v4517, %v4516
    %v4551 = vpack.c.bf16 %v4519, %v4518
    %s4552 = scalar_lea.vmem %s4, 320
    %v4553 = vld [vmem:[%s4552] sm:$0xf]
    %v4554 = vld [vmem:[%s4552 + $0x4] sm:$0xf]
    %v4555 = vld [vmem:[%s4552 + $0x8] sm:$0xf]
    %v4556 = vld [vmem:[%s4552 + $0xc] sm:$0xf]
    %v4557 = vld [vmem:[%s4552 + $0x10] sm:$0xf]
    %v4558 = vld [vmem:[%s4552 + $0x14] sm:$0xf]
    %v4559 = vld [vmem:[%s4552 + $0x18] sm:$0xf]
    %v4560 = vld [vmem:[%s4552 + $0x1c] sm:$0xf]
    %v4561 = vld [vmem:[%s4552 + $0x20] sm:$0xf]
    %v4562 = vld [vmem:[%s4552 + $0x24] sm:$0xf]
    %v4563 = vld [vmem:[%s4552 + $0x28] sm:$0xf]
    %v4564 = vld [vmem:[%s4552 + $0x2c] sm:$0xf]
    %v4565 = vld [vmem:[%s4552 + $0x30] sm:$0xf]
    %v4566 = vld [vmem:[%s4552 + $0x34] sm:$0xf]
    %v4567 = vld [vmem:[%s4552 + $0x38] sm:$0xf]
    %v4568 = vld [vmem:[%s4552 + $0x3c] sm:$0xf]
    %v4585 = vunpack.c.l.b16 %v4553
    %v4586 = vunpack.c.l.b16 %v4554
    %v4587 = vunpack.c.l.b16 %v4555
    %v4588 = vunpack.c.l.b16 %v4556
    %v4589 = vunpack.c.l.b16 %v4557
    %v4590 = vunpack.c.l.b16 %v4558
    %v4591 = vunpack.c.l.b16 %v4559
    %v4592 = vunpack.c.l.b16 %v4560
    %v4593 = vunpack.c.l.b16 %v4561
    %v4594 = vunpack.c.l.b16 %v4562
    %v4595 = vunpack.c.l.b16 %v4563
    %v4596 = vunpack.c.l.b16 %v4564
    %v4597 = vunpack.c.l.b16 %v4565
    %v4598 = vunpack.c.l.b16 %v4566
    %v4599 = vunpack.c.l.b16 %v4567
    %v4600 = vunpack.c.l.b16 %v4568
    %v4601 = vpack.c.b16 %v4586, %v4585
    %v4602 = vpack.c.b16 %v4588, %v4587
    %v4603 = vpack.c.b16 %v4590, %v4589
    %v4604 = vpack.c.b16 %v4592, %v4591
    %v4605 = vpack.c.b16 %v4594, %v4593
    %v4606 = vpack.c.b16 %v4596, %v4595
    %v4607 = vpack.c.b16 %v4598, %v4597
    %v4608 = vpack.c.b16 %v4600, %v4599
    %4617 = vmatpush.bf16.msra.mxu0 %v4608
    %4618 = vmatpush.bf16.msra.mxu0 %v4607
    %4619 = vmatpush.bf16.msra.mxu0 %v4606
    %4620 = vmatpush.bf16.msra.mxu0 %v4605
    %4621 = vmatpush.bf16.msra.mxu0 %v4604
    %4622 = vmatpush.bf16.msra.mxu0 %v4603
    %4623 = vmatpush.bf16.msra.mxu0 %v4602
    %4624 = vmatpush.bf16.msra.mxu0 %v4601
    %4625 = vmatmul.bf16.gmra.mxu0 %v4520
    %v4626 = vpop.f32.mrf.mxu0
    %v4627 = vadd.f32 0.0, %v4626
    %v4628 = vpop.f32.mrf.mxu0
    %v4629 = vadd.f32 0.0, %v4628
    %4630 = vmatmul.bf16.gmra.mxu0 %v4521
    %v4631 = vpop.f32.mrf.mxu0
    %v4632 = vadd.f32 0.0, %v4631
    %v4633 = vpop.f32.mrf.mxu0
    %v4634 = vadd.f32 0.0, %v4633
    %4635 = vmatmul.bf16.gmra.mxu0 %v4522
    %v4636 = vpop.f32.mrf.mxu0
    %v4637 = vadd.f32 0.0, %v4636
    %v4638 = vpop.f32.mrf.mxu0
    %v4639 = vadd.f32 0.0, %v4638
    %4640 = vmatmul.bf16.gmra.mxu0 %v4523
    %v4641 = vpop.f32.mrf.mxu0
    %v4642 = vadd.f32 0.0, %v4641
    %v4643 = vpop.f32.mrf.mxu0
    %v4644 = vadd.f32 0.0, %v4643
    %4645 = vmatmul.bf16.gmra.mxu0 %v4524
    %v4646 = vpop.f32.mrf.mxu0
    %v4647 = vadd.f32 0.0, %v4646
    %v4648 = vpop.f32.mrf.mxu0
    %v4649 = vadd.f32 0.0, %v4648
    %4650 = vmatmul.bf16.gmra.mxu0 %v4525
    %v4651 = vpop.f32.mrf.mxu0
    %v4652 = vadd.f32 0.0, %v4651
    %v4653 = vpop.f32.mrf.mxu0
    %v4654 = vadd.f32 0.0, %v4653
    %4655 = vmatmul.bf16.gmra.mxu0 %v4526
    %v4656 = vpop.f32.mrf.mxu0
    %v4657 = vadd.f32 0.0, %v4656
    %v4658 = vpop.f32.mrf.mxu0
    %v4659 = vadd.f32 0.0, %v4658
    %4660 = vmatmul.bf16.gmra.mxu0 %v4527
    %v4661 = vpop.f32.mrf.mxu0
    %v4662 = vadd.f32 0.0, %v4661
    %v4663 = vpop.f32.mrf.mxu0
    %v4664 = vadd.f32 0.0, %v4663
    %4665 = vmatmul.bf16.gmra.mxu0 %v4528
    %v4666 = vpop.f32.mrf.mxu0
    %v4667 = vadd.f32 0.0, %v4666
    %v4668 = vpop.f32.mrf.mxu0
    %v4669 = vadd.f32 0.0, %v4668
    %4670 = vmatmul.bf16.gmra.mxu0 %v4529
    %v4671 = vpop.f32.mrf.mxu0
    %v4672 = vadd.f32 0.0, %v4671
    %v4673 = vpop.f32.mrf.mxu0
    %v4674 = vadd.f32 0.0, %v4673
    %4675 = vmatmul.bf16.gmra.mxu0 %v4530
    %v4676 = vpop.f32.mrf.mxu0
    %v4677 = vadd.f32 0.0, %v4676
    %v4678 = vpop.f32.mrf.mxu0
    %v4679 = vadd.f32 0.0, %v4678
    %4680 = vmatmul.bf16.gmra.mxu0 %v4531
    %v4681 = vpop.f32.mrf.mxu0
    %v4682 = vadd.f32 0.0, %v4681
    %v4683 = vpop.f32.mrf.mxu0
    %v4684 = vadd.f32 0.0, %v4683
    %4685 = vmatmul.bf16.gmra.mxu0 %v4532
    %v4686 = vpop.f32.mrf.mxu0
    %v4687 = vadd.f32 0.0, %v4686
    %v4688 = vpop.f32.mrf.mxu0
    %v4689 = vadd.f32 0.0, %v4688
    %4690 = vmatmul.bf16.gmra.mxu0 %v4533
    %v4691 = vpop.f32.mrf.mxu0
    %v4692 = vadd.f32 0.0, %v4691
    %v4693 = vpop.f32.mrf.mxu0
    %v4694 = vadd.f32 0.0, %v4693
    %4695 = vmatmul.bf16.gmra.mxu0 %v4534
    %v4696 = vpop.f32.mrf.mxu0
    %v4697 = vadd.f32 0.0, %v4696
    %v4698 = vpop.f32.mrf.mxu0
    %v4699 = vadd.f32 0.0, %v4698
    %4700 = vmatmul.bf16.gmra.mxu0 %v4535
    %v4701 = vpop.f32.mrf.mxu0
    %v4702 = vadd.f32 0.0, %v4701
    %v4703 = vpop.f32.mrf.mxu0
    %v4704 = vadd.f32 0.0, %v4703
    %4705 = vmatmul.bf16.gmra.mxu0 %v4536
    %v4706 = vpop.f32.mrf.mxu0
    %v4707 = vadd.f32 0.0, %v4706
    %v4708 = vpop.f32.mrf.mxu0
    %v4709 = vadd.f32 0.0, %v4708
    %4710 = vmatmul.bf16.gmra.mxu0 %v4537
    %v4711 = vpop.f32.mrf.mxu0
    %v4712 = vadd.f32 0.0, %v4711
    %v4713 = vpop.f32.mrf.mxu0
    %v4714 = vadd.f32 0.0, %v4713
    %4715 = vmatmul.bf16.gmra.mxu0 %v4538
    %v4716 = vpop.f32.mrf.mxu0
    %v4717 = vadd.f32 0.0, %v4716
    %v4718 = vpop.f32.mrf.mxu0
    %v4719 = vadd.f32 0.0, %v4718
    %4720 = vmatmul.bf16.gmra.mxu0 %v4539
    %v4721 = vpop.f32.mrf.mxu0
    %v4722 = vadd.f32 0.0, %v4721
    %v4723 = vpop.f32.mrf.mxu0
    %v4724 = vadd.f32 0.0, %v4723
    %4725 = vmatmul.bf16.gmra.mxu0 %v4540
    %v4726 = vpop.f32.mrf.mxu0
    %v4727 = vadd.f32 0.0, %v4726
    %v4728 = vpop.f32.mrf.mxu0
    %v4729 = vadd.f32 0.0, %v4728
    %4730 = vmatmul.bf16.gmra.mxu0 %v4541
    %v4731 = vpop.f32.mrf.mxu0
    %v4732 = vadd.f32 0.0, %v4731
    %v4733 = vpop.f32.mrf.mxu0
    %v4734 = vadd.f32 0.0, %v4733
    %4735 = vmatmul.bf16.gmra.mxu0 %v4542
    %v4736 = vpop.f32.mrf.mxu0
    %v4737 = vadd.f32 0.0, %v4736
    %v4738 = vpop.f32.mrf.mxu0
    %v4739 = vadd.f32 0.0, %v4738
    %4740 = vmatmul.bf16.gmra.mxu0 %v4543
    %v4741 = vpop.f32.mrf.mxu0
    %v4742 = vadd.f32 0.0, %v4741
    %v4743 = vpop.f32.mrf.mxu0
    %v4744 = vadd.f32 0.0, %v4743
    %4745 = vmatmul.bf16.gmra.mxu0 %v4544
    %v4746 = vpop.f32.mrf.mxu0
    %v4747 = vadd.f32 0.0, %v4746
    %v4748 = vpop.f32.mrf.mxu0
    %v4749 = vadd.f32 0.0, %v4748
    %4750 = vmatmul.bf16.gmra.mxu0 %v4545
    %v4751 = vpop.f32.mrf.mxu0
    %v4752 = vadd.f32 0.0, %v4751
    %v4753 = vpop.f32.mrf.mxu0
    %v4754 = vadd.f32 0.0, %v4753
    %4755 = vmatmul.bf16.gmra.mxu0 %v4546
    %v4756 = vpop.f32.mrf.mxu0
    %v4757 = vadd.f32 0.0, %v4756
    %v4758 = vpop.f32.mrf.mxu0
    %v4759 = vadd.f32 0.0, %v4758
    %4760 = vmatmul.bf16.gmra.mxu0 %v4547
    %v4761 = vpop.f32.mrf.mxu0
    %v4762 = vadd.f32 0.0, %v4761
    %v4763 = vpop.f32.mrf.mxu0
    %v4764 = vadd.f32 0.0, %v4763
    %4765 = vmatmul.bf16.gmra.mxu0 %v4548
    %v4766 = vpop.f32.mrf.mxu0
    %v4767 = vadd.f32 0.0, %v4766
    %v4768 = vpop.f32.mrf.mxu0
    %v4769 = vadd.f32 0.0, %v4768
    %4770 = vmatmul.bf16.gmra.mxu0 %v4549
    %v4771 = vpop.f32.mrf.mxu0
    %v4772 = vadd.f32 0.0, %v4771
    %v4773 = vpop.f32.mrf.mxu0
    %v4774 = vadd.f32 0.0, %v4773
    %4775 = vmatmul.bf16.gmra.mxu0 %v4550
    %v4776 = vpop.f32.mrf.mxu0
    %v4777 = vadd.f32 0.0, %v4776
    %v4778 = vpop.f32.mrf.mxu0
    %v4779 = vadd.f32 0.0, %v4778
    %4780 = vmatmul.bf16.gmra.mxu0 %v4551
    %v4781 = vpop.f32.mrf.mxu0
    %v4782 = vadd.f32 0.0, %v4781
    %v4783 = vpop.f32.mrf.mxu0
    %v4784 = vadd.f32 0.0, %v4783
    %4785 = vdwg.mxu0
    %v4786 = vadd.f32 %v4392, %v4627
    %v4787 = vadd.f32 %v4393, %v4629
    %v4788 = vadd.f32 %v4394, %v4632
    %v4789 = vadd.f32 %v4395, %v4634
    %v4790 = vadd.f32 %v4396, %v4637
    %v4791 = vadd.f32 %v4397, %v4639
    %v4792 = vadd.f32 %v4398, %v4642
    %v4793 = vadd.f32 %v4399, %v4644
    %v4794 = vadd.f32 %v4400, %v4647
    %v4795 = vadd.f32 %v4401, %v4649
    %v4796 = vadd.f32 %v4402, %v4652
    %v4797 = vadd.f32 %v4403, %v4654
    %v4798 = vadd.f32 %v4404, %v4657
    %v4799 = vadd.f32 %v4405, %v4659
    %v4800 = vadd.f32 %v4406, %v4662
    %v4801 = vadd.f32 %v4407, %v4664
    %v4802 = vadd.f32 %v4408, %v4667
    %v4803 = vadd.f32 %v4409, %v4669
    %v4804 = vadd.f32 %v4410, %v4672
    %v4805 = vadd.f32 %v4411, %v4674
    %v4806 = vadd.f32 %v4412, %v4677
    %v4807 = vadd.f32 %v4413, %v4679
    %v4808 = vadd.f32 %v4414, %v4682
    %v4809 = vadd.f32 %v4415, %v4684
    %v4810 = vadd.f32 %v4416, %v4687
    %v4811 = vadd.f32 %v4417, %v4689
    %v4812 = vadd.f32 %v4418, %v4692
    %v4813 = vadd.f32 %v4419, %v4694
    %v4814 = vadd.f32 %v4420, %v4697
    %v4815 = vadd.f32 %v4421, %v4699
    %v4816 = vadd.f32 %v4422, %v4702
    %v4817 = vadd.f32 %v4423, %v4704
    %v4818 = vadd.f32 %v4424, %v4707
    %v4819 = vadd.f32 %v4425, %v4709
    %v4820 = vadd.f32 %v4426, %v4712
    %v4821 = vadd.f32 %v4427, %v4714
    %v4822 = vadd.f32 %v4428, %v4717
    %v4823 = vadd.f32 %v4429, %v4719
    %v4824 = vadd.f32 %v4430, %v4722
    %v4825 = vadd.f32 %v4431, %v4724
    %v4826 = vadd.f32 %v4432, %v4727
    %v4827 = vadd.f32 %v4433, %v4729
    %v4828 = vadd.f32 %v4434, %v4732
    %v4829 = vadd.f32 %v4435, %v4734
    %v4830 = vadd.f32 %v4436, %v4737
    %v4831 = vadd.f32 %v4437, %v4739
    %v4832 = vadd.f32 %v4438, %v4742
    %v4833 = vadd.f32 %v4439, %v4744
    %v4834 = vadd.f32 %v4440, %v4747
    %v4835 = vadd.f32 %v4441, %v4749
    %v4836 = vadd.f32 %v4442, %v4752
    %v4837 = vadd.f32 %v4443, %v4754
    %v4838 = vadd.f32 %v4444, %v4757
    %v4839 = vadd.f32 %v4445, %v4759
    %v4840 = vadd.f32 %v4446, %v4762
    %v4841 = vadd.f32 %v4447, %v4764
    %v4842 = vadd.f32 %v4448, %v4767
    %v4843 = vadd.f32 %v4449, %v4769
    %v4844 = vadd.f32 %v4450, %v4772
    %v4845 = vadd.f32 %v4451, %v4774
    %v4846 = vadd.f32 %v4452, %v4777
    %v4847 = vadd.f32 %v4453, %v4779
    %v4848 = vadd.f32 %v4454, %v4782
    %v4849 = vadd.f32 %v4455, %v4784
    %s4850 = scalar_lea.vmem [#allocation2], 48
    %v4851 = vld [vmem:[%s4850] sm:$0xff]
    %v4852 = vld [vmem:[%s4850 + $0x8] sm:$0xff]
    %v4853 = vld [vmem:[%s4850 + $0x18] sm:$0xff]
    %v4854 = vld [vmem:[%s4850 + $0x20] sm:$0xff]
    %v4855 = vld [vmem:[%s4850 + $0x30] sm:$0xff]
    %v4856 = vld [vmem:[%s4850 + $0x38] sm:$0xff]
    %v4857 = vld [vmem:[%s4850 + $0x48] sm:$0xff]
    %v4858 = vld [vmem:[%s4850 + $0x50] sm:$0xff]
    %v4859 = vld [vmem:[%s4850 + $0x60] sm:$0xff]
    %v4860 = vld [vmem:[%s4850 + $0x68] sm:$0xff]
    %v4861 = vld [vmem:[%s4850 + $0x78] sm:$0xff]
    %v4862 = vld [vmem:[%s4850 + $0x80] sm:$0xff]
    %v4863 = vld [vmem:[%s4850 + $0x90] sm:$0xff]
    %v4864 = vld [vmem:[%s4850 + $0x98] sm:$0xff]
    %v4865 = vld [vmem:[%s4850 + $0xa8] sm:$0xff]
    %v4866 = vld [vmem:[%s4850 + $0xb0] sm:$0xff]
    %v4867 = vld [vmem:[%s4850 + $0xc0] sm:$0xff]
    %v4868 = vld [vmem:[%s4850 + $0xc8] sm:$0xff]
    %v4869 = vld [vmem:[%s4850 + $0xd8] sm:$0xff]
    %v4870 = vld [vmem:[%s4850 + $0xe0] sm:$0xff]
    %v4871 = vld [vmem:[%s4850 + $0xf0] sm:$0xff]
    %v4872 = vld [vmem:[%s4850 + $0xf8] sm:$0xff]
    %v4873 = vld [vmem:[%s4850 + $0x108] sm:$0xff]
    %v4874 = vld [vmem:[%s4850 + $0x110] sm:$0xff]
    %v4875 = vld [vmem:[%s4850 + $0x120] sm:$0xff]
    %v4876 = vld [vmem:[%s4850 + $0x128] sm:$0xff]
    %v4877 = vld [vmem:[%s4850 + $0x138] sm:$0xff]
    %v4878 = vld [vmem:[%s4850 + $0x140] sm:$0xff]
    %v4879 = vld [vmem:[%s4850 + $0x150] sm:$0xff]
    %v4880 = vld [vmem:[%s4850 + $0x158] sm:$0xff]
    %v4881 = vld [vmem:[%s4850 + $0x168] sm:$0xff]
    %v4882 = vld [vmem:[%s4850 + $0x170] sm:$0xff]
    %v4883 = vld [vmem:[%s4850 + $0x1b0] sm:$0xff]
    %v4884 = vld [vmem:[%s4850 + $0x1b8] sm:$0xff]
    %v4885 = vld [vmem:[%s4850 + $0x1c8] sm:$0xff]
    %v4886 = vld [vmem:[%s4850 + $0x1d0] sm:$0xff]
    %v4887 = vld [vmem:[%s4850 + $0x1e0] sm:$0xff]
    %v4888 = vld [vmem:[%s4850 + $0x1e8] sm:$0xff]
    %v4889 = vld [vmem:[%s4850 + $0x1f8] sm:$0xff]
    %v4890 = vld [vmem:[%s4850 + $0x200] sm:$0xff]
    %v4891 = vld [vmem:[%s4850 + $0x210] sm:$0xff]
    %v4892 = vld [vmem:[%s4850 + $0x218] sm:$0xff]
    %v4893 = vld [vmem:[%s4850 + $0x228] sm:$0xff]
    %v4894 = vld [vmem:[%s4850 + $0x230] sm:$0xff]
    %v4895 = vld [vmem:[%s4850 + $0x240] sm:$0xff]
    %v4896 = vld [vmem:[%s4850 + $0x248] sm:$0xff]
    %v4897 = vld [vmem:[%s4850 + $0x258] sm:$0xff]
    %v4898 = vld [vmem:[%s4850 + $0x260] sm:$0xff]
    %v4899 = vld [vmem:[%s4850 + $0x270] sm:$0xff]
    %v4900 = vld [vmem:[%s4850 + $0x278] sm:$0xff]
    %v4901 = vld [vmem:[%s4850 + $0x288] sm:$0xff]
    %v4902 = vld [vmem:[%s4850 + $0x290] sm:$0xff]
    %v4903 = vld [vmem:[%s4850 + $0x2a0] sm:$0xff]
    %v4904 = vld [vmem:[%s4850 + $0x2a8] sm:$0xff]
    %v4905 = vld [vmem:[%s4850 + $0x2b8] sm:$0xff]
    %v4906 = vld [vmem:[%s4850 + $0x2c0] sm:$0xff]
    %v4907 = vld [vmem:[%s4850 + $0x2d0] sm:$0xff]
    %v4908 = vld [vmem:[%s4850 + $0x2d8] sm:$0xff]
    %v4909 = vld [vmem:[%s4850 + $0x2e8] sm:$0xff]
    %v4910 = vld [vmem:[%s4850 + $0x2f0] sm:$0xff]
    %v4911 = vld [vmem:[%s4850 + $0x300] sm:$0xff]
    %v4912 = vld [vmem:[%s4850 + $0x308] sm:$0xff]
    %v4913 = vld [vmem:[%s4850 + $0x318] sm:$0xff]
    %v4914 = vld [vmem:[%s4850 + $0x320] sm:$0xff]
    %v4915 = vpack.c.bf16 %v4852, %v4851
    %v4916 = vpack.c.bf16 %v4854, %v4853
    %v4917 = vpack.c.bf16 %v4856, %v4855
    %v4918 = vpack.c.bf16 %v4858, %v4857
    %v4919 = vpack.c.bf16 %v4860, %v4859
    %v4920 = vpack.c.bf16 %v4862, %v4861
    %v4921 = vpack.c.bf16 %v4864, %v4863
    %v4922 = vpack.c.bf16 %v4866, %v4865
    %v4923 = vpack.c.bf16 %v4868, %v4867
    %v4924 = vpack.c.bf16 %v4870, %v4869
    %v4925 = vpack.c.bf16 %v4872, %v4871
    %v4926 = vpack.c.bf16 %v4874, %v4873
    %v4927 = vpack.c.bf16 %v4876, %v4875
    %v4928 = vpack.c.bf16 %v4878, %v4877
    %v4929 = vpack.c.bf16 %v4880, %v4879
    %v4930 = vpack.c.bf16 %v4882, %v4881
    %v4931 = vpack.c.bf16 %v4884, %v4883
    %v4932 = vpack.c.bf16 %v4886, %v4885
    %v4933 = vpack.c.bf16 %v4888, %v4887
    %v4934 = vpack.c.bf16 %v4890, %v4889
    %v4935 = vpack.c.bf16 %v4892, %v4891
    %v4936 = vpack.c.bf16 %v4894, %v4893
    %v4937 = vpack.c.bf16 %v4896, %v4895
    %v4938 = vpack.c.bf16 %v4898, %v4897
    %v4939 = vpack.c.bf16 %v4900, %v4899
    %v4940 = vpack.c.bf16 %v4902, %v4901
    %v4941 = vpack.c.bf16 %v4904, %v4903
    %v4942 = vpack.c.bf16 %v4906, %v4905
    %v4943 = vpack.c.bf16 %v4908, %v4907
    %v4944 = vpack.c.bf16 %v4910, %v4909
    %v4945 = vpack.c.bf16 %v4912, %v4911
    %v4946 = vpack.c.bf16 %v4914, %v4913
    %s4947 = scalar_lea.vmem %s4, 384
    %v4948 = vld [vmem:[%s4947] sm:$0xf]
    %v4949 = vld [vmem:[%s4947 + $0x4] sm:$0xf]
    %v4950 = vld [vmem:[%s4947 + $0x8] sm:$0xf]
    %v4951 = vld [vmem:[%s4947 + $0xc] sm:$0xf]
    %v4952 = vld [vmem:[%s4947 + $0x10] sm:$0xf]
    %v4953 = vld [vmem:[%s4947 + $0x14] sm:$0xf]
    %v4954 = vld [vmem:[%s4947 + $0x18] sm:$0xf]
    %v4955 = vld [vmem:[%s4947 + $0x1c] sm:$0xf]
    %v4956 = vld [vmem:[%s4947 + $0x20] sm:$0xf]
    %v4957 = vld [vmem:[%s4947 + $0x24] sm:$0xf]
    %v4958 = vld [vmem:[%s4947 + $0x28] sm:$0xf]
    %v4959 = vld [vmem:[%s4947 + $0x2c] sm:$0xf]
    %v4960 = vld [vmem:[%s4947 + $0x30] sm:$0xf]
    %v4961 = vld [vmem:[%s4947 + $0x34] sm:$0xf]
    %v4962 = vld [vmem:[%s4947 + $0x38] sm:$0xf]
    %v4963 = vld [vmem:[%s4947 + $0x3c] sm:$0xf]
    %v4980 = vunpack.c.l.b16 %v4948
    %v4981 = vunpack.c.l.b16 %v4949
    %v4982 = vunpack.c.l.b16 %v4950
    %v4983 = vunpack.c.l.b16 %v4951
    %v4984 = vunpack.c.l.b16 %v4952
    %v4985 = vunpack.c.l.b16 %v4953
    %v4986 = vunpack.c.l.b16 %v4954
    %v4987 = vunpack.c.l.b16 %v4955
    %v4988 = vunpack.c.l.b16 %v4956
    %v4989 = vunpack.c.l.b16 %v4957
    %v4990 = vunpack.c.l.b16 %v4958
    %v4991 = vunpack.c.l.b16 %v4959
    %v4992 = vunpack.c.l.b16 %v4960
    %v4993 = vunpack.c.l.b16 %v4961
    %v4994 = vunpack.c.l.b16 %v4962
    %v4995 = vunpack.c.l.b16 %v4963
    %v4996 = vpack.c.b16 %v4981, %v4980
    %v4997 = vpack.c.b16 %v4983, %v4982
    %v4998 = vpack.c.b16 %v4985, %v4984
    %v4999 = vpack.c.b16 %v4987, %v4986
    %v5000 = vpack.c.b16 %v4989, %v4988
    %v5001 = vpack.c.b16 %v4991, %v4990
    %v5002 = vpack.c.b16 %v4993, %v4992
    %v5003 = vpack.c.b16 %v4995, %v4994
    %5012 = vmatpush.bf16.msra.mxu0 %v5003
    %5013 = vmatpush.bf16.msra.mxu0 %v5002
    %5014 = vmatpush.bf16.msra.mxu0 %v5001
    %5015 = vmatpush.bf16.msra.mxu0 %v5000
    %5016 = vmatpush.bf16.msra.mxu0 %v4999
    %5017 = vmatpush.bf16.msra.mxu0 %v4998
    %5018 = vmatpush.bf16.msra.mxu0 %v4997
    %5019 = vmatpush.bf16.msra.mxu0 %v4996
    %5020 = vmatmul.bf16.gmra.mxu0 %v4915
    %v5021 = vpop.f32.mrf.mxu0
    %v5022 = vadd.f32 0.0, %v5021
    %v5023 = vpop.f32.mrf.mxu0
    %v5024 = vadd.f32 0.0, %v5023
    %5025 = vmatmul.bf16.gmra.mxu0 %v4916
    %v5026 = vpop.f32.mrf.mxu0
    %v5027 = vadd.f32 0.0, %v5026
    %v5028 = vpop.f32.mrf.mxu0
    %v5029 = vadd.f32 0.0, %v5028
    %5030 = vmatmul.bf16.gmra.mxu0 %v4917
    %v5031 = vpop.f32.mrf.mxu0
    %v5032 = vadd.f32 0.0, %v5031
    %v5033 = vpop.f32.mrf.mxu0
    %v5034 = vadd.f32 0.0, %v5033
    %5035 = vmatmul.bf16.gmra.mxu0 %v4918
    %v5036 = vpop.f32.mrf.mxu0
    %v5037 = vadd.f32 0.0, %v5036
    %v5038 = vpop.f32.mrf.mxu0
    %v5039 = vadd.f32 0.0, %v5038
    %5040 = vmatmul.bf16.gmra.mxu0 %v4919
    %v5041 = vpop.f32.mrf.mxu0
    %v5042 = vadd.f32 0.0, %v5041
    %v5043 = vpop.f32.mrf.mxu0
    %v5044 = vadd.f32 0.0, %v5043
    %5045 = vmatmul.bf16.gmra.mxu0 %v4920
    %v5046 = vpop.f32.mrf.mxu0
    %v5047 = vadd.f32 0.0, %v5046
    %v5048 = vpop.f32.mrf.mxu0
    %v5049 = vadd.f32 0.0, %v5048
    %5050 = vmatmul.bf16.gmra.mxu0 %v4921
    %v5051 = vpop.f32.mrf.mxu0
    %v5052 = vadd.f32 0.0, %v5051
    %v5053 = vpop.f32.mrf.mxu0
    %v5054 = vadd.f32 0.0, %v5053
    %5055 = vmatmul.bf16.gmra.mxu0 %v4922
    %v5056 = vpop.f32.mrf.mxu0
    %v5057 = vadd.f32 0.0, %v5056
    %v5058 = vpop.f32.mrf.mxu0
    %v5059 = vadd.f32 0.0, %v5058
    %5060 = vmatmul.bf16.gmra.mxu0 %v4923
    %v5061 = vpop.f32.mrf.mxu0
    %v5062 = vadd.f32 0.0, %v5061
    %v5063 = vpop.f32.mrf.mxu0
    %v5064 = vadd.f32 0.0, %v5063
    %5065 = vmatmul.bf16.gmra.mxu0 %v4924
    %v5066 = vpop.f32.mrf.mxu0
    %v5067 = vadd.f32 0.0, %v5066
    %v5068 = vpop.f32.mrf.mxu0
    %v5069 = vadd.f32 0.0, %v5068
    %5070 = vmatmul.bf16.gmra.mxu0 %v4925
    %v5071 = vpop.f32.mrf.mxu0
    %v5072 = vadd.f32 0.0, %v5071
    %v5073 = vpop.f32.mrf.mxu0
    %v5074 = vadd.f32 0.0, %v5073
    %5075 = vmatmul.bf16.gmra.mxu0 %v4926
    %v5076 = vpop.f32.mrf.mxu0
    %v5077 = vadd.f32 0.0, %v5076
    %v5078 = vpop.f32.mrf.mxu0
    %v5079 = vadd.f32 0.0, %v5078
    %5080 = vmatmul.bf16.gmra.mxu0 %v4927
    %v5081 = vpop.f32.mrf.mxu0
    %v5082 = vadd.f32 0.0, %v5081
    %v5083 = vpop.f32.mrf.mxu0
    %v5084 = vadd.f32 0.0, %v5083
    %5085 = vmatmul.bf16.gmra.mxu0 %v4928
    %v5086 = vpop.f32.mrf.mxu0
    %v5087 = vadd.f32 0.0, %v5086
    %v5088 = vpop.f32.mrf.mxu0
    %v5089 = vadd.f32 0.0, %v5088
    %5090 = vmatmul.bf16.gmra.mxu0 %v4929
    %v5091 = vpop.f32.mrf.mxu0
    %v5092 = vadd.f32 0.0, %v5091
    %v5093 = vpop.f32.mrf.mxu0
    %v5094 = vadd.f32 0.0, %v5093
    %5095 = vmatmul.bf16.gmra.mxu0 %v4930
    %v5096 = vpop.f32.mrf.mxu0
    %v5097 = vadd.f32 0.0, %v5096
    %v5098 = vpop.f32.mrf.mxu0
    %v5099 = vadd.f32 0.0, %v5098
    %5100 = vmatmul.bf16.gmra.mxu0 %v4931
    %v5101 = vpop.f32.mrf.mxu0
    %v5102 = vadd.f32 0.0, %v5101
    %v5103 = vpop.f32.mrf.mxu0
    %v5104 = vadd.f32 0.0, %v5103
    %5105 = vmatmul.bf16.gmra.mxu0 %v4932
    %v5106 = vpop.f32.mrf.mxu0
    %v5107 = vadd.f32 0.0, %v5106
    %v5108 = vpop.f32.mrf.mxu0
    %v5109 = vadd.f32 0.0, %v5108
    %5110 = vmatmul.bf16.gmra.mxu0 %v4933
    %v5111 = vpop.f32.mrf.mxu0
    %v5112 = vadd.f32 0.0, %v5111
    %v5113 = vpop.f32.mrf.mxu0
    %v5114 = vadd.f32 0.0, %v5113
    %5115 = vmatmul.bf16.gmra.mxu0 %v4934
    %v5116 = vpop.f32.mrf.mxu0
    %v5117 = vadd.f32 0.0, %v5116
    %v5118 = vpop.f32.mrf.mxu0
    %v5119 = vadd.f32 0.0, %v5118
    %5120 = vmatmul.bf16.gmra.mxu0 %v4935
    %v5121 = vpop.f32.mrf.mxu0
    %v5122 = vadd.f32 0.0, %v5121
    %v5123 = vpop.f32.mrf.mxu0
    %v5124 = vadd.f32 0.0, %v5123
    %5125 = vmatmul.bf16.gmra.mxu0 %v4936
    %v5126 = vpop.f32.mrf.mxu0
    %v5127 = vadd.f32 0.0, %v5126
    %v5128 = vpop.f32.mrf.mxu0
    %v5129 = vadd.f32 0.0, %v5128
    %5130 = vmatmul.bf16.gmra.mxu0 %v4937
    %v5131 = vpop.f32.mrf.mxu0
    %v5132 = vadd.f32 0.0, %v5131
    %v5133 = vpop.f32.mrf.mxu0
    %v5134 = vadd.f32 0.0, %v5133
    %5135 = vmatmul.bf16.gmra.mxu0 %v4938
    %v5136 = vpop.f32.mrf.mxu0
    %v5137 = vadd.f32 0.0, %v5136
    %v5138 = vpop.f32.mrf.mxu0
    %v5139 = vadd.f32 0.0, %v5138
    %5140 = vmatmul.bf16.gmra.mxu0 %v4939
    %v5141 = vpop.f32.mrf.mxu0
    %v5142 = vadd.f32 0.0, %v5141
    %v5143 = vpop.f32.mrf.mxu0
    %v5144 = vadd.f32 0.0, %v5143
    %5145 = vmatmul.bf16.gmra.mxu0 %v4940
    %v5146 = vpop.f32.mrf.mxu0
    %v5147 = vadd.f32 0.0, %v5146
    %v5148 = vpop.f32.mrf.mxu0
    %v5149 = vadd.f32 0.0, %v5148
    %5150 = vmatmul.bf16.gmra.mxu0 %v4941
    %v5151 = vpop.f32.mrf.mxu0
    %v5152 = vadd.f32 0.0, %v5151
    %v5153 = vpop.f32.mrf.mxu0
    %v5154 = vadd.f32 0.0, %v5153
    %5155 = vmatmul.bf16.gmra.mxu0 %v4942
    %v5156 = vpop.f32.mrf.mxu0
    %v5157 = vadd.f32 0.0, %v5156
    %v5158 = vpop.f32.mrf.mxu0
    %v5159 = vadd.f32 0.0, %v5158
    %5160 = vmatmul.bf16.gmra.mxu0 %v4943
    %v5161 = vpop.f32.mrf.mxu0
    %v5162 = vadd.f32 0.0, %v5161
    %v5163 = vpop.f32.mrf.mxu0
    %v5164 = vadd.f32 0.0, %v5163
    %5165 = vmatmul.bf16.gmra.mxu0 %v4944
    %v5166 = vpop.f32.mrf.mxu0
    %v5167 = vadd.f32 0.0, %v5166
    %v5168 = vpop.f32.mrf.mxu0
    %v5169 = vadd.f32 0.0, %v5168
    %5170 = vmatmul.bf16.gmra.mxu0 %v4945
    %v5171 = vpop.f32.mrf.mxu0
    %v5172 = vadd.f32 0.0, %v5171
    %v5173 = vpop.f32.mrf.mxu0
    %v5174 = vadd.f32 0.0, %v5173
    %5175 = vmatmul.bf16.gmra.mxu0 %v4946
    %v5176 = vpop.f32.mrf.mxu0
    %v5177 = vadd.f32 0.0, %v5176
    %v5178 = vpop.f32.mrf.mxu0
    %v5179 = vadd.f32 0.0, %v5178
    %5180 = vdwg.mxu0
    %v5181 = vadd.f32 %v4786, %v5022
    %v5182 = vadd.f32 %v4787, %v5024
    %v5183 = vadd.f32 %v4788, %v5027
    %v5184 = vadd.f32 %v4789, %v5029
    %v5185 = vadd.f32 %v4790, %v5032
    %v5186 = vadd.f32 %v4791, %v5034
    %v5187 = vadd.f32 %v4792, %v5037
    %v5188 = vadd.f32 %v4793, %v5039
    %v5189 = vadd.f32 %v4794, %v5042
    %v5190 = vadd.f32 %v4795, %v5044
    %v5191 = vadd.f32 %v4796, %v5047
    %v5192 = vadd.f32 %v4797, %v5049
    %v5193 = vadd.f32 %v4798, %v5052
    %v5194 = vadd.f32 %v4799, %v5054
    %v5195 = vadd.f32 %v4800, %v5057
    %v5196 = vadd.f32 %v4801, %v5059
    %v5197 = vadd.f32 %v4802, %v5062
    %v5198 = vadd.f32 %v4803, %v5064
    %v5199 = vadd.f32 %v4804, %v5067
    %v5200 = vadd.f32 %v4805, %v5069
    %v5201 = vadd.f32 %v4806, %v5072
    %v5202 = vadd.f32 %v4807, %v5074
    %v5203 = vadd.f32 %v4808, %v5077
    %v5204 = vadd.f32 %v4809, %v5079
    %v5205 = vadd.f32 %v4810, %v5082
    %v5206 = vadd.f32 %v4811, %v5084
    %v5207 = vadd.f32 %v4812, %v5087
    %v5208 = vadd.f32 %v4813, %v5089
    %v5209 = vadd.f32 %v4814, %v5092
    %v5210 = vadd.f32 %v4815, %v5094
    %v5211 = vadd.f32 %v4816, %v5097
    %v5212 = vadd.f32 %v4817, %v5099
    %v5213 = vadd.f32 %v4818, %v5102
    %v5214 = vadd.f32 %v4819, %v5104
    %v5215 = vadd.f32 %v4820, %v5107
    %v5216 = vadd.f32 %v4821, %v5109
    %v5217 = vadd.f32 %v4822, %v5112
    %v5218 = vadd.f32 %v4823, %v5114
    %v5219 = vadd.f32 %v4824, %v5117
    %v5220 = vadd.f32 %v4825, %v5119
    %v5221 = vadd.f32 %v4826, %v5122
    %v5222 = vadd.f32 %v4827, %v5124
    %v5223 = vadd.f32 %v4828, %v5127
    %v5224 = vadd.f32 %v4829, %v5129
    %v5225 = vadd.f32 %v4830, %v5132
    %v5226 = vadd.f32 %v4831, %v5134
    %v5227 = vadd.f32 %v4832, %v5137
    %v5228 = vadd.f32 %v4833, %v5139
    %v5229 = vadd.f32 %v4834, %v5142
    %v5230 = vadd.f32 %v4835, %v5144
    %v5231 = vadd.f32 %v4836, %v5147
    %v5232 = vadd.f32 %v4837, %v5149
    %v5233 = vadd.f32 %v4838, %v5152
    %v5234 = vadd.f32 %v4839, %v5154
    %v5235 = vadd.f32 %v4840, %v5157
    %v5236 = vadd.f32 %v4841, %v5159
    %v5237 = vadd.f32 %v4842, %v5162
    %v5238 = vadd.f32 %v4843, %v5164
    %v5239 = vadd.f32 %v4844, %v5167
    %v5240 = vadd.f32 %v4845, %v5169
    %v5241 = vadd.f32 %v4846, %v5172
    %v5242 = vadd.f32 %v4847, %v5174
    %v5243 = vadd.f32 %v4848, %v5177
    %v5244 = vadd.f32 %v4849, %v5179
    %v5245 = vld [vmem:[%s4850 + $0x1] sm:$0xff]
    %v5246 = vld [vmem:[%s4850 + $0x9] sm:$0xff]
    %v5247 = vld [vmem:[%s4850 + $0x19] sm:$0xff]
    %v5248 = vld [vmem:[%s4850 + $0x21] sm:$0xff]
    %v5249 = vld [vmem:[%s4850 + $0x31] sm:$0xff]
    %v5250 = vld [vmem:[%s4850 + $0x39] sm:$0xff]
    %v5251 = vld [vmem:[%s4850 + $0x49] sm:$0xff]
    %v5252 = vld [vmem:[%s4850 + $0x51] sm:$0xff]
    %v5253 = vld [vmem:[%s4850 + $0x61] sm:$0xff]
    %v5254 = vld [vmem:[%s4850 + $0x69] sm:$0xff]
    %v5255 = vld [vmem:[%s4850 + $0x79] sm:$0xff]
    %v5256 = vld [vmem:[%s4850 + $0x81] sm:$0xff]
    %v5257 = vld [vmem:[%s4850 + $0x91] sm:$0xff]
    %v5258 = vld [vmem:[%s4850 + $0x99] sm:$0xff]
    %v5259 = vld [vmem:[%s4850 + $0xa9] sm:$0xff]
    %v5260 = vld [vmem:[%s4850 + $0xb1] sm:$0xff]
    %v5261 = vld [vmem:[%s4850 + $0xc1] sm:$0xff]
    %v5262 = vld [vmem:[%s4850 + $0xc9] sm:$0xff]
    %v5263 = vld [vmem:[%s4850 + $0xd9] sm:$0xff]
    %v5264 = vld [vmem:[%s4850 + $0xe1] sm:$0xff]
    %v5265 = vld [vmem:[%s4850 + $0xf1] sm:$0xff]
    %v5266 = vld [vmem:[%s4850 + $0xf9] sm:$0xff]
    %v5267 = vld [vmem:[%s4850 + $0x109] sm:$0xff]
    %v5268 = vld [vmem:[%s4850 + $0x111] sm:$0xff]
    %v5269 = vld [vmem:[%s4850 + $0x121] sm:$0xff]
    %v5270 = vld [vmem:[%s4850 + $0x129] sm:$0xff]
    %v5271 = vld [vmem:[%s4850 + $0x139] sm:$0xff]
    %v5272 = vld [vmem:[%s4850 + $0x141] sm:$0xff]
    %v5273 = vld [vmem:[%s4850 + $0x151] sm:$0xff]
    %v5274 = vld [vmem:[%s4850 + $0x159] sm:$0xff]
    %v5275 = vld [vmem:[%s4850 + $0x169] sm:$0xff]
    %v5276 = vld [vmem:[%s4850 + $0x171] sm:$0xff]
    %v5277 = vld [vmem:[%s4850 + $0x1b1] sm:$0xff]
    %v5278 = vld [vmem:[%s4850 + $0x1b9] sm:$0xff]
    %v5279 = vld [vmem:[%s4850 + $0x1c9] sm:$0xff]
    %v5280 = vld [vmem:[%s4850 + $0x1d1] sm:$0xff]
    %v5281 = vld [vmem:[%s4850 + $0x1e1] sm:$0xff]
    %v5282 = vld [vmem:[%s4850 + $0x1e9] sm:$0xff]
    %v5283 = vld [vmem:[%s4850 + $0x1f9] sm:$0xff]
    %v5284 = vld [vmem:[%s4850 + $0x201] sm:$0xff]
    %v5285 = vld [vmem:[%s4850 + $0x211] sm:$0xff]
    %v5286 = vld [vmem:[%s4850 + $0x219] sm:$0xff]
    %v5287 = vld [vmem:[%s4850 + $0x229] sm:$0xff]
    %v5288 = vld [vmem:[%s4850 + $0x231] sm:$0xff]
    %v5289 = vld [vmem:[%s4850 + $0x241] sm:$0xff]
    %v5290 = vld [vmem:[%s4850 + $0x249] sm:$0xff]
    %v5291 = vld [vmem:[%s4850 + $0x259] sm:$0xff]
    %v5292 = vld [vmem:[%s4850 + $0x261] sm:$0xff]
    %v5293 = vld [vmem:[%s4850 + $0x271] sm:$0xff]
    %v5294 = vld [vmem:[%s4850 + $0x279] sm:$0xff]
    %v5295 = vld [vmem:[%s4850 + $0x289] sm:$0xff]
    %v5296 = vld [vmem:[%s4850 + $0x291] sm:$0xff]
    %v5297 = vld [vmem:[%s4850 + $0x2a1] sm:$0xff]
    %v5298 = vld [vmem:[%s4850 + $0x2a9] sm:$0xff]
    %v5299 = vld [vmem:[%s4850 + $0x2b9] sm:$0xff]
    %v5300 = vld [vmem:[%s4850 + $0x2c1] sm:$0xff]
    %v5301 = vld [vmem:[%s4850 + $0x2d1] sm:$0xff]
    %v5302 = vld [vmem:[%s4850 + $0x2d9] sm:$0xff]
    %v5303 = vld [vmem:[%s4850 + $0x2e9] sm:$0xff]
    %v5304 = vld [vmem:[%s4850 + $0x2f1] sm:$0xff]
    %v5305 = vld [vmem:[%s4850 + $0x301] sm:$0xff]
    %v5306 = vld [vmem:[%s4850 + $0x309] sm:$0xff]
    %v5307 = vld [vmem:[%s4850 + $0x319] sm:$0xff]
    %v5308 = vld [vmem:[%s4850 + $0x321] sm:$0xff]
    %v5309 = vpack.c.bf16 %v5246, %v5245
    %v5310 = vpack.c.bf16 %v5248, %v5247
    %v5311 = vpack.c.bf16 %v5250, %v5249
    %v5312 = vpack.c.bf16 %v5252, %v5251
    %v5313 = vpack.c.bf16 %v5254, %v5253
    %v5314 = vpack.c.bf16 %v5256, %v5255
    %v5315 = vpack.c.bf16 %v5258, %v5257
    %v5316 = vpack.c.bf16 %v5260, %v5259
    %v5317 = vpack.c.bf16 %v5262, %v5261
    %v5318 = vpack.c.bf16 %v5264, %v5263
    %v5319 = vpack.c.bf16 %v5266, %v5265
    %v5320 = vpack.c.bf16 %v5268, %v5267
    %v5321 = vpack.c.bf16 %v5270, %v5269
    %v5322 = vpack.c.bf16 %v5272, %v5271
    %v5323 = vpack.c.bf16 %v5274, %v5273
    %v5324 = vpack.c.bf16 %v5276, %v5275
    %v5325 = vpack.c.bf16 %v5278, %v5277
    %v5326 = vpack.c.bf16 %v5280, %v5279
    %v5327 = vpack.c.bf16 %v5282, %v5281
    %v5328 = vpack.c.bf16 %v5284, %v5283
    %v5329 = vpack.c.bf16 %v5286, %v5285
    %v5330 = vpack.c.bf16 %v5288, %v5287
    %v5331 = vpack.c.bf16 %v5290, %v5289
    %v5332 = vpack.c.bf16 %v5292, %v5291
    %v5333 = vpack.c.bf16 %v5294, %v5293
    %v5334 = vpack.c.bf16 %v5296, %v5295
    %v5335 = vpack.c.bf16 %v5298, %v5297
    %v5336 = vpack.c.bf16 %v5300, %v5299
    %v5337 = vpack.c.bf16 %v5302, %v5301
    %v5338 = vpack.c.bf16 %v5304, %v5303
    %v5339 = vpack.c.bf16 %v5306, %v5305
    %v5340 = vpack.c.bf16 %v5308, %v5307
    %s5341 = scalar_lea.vmem %s4, 448
    %v5342 = vld [vmem:[%s5341] sm:$0xf]
    %v5343 = vld [vmem:[%s5341 + $0x4] sm:$0xf]
    %v5344 = vld [vmem:[%s5341 + $0x8] sm:$0xf]
    %v5345 = vld [vmem:[%s5341 + $0xc] sm:$0xf]
    %v5346 = vld [vmem:[%s5341 + $0x10] sm:$0xf]
    %v5347 = vld [vmem:[%s5341 + $0x14] sm:$0xf]
    %v5348 = vld [vmem:[%s5341 + $0x18] sm:$0xf]
    %v5349 = vld [vmem:[%s5341 + $0x1c] sm:$0xf]
    %v5350 = vld [vmem:[%s5341 + $0x20] sm:$0xf]
    %v5351 = vld [vmem:[%s5341 + $0x24] sm:$0xf]
    %v5352 = vld [vmem:[%s5341 + $0x28] sm:$0xf]
    %v5353 = vld [vmem:[%s5341 + $0x2c] sm:$0xf]
    %v5354 = vld [vmem:[%s5341 + $0x30] sm:$0xf]
    %v5355 = vld [vmem:[%s5341 + $0x34] sm:$0xf]
    %v5356 = vld [vmem:[%s5341 + $0x38] sm:$0xf]
    %v5357 = vld [vmem:[%s5341 + $0x3c] sm:$0xf]
    %v5374 = vunpack.c.l.b16 %v5342
    %v5375 = vunpack.c.l.b16 %v5343
    %v5376 = vunpack.c.l.b16 %v5344
    %v5377 = vunpack.c.l.b16 %v5345
    %v5378 = vunpack.c.l.b16 %v5346
    %v5379 = vunpack.c.l.b16 %v5347
    %v5380 = vunpack.c.l.b16 %v5348
    %v5381 = vunpack.c.l.b16 %v5349
    %v5382 = vunpack.c.l.b16 %v5350
    %v5383 = vunpack.c.l.b16 %v5351
    %v5384 = vunpack.c.l.b16 %v5352
    %v5385 = vunpack.c.l.b16 %v5353
    %v5386 = vunpack.c.l.b16 %v5354
    %v5387 = vunpack.c.l.b16 %v5355
    %v5388 = vunpack.c.l.b16 %v5356
    %v5389 = vunpack.c.l.b16 %v5357
    %v5390 = vpack.c.b16 %v5375, %v5374
    %v5391 = vpack.c.b16 %v5377, %v5376
    %v5392 = vpack.c.b16 %v5379, %v5378
    %v5393 = vpack.c.b16 %v5381, %v5380
    %v5394 = vpack.c.b16 %v5383, %v5382
    %v5395 = vpack.c.b16 %v5385, %v5384
    %v5396 = vpack.c.b16 %v5387, %v5386
    %v5397 = vpack.c.b16 %v5389, %v5388
    %5406 = vmatpush.bf16.msra.mxu0 %v5397
    %5407 = vmatpush.bf16.msra.mxu0 %v5396
    %5408 = vmatpush.bf16.msra.mxu0 %v5395
    %5409 = vmatpush.bf16.msra.mxu0 %v5394
    %5410 = vmatpush.bf16.msra.mxu0 %v5393
    %5411 = vmatpush.bf16.msra.mxu0 %v5392
    %5412 = vmatpush.bf16.msra.mxu0 %v5391
    %5413 = vmatpush.bf16.msra.mxu0 %v5390
    %5414 = vmatmul.bf16.gmra.mxu0 %v5309
    %v5415 = vpop.f32.mrf.mxu0
    %v5416 = vadd.f32 0.0, %v5415
    %v5417 = vpop.f32.mrf.mxu0
    %v5418 = vadd.f32 0.0, %v5417
    %5419 = vmatmul.bf16.gmra.mxu0 %v5310
    %v5420 = vpop.f32.mrf.mxu0
    %v5421 = vadd.f32 0.0, %v5420
    %v5422 = vpop.f32.mrf.mxu0
    %v5423 = vadd.f32 0.0, %v5422
    %5424 = vmatmul.bf16.gmra.mxu0 %v5311
    %v5425 = vpop.f32.mrf.mxu0
    %v5426 = vadd.f32 0.0, %v5425
    %v5427 = vpop.f32.mrf.mxu0
    %v5428 = vadd.f32 0.0, %v5427
    %5429 = vmatmul.bf16.gmra.mxu0 %v5312
    %v5430 = vpop.f32.mrf.mxu0
    %v5431 = vadd.f32 0.0, %v5430
    %v5432 = vpop.f32.mrf.mxu0
    %v5433 = vadd.f32 0.0, %v5432
    %5434 = vmatmul.bf16.gmra.mxu0 %v5313
    %v5435 = vpop.f32.mrf.mxu0
    %v5436 = vadd.f32 0.0, %v5435
    %v5437 = vpop.f32.mrf.mxu0
    %v5438 = vadd.f32 0.0, %v5437
    %5439 = vmatmul.bf16.gmra.mxu0 %v5314
    %v5440 = vpop.f32.mrf.mxu0
    %v5441 = vadd.f32 0.0, %v5440
    %v5442 = vpop.f32.mrf.mxu0
    %v5443 = vadd.f32 0.0, %v5442
    %5444 = vmatmul.bf16.gmra.mxu0 %v5315
    %v5445 = vpop.f32.mrf.mxu0
    %v5446 = vadd.f32 0.0, %v5445
    %v5447 = vpop.f32.mrf.mxu0
    %v5448 = vadd.f32 0.0, %v5447
    %5449 = vmatmul.bf16.gmra.mxu0 %v5316
    %v5450 = vpop.f32.mrf.mxu0
    %v5451 = vadd.f32 0.0, %v5450
    %v5452 = vpop.f32.mrf.mxu0
    %v5453 = vadd.f32 0.0, %v5452
    %5454 = vmatmul.bf16.gmra.mxu0 %v5317
    %v5455 = vpop.f32.mrf.mxu0
    %v5456 = vadd.f32 0.0, %v5455
    %v5457 = vpop.f32.mrf.mxu0
    %v5458 = vadd.f32 0.0, %v5457
    %5459 = vmatmul.bf16.gmra.mxu0 %v5318
    %v5460 = vpop.f32.mrf.mxu0
    %v5461 = vadd.f32 0.0, %v5460
    %v5462 = vpop.f32.mrf.mxu0
    %v5463 = vadd.f32 0.0, %v5462
    %5464 = vmatmul.bf16.gmra.mxu0 %v5319
    %v5465 = vpop.f32.mrf.mxu0
    %v5466 = vadd.f32 0.0, %v5465
    %v5467 = vpop.f32.mrf.mxu0
    %v5468 = vadd.f32 0.0, %v5467
    %5469 = vmatmul.bf16.gmra.mxu0 %v5320
    %v5470 = vpop.f32.mrf.mxu0
    %v5471 = vadd.f32 0.0, %v5470
    %v5472 = vpop.f32.mrf.mxu0
    %v5473 = vadd.f32 0.0, %v5472
    %5474 = vmatmul.bf16.gmra.mxu0 %v5321
    %v5475 = vpop.f32.mrf.mxu0
    %v5476 = vadd.f32 0.0, %v5475
    %v5477 = vpop.f32.mrf.mxu0
    %v5478 = vadd.f32 0.0, %v5477
    %5479 = vmatmul.bf16.gmra.mxu0 %v5322
    %v5480 = vpop.f32.mrf.mxu0
    %v5481 = vadd.f32 0.0, %v5480
    %v5482 = vpop.f32.mrf.mxu0
    %v5483 = vadd.f32 0.0, %v5482
    %5484 = vmatmul.bf16.gmra.mxu0 %v5323
    %v5485 = vpop.f32.mrf.mxu0
    %v5486 = vadd.f32 0.0, %v5485
    %v5487 = vpop.f32.mrf.mxu0
    %v5488 = vadd.f32 0.0, %v5487
    %5489 = vmatmul.bf16.gmra.mxu0 %v5324
    %v5490 = vpop.f32.mrf.mxu0
    %v5491 = vadd.f32 0.0, %v5490
    %v5492 = vpop.f32.mrf.mxu0
    %v5493 = vadd.f32 0.0, %v5492
    %5494 = vmatmul.bf16.gmra.mxu0 %v5325
    %v5495 = vpop.f32.mrf.mxu0
    %v5496 = vadd.f32 0.0, %v5495
    %v5497 = vpop.f32.mrf.mxu0
    %v5498 = vadd.f32 0.0, %v5497
    %5499 = vmatmul.bf16.gmra.mxu0 %v5326
    %v5500 = vpop.f32.mrf.mxu0
    %v5501 = vadd.f32 0.0, %v5500
    %v5502 = vpop.f32.mrf.mxu0
    %v5503 = vadd.f32 0.0, %v5502
    %5504 = vmatmul.bf16.gmra.mxu0 %v5327
    %v5505 = vpop.f32.mrf.mxu0
    %v5506 = vadd.f32 0.0, %v5505
    %v5507 = vpop.f32.mrf.mxu0
    %v5508 = vadd.f32 0.0, %v5507
    %5509 = vmatmul.bf16.gmra.mxu0 %v5328
    %v5510 = vpop.f32.mrf.mxu0
    %v5511 = vadd.f32 0.0, %v5510
    %v5512 = vpop.f32.mrf.mxu0
    %v5513 = vadd.f32 0.0, %v5512
    %5514 = vmatmul.bf16.gmra.mxu0 %v5329
    %v5515 = vpop.f32.mrf.mxu0
    %v5516 = vadd.f32 0.0, %v5515
    %v5517 = vpop.f32.mrf.mxu0
    %v5518 = vadd.f32 0.0, %v5517
    %5519 = vmatmul.bf16.gmra.mxu0 %v5330
    %v5520 = vpop.f32.mrf.mxu0
    %v5521 = vadd.f32 0.0, %v5520
    %v5522 = vpop.f32.mrf.mxu0
    %v5523 = vadd.f32 0.0, %v5522
    %5524 = vmatmul.bf16.gmra.mxu0 %v5331
    %v5525 = vpop.f32.mrf.mxu0
    %v5526 = vadd.f32 0.0, %v5525
    %v5527 = vpop.f32.mrf.mxu0
    %v5528 = vadd.f32 0.0, %v5527
    %5529 = vmatmul.bf16.gmra.mxu0 %v5332
    %v5530 = vpop.f32.mrf.mxu0
    %v5531 = vadd.f32 0.0, %v5530
    %v5532 = vpop.f32.mrf.mxu0
    %v5533 = vadd.f32 0.0, %v5532
    %5534 = vmatmul.bf16.gmra.mxu0 %v5333
    %v5535 = vpop.f32.mrf.mxu0
    %v5536 = vadd.f32 0.0, %v5535
    %v5537 = vpop.f32.mrf.mxu0
    %v5538 = vadd.f32 0.0, %v5537
    %5539 = vmatmul.bf16.gmra.mxu0 %v5334
    %v5540 = vpop.f32.mrf.mxu0
    %v5541 = vadd.f32 0.0, %v5540
    %v5542 = vpop.f32.mrf.mxu0
    %v5543 = vadd.f32 0.0, %v5542
    %5544 = vmatmul.bf16.gmra.mxu0 %v5335
    %v5545 = vpop.f32.mrf.mxu0
    %v5546 = vadd.f32 0.0, %v5545
    %v5547 = vpop.f32.mrf.mxu0
    %v5548 = vadd.f32 0.0, %v5547
    %5549 = vmatmul.bf16.gmra.mxu0 %v5336
    %v5550 = vpop.f32.mrf.mxu0
    %v5551 = vadd.f32 0.0, %v5550
    %v5552 = vpop.f32.mrf.mxu0
    %v5553 = vadd.f32 0.0, %v5552
    %5554 = vmatmul.bf16.gmra.mxu0 %v5337
    %v5555 = vpop.f32.mrf.mxu0
    %v5556 = vadd.f32 0.0, %v5555
    %v5557 = vpop.f32.mrf.mxu0
    %v5558 = vadd.f32 0.0, %v5557
    %5559 = vmatmul.bf16.gmra.mxu0 %v5338
    %v5560 = vpop.f32.mrf.mxu0
    %v5561 = vadd.f32 0.0, %v5560
    %v5562 = vpop.f32.mrf.mxu0
    %v5563 = vadd.f32 0.0, %v5562
    %5564 = vmatmul.bf16.gmra.mxu0 %v5339
    %v5565 = vpop.f32.mrf.mxu0
    %v5566 = vadd.f32 0.0, %v5565
    %v5567 = vpop.f32.mrf.mxu0
    %v5568 = vadd.f32 0.0, %v5567
    %5569 = vmatmul.bf16.gmra.mxu0 %v5340
    %v5570 = vpop.f32.mrf.mxu0
    %v5571 = vadd.f32 0.0, %v5570
    %v5572 = vpop.f32.mrf.mxu0
    %v5573 = vadd.f32 0.0, %v5572
    %5574 = vdwg.mxu0
    %v5575 = vadd.f32 %v5181, %v5416
    %v5576 = vadd.f32 %v5182, %v5418
    %v5577 = vadd.f32 %v5183, %v5421
    %v5578 = vadd.f32 %v5184, %v5423
    %v5579 = vadd.f32 %v5185, %v5426
    %v5580 = vadd.f32 %v5186, %v5428
    %v5581 = vadd.f32 %v5187, %v5431
    %v5582 = vadd.f32 %v5188, %v5433
    %v5583 = vadd.f32 %v5189, %v5436
    %v5584 = vadd.f32 %v5190, %v5438
    %v5585 = vadd.f32 %v5191, %v5441
    %v5586 = vadd.f32 %v5192, %v5443
    %v5587 = vadd.f32 %v5193, %v5446
    %v5588 = vadd.f32 %v5194, %v5448
    %v5589 = vadd.f32 %v5195, %v5451
    %v5590 = vadd.f32 %v5196, %v5453
    %v5591 = vadd.f32 %v5197, %v5456
    %v5592 = vadd.f32 %v5198, %v5458
    %v5593 = vadd.f32 %v5199, %v5461
    %v5594 = vadd.f32 %v5200, %v5463
    %v5595 = vadd.f32 %v5201, %v5466
    %v5596 = vadd.f32 %v5202, %v5468
    %v5597 = vadd.f32 %v5203, %v5471
    %v5598 = vadd.f32 %v5204, %v5473
    %v5599 = vadd.f32 %v5205, %v5476
    %v5600 = vadd.f32 %v5206, %v5478
    %v5601 = vadd.f32 %v5207, %v5481
    %v5602 = vadd.f32 %v5208, %v5483
    %v5603 = vadd.f32 %v5209, %v5486
    %v5604 = vadd.f32 %v5210, %v5488
    %v5605 = vadd.f32 %v5211, %v5491
    %v5606 = vadd.f32 %v5212, %v5493
    %v5607 = vadd.f32 %v5213, %v5496
    %v5608 = vadd.f32 %v5214, %v5498
    %v5609 = vadd.f32 %v5215, %v5501
    %v5610 = vadd.f32 %v5216, %v5503
    %v5611 = vadd.f32 %v5217, %v5506
    %v5612 = vadd.f32 %v5218, %v5508
    %v5613 = vadd.f32 %v5219, %v5511
    %v5614 = vadd.f32 %v5220, %v5513
    %v5615 = vadd.f32 %v5221, %v5516
    %v5616 = vadd.f32 %v5222, %v5518
    %v5617 = vadd.f32 %v5223, %v5521
    %v5618 = vadd.f32 %v5224, %v5523
    %v5619 = vadd.f32 %v5225, %v5526
    %v5620 = vadd.f32 %v5226, %v5528
    %v5621 = vadd.f32 %v5227, %v5531
    %v5622 = vadd.f32 %v5228, %v5533
    %v5623 = vadd.f32 %v5229, %v5536
    %v5624 = vadd.f32 %v5230, %v5538
    %v5625 = vadd.f32 %v5231, %v5541
    %v5626 = vadd.f32 %v5232, %v5543
    %v5627 = vadd.f32 %v5233, %v5546
    %v5628 = vadd.f32 %v5234, %v5548
    %v5629 = vadd.f32 %v5235, %v5551
    %v5630 = vadd.f32 %v5236, %v5553
    %v5631 = vadd.f32 %v5237, %v5556
    %v5632 = vadd.f32 %v5238, %v5558
    %v5633 = vadd.f32 %v5239, %v5561
    %v5634 = vadd.f32 %v5240, %v5563
    %v5635 = vadd.f32 %v5241, %v5566
    %v5636 = vadd.f32 %v5242, %v5568
    %v5637 = vadd.f32 %v5243, %v5571
    %v5638 = vadd.f32 %v5244, %v5573
    %v5639 = vld [vmem:[%s4850 + $0x2] sm:$0xff]
    %v5640 = vld [vmem:[%s4850 + $0xa] sm:$0xff]
    %v5641 = vld [vmem:[%s4850 + $0x1a] sm:$0xff]
    %v5642 = vld [vmem:[%s4850 + $0x22] sm:$0xff]
    %v5643 = vld [vmem:[%s4850 + $0x32] sm:$0xff]
    %v5644 = vld [vmem:[%s4850 + $0x3a] sm:$0xff]
    %v5645 = vld [vmem:[%s4850 + $0x4a] sm:$0xff]
    %v5646 = vld [vmem:[%s4850 + $0x52] sm:$0xff]
    %v5647 = vld [vmem:[%s4850 + $0x62] sm:$0xff]
    %v5648 = vld [vmem:[%s4850 + $0x6a] sm:$0xff]
    %v5649 = vld [vmem:[%s4850 + $0x7a] sm:$0xff]
    %v5650 = vld [vmem:[%s4850 + $0x82] sm:$0xff]
    %v5651 = vld [vmem:[%s4850 + $0x92] sm:$0xff]
    %v5652 = vld [vmem:[%s4850 + $0x9a] sm:$0xff]
    %v5653 = vld [vmem:[%s4850 + $0xaa] sm:$0xff]
    %v5654 = vld [vmem:[%s4850 + $0xb2] sm:$0xff]
    %v5655 = vld [vmem:[%s4850 + $0xc2] sm:$0xff]
    %v5656 = vld [vmem:[%s4850 + $0xca] sm:$0xff]
    %v5657 = vld [vmem:[%s4850 + $0xda] sm:$0xff]
    %v5658 = vld [vmem:[%s4850 + $0xe2] sm:$0xff]
    %v5659 = vld [vmem:[%s4850 + $0xf2] sm:$0xff]
    %v5660 = vld [vmem:[%s4850 + $0xfa] sm:$0xff]
    %v5661 = vld [vmem:[%s4850 + $0x10a] sm:$0xff]
    %v5662 = vld [vmem:[%s4850 + $0x112] sm:$0xff]
    %v5663 = vld [vmem:[%s4850 + $0x122] sm:$0xff]
    %v5664 = vld [vmem:[%s4850 + $0x12a] sm:$0xff]
    %v5665 = vld [vmem:[%s4850 + $0x13a] sm:$0xff]
    %v5666 = vld [vmem:[%s4850 + $0x142] sm:$0xff]
    %v5667 = vld [vmem:[%s4850 + $0x152] sm:$0xff]
    %v5668 = vld [vmem:[%s4850 + $0x15a] sm:$0xff]
    %v5669 = vld [vmem:[%s4850 + $0x16a] sm:$0xff]
    %v5670 = vld [vmem:[%s4850 + $0x172] sm:$0xff]
    %v5671 = vld [vmem:[%s4850 + $0x1b2] sm:$0xff]
    %v5672 = vld [vmem:[%s4850 + $0x1ba] sm:$0xff]
    %v5673 = vld [vmem:[%s4850 + $0x1ca] sm:$0xff]
    %v5674 = vld [vmem:[%s4850 + $0x1d2] sm:$0xff]
    %v5675 = vld [vmem:[%s4850 + $0x1e2] sm:$0xff]
    %v5676 = vld [vmem:[%s4850 + $0x1ea] sm:$0xff]
    %v5677 = vld [vmem:[%s4850 + $0x1fa] sm:$0xff]
    %v5678 = vld [vmem:[%s4850 + $0x202] sm:$0xff]
    %v5679 = vld [vmem:[%s4850 + $0x212] sm:$0xff]
    %v5680 = vld [vmem:[%s4850 + $0x21a] sm:$0xff]
    %v5681 = vld [vmem:[%s4850 + $0x22a] sm:$0xff]
    %v5682 = vld [vmem:[%s4850 + $0x232] sm:$0xff]
    %v5683 = vld [vmem:[%s4850 + $0x242] sm:$0xff]
    %v5684 = vld [vmem:[%s4850 + $0x24a] sm:$0xff]
    %v5685 = vld [vmem:[%s4850 + $0x25a] sm:$0xff]
    %v5686 = vld [vmem:[%s4850 + $0x262] sm:$0xff]
    %v5687 = vld [vmem:[%s4850 + $0x272] sm:$0xff]
    %v5688 = vld [vmem:[%s4850 + $0x27a] sm:$0xff]
    %v5689 = vld [vmem:[%s4850 + $0x28a] sm:$0xff]
    %v5690 = vld [vmem:[%s4850 + $0x292] sm:$0xff]
    %v5691 = vld [vmem:[%s4850 + $0x2a2] sm:$0xff]
    %v5692 = vld [vmem:[%s4850 + $0x2aa] sm:$0xff]
    %v5693 = vld [vmem:[%s4850 + $0x2ba] sm:$0xff]
    %v5694 = vld [vmem:[%s4850 + $0x2c2] sm:$0xff]
    %v5695 = vld [vmem:[%s4850 + $0x2d2] sm:$0xff]
    %v5696 = vld [vmem:[%s4850 + $0x2da] sm:$0xff]
    %v5697 = vld [vmem:[%s4850 + $0x2ea] sm:$0xff]
    %v5698 = vld [vmem:[%s4850 + $0x2f2] sm:$0xff]
    %v5699 = vld [vmem:[%s4850 + $0x302] sm:$0xff]
    %v5700 = vld [vmem:[%s4850 + $0x30a] sm:$0xff]
    %v5701 = vld [vmem:[%s4850 + $0x31a] sm:$0xff]
    %v5702 = vld [vmem:[%s4850 + $0x322] sm:$0xff]
    %v5703 = vpack.c.bf16 %v5640, %v5639
    %v5704 = vpack.c.bf16 %v5642, %v5641
    %v5705 = vpack.c.bf16 %v5644, %v5643
    %v5706 = vpack.c.bf16 %v5646, %v5645
    %v5707 = vpack.c.bf16 %v5648, %v5647
    %v5708 = vpack.c.bf16 %v5650, %v5649
    %v5709 = vpack.c.bf16 %v5652, %v5651
    %v5710 = vpack.c.bf16 %v5654, %v5653
    %v5711 = vpack.c.bf16 %v5656, %v5655
    %v5712 = vpack.c.bf16 %v5658, %v5657
    %v5713 = vpack.c.bf16 %v5660, %v5659
    %v5714 = vpack.c.bf16 %v5662, %v5661
    %v5715 = vpack.c.bf16 %v5664, %v5663
    %v5716 = vpack.c.bf16 %v5666, %v5665
    %v5717 = vpack.c.bf16 %v5668, %v5667
    %v5718 = vpack.c.bf16 %v5670, %v5669
    %v5719 = vpack.c.bf16 %v5672, %v5671
    %v5720 = vpack.c.bf16 %v5674, %v5673
    %v5721 = vpack.c.bf16 %v5676, %v5675
    %v5722 = vpack.c.bf16 %v5678, %v5677
    %v5723 = vpack.c.bf16 %v5680, %v5679
    %v5724 = vpack.c.bf16 %v5682, %v5681
    %v5725 = vpack.c.bf16 %v5684, %v5683
    %v5726 = vpack.c.bf16 %v5686, %v5685
    %v5727 = vpack.c.bf16 %v5688, %v5687
    %v5728 = vpack.c.bf16 %v5690, %v5689
    %v5729 = vpack.c.bf16 %v5692, %v5691
    %v5730 = vpack.c.bf16 %v5694, %v5693
    %v5731 = vpack.c.bf16 %v5696, %v5695
    %v5732 = vpack.c.bf16 %v5698, %v5697
    %v5733 = vpack.c.bf16 %v5700, %v5699
    %v5734 = vpack.c.bf16 %v5702, %v5701
    %s5735 = scalar_lea.vmem %s4, 512
    %v5736 = vld [vmem:[%s5735] sm:$0xf]
    %v5737 = vld [vmem:[%s5735 + $0x4] sm:$0xf]
    %v5738 = vld [vmem:[%s5735 + $0x8] sm:$0xf]
    %v5739 = vld [vmem:[%s5735 + $0xc] sm:$0xf]
    %v5740 = vld [vmem:[%s5735 + $0x10] sm:$0xf]
    %v5741 = vld [vmem:[%s5735 + $0x14] sm:$0xf]
    %v5742 = vld [vmem:[%s5735 + $0x18] sm:$0xf]
    %v5743 = vld [vmem:[%s5735 + $0x1c] sm:$0xf]
    %v5744 = vld [vmem:[%s5735 + $0x20] sm:$0xf]
    %v5745 = vld [vmem:[%s5735 + $0x24] sm:$0xf]
    %v5746 = vld [vmem:[%s5735 + $0x28] sm:$0xf]
    %v5747 = vld [vmem:[%s5735 + $0x2c] sm:$0xf]
    %v5748 = vld [vmem:[%s5735 + $0x30] sm:$0xf]
    %v5749 = vld [vmem:[%s5735 + $0x34] sm:$0xf]
    %v5750 = vld [vmem:[%s5735 + $0x38] sm:$0xf]
    %v5751 = vld [vmem:[%s5735 + $0x3c] sm:$0xf]
    %v5768 = vunpack.c.l.b16 %v5736
    %v5769 = vunpack.c.l.b16 %v5737
    %v5770 = vunpack.c.l.b16 %v5738
    %v5771 = vunpack.c.l.b16 %v5739
    %v5772 = vunpack.c.l.b16 %v5740
    %v5773 = vunpack.c.l.b16 %v5741
    %v5774 = vunpack.c.l.b16 %v5742
    %v5775 = vunpack.c.l.b16 %v5743
    %v5776 = vunpack.c.l.b16 %v5744
    %v5777 = vunpack.c.l.b16 %v5745
    %v5778 = vunpack.c.l.b16 %v5746
    %v5779 = vunpack.c.l.b16 %v5747
    %v5780 = vunpack.c.l.b16 %v5748
    %v5781 = vunpack.c.l.b16 %v5749
    %v5782 = vunpack.c.l.b16 %v5750
    %v5783 = vunpack.c.l.b16 %v5751
    %v5784 = vpack.c.b16 %v5769, %v5768
    %v5785 = vpack.c.b16 %v5771, %v5770
    %v5786 = vpack.c.b16 %v5773, %v5772
    %v5787 = vpack.c.b16 %v5775, %v5774
    %v5788 = vpack.c.b16 %v5777, %v5776
    %v5789 = vpack.c.b16 %v5779, %v5778
    %v5790 = vpack.c.b16 %v5781, %v5780
    %v5791 = vpack.c.b16 %v5783, %v5782
    %5800 = vmatpush.bf16.msra.mxu0 %v5791
    %5801 = vmatpush.bf16.msra.mxu0 %v5790
    %5802 = vmatpush.bf16.msra.mxu0 %v5789
    %5803 = vmatpush.bf16.msra.mxu0 %v5788
    %5804 = vmatpush.bf16.msra.mxu0 %v5787
    %5805 = vmatpush.bf16.msra.mxu0 %v5786
    %5806 = vmatpush.bf16.msra.mxu0 %v5785
    %5807 = vmatpush.bf16.msra.mxu0 %v5784
    %5808 = vmatmul.bf16.gmra.mxu0 %v5703
    %v5809 = vpop.f32.mrf.mxu0
    %v5810 = vadd.f32 0.0, %v5809
    %v5811 = vpop.f32.mrf.mxu0
    %v5812 = vadd.f32 0.0, %v5811
    %5813 = vmatmul.bf16.gmra.mxu0 %v5704
    %v5814 = vpop.f32.mrf.mxu0
    %v5815 = vadd.f32 0.0, %v5814
    %v5816 = vpop.f32.mrf.mxu0
    %v5817 = vadd.f32 0.0, %v5816
    %5818 = vmatmul.bf16.gmra.mxu0 %v5705
    %v5819 = vpop.f32.mrf.mxu0
    %v5820 = vadd.f32 0.0, %v5819
    %v5821 = vpop.f32.mrf.mxu0
    %v5822 = vadd.f32 0.0, %v5821
    %5823 = vmatmul.bf16.gmra.mxu0 %v5706
    %v5824 = vpop.f32.mrf.mxu0
    %v5825 = vadd.f32 0.0, %v5824
    %v5826 = vpop.f32.mrf.mxu0
    %v5827 = vadd.f32 0.0, %v5826
    %5828 = vmatmul.bf16.gmra.mxu0 %v5707
    %v5829 = vpop.f32.mrf.mxu0
    %v5830 = vadd.f32 0.0, %v5829
    %v5831 = vpop.f32.mrf.mxu0
    %v5832 = vadd.f32 0.0, %v5831
    %5833 = vmatmul.bf16.gmra.mxu0 %v5708
    %v5834 = vpop.f32.mrf.mxu0
    %v5835 = vadd.f32 0.0, %v5834
    %v5836 = vpop.f32.mrf.mxu0
    %v5837 = vadd.f32 0.0, %v5836
    %5838 = vmatmul.bf16.gmra.mxu0 %v5709
    %v5839 = vpop.f32.mrf.mxu0
    %v5840 = vadd.f32 0.0, %v5839
    %v5841 = vpop.f32.mrf.mxu0
    %v5842 = vadd.f32 0.0, %v5841
    %5843 = vmatmul.bf16.gmra.mxu0 %v5710
    %v5844 = vpop.f32.mrf.mxu0
    %v5845 = vadd.f32 0.0, %v5844
    %v5846 = vpop.f32.mrf.mxu0
    %v5847 = vadd.f32 0.0, %v5846
    %5848 = vmatmul.bf16.gmra.mxu0 %v5711
    %v5849 = vpop.f32.mrf.mxu0
    %v5850 = vadd.f32 0.0, %v5849
    %v5851 = vpop.f32.mrf.mxu0
    %v5852 = vadd.f32 0.0, %v5851
    %5853 = vmatmul.bf16.gmra.mxu0 %v5712
    %v5854 = vpop.f32.mrf.mxu0
    %v5855 = vadd.f32 0.0, %v5854
    %v5856 = vpop.f32.mrf.mxu0
    %v5857 = vadd.f32 0.0, %v5856
    %5858 = vmatmul.bf16.gmra.mxu0 %v5713
    %v5859 = vpop.f32.mrf.mxu0
    %v5860 = vadd.f32 0.0, %v5859
    %v5861 = vpop.f32.mrf.mxu0
    %v5862 = vadd.f32 0.0, %v5861
    %5863 = vmatmul.bf16.gmra.mxu0 %v5714
    %v5864 = vpop.f32.mrf.mxu0
    %v5865 = vadd.f32 0.0, %v5864
    %v5866 = vpop.f32.mrf.mxu0
    %v5867 = vadd.f32 0.0, %v5866
    %5868 = vmatmul.bf16.gmra.mxu0 %v5715
    %v5869 = vpop.f32.mrf.mxu0
    %v5870 = vadd.f32 0.0, %v5869
    %v5871 = vpop.f32.mrf.mxu0
    %v5872 = vadd.f32 0.0, %v5871
    %5873 = vmatmul.bf16.gmra.mxu0 %v5716
    %v5874 = vpop.f32.mrf.mxu0
    %v5875 = vadd.f32 0.0, %v5874
    %v5876 = vpop.f32.mrf.mxu0
    %v5877 = vadd.f32 0.0, %v5876
    %5878 = vmatmul.bf16.gmra.mxu0 %v5717
    %v5879 = vpop.f32.mrf.mxu0
    %v5880 = vadd.f32 0.0, %v5879
    %v5881 = vpop.f32.mrf.mxu0
    %v5882 = vadd.f32 0.0, %v5881
    %5883 = vmatmul.bf16.gmra.mxu0 %v5718
    %v5884 = vpop.f32.mrf.mxu0
    %v5885 = vadd.f32 0.0, %v5884
    %v5886 = vpop.f32.mrf.mxu0
    %v5887 = vadd.f32 0.0, %v5886
    %5888 = vmatmul.bf16.gmra.mxu0 %v5719
    %v5889 = vpop.f32.mrf.mxu0
    %v5890 = vadd.f32 0.0, %v5889
    %v5891 = vpop.f32.mrf.mxu0
    %v5892 = vadd.f32 0.0, %v5891
    %5893 = vmatmul.bf16.gmra.mxu0 %v5720
    %v5894 = vpop.f32.mrf.mxu0
    %v5895 = vadd.f32 0.0, %v5894
    %v5896 = vpop.f32.mrf.mxu0
    %v5897 = vadd.f32 0.0, %v5896
    %5898 = vmatmul.bf16.gmra.mxu0 %v5721
    %v5899 = vpop.f32.mrf.mxu0
    %v5900 = vadd.f32 0.0, %v5899
    %v5901 = vpop.f32.mrf.mxu0
    %v5902 = vadd.f32 0.0, %v5901
    %5903 = vmatmul.bf16.gmra.mxu0 %v5722
    %v5904 = vpop.f32.mrf.mxu0
    %v5905 = vadd.f32 0.0, %v5904
    %v5906 = vpop.f32.mrf.mxu0
    %v5907 = vadd.f32 0.0, %v5906
    %5908 = vmatmul.bf16.gmra.mxu0 %v5723
    %v5909 = vpop.f32.mrf.mxu0
    %v5910 = vadd.f32 0.0, %v5909
    %v5911 = vpop.f32.mrf.mxu0
    %v5912 = vadd.f32 0.0, %v5911
    %5913 = vmatmul.bf16.gmra.mxu0 %v5724
    %v5914 = vpop.f32.mrf.mxu0
    %v5915 = vadd.f32 0.0, %v5914
    %v5916 = vpop.f32.mrf.mxu0
    %v5917 = vadd.f32 0.0, %v5916
    %5918 = vmatmul.bf16.gmra.mxu0 %v5725
    %v5919 = vpop.f32.mrf.mxu0
    %v5920 = vadd.f32 0.0, %v5919
    %v5921 = vpop.f32.mrf.mxu0
    %v5922 = vadd.f32 0.0, %v5921
    %5923 = vmatmul.bf16.gmra.mxu0 %v5726
    %v5924 = vpop.f32.mrf.mxu0
    %v5925 = vadd.f32 0.0, %v5924
    %v5926 = vpop.f32.mrf.mxu0
    %v5927 = vadd.f32 0.0, %v5926
    %5928 = vmatmul.bf16.gmra.mxu0 %v5727
    %v5929 = vpop.f32.mrf.mxu0
    %v5930 = vadd.f32 0.0, %v5929
    %v5931 = vpop.f32.mrf.mxu0
    %v5932 = vadd.f32 0.0, %v5931
    %5933 = vmatmul.bf16.gmra.mxu0 %v5728
    %v5934 = vpop.f32.mrf.mxu0
    %v5935 = vadd.f32 0.0, %v5934
    %v5936 = vpop.f32.mrf.mxu0
    %v5937 = vadd.f32 0.0, %v5936
    %5938 = vmatmul.bf16.gmra.mxu0 %v5729
    %v5939 = vpop.f32.mrf.mxu0
    %v5940 = vadd.f32 0.0, %v5939
    %v5941 = vpop.f32.mrf.mxu0
    %v5942 = vadd.f32 0.0, %v5941
    %5943 = vmatmul.bf16.gmra.mxu0 %v5730
    %v5944 = vpop.f32.mrf.mxu0
    %v5945 = vadd.f32 0.0, %v5944
    %v5946 = vpop.f32.mrf.mxu0
    %v5947 = vadd.f32 0.0, %v5946
    %5948 = vmatmul.bf16.gmra.mxu0 %v5731
    %v5949 = vpop.f32.mrf.mxu0
    %v5950 = vadd.f32 0.0, %v5949
    %v5951 = vpop.f32.mrf.mxu0
    %v5952 = vadd.f32 0.0, %v5951
    %5953 = vmatmul.bf16.gmra.mxu0 %v5732
    %v5954 = vpop.f32.mrf.mxu0
    %v5955 = vadd.f32 0.0, %v5954
    %v5956 = vpop.f32.mrf.mxu0
    %v5957 = vadd.f32 0.0, %v5956
    %5958 = vmatmul.bf16.gmra.mxu0 %v5733
    %v5959 = vpop.f32.mrf.mxu0
    %v5960 = vadd.f32 0.0, %v5959
    %v5961 = vpop.f32.mrf.mxu0
    %v5962 = vadd.f32 0.0, %v5961
    %5963 = vmatmul.bf16.gmra.mxu0 %v5734
    %v5964 = vpop.f32.mrf.mxu0
    %v5965 = vadd.f32 0.0, %v5964
    %v5966 = vpop.f32.mrf.mxu0
    %v5967 = vadd.f32 0.0, %v5966
    %5968 = vdwg.mxu0
    %v5969 = vadd.f32 %v5575, %v5810
    %v5970 = vadd.f32 %v5576, %v5812
    %v5971 = vadd.f32 %v5577, %v5815
    %v5972 = vadd.f32 %v5578, %v5817
    %v5973 = vadd.f32 %v5579, %v5820
    %v5974 = vadd.f32 %v5580, %v5822
    %v5975 = vadd.f32 %v5581, %v5825
    %v5976 = vadd.f32 %v5582, %v5827
    %v5977 = vadd.f32 %v5583, %v5830
    %v5978 = vadd.f32 %v5584, %v5832
    %v5979 = vadd.f32 %v5585, %v5835
    %v5980 = vadd.f32 %v5586, %v5837
    %v5981 = vadd.f32 %v5587, %v5840
    %v5982 = vadd.f32 %v5588, %v5842
    %v5983 = vadd.f32 %v5589, %v5845
    %v5984 = vadd.f32 %v5590, %v5847
    %v5985 = vadd.f32 %v5591, %v5850
    %v5986 = vadd.f32 %v5592, %v5852
    %v5987 = vadd.f32 %v5593, %v5855
    %v5988 = vadd.f32 %v5594, %v5857
    %v5989 = vadd.f32 %v5595, %v5860
    %v5990 = vadd.f32 %v5596, %v5862
    %v5991 = vadd.f32 %v5597, %v5865
    %v5992 = vadd.f32 %v5598, %v5867
    %v5993 = vadd.f32 %v5599, %v5870
    %v5994 = vadd.f32 %v5600, %v5872
    %v5995 = vadd.f32 %v5601, %v5875
    %v5996 = vadd.f32 %v5602, %v5877
    %v5997 = vadd.f32 %v5603, %v5880
    %v5998 = vadd.f32 %v5604, %v5882
    %v5999 = vadd.f32 %v5605, %v5885
    %v6000 = vadd.f32 %v5606, %v5887
    %v6001 = vadd.f32 %v5607, %v5890
    %v6002 = vadd.f32 %v5608, %v5892
    %v6003 = vadd.f32 %v5609, %v5895
    %v6004 = vadd.f32 %v5610, %v5897
    %v6005 = vadd.f32 %v5611, %v5900
    %v6006 = vadd.f32 %v5612, %v5902
    %v6007 = vadd.f32 %v5613, %v5905
    %v6008 = vadd.f32 %v5614, %v5907
    %v6009 = vadd.f32 %v5615, %v5910
    %v6010 = vadd.f32 %v5616, %v5912
    %v6011 = vadd.f32 %v5617, %v5915
    %v6012 = vadd.f32 %v5618, %v5917
    %v6013 = vadd.f32 %v5619, %v5920
    %v6014 = vadd.f32 %v5620, %v5922
    %v6015 = vadd.f32 %v5621, %v5925
    %v6016 = vadd.f32 %v5622, %v5927
    %v6017 = vadd.f32 %v5623, %v5930
    %v6018 = vadd.f32 %v5624, %v5932
    %v6019 = vadd.f32 %v5625, %v5935
    %v6020 = vadd.f32 %v5626, %v5937
    %v6021 = vadd.f32 %v5627, %v5940
    %v6022 = vadd.f32 %v5628, %v5942
    %v6023 = vadd.f32 %v5629, %v5945
    %v6024 = vadd.f32 %v5630, %v5947
    %v6025 = vadd.f32 %v5631, %v5950
    %v6026 = vadd.f32 %v5632, %v5952
    %v6027 = vadd.f32 %v5633, %v5955
    %v6028 = vadd.f32 %v5634, %v5957
    %v6029 = vadd.f32 %v5635, %v5960
    %v6030 = vadd.f32 %v5636, %v5962
    %v6031 = vadd.f32 %v5637, %v5965
    %v6032 = vadd.f32 %v5638, %v5967
    %v6033 = vadd.f32 %v5969, %v5970
    %v6034 = vadd.f32 %v6033, %v5971
    %v6035 = vadd.f32 %v6034, %v5972
    %v6036 = vadd.f32 %v6035, %v5973
    %v6037 = vadd.f32 %v6036, %v5974
    %v6038 = vadd.f32 %v6037, %v5975
    %v6039 = vadd.f32 %v6038, %v5976
    %v6040 = vadd.f32 %v6039, %v5977
    %v6041 = vadd.f32 %v6040, %v5978
    %v6042 = vadd.f32 %v6041, %v5979
    %v6043 = vadd.f32 %v6042, %v5980
    %v6044 = vadd.f32 %v6043, %v5981
    %v6045 = vadd.f32 %v6044, %v5982
    %v6046 = vadd.f32 %v6045, %v5983
    %v6047 = vadd.f32 %v6046, %v5984
    %v6048 = vadd.f32 %v6047, %v5985
    %v6049 = vadd.f32 %v6048, %v5986
    %v6050 = vadd.f32 %v6049, %v5987
    %v6051 = vadd.f32 %v6050, %v5988
    %v6052 = vadd.f32 %v6051, %v5989
    %v6053 = vadd.f32 %v6052, %v5990
    %v6054 = vadd.f32 %v6053, %v5991
    %v6055 = vadd.f32 %v6054, %v5992
    %v6056 = vadd.f32 %v6055, %v5993
    %v6057 = vadd.f32 %v6056, %v5994
    %v6058 = vadd.f32 %v6057, %v5995
    %v6059 = vadd.f32 %v6058, %v5996
    %v6060 = vadd.f32 %v6059, %v5997
    %v6061 = vadd.f32 %v6060, %v5998
    %v6062 = vadd.f32 %v6061, %v5999
    %v6063 = vadd.f32 %v6062, %v6000
    %v6064 = vadd.f32 %v6063, %v6001
    %v6065 = vadd.f32 %v6064, %v6002
    %v6066 = vadd.f32 %v6065, %v6003
    %v6067 = vadd.f32 %v6066, %v6004
    %v6068 = vadd.f32 %v6067, %v6005
    %v6069 = vadd.f32 %v6068, %v6006
    %v6070 = vadd.f32 %v6069, %v6007
    %v6071 = vadd.f32 %v6070, %v6008
    %v6072 = vadd.f32 %v6071, %v6009
    %v6073 = vadd.f32 %v6072, %v6010
    %v6074 = vadd.f32 %v6073, %v6011
    %v6075 = vadd.f32 %v6074, %v6012
    %v6076 = vadd.f32 %v6075, %v6013
    %v6077 = vadd.f32 %v6076, %v6014
    %v6078 = vadd.f32 %v6077, %v6015
    %v6079 = vadd.f32 %v6078, %v6016
    %v6080 = vadd.f32 %v6079, %v6017
    %v6081 = vadd.f32 %v6080, %v6018
    %v6082 = vadd.f32 %v6081, %v6019
    %v6083 = vadd.f32 %v6082, %v6020
    %v6084 = vadd.f32 %v6083, %v6021
    %v6085 = vadd.f32 %v6084, %v6022
    %v6086 = vadd.f32 %v6085, %v6023
    %v6087 = vadd.f32 %v6086, %v6024
    %v6088 = vadd.f32 %v6087, %v6025
    %v6089 = vadd.f32 %v6088, %v6026
    %v6090 = vadd.f32 %v6089, %v6027
    %v6091 = vadd.f32 %v6090, %v6028
    %v6092 = vadd.f32 %v6091, %v6029
    %v6093 = vadd.f32 %v6092, %v6030
    %v6094 = vadd.f32 %v6093, %v6031
    %v6095 = vadd.f32 %v6094, %v6032
    %v6096 = vrot.slane %v6095, 4
    %v6097 = vadd.f32 %v6095, %v6096
    %v6098 = vrot.slane %v6097, 2
    %v6099 = vadd.f32 %v6097, %v6098
    %v6100 = vrot.slane %v6099, 1
    %v6101 = vadd.f32 %v6099, %v6100
    %v6102 = vrcp.pop 512.0
    %v6103 = vmul.f32 512.0, %v6102
    %v6104 = vsub.f32 1.0, %v6103
    %v6105 = vmul.f32 %v6102, %v6104
    %v6106 = vadd.f32 %v6102, %v6105
    %vm6107 = vweird.f32 %v6102
    %v6108 = vsel %vm6107, %v6102, %v6106
    %v6109 = vmul.f32 %v6101, %v6108
    %v6110 = vsub.f32 %v5969, %v6109
    %v6111 = vsub.f32 %v5970, %v6109
    %v6112 = vsub.f32 %v5971, %v6109
    %v6113 = vsub.f32 %v5972, %v6109
    %v6114 = vsub.f32 %v5973, %v6109
    %v6115 = vsub.f32 %v5974, %v6109
    %v6116 = vsub.f32 %v5975, %v6109
    %v6117 = vsub.f32 %v5976, %v6109
    %v6118 = vsub.f32 %v5977, %v6109
    %v6119 = vsub.f32 %v5978, %v6109
    %v6120 = vsub.f32 %v5979, %v6109
    %v6121 = vsub.f32 %v5980, %v6109
    %v6122 = vsub.f32 %v5981, %v6109
    %v6123 = vsub.f32 %v5982, %v6109
    %v6124 = vsub.f32 %v5983, %v6109
    %v6125 = vsub.f32 %v5984, %v6109
    %v6126 = vsub.f32 %v5985, %v6109
    %v6127 = vsub.f32 %v5986, %v6109
    %v6128 = vsub.f32 %v5987, %v6109
    %v6129 = vsub.f32 %v5988, %v6109
    %v6130 = vsub.f32 %v5989, %v6109
    %v6131 = vsub.f32 %v5990, %v6109
    %v6132 = vsub.f32 %v5991, %v6109
    %v6133 = vsub.f32 %v5992, %v6109
    %v6134 = vsub.f32 %v5993, %v6109
    %v6135 = vsub.f32 %v5994, %v6109
    %v6136 = vsub.f32 %v5995, %v6109
    %v6137 = vsub.f32 %v5996, %v6109
    %v6138 = vsub.f32 %v5997, %v6109
    %v6139 = vsub.f32 %v5998, %v6109
    %v6140 = vsub.f32 %v5999, %v6109
    %v6141 = vsub.f32 %v6000, %v6109
    %v6142 = vsub.f32 %v6001, %v6109
    %v6143 = vsub.f32 %v6002, %v6109
    %v6144 = vsub.f32 %v6003, %v6109
    %v6145 = vsub.f32 %v6004, %v6109
    %v6146 = vsub.f32 %v6005, %v6109
    %v6147 = vsub.f32 %v6006, %v6109
    %v6148 = vsub.f32 %v6007, %v6109
    %v6149 = vsub.f32 %v6008, %v6109
    %v6150 = vsub.f32 %v6009, %v6109
    %v6151 = vsub.f32 %v6010, %v6109
    %v6152 = vsub.f32 %v6011, %v6109
    %v6153 = vsub.f32 %v6012, %v6109
    %v6154 = vsub.f32 %v6013, %v6109
    %v6155 = vsub.f32 %v6014, %v6109
    %v6156 = vsub.f32 %v6015, %v6109
    %v6157 = vsub.f32 %v6016, %v6109
    %v6158 = vsub.f32 %v6017, %v6109
    %v6159 = vsub.f32 %v6018, %v6109
    %v6160 = vsub.f32 %v6019, %v6109
    %v6161 = vsub.f32 %v6020, %v6109
    %v6162 = vsub.f32 %v6021, %v6109
    %v6163 = vsub.f32 %v6022, %v6109
    %v6164 = vsub.f32 %v6023, %v6109
    %v6165 = vsub.f32 %v6024, %v6109
    %v6166 = vsub.f32 %v6025, %v6109
    %v6167 = vsub.f32 %v6026, %v6109
    %v6168 = vsub.f32 %v6027, %v6109
    %v6169 = vsub.f32 %v6028, %v6109
    %v6170 = vsub.f32 %v6029, %v6109
    %v6171 = vsub.f32 %v6030, %v6109
    %v6172 = vsub.f32 %v6031, %v6109
    %v6173 = vsub.f32 %v6032, %v6109
    %v6174 = vmul.f32 %v6110, %v6110
    %v6175 = vmul.f32 %v6111, %v6111
    %v6176 = vmul.f32 %v6112, %v6112
    %v6177 = vmul.f32 %v6113, %v6113
    %v6178 = vmul.f32 %v6114, %v6114
    %v6179 = vmul.f32 %v6115, %v6115
    %v6180 = vmul.f32 %v6116, %v6116
    %v6181 = vmul.f32 %v6117, %v6117
    %v6182 = vmul.f32 %v6118, %v6118
    %v6183 = vmul.f32 %v6119, %v6119
    %v6184 = vmul.f32 %v6120, %v6120
    %v6185 = vmul.f32 %v6121, %v6121
    %v6186 = vmul.f32 %v6122, %v6122
    %v6187 = vmul.f32 %v6123, %v6123
    %v6188 = vmul.f32 %v6124, %v6124
    %v6189 = vmul.f32 %v6125, %v6125
    %v6190 = vmul.f32 %v6126, %v6126
    %v6191 = vmul.f32 %v6127, %v6127
    %v6192 = vmul.f32 %v6128, %v6128
    %v6193 = vmul.f32 %v6129, %v6129
    %v6194 = vmul.f32 %v6130, %v6130
    %v6195 = vmul.f32 %v6131, %v6131
    %v6196 = vmul.f32 %v6132, %v6132
    %v6197 = vmul.f32 %v6133, %v6133
    %v6198 = vmul.f32 %v6134, %v6134
    %v6199 = vmul.f32 %v6135, %v6135
    %v6200 = vmul.f32 %v6136, %v6136
    %v6201 = vmul.f32 %v6137, %v6137
    %v6202 = vmul.f32 %v6138, %v6138
    %v6203 = vmul.f32 %v6139, %v6139
    %v6204 = vmul.f32 %v6140, %v6140
    %v6205 = vmul.f32 %v6141, %v6141
    %v6206 = vmul.f32 %v6142, %v6142
    %v6207 = vmul.f32 %v6143, %v6143
    %v6208 = vmul.f32 %v6144, %v6144
    %v6209 = vmul.f32 %v6145, %v6145
    %v6210 = vmul.f32 %v6146, %v6146
    %v6211 = vmul.f32 %v6147, %v6147
    %v6212 = vmul.f32 %v6148, %v6148
    %v6213 = vmul.f32 %v6149, %v6149
    %v6214 = vmul.f32 %v6150, %v6150
    %v6215 = vmul.f32 %v6151, %v6151
    %v6216 = vmul.f32 %v6152, %v6152
    %v6217 = vmul.f32 %v6153, %v6153
    %v6218 = vmul.f32 %v6154, %v6154
    %v6219 = vmul.f32 %v6155, %v6155
    %v6220 = vmul.f32 %v6156, %v6156
    %v6221 = vmul.f32 %v6157, %v6157
    %v6222 = vmul.f32 %v6158, %v6158
    %v6223 = vmul.f32 %v6159, %v6159
    %v6224 = vmul.f32 %v6160, %v6160
    %v6225 = vmul.f32 %v6161, %v6161
    %v6226 = vmul.f32 %v6162, %v6162
    %v6227 = vmul.f32 %v6163, %v6163
    %v6228 = vmul.f32 %v6164, %v6164
    %v6229 = vmul.f32 %v6165, %v6165
    %v6230 = vmul.f32 %v6166, %v6166
    %v6231 = vmul.f32 %v6167, %v6167
    %v6232 = vmul.f32 %v6168, %v6168
    %v6233 = vmul.f32 %v6169, %v6169
    %v6234 = vmul.f32 %v6170, %v6170
    %v6235 = vmul.f32 %v6171, %v6171
    %v6236 = vmul.f32 %v6172, %v6172
    %v6237 = vmul.f32 %v6173, %v6173
    %v6238 = vadd.f32 %v6174, %v6175
    %v6239 = vadd.f32 %v6238, %v6176
    %v6240 = vadd.f32 %v6239, %v6177
    %v6241 = vadd.f32 %v6240, %v6178
    %v6242 = vadd.f32 %v6241, %v6179
    %v6243 = vadd.f32 %v6242, %v6180
    %v6244 = vadd.f32 %v6243, %v6181
    %v6245 = vadd.f32 %v6244, %v6182
    %v6246 = vadd.f32 %v6245, %v6183
    %v6247 = vadd.f32 %v6246, %v6184
    %v6248 = vadd.f32 %v6247, %v6185
    %v6249 = vadd.f32 %v6248, %v6186
    %v6250 = vadd.f32 %v6249, %v6187
    %v6251 = vadd.f32 %v6250, %v6188
    %v6252 = vadd.f32 %v6251, %v6189
    %v6253 = vadd.f32 %v6252, %v6190
    %v6254 = vadd.f32 %v6253, %v6191
    %v6255 = vadd.f32 %v6254, %v6192
    %v6256 = vadd.f32 %v6255, %v6193
    %v6257 = vadd.f32 %v6256, %v6194
    %v6258 = vadd.f32 %v6257, %v6195
    %v6259 = vadd.f32 %v6258, %v6196
    %v6260 = vadd.f32 %v6259, %v6197
    %v6261 = vadd.f32 %v6260, %v6198
    %v6262 = vadd.f32 %v6261, %v6199
    %v6263 = vadd.f32 %v6262, %v6200
    %v6264 = vadd.f32 %v6263, %v6201
    %v6265 = vadd.f32 %v6264, %v6202
    %v6266 = vadd.f32 %v6265, %v6203
    %v6267 = vadd.f32 %v6266, %v6204
    %v6268 = vadd.f32 %v6267, %v6205
    %v6269 = vadd.f32 %v6268, %v6206
    %v6270 = vadd.f32 %v6269, %v6207
    %v6271 = vadd.f32 %v6270, %v6208
    %v6272 = vadd.f32 %v6271, %v6209
    %v6273 = vadd.f32 %v6272, %v6210
    %v6274 = vadd.f32 %v6273, %v6211
    %v6275 = vadd.f32 %v6274, %v6212
    %v6276 = vadd.f32 %v6275, %v6213
    %v6277 = vadd.f32 %v6276, %v6214
    %v6278 = vadd.f32 %v6277, %v6215
    %v6279 = vadd.f32 %v6278, %v6216
    %v6280 = vadd.f32 %v6279, %v6217
    %v6281 = vadd.f32 %v6280, %v6218
    %v6282 = vadd.f32 %v6281, %v6219
    %v6283 = vadd.f32 %v6282, %v6220
    %v6284 = vadd.f32 %v6283, %v6221
    %v6285 = vadd.f32 %v6284, %v6222
    %v6286 = vadd.f32 %v6285, %v6223
    %v6287 = vadd.f32 %v6286, %v6224
    %v6288 = vadd.f32 %v6287, %v6225
    %v6289 = vadd.f32 %v6288, %v6226
    %v6290 = vadd.f32 %v6289, %v6227
    %v6291 = vadd.f32 %v6290, %v6228
    %v6292 = vadd.f32 %v6291, %v6229
    %v6293 = vadd.f32 %v6292, %v6230
    %v6294 = vadd.f32 %v6293, %v6231
    %v6295 = vadd.f32 %v6294, %v6232
    %v6296 = vadd.f32 %v6295, %v6233
    %v6297 = vadd.f32 %v6296, %v6234
    %v6298 = vadd.f32 %v6297, %v6235
    %v6299 = vadd.f32 %v6298, %v6236
    %v6300 = vadd.f32 %v6299, %v6237
    %v6301 = vrot.slane %v6300, 4
    %v6302 = vadd.f32 %v6300, %v6301
    %v6303 = vrot.slane %v6302, 2
    %v6304 = vadd.f32 %v6302, %v6303
    %v6305 = vrot.slane %v6304, 1
    %v6306 = vadd.f32 %v6304, %v6305
    %v6307 = vmul.f32 %v6306, %v6108
    %v6308 = vadd.f32 %v6307, 1e-05
    %v6309 = vrsqrt.pop %v6308
    %v6310 = vmul.f32 %v6309, %v6308
    %v6311 = vmul.f32 %v6310, %v6309
    %v6312 = vmul.f32 0.5, %v6311
    %v6313 = vsub.f32 1.5, %v6312
    %v6314 = vmul.f32 %v6309, %v6313
    %vm6315 = vweird.f32 %v6308
    %vm6316 = vweird.f32 %v6309
    %vm6317 = vmor %vm6315, %vm6316
    %v6318 = vsel %vm6317, %v6309, %v6314
    %v6319 = vmul.f32 %v2607, %v6318
    %v6321 = vperm.slane %v6319, 0
    %v6323 = vmul.f32 %v6110, %v6321
    %v6324 = vmul.f32 %v6111, %v6321
    %v6325 = vmul.f32 %v6112, %v6321
    %v6326 = vmul.f32 %v6113, %v6321
    %v6327 = vmul.f32 %v6114, %v6321
    %v6328 = vmul.f32 %v6115, %v6321
    %v6329 = vmul.f32 %v6116, %v6321
    %v6330 = vmul.f32 %v6117, %v6321
    %v6331 = vmul.f32 %v6118, %v6321
    %v6332 = vmul.f32 %v6119, %v6321
    %v6333 = vmul.f32 %v6120, %v6321
    %v6334 = vmul.f32 %v6121, %v6321
    %v6335 = vmul.f32 %v6122, %v6321
    %v6336 = vmul.f32 %v6123, %v6321
    %v6337 = vmul.f32 %v6124, %v6321
    %v6338 = vmul.f32 %v6125, %v6321
    %v6339 = vmul.f32 %v6126, %v6321
    %v6340 = vmul.f32 %v6127, %v6321
    %v6341 = vmul.f32 %v6128, %v6321
    %v6342 = vmul.f32 %v6129, %v6321
    %v6343 = vmul.f32 %v6130, %v6321
    %v6344 = vmul.f32 %v6131, %v6321
    %v6345 = vmul.f32 %v6132, %v6321
    %v6346 = vmul.f32 %v6133, %v6321
    %v6347 = vmul.f32 %v6134, %v6321
    %v6348 = vmul.f32 %v6135, %v6321
    %v6349 = vmul.f32 %v6136, %v6321
    %v6350 = vmul.f32 %v6137, %v6321
    %v6351 = vmul.f32 %v6138, %v6321
    %v6352 = vmul.f32 %v6139, %v6321
    %v6353 = vmul.f32 %v6140, %v6321
    %v6354 = vmul.f32 %v6141, %v6321
    %v6355 = vmul.f32 %v6142, %v6321
    %v6356 = vmul.f32 %v6143, %v6321
    %v6357 = vmul.f32 %v6144, %v6321
    %v6358 = vmul.f32 %v6145, %v6321
    %v6359 = vmul.f32 %v6146, %v6321
    %v6360 = vmul.f32 %v6147, %v6321
    %v6361 = vmul.f32 %v6148, %v6321
    %v6362 = vmul.f32 %v6149, %v6321
    %v6363 = vmul.f32 %v6150, %v6321
    %v6364 = vmul.f32 %v6151, %v6321
    %v6365 = vmul.f32 %v6152, %v6321
    %v6366 = vmul.f32 %v6153, %v6321
    %v6367 = vmul.f32 %v6154, %v6321
    %v6368 = vmul.f32 %v6155, %v6321
    %v6369 = vmul.f32 %v6156, %v6321
    %v6370 = vmul.f32 %v6157, %v6321
    %v6371 = vmul.f32 %v6158, %v6321
    %v6372 = vmul.f32 %v6159, %v6321
    %v6373 = vmul.f32 %v6160, %v6321
    %v6374 = vmul.f32 %v6161, %v6321
    %v6375 = vmul.f32 %v6162, %v6321
    %v6376 = vmul.f32 %v6163, %v6321
    %v6377 = vmul.f32 %v6164, %v6321
    %v6378 = vmul.f32 %v6165, %v6321
    %v6379 = vmul.f32 %v6166, %v6321
    %v6380 = vmul.f32 %v6167, %v6321
    %v6381 = vmul.f32 %v6168, %v6321
    %v6382 = vmul.f32 %v6169, %v6321
    %v6383 = vmul.f32 %v6170, %v6321
    %v6384 = vmul.f32 %v6171, %v6321
    %v6385 = vmul.f32 %v6172, %v6321
    %v6386 = vmul.f32 %v6173, %v6321
    %v6388 = vperm.slane %v2608, 0
    %v6390 = vadd.f32 %v6323, %v6388
    %v6391 = vadd.f32 %v6324, %v6388
    %v6392 = vadd.f32 %v6325, %v6388
    %v6393 = vadd.f32 %v6326, %v6388
    %v6394 = vadd.f32 %v6327, %v6388
    %v6395 = vadd.f32 %v6328, %v6388
    %v6396 = vadd.f32 %v6329, %v6388
    %v6397 = vadd.f32 %v6330, %v6388
    %v6398 = vadd.f32 %v6331, %v6388
    %v6399 = vadd.f32 %v6332, %v6388
    %v6400 = vadd.f32 %v6333, %v6388
    %v6401 = vadd.f32 %v6334, %v6388
    %v6402 = vadd.f32 %v6335, %v6388
    %v6403 = vadd.f32 %v6336, %v6388
    %v6404 = vadd.f32 %v6337, %v6388
    %v6405 = vadd.f32 %v6338, %v6388
    %v6406 = vadd.f32 %v6339, %v6388
    %v6407 = vadd.f32 %v6340, %v6388
    %v6408 = vadd.f32 %v6341, %v6388
    %v6409 = vadd.f32 %v6342, %v6388
    %v6410 = vadd.f32 %v6343, %v6388
    %v6411 = vadd.f32 %v6344, %v6388
    %v6412 = vadd.f32 %v6345, %v6388
    %v6413 = vadd.f32 %v6346, %v6388
    %v6414 = vadd.f32 %v6347, %v6388
    %v6415 = vadd.f32 %v6348, %v6388
    %v6416 = vadd.f32 %v6349, %v6388
    %v6417 = vadd.f32 %v6350, %v6388
    %v6418 = vadd.f32 %v6351, %v6388
    %v6419 = vadd.f32 %v6352, %v6388
    %v6420 = vadd.f32 %v6353, %v6388
    %v6421 = vadd.f32 %v6354, %v6388
    %v6422 = vadd.f32 %v6355, %v6388
    %v6423 = vadd.f32 %v6356, %v6388
    %v6424 = vadd.f32 %v6357, %v6388
    %v6425 = vadd.f32 %v6358, %v6388
    %v6426 = vadd.f32 %v6359, %v6388
    %v6427 = vadd.f32 %v6360, %v6388
    %v6428 = vadd.f32 %v6361, %v6388
    %v6429 = vadd.f32 %v6362, %v6388
    %v6430 = vadd.f32 %v6363, %v6388
    %v6431 = vadd.f32 %v6364, %v6388
    %v6432 = vadd.f32 %v6365, %v6388
    %v6433 = vadd.f32 %v6366, %v6388
    %v6434 = vadd.f32 %v6367, %v6388
    %v6435 = vadd.f32 %v6368, %v6388
    %v6436 = vadd.f32 %v6369, %v6388
    %v6437 = vadd.f32 %v6370, %v6388
    %v6438 = vadd.f32 %v6371, %v6388
    %v6439 = vadd.f32 %v6372, %v6388
    %v6440 = vadd.f32 %v6373, %v6388
    %v6441 = vadd.f32 %v6374, %v6388
    %v6442 = vadd.f32 %v6375, %v6388
    %v6443 = vadd.f32 %v6376, %v6388
    %v6444 = vadd.f32 %v6377, %v6388
    %v6445 = vadd.f32 %v6378, %v6388
    %v6446 = vadd.f32 %v6379, %v6388
    %v6447 = vadd.f32 %v6380, %v6388
    %v6448 = vadd.f32 %v6381, %v6388
    %v6449 = vadd.f32 %v6382, %v6388
    %v6450 = vadd.f32 %v6383, %v6388
    %v6451 = vadd.f32 %v6384, %v6388
    %v6452 = vadd.f32 %v6385, %v6388
    %v6453 = vadd.f32 %v6386, %v6388
    %v6454 = vmax.f32 %v6390, 0.0
    %v6455 = vmax.f32 %v6391, 0.0
    %v6456 = vmax.f32 %v6392, 0.0
    %v6457 = vmax.f32 %v6393, 0.0
    %v6458 = vmax.f32 %v6394, 0.0
    %v6459 = vmax.f32 %v6395, 0.0
    %v6460 = vmax.f32 %v6396, 0.0
    %v6461 = vmax.f32 %v6397, 0.0
    %v6462 = vmax.f32 %v6398, 0.0
    %v6463 = vmax.f32 %v6399, 0.0
    %v6464 = vmax.f32 %v6400, 0.0
    %v6465 = vmax.f32 %v6401, 0.0
    %v6466 = vmax.f32 %v6402, 0.0
    %v6467 = vmax.f32 %v6403, 0.0
    %v6468 = vmax.f32 %v6404, 0.0
    %v6469 = vmax.f32 %v6405, 0.0
    %v6470 = vmax.f32 %v6406, 0.0
    %v6471 = vmax.f32 %v6407, 0.0
    %v6472 = vmax.f32 %v6408, 0.0
    %v6473 = vmax.f32 %v6409, 0.0
    %v6474 = vmax.f32 %v6410, 0.0
    %v6475 = vmax.f32 %v6411, 0.0
    %v6476 = vmax.f32 %v6412, 0.0
    %v6477 = vmax.f32 %v6413, 0.0
    %v6478 = vmax.f32 %v6414, 0.0
    %v6479 = vmax.f32 %v6415, 0.0
    %v6480 = vmax.f32 %v6416, 0.0
    %v6481 = vmax.f32 %v6417, 0.0
    %v6482 = vmax.f32 %v6418, 0.0
    %v6483 = vmax.f32 %v6419, 0.0
    %v6484 = vmax.f32 %v6420, 0.0
    %v6485 = vmax.f32 %v6421, 0.0
    %v6486 = vmax.f32 %v6422, 0.0
    %v6487 = vmax.f32 %v6423, 0.0
    %v6488 = vmax.f32 %v6424, 0.0
    %v6489 = vmax.f32 %v6425, 0.0
    %v6490 = vmax.f32 %v6426, 0.0
    %v6491 = vmax.f32 %v6427, 0.0
    %v6492 = vmax.f32 %v6428, 0.0
    %v6493 = vmax.f32 %v6429, 0.0
    %v6494 = vmax.f32 %v6430, 0.0
    %v6495 = vmax.f32 %v6431, 0.0
    %v6496 = vmax.f32 %v6432, 0.0
    %v6497 = vmax.f32 %v6433, 0.0
    %v6498 = vmax.f32 %v6434, 0.0
    %v6499 = vmax.f32 %v6435, 0.0
    %v6500 = vmax.f32 %v6436, 0.0
    %v6501 = vmax.f32 %v6437, 0.0
    %v6502 = vmax.f32 %v6438, 0.0
    %v6503 = vmax.f32 %v6439, 0.0
    %v6504 = vmax.f32 %v6440, 0.0
    %v6505 = vmax.f32 %v6441, 0.0
    %v6506 = vmax.f32 %v6442, 0.0
    %v6507 = vmax.f32 %v6443, 0.0
    %v6508 = vmax.f32 %v6444, 0.0
    %v6509 = vmax.f32 %v6445, 0.0
    %v6510 = vmax.f32 %v6446, 0.0
    %v6511 = vmax.f32 %v6447, 0.0
    %v6512 = vmax.f32 %v6448, 0.0
    %v6513 = vmax.f32 %v6449, 0.0
    %v6514 = vmax.f32 %v6450, 0.0
    %v6515 = vmax.f32 %v6451, 0.0
    %v6516 = vmax.f32 %v6452, 0.0
    %v6517 = vmax.f32 %v6453, 0.0
    %v6518 = vadd.f32 %v6454, %v4062
    %v6519 = vadd.f32 %v6455, %v4063
    %v6520 = vadd.f32 %v6456, %v4064
    %v6521 = vadd.f32 %v6457, %v4065
    %v6522 = vadd.f32 %v6458, %v4066
    %v6523 = vadd.f32 %v6459, %v4067
    %v6524 = vadd.f32 %v6460, %v4068
    %v6525 = vadd.f32 %v6461, %v4069
    %v6526 = vadd.f32 %v6462, %v4070
    %v6527 = vadd.f32 %v6463, %v4071
    %v6528 = vadd.f32 %v6464, %v4072
    %v6529 = vadd.f32 %v6465, %v4073
    %v6530 = vadd.f32 %v6466, %v4074
    %v6531 = vadd.f32 %v6467, %v4075
    %v6532 = vadd.f32 %v6468, %v4076
    %v6533 = vadd.f32 %v6469, %v4077
    %v6534 = vadd.f32 %v6470, %v4078
    %v6535 = vadd.f32 %v6471, %v4079
    %v6536 = vadd.f32 %v6472, %v4080
    %v6537 = vadd.f32 %v6473, %v4081
    %v6538 = vadd.f32 %v6474, %v4082
    %v6539 = vadd.f32 %v6475, %v4083
    %v6540 = vadd.f32 %v6476, %v4084
    %v6541 = vadd.f32 %v6477, %v4085
    %v6542 = vadd.f32 %v6478, %v4086
    %v6543 = vadd.f32 %v6479, %v4087
    %v6544 = vadd.f32 %v6480, %v4088
    %v6545 = vadd.f32 %v6481, %v4089
    %v6546 = vadd.f32 %v6482, %v4090
    %v6547 = vadd.f32 %v6483, %v4091
    %v6548 = vadd.f32 %v6484, %v4092
    %v6549 = vadd.f32 %v6485, %v4093
    %v6550 = vadd.f32 %v6486, %v4094
    %v6551 = vadd.f32 %v6487, %v4095
    %v6552 = vadd.f32 %v6488, %v4096
    %v6553 = vadd.f32 %v6489, %v4097
    %v6554 = vadd.f32 %v6490, %v4098
    %v6555 = vadd.f32 %v6491, %v4099
    %v6556 = vadd.f32 %v6492, %v4100
    %v6557 = vadd.f32 %v6493, %v4101
    %v6558 = vadd.f32 %v6494, %v4102
    %v6559 = vadd.f32 %v6495, %v4103
    %v6560 = vadd.f32 %v6496, %v4104
    %v6561 = vadd.f32 %v6497, %v4105
    %v6562 = vadd.f32 %v6498, %v4106
    %v6563 = vadd.f32 %v6499, %v4107
    %v6564 = vadd.f32 %v6500, %v4108
    %v6565 = vadd.f32 %v6501, %v4109
    %v6566 = vadd.f32 %v6502, %v4110
    %v6567 = vadd.f32 %v6503, %v4111
    %v6568 = vadd.f32 %v6504, %v4112
    %v6569 = vadd.f32 %v6505, %v4113
    %v6570 = vadd.f32 %v6506, %v4114
    %v6571 = vadd.f32 %v6507, %v4115
    %v6572 = vadd.f32 %v6508, %v4116
    %v6573 = vadd.f32 %v6509, %v4117
    %v6574 = vadd.f32 %v6510, %v4118
    %v6575 = vadd.f32 %v6511, %v4119
    %v6576 = vadd.f32 %v6512, %v4120
    %v6577 = vadd.f32 %v6513, %v4121
    %v6578 = vadd.f32 %v6514, %v4122
    %v6579 = vadd.f32 %v6515, %v4123
    %v6580 = vadd.f32 %v6516, %v4124
    %v6581 = vadd.f32 %v6517, %v4125
    %6582 = vst [vmem:[%s2542 + $0x1] sm:$0xff] %v6518
    %6583 = vst [vmem:[%s2542 + $0x9] sm:$0xff] %v6519
    %6584 = vst [vmem:[%s2542 + $0x19] sm:$0xff] %v6520
    %6585 = vst [vmem:[%s2542 + $0x21] sm:$0xff] %v6521
    %6586 = vst [vmem:[%s2542 + $0x31] sm:$0xff] %v6522
    %6587 = vst [vmem:[%s2542 + $0x39] sm:$0xff] %v6523
    %6588 = vst [vmem:[%s2542 + $0x49] sm:$0xff] %v6524
    %6589 = vst [vmem:[%s2542 + $0x51] sm:$0xff] %v6525
    %6590 = vst [vmem:[%s2542 + $0x61] sm:$0xff] %v6526
    %6591 = vst [vmem:[%s2542 + $0x69] sm:$0xff] %v6527
    %6592 = vst [vmem:[%s2542 + $0x79] sm:$0xff] %v6528
    %6593 = vst [vmem:[%s2542 + $0x81] sm:$0xff] %v6529
    %6594 = vst [vmem:[%s2542 + $0x91] sm:$0xff] %v6530
    %6595 = vst [vmem:[%s2542 + $0x99] sm:$0xff] %v6531
    %6596 = vst [vmem:[%s2542 + $0xa9] sm:$0xff] %v6532
    %6597 = vst [vmem:[%s2542 + $0xb1] sm:$0xff] %v6533
    %6598 = vst [vmem:[%s2542 + $0xc1] sm:$0xff] %v6534
    %6599 = vst [vmem:[%s2542 + $0xc9] sm:$0xff] %v6535
    %6600 = vst [vmem:[%s2542 + $0xd9] sm:$0xff] %v6536
    %6601 = vst [vmem:[%s2542 + $0xe1] sm:$0xff] %v6537
    %6602 = vst [vmem:[%s2542 + $0xf1] sm:$0xff] %v6538
    %6603 = vst [vmem:[%s2542 + $0xf9] sm:$0xff] %v6539
    %6604 = vst [vmem:[%s2542 + $0x109] sm:$0xff] %v6540
    %6605 = vst [vmem:[%s2542 + $0x111] sm:$0xff] %v6541
    %6606 = vst [vmem:[%s2542 + $0x121] sm:$0xff] %v6542
    %6607 = vst [vmem:[%s2542 + $0x129] sm:$0xff] %v6543
    %6608 = vst [vmem:[%s2542 + $0x139] sm:$0xff] %v6544
    %6609 = vst [vmem:[%s2542 + $0x141] sm:$0xff] %v6545
    %6610 = vst [vmem:[%s2542 + $0x151] sm:$0xff] %v6546
    %6611 = vst [vmem:[%s2542 + $0x159] sm:$0xff] %v6547
    %6612 = vst [vmem:[%s2542 + $0x169] sm:$0xff] %v6548
    %6613 = vst [vmem:[%s2542 + $0x171] sm:$0xff] %v6549
    %6614 = vst [vmem:[%s2542 + $0x1b1] sm:$0xff] %v6550
    %6615 = vst [vmem:[%s2542 + $0x1b9] sm:$0xff] %v6551
    %6616 = vst [vmem:[%s2542 + $0x1c9] sm:$0xff] %v6552
    %6617 = vst [vmem:[%s2542 + $0x1d1] sm:$0xff] %v6553
    %6618 = vst [vmem:[%s2542 + $0x1e1] sm:$0xff] %v6554
    %6619 = vst [vmem:[%s2542 + $0x1e9] sm:$0xff] %v6555
    %6620 = vst [vmem:[%s2542 + $0x1f9] sm:$0xff] %v6556
    %6621 = vst [vmem:[%s2542 + $0x201] sm:$0xff] %v6557
    %6622 = vst [vmem:[%s2542 + $0x211] sm:$0xff] %v6558
    %6623 = vst [vmem:[%s2542 + $0x219] sm:$0xff] %v6559
    %6624 = vst [vmem:[%s2542 + $0x229] sm:$0xff] %v6560
    %6625 = vst [vmem:[%s2542 + $0x231] sm:$0xff] %v6561
    %6626 = vst [vmem:[%s2542 + $0x241] sm:$0xff] %v6562
    %6627 = vst [vmem:[%s2542 + $0x249] sm:$0xff] %v6563
    %6628 = vst [vmem:[%s2542 + $0x259] sm:$0xff] %v6564
    %6629 = vst [vmem:[%s2542 + $0x261] sm:$0xff] %v6565
    %6630 = vst [vmem:[%s2542 + $0x271] sm:$0xff] %v6566
    %6631 = vst [vmem:[%s2542 + $0x279] sm:$0xff] %v6567
    %6632 = vst [vmem:[%s2542 + $0x289] sm:$0xff] %v6568
    %6633 = vst [vmem:[%s2542 + $0x291] sm:$0xff] %v6569
    %6634 = vst [vmem:[%s2542 + $0x2a1] sm:$0xff] %v6570
    %6635 = vst [vmem:[%s2542 + $0x2a9] sm:$0xff] %v6571
    %6636 = vst [vmem:[%s2542 + $0x2b9] sm:$0xff] %v6572
    %6637 = vst [vmem:[%s2542 + $0x2c1] sm:$0xff] %v6573
    %6638 = vst [vmem:[%s2542 + $0x2d1] sm:$0xff] %v6574
    %6639 = vst [vmem:[%s2542 + $0x2d9] sm:$0xff] %v6575
    %6640 = vst [vmem:[%s2542 + $0x2e9] sm:$0xff] %v6576
    %6641 = vst [vmem:[%s2542 + $0x2f1] sm:$0xff] %v6577
    %6642 = vst [vmem:[%s2542 + $0x301] sm:$0xff] %v6578
    %6643 = vst [vmem:[%s2542 + $0x309] sm:$0xff] %v6579
    %6644 = vst [vmem:[%s2542 + $0x319] sm:$0xff] %v6580
    %6645 = vst [vmem:[%s2542 + $0x321] sm:$0xff] %v6581
  $region34: #{_lambda_.2} parent=0 // loop_footer
    %s2614 = sadd.s32 1, %s2610
  $region35: #{_lambda_.2} parent=0 // loop_footer_branch
    %2609 = sbr.rel target = $region31
  $region36: #{_lambda_.2} parent=0 // loop_exit
    _
  %v6646 = vld [vmem:[%s2542 + $0x1] sm:$0xff]
  %v6647 = vld [vmem:[%s2542 + $0x9] sm:$0xff]
  %v6648 = vld [vmem:[%s2542 + $0x19] sm:$0xff]
  %v6649 = vld [vmem:[%s2542 + $0x21] sm:$0xff]
  %v6650 = vld [vmem:[%s2542 + $0x31] sm:$0xff]
  %v6651 = vld [vmem:[%s2542 + $0x39] sm:$0xff]
  %v6652 = vld [vmem:[%s2542 + $0x49] sm:$0xff]
  %v6653 = vld [vmem:[%s2542 + $0x51] sm:$0xff]
  %v6654 = vld [vmem:[%s2542 + $0x61] sm:$0xff]
  %v6655 = vld [vmem:[%s2542 + $0x69] sm:$0xff]
  %v6656 = vld [vmem:[%s2542 + $0x79] sm:$0xff]
  %v6657 = vld [vmem:[%s2542 + $0x81] sm:$0xff]
  %v6658 = vld [vmem:[%s2542 + $0x91] sm:$0xff]
  %v6659 = vld [vmem:[%s2542 + $0x99] sm:$0xff]
  %v6660 = vld [vmem:[%s2542 + $0xa9] sm:$0xff]
  %v6661 = vld [vmem:[%s2542 + $0xb1] sm:$0xff]
  %v6662 = vld [vmem:[%s2542 + $0xc1] sm:$0xff]
  %v6663 = vld [vmem:[%s2542 + $0xc9] sm:$0xff]
  %v6664 = vld [vmem:[%s2542 + $0xd9] sm:$0xff]
  %v6665 = vld [vmem:[%s2542 + $0xe1] sm:$0xff]
  %v6666 = vld [vmem:[%s2542 + $0xf1] sm:$0xff]
  %v6667 = vld [vmem:[%s2542 + $0xf9] sm:$0xff]
  %v6668 = vld [vmem:[%s2542 + $0x109] sm:$0xff]
  %v6669 = vld [vmem:[%s2542 + $0x111] sm:$0xff]
  %v6670 = vld [vmem:[%s2542 + $0x121] sm:$0xff]
  %v6671 = vld [vmem:[%s2542 + $0x129] sm:$0xff]
  %v6672 = vld [vmem:[%s2542 + $0x139] sm:$0xff]
  %v6673 = vld [vmem:[%s2542 + $0x141] sm:$0xff]
  %v6674 = vld [vmem:[%s2542 + $0x151] sm:$0xff]
  %v6675 = vld [vmem:[%s2542 + $0x159] sm:$0xff]
  %v6676 = vld [vmem:[%s2542 + $0x169] sm:$0xff]
  %v6677 = vld [vmem:[%s2542 + $0x171] sm:$0xff]
  %v6678 = vld [vmem:[%s2542 + $0x1b1] sm:$0xff]
  %v6679 = vld [vmem:[%s2542 + $0x1b9] sm:$0xff]
  %v6680 = vld [vmem:[%s2542 + $0x1c9] sm:$0xff]
  %v6681 = vld [vmem:[%s2542 + $0x1d1] sm:$0xff]
  %v6682 = vld [vmem:[%s2542 + $0x1e1] sm:$0xff]
  %v6683 = vld [vmem:[%s2542 + $0x1e9] sm:$0xff]
  %v6684 = vld [vmem:[%s2542 + $0x1f9] sm:$0xff]
  %v6685 = vld [vmem:[%s2542 + $0x201] sm:$0xff]
  %v6686 = vld [vmem:[%s2542 + $0x211] sm:$0xff]
  %v6687 = vld [vmem:[%s2542 + $0x219] sm:$0xff]
  %v6688 = vld [vmem:[%s2542 + $0x229] sm:$0xff]
  %v6689 = vld [vmem:[%s2542 + $0x231] sm:$0xff]
  %v6690 = vld [vmem:[%s2542 + $0x241] sm:$0xff]
  %v6691 = vld [vmem:[%s2542 + $0x249] sm:$0xff]
  %v6692 = vld [vmem:[%s2542 + $0x259] sm:$0xff]
  %v6693 = vld [vmem:[%s2542 + $0x261] sm:$0xff]
  %v6694 = vld [vmem:[%s2542 + $0x271] sm:$0xff]
  %v6695 = vld [vmem:[%s2542 + $0x279] sm:$0xff]
  %v6696 = vld [vmem:[%s2542 + $0x289] sm:$0xff]
  %v6697 = vld [vmem:[%s2542 + $0x291] sm:$0xff]
  %v6698 = vld [vmem:[%s2542 + $0x2a1] sm:$0xff]
  %v6699 = vld [vmem:[%s2542 + $0x2a9] sm:$0xff]
  %v6700 = vld [vmem:[%s2542 + $0x2b9] sm:$0xff]
  %v6701 = vld [vmem:[%s2542 + $0x2c1] sm:$0xff]
  %v6702 = vld [vmem:[%s2542 + $0x2d1] sm:$0xff]
  %v6703 = vld [vmem:[%s2542 + $0x2d9] sm:$0xff]
  %v6704 = vld [vmem:[%s2542 + $0x2e9] sm:$0xff]
  %v6705 = vld [vmem:[%s2542 + $0x2f1] sm:$0xff]
  %v6706 = vld [vmem:[%s2542 + $0x301] sm:$0xff]
  %v6707 = vld [vmem:[%s2542 + $0x309] sm:$0xff]
  %v6708 = vld [vmem:[%s2542 + $0x319] sm:$0xff]
  %v6709 = vld [vmem:[%s2542 + $0x321] sm:$0xff]
  %6710 = vst [vmem:[%s7] sm:$0xff] %v6646
  %6711 = vst [vmem:[%s7 + $0x8] sm:$0xff] %v6647
  %6712 = vst [vmem:[%s7 + $0x10] sm:$0xff] %v6648
  %6713 = vst [vmem:[%s7 + $0x18] sm:$0xff] %v6649
  %6714 = vst [vmem:[%s7 + $0x20] sm:$0xff] %v6650
  %6715 = vst [vmem:[%s7 + $0x28] sm:$0xff] %v6651
  %6716 = vst [vmem:[%s7 + $0x30] sm:$0xff] %v6652
  %6717 = vst [vmem:[%s7 + $0x38] sm:$0xff] %v6653
  %6718 = vst [vmem:[%s7 + $0x40] sm:$0xff] %v6654
  %6719 = vst [vmem:[%s7 + $0x48] sm:$0xff] %v6655
  %6720 = vst [vmem:[%s7 + $0x50] sm:$0xff] %v6656
  %6721 = vst [vmem:[%s7 + $0x58] sm:$0xff] %v6657
  %6722 = vst [vmem:[%s7 + $0x60] sm:$0xff] %v6658
  %6723 = vst [vmem:[%s7 + $0x68] sm:$0xff] %v6659
  %6724 = vst [vmem:[%s7 + $0x70] sm:$0xff] %v6660
  %6725 = vst [vmem:[%s7 + $0x78] sm:$0xff] %v6661
  %6726 = vst [vmem:[%s7 + $0x80] sm:$0xff] %v6662
  %6727 = vst [vmem:[%s7 + $0x88] sm:$0xff] %v6663
  %6728 = vst [vmem:[%s7 + $0x90] sm:$0xff] %v6664
  %6729 = vst [vmem:[%s7 + $0x98] sm:$0xff] %v6665
  %6730 = vst [vmem:[%s7 + $0xa0] sm:$0xff] %v6666
  %6731 = vst [vmem:[%s7 + $0xa8] sm:$0xff] %v6667
  %6732 = vst [vmem:[%s7 + $0xb0] sm:$0xff] %v6668
  %6733 = vst [vmem:[%s7 + $0xb8] sm:$0xff] %v6669
  %6734 = vst [vmem:[%s7 + $0xc0] sm:$0xff] %v6670
  %6735 = vst [vmem:[%s7 + $0xc8] sm:$0xff] %v6671
  %6736 = vst [vmem:[%s7 + $0xd0] sm:$0xff] %v6672
  %6737 = vst [vmem:[%s7 + $0xd8] sm:$0xff] %v6673
  %6738 = vst [vmem:[%s7 + $0xe0] sm:$0xff] %v6674
  %6739 = vst [vmem:[%s7 + $0xe8] sm:$0xff] %v6675
  %6740 = vst [vmem:[%s7 + $0xf0] sm:$0xff] %v6676
  %6741 = vst [vmem:[%s7 + $0xf8] sm:$0xff] %v6677
  %6742 = vst [vmem:[%s7 + $0x100] sm:$0xff] %v6678
  %6743 = vst [vmem:[%s7 + $0x108] sm:$0xff] %v6679
  %6744 = vst [vmem:[%s7 + $0x110] sm:$0xff] %v6680
  %6745 = vst [vmem:[%s7 + $0x118] sm:$0xff] %v6681
  %6746 = vst [vmem:[%s7 + $0x120] sm:$0xff] %v6682
  %6747 = vst [vmem:[%s7 + $0x128] sm:$0xff] %v6683
  %6748 = vst [vmem:[%s7 + $0x130] sm:$0xff] %v6684
  %6749 = vst [vmem:[%s7 + $0x138] sm:$0xff] %v6685
  %6750 = vst [vmem:[%s7 + $0x140] sm:$0xff] %v6686
  %6751 = vst [vmem:[%s7 + $0x148] sm:$0xff] %v6687
  %6752 = vst [vmem:[%s7 + $0x150] sm:$0xff] %v6688
  %6753 = vst [vmem:[%s7 + $0x158] sm:$0xff] %v6689
  %6754 = vst [vmem:[%s7 + $0x160] sm:$0xff] %v6690
  %6755 = vst [vmem:[%s7 + $0x168] sm:$0xff] %v6691
  %6756 = vst [vmem:[%s7 + $0x170] sm:$0xff] %v6692
  %6757 = vst [vmem:[%s7 + $0x178] sm:$0xff] %v6693
  %6758 = vst [vmem:[%s7 + $0x180] sm:$0xff] %v6694
  %6759 = vst [vmem:[%s7 + $0x188] sm:$0xff] %v6695
  %6760 = vst [vmem:[%s7 + $0x190] sm:$0xff] %v6696
  %6761 = vst [vmem:[%s7 + $0x198] sm:$0xff] %v6697
  %6762 = vst [vmem:[%s7 + $0x1a0] sm:$0xff] %v6698
  %6763 = vst [vmem:[%s7 + $0x1a8] sm:$0xff] %v6699
  %6764 = vst [vmem:[%s7 + $0x1b0] sm:$0xff] %v6700
  %6765 = vst [vmem:[%s7 + $0x1b8] sm:$0xff] %v6701
  %6766 = vst [vmem:[%s7 + $0x1c0] sm:$0xff] %v6702
  %6767 = vst [vmem:[%s7 + $0x1c8] sm:$0xff] %v6703
  %6768 = vst [vmem:[%s7 + $0x1d0] sm:$0xff] %v6704
  %6769 = vst [vmem:[%s7 + $0x1d8] sm:$0xff] %v6705
  %6770 = vst [vmem:[%s7 + $0x1e0] sm:$0xff] %v6706
  %6771 = vst [vmem:[%s7 + $0x1e8] sm:$0xff] %v6707
  %6772 = vst [vmem:[%s7 + $0x1f0] sm:$0xff] %v6708
  %6773 = vst [vmem:[%s7 + $0x1f8] sm:$0xff] %v6709
  // Predicated region
  $region37: #{_lambda_.2} parent=0 // pred_check
    _
  $region38: #{_lambda_.2} parent=0 // pred_check_branch
    %6775 = sbr.rel (0) target = $region40
  $region39: #{_lambda_.2} parent=0 // pred_region
    _
  $region40: #{_lambda_.2} parent=0 // pred_fallthru
    _
  // Predicated region
  $region41: #{_lambda_.2} parent=0 // pred_check
    _
  $region42: #{_lambda_.2} parent=0 // pred_check_branch
    %6777 = sbr.rel (0) target = $region44
  $region43: #{_lambda_.2} parent=0 // pred_region
    _
  $region44: #{_lambda_.2} parent=0 // pred_fallthru
    _

// kernel: _lambda_.3
$region0: #{_lambda_.3}
  #allocation0 [shape = 'u32[]', space=smem, size = 0x4, offset = 0x4, fixed_abs, tag = 'smem constant byte address 0x4 - core index']
  #allocation1 [shape = 'u32[72,128]{1,0:T(1,128)}', space=vmem, size = 0x9000, scoped, tag = 'internal scratch']
  %s0 = inlined_call_operand.vmem [shape: bf16[2,8192], index: 0, kind: input, shape index: {}]
  %s1 = inlined_call_operand.vmem [shape: bf16[8192,128], index: 1, kind: input, shape index: {}]
  %s2 = inlined_call_operand.vmem [shape: f32[1,128], index: 2, kind: input, shape index: {}]
  %s3 = inlined_call_operand.vmem [shape: bf16[128,128], index: 3, kind: input, shape index: {}]
  %s4 = inlined_call_operand.vmem [shape: f32[1,128], index: 4, kind: input, shape index: {}]
  %s5 = inlined_call_operand.hbm [shape: f32[2,128], index: 5, kind: output, shape index: {}]
  %s6 = sld [smem:[#allocation0]]
  $region30: #{_lambda_.3} parent=0
    _
  %s8 = ssub.s32 1, %s6
  %s9 = scalar_select 0, %s8, %s6
  $region1: #{_lambda_.3} parent=0
    #allocation2 [shape = 'u8[1024]{0}', space=vmem, size = 0x400, scoped, tag = 'output window, operand 0, single buffered']
    #allocation3 [shape = 's32[1]{0}', space=sflag, size = 0x4, scoped, tag = 'scoped memory for _lambda_.3']
    %10 = vsyncpa [#allocation3], 0
    // Predicated region
    $region2: #{_lambda_.3} parent=1 // pred_check
      _
    $region3: #{_lambda_.3} parent=1 // pred_check_branch
      %12 = sbr.rel (0) target = $region5
    $region4: #{_lambda_.3} parent=1 // pred_region
      _
    $region5: #{_lambda_.3} parent=1 // pred_fallthru
      _
    // Predicated region
    $region6: #{_lambda_.3} parent=1 // pred_check
      _
    $region7: #{_lambda_.3} parent=1 // pred_check_branch
      %14 = sbr.rel (0) target = $region9
    $region8: #{_lambda_.3} parent=1 // pred_region
      _
    $region9: #{_lambda_.3} parent=1 // pred_fallthru
      _
    // Predicated region
    $region10: #{_lambda_.3} parent=1 // pred_check
      _
    $region11: #{_lambda_.3} parent=1 // pred_check_branch
      %16 = sbr.rel (0) target = $region13
    $region12: #{_lambda_.3} parent=1 // pred_region
      _
    $region13: #{_lambda_.3} parent=1 // pred_fallthru
      _
    // Predicated region
    $region14: #{_lambda_.3} parent=1 // pred_check
      _
    $region15: #{_lambda_.3} parent=1 // pred_check_branch
      %18 = sbr.rel (0) target = $region17
    $region16: #{_lambda_.3} parent=1 // pred_region
      _
    $region17: #{_lambda_.3} parent=1 // pred_fallthru
      _
    // Predicated region
    $region18: #{_lambda_.3} parent=1 // pred_check
      _
    $region19: #{_lambda_.3} parent=1 // pred_check_branch
      %20 = sbr.rel (0) target = $region21
    $region20: #{_lambda_.3} parent=1 // pred_region
      _
    $region21: #{_lambda_.3} parent=1 // pred_fallthru
      _
    %v21 = vld [vmem:[%s0] sm:$0xff]
    %v22 = vld [vmem:[%s0 + $0x8] sm:$0xff]
    %v23 = vld [vmem:[%s0 + $0x10] sm:$0xff]
    %v24 = vld [vmem:[%s0 + $0x18] sm:$0xff]
    %v25 = vld [vmem:[%s0 + $0x20] sm:$0xff]
    %v26 = vld [vmem:[%s0 + $0x28] sm:$0xff]
    %v27 = vld [vmem:[%s0 + $0x30] sm:$0xff]
    %v28 = vld [vmem:[%s0 + $0x38] sm:$0xff]
    %v29 = vld [vmem:[%s1] sm:$0xf]
    %v30 = vld [vmem:[%s1 + $0x4] sm:$0xf]
    %v31 = vld [vmem:[%s1 + $0x8] sm:$0xf]
    %v32 = vld [vmem:[%s1 + $0xc] sm:$0xf]
    %v33 = vld [vmem:[%s1 + $0x10] sm:$0xf]
    %v34 = vld [vmem:[%s1 + $0x14] sm:$0xf]
    %v35 = vld [vmem:[%s1 + $0x18] sm:$0xf]
    %v36 = vld [vmem:[%s1 + $0x1c] sm:$0xf]
    %v37 = vld [vmem:[%s1 + $0x20] sm:$0xf]
    %v38 = vld [vmem:[%s1 + $0x24] sm:$0xf]
    %v39 = vld [vmem:[%s1 + $0x28] sm:$0xf]
    %v40 = vld [vmem:[%s1 + $0x2c] sm:$0xf]
    %v41 = vld [vmem:[%s1 + $0x30] sm:$0xf]
    %v42 = vld [vmem:[%s1 + $0x34] sm:$0xf]
    %v43 = vld [vmem:[%s1 + $0x38] sm:$0xf]
    %v44 = vld [vmem:[%s1 + $0x3c] sm:$0xf]
    %v45 = vld [vmem:[%s1 + $0x40] sm:$0xf]
    %v46 = vld [vmem:[%s1 + $0x44] sm:$0xf]
    %v47 = vld [vmem:[%s1 + $0x48] sm:$0xf]
    %v48 = vld [vmem:[%s1 + $0x4c] sm:$0xf]
    %v49 = vld [vmem:[%s1 + $0x50] sm:$0xf]
    %v50 = vld [vmem:[%s1 + $0x54] sm:$0xf]
    %v51 = vld [vmem:[%s1 + $0x58] sm:$0xf]
    %v52 = vld [vmem:[%s1 + $0x5c] sm:$0xf]
    %v53 = vld [vmem:[%s1 + $0x60] sm:$0xf]
    %v54 = vld [vmem:[%s1 + $0x64] sm:$0xf]
    %v55 = vld [vmem:[%s1 + $0x68] sm:$0xf]
    %v56 = vld [vmem:[%s1 + $0x6c] sm:$0xf]
    %v57 = vld [vmem:[%s1 + $0x70] sm:$0xf]
    %v58 = vld [vmem:[%s1 + $0x74] sm:$0xf]
    %v59 = vld [vmem:[%s1 + $0x78] sm:$0xf]
    %v60 = vld [vmem:[%s1 + $0x7c] sm:$0xf]
    %v61 = vld [vmem:[%s1 + $0x80] sm:$0xf]
    %v62 = vld [vmem:[%s1 + $0x84] sm:$0xf]
    %v63 = vld [vmem:[%s1 + $0x88] sm:$0xf]
    %v64 = vld [vmem:[%s1 + $0x8c] sm:$0xf]
    %v65 = vld [vmem:[%s1 + $0x90] sm:$0xf]
    %v66 = vld [vmem:[%s1 + $0x94] sm:$0xf]
    %v67 = vld [vmem:[%s1 + $0x98] sm:$0xf]
    %v68 = vld [vmem:[%s1 + $0x9c] sm:$0xf]
    %v69 = vld [vmem:[%s1 + $0xa0] sm:$0xf]
    %v70 = vld [vmem:[%s1 + $0xa4] sm:$0xf]
    %v71 = vld [vmem:[%s1 + $0xa8] sm:$0xf]
    %v72 = vld [vmem:[%s1 + $0xac] sm:$0xf]
    %v73 = vld [vmem:[%s1 + $0xb0] sm:$0xf]
    %v74 = vld [vmem:[%s1 + $0xb4] sm:$0xf]
    %v75 = vld [vmem:[%s1 + $0xb8] sm:$0xf]
    %v76 = vld [vmem:[%s1 + $0xbc] sm:$0xf]
    %v77 = vld [vmem:[%s1 + $0xc0] sm:$0xf]
    %v78 = vld [vmem:[%s1 + $0xc4] sm:$0xf]
    %v79 = vld [vmem:[%s1 + $0xc8] sm:$0xf]
    %v80 = vld [vmem:[%s1 + $0xcc] sm:$0xf]
    %v81 = vld [vmem:[%s1 + $0xd0] sm:$0xf]
    %v82 = vld [vmem:[%s1 + $0xd4] sm:$0xf]
    %v83 = vld [vmem:[%s1 + $0xd8] sm:$0xf]
    %v84 = vld [vmem:[%s1 + $0xdc] sm:$0xf]
    %v85 = vld [vmem:[%s1 + $0xe0] sm:$0xf]
    %v86 = vld [vmem:[%s1 + $0xe4] sm:$0xf]
    %v87 = vld [vmem:[%s1 + $0xe8] sm:$0xf]
    %v88 = vld [vmem:[%s1 + $0xec] sm:$0xf]
    %v89 = vld [vmem:[%s1 + $0xf0] sm:$0xf]
    %v90 = vld [vmem:[%s1 + $0xf4] sm:$0xf]
    %v91 = vld [vmem:[%s1 + $0xf8] sm:$0xf]
    %v92 = vld [vmem:[%s1 + $0xfc] sm:$0xf]
    %v93 = vld [vmem:[%s1 + $0x100] sm:$0xf]
    %v94 = vld [vmem:[%s1 + $0x104] sm:$0xf]
    %v95 = vld [vmem:[%s1 + $0x108] sm:$0xf]
    %v96 = vld [vmem:[%s1 + $0x10c] sm:$0xf]
    %v97 = vld [vmem:[%s1 + $0x110] sm:$0xf]
    %v98 = vld [vmem:[%s1 + $0x114] sm:$0xf]
    %v99 = vld [vmem:[%s1 + $0x118] sm:$0xf]
    %v100 = vld [vmem:[%s1 + $0x11c] sm:$0xf]
    %v101 = vld [vmem:[%s1 + $0x120] sm:$0xf]
    %v102 = vld [vmem:[%s1 + $0x124] sm:$0xf]
    %v103 = vld [vmem:[%s1 + $0x128] sm:$0xf]
    %v104 = vld [vmem:[%s1 + $0x12c] sm:$0xf]
    %v105 = vld [vmem:[%s1 + $0x130] sm:$0xf]
    %v106 = vld [vmem:[%s1 + $0x134] sm:$0xf]
    %v107 = vld [vmem:[%s1 + $0x138] sm:$0xf]
    %v108 = vld [vmem:[%s1 + $0x13c] sm:$0xf]
    %v109 = vld [vmem:[%s1 + $0x140] sm:$0xf]
    %v110 = vld [vmem:[%s1 + $0x144] sm:$0xf]
    %v111 = vld [vmem:[%s1 + $0x148] sm:$0xf]
    %v112 = vld [vmem:[%s1 + $0x14c] sm:$0xf]
    %v113 = vld [vmem:[%s1 + $0x150] sm:$0xf]
    %v114 = vld [vmem:[%s1 + $0x154] sm:$0xf]
    %v115 = vld [vmem:[%s1 + $0x158] sm:$0xf]
    %v116 = vld [vmem:[%s1 + $0x15c] sm:$0xf]
    %v117 = vld [vmem:[%s1 + $0x160] sm:$0xf]
    %v118 = vld [vmem:[%s1 + $0x164] sm:$0xf]
    %v119 = vld [vmem:[%s1 + $0x168] sm:$0xf]
    %v120 = vld [vmem:[%s1 + $0x16c] sm:$0xf]
    %v121 = vld [vmem:[%s1 + $0x170] sm:$0xf]
    %v122 = vld [vmem:[%s1 + $0x174] sm:$0xf]
    %v123 = vld [vmem:[%s1 + $0x178] sm:$0xf]
    %v124 = vld [vmem:[%s1 + $0x17c] sm:$0xf]
    %v125 = vld [vmem:[%s1 + $0x180] sm:$0xf]
    %v126 = vld [vmem:[%s1 + $0x184] sm:$0xf]
    %v127 = vld [vmem:[%s1 + $0x188] sm:$0xf]
    %v128 = vld [vmem:[%s1 + $0x18c] sm:$0xf]
    %v129 = vld [vmem:[%s1 + $0x190] sm:$0xf]
    %v130 = vld [vmem:[%s1 + $0x194] sm:$0xf]
    %v131 = vld [vmem:[%s1 + $0x198] sm:$0xf]
    %v132 = vld [vmem:[%s1 + $0x19c] sm:$0xf]
    %v133 = vld [vmem:[%s1 + $0x1a0] sm:$0xf]
    %v134 = vld [vmem:[%s1 + $0x1a4] sm:$0xf]
    %v135 = vld [vmem:[%s1 + $0x1a8] sm:$0xf]
    %v136 = vld [vmem:[%s1 + $0x1ac] sm:$0xf]
    %v137 = vld [vmem:[%s1 + $0x1b0] sm:$0xf]
    %v138 = vld [vmem:[%s1 + $0x1b4] sm:$0xf]
    %v139 = vld [vmem:[%s1 + $0x1b8] sm:$0xf]
    %v140 = vld [vmem:[%s1 + $0x1bc] sm:$0xf]
    %v141 = vld [vmem:[%s1 + $0x1c0] sm:$0xf]
    %v142 = vld [vmem:[%s1 + $0x1c4] sm:$0xf]
    %v143 = vld [vmem:[%s1 + $0x1c8] sm:$0xf]
    %v144 = vld [vmem:[%s1 + $0x1cc] sm:$0xf]
    %v145 = vld [vmem:[%s1 + $0x1d0] sm:$0xf]
    %v146 = vld [vmem:[%s1 + $0x1d4] sm:$0xf]
    %v147 = vld [vmem:[%s1 + $0x1d8] sm:$0xf]
    %v148 = vld [vmem:[%s1 + $0x1dc] sm:$0xf]
    %v149 = vld [vmem:[%s1 + $0x1e0] sm:$0xf]
    %v150 = vld [vmem:[%s1 + $0x1e4] sm:$0xf]
    %v151 = vld [vmem:[%s1 + $0x1e8] sm:$0xf]
    %v152 = vld [vmem:[%s1 + $0x1ec] sm:$0xf]
    %v153 = vld [vmem:[%s1 + $0x1f0] sm:$0xf]
    %v154 = vld [vmem:[%s1 + $0x1f4] sm:$0xf]
    %v155 = vld [vmem:[%s1 + $0x1f8] sm:$0xf]
    %v156 = vld [vmem:[%s1 + $0x1fc] sm:$0xf]
    %v157 = vld [vmem:[%s1 + $0x200] sm:$0xf]
    %v158 = vld [vmem:[%s1 + $0x204] sm:$0xf]
    %v159 = vld [vmem:[%s1 + $0x208] sm:$0xf]
    %v160 = vld [vmem:[%s1 + $0x20c] sm:$0xf]
    %v161 = vld [vmem:[%s1 + $0x210] sm:$0xf]
    %v162 = vld [vmem:[%s1 + $0x214] sm:$0xf]
    %v163 = vld [vmem:[%s1 + $0x218] sm:$0xf]
    %v164 = vld [vmem:[%s1 + $0x21c] sm:$0xf]
    %v165 = vld [vmem:[%s1 + $0x220] sm:$0xf]
    %v166 = vld [vmem:[%s1 + $0x224] sm:$0xf]
    %v167 = vld [vmem:[%s1 + $0x228] sm:$0xf]
    %v168 = vld [vmem:[%s1 + $0x22c] sm:$0xf]
    %v169 = vld [vmem:[%s1 + $0x230] sm:$0xf]
    %v170 = vld [vmem:[%s1 + $0x234] sm:$0xf]
    %v171 = vld [vmem:[%s1 + $0x238] sm:$0xf]
    %v172 = vld [vmem:[%s1 + $0x23c] sm:$0xf]
    %v173 = vld [vmem:[%s1 + $0x240] sm:$0xf]
    %v174 = vld [vmem:[%s1 + $0x244] sm:$0xf]
    %v175 = vld [vmem:[%s1 + $0x248] sm:$0xf]
    %v176 = vld [vmem:[%s1 + $0x24c] sm:$0xf]
    %v177 = vld [vmem:[%s1 + $0x250] sm:$0xf]
    %v178 = vld [vmem:[%s1 + $0x254] sm:$0xf]
    %v179 = vld [vmem:[%s1 + $0x258] sm:$0xf]
    %v180 = vld [vmem:[%s1 + $0x25c] sm:$0xf]
    %v181 = vld [vmem:[%s1 + $0x260] sm:$0xf]
    %v182 = vld [vmem:[%s1 + $0x264] sm:$0xf]
    %v183 = vld [vmem:[%s1 + $0x268] sm:$0xf]
    %v184 = vld [vmem:[%s1 + $0x26c] sm:$0xf]
    %v185 = vld [vmem:[%s1 + $0x270] sm:$0xf]
    %v186 = vld [vmem:[%s1 + $0x274] sm:$0xf]
    %v187 = vld [vmem:[%s1 + $0x278] sm:$0xf]
    %v188 = vld [vmem:[%s1 + $0x27c] sm:$0xf]
    %v189 = vld [vmem:[%s1 + $0x280] sm:$0xf]
    %v190 = vld [vmem:[%s1 + $0x284] sm:$0xf]
    %v191 = vld [vmem:[%s1 + $0x288] sm:$0xf]
    %v192 = vld [vmem:[%s1 + $0x28c] sm:$0xf]
    %v193 = vld [vmem:[%s1 + $0x290] sm:$0xf]
    %v194 = vld [vmem:[%s1 + $0x294] sm:$0xf]
    %v195 = vld [vmem:[%s1 + $0x298] sm:$0xf]
    %v196 = vld [vmem:[%s1 + $0x29c] sm:$0xf]
    %v197 = vld [vmem:[%s1 + $0x2a0] sm:$0xf]
    %v198 = vld [vmem:[%s1 + $0x2a4] sm:$0xf]
    %v199 = vld [vmem:[%s1 + $0x2a8] sm:$0xf]
    %v200 = vld [vmem:[%s1 + $0x2ac] sm:$0xf]
    %v201 = vld [vmem:[%s1 + $0x2b0] sm:$0xf]
    %v202 = vld [vmem:[%s1 + $0x2b4] sm:$0xf]
    %v203 = vld [vmem:[%s1 + $0x2b8] sm:$0xf]
    %v204 = vld [vmem:[%s1 + $0x2bc] sm:$0xf]
    %v205 = vld [vmem:[%s1 + $0x2c0] sm:$0xf]
    %v206 = vld [vmem:[%s1 + $0x2c4] sm:$0xf]
    %v207 = vld [vmem:[%s1 + $0x2c8] sm:$0xf]
    %v208 = vld [vmem:[%s1 + $0x2cc] sm:$0xf]
    %v209 = vld [vmem:[%s1 + $0x2d0] sm:$0xf]
    %v210 = vld [vmem:[%s1 + $0x2d4] sm:$0xf]
    %v211 = vld [vmem:[%s1 + $0x2d8] sm:$0xf]
    %v212 = vld [vmem:[%s1 + $0x2dc] sm:$0xf]
    %v213 = vld [vmem:[%s1 + $0x2e0] sm:$0xf]
    %v214 = vld [vmem:[%s1 + $0x2e4] sm:$0xf]
    %v215 = vld [vmem:[%s1 + $0x2e8] sm:$0xf]
    %v216 = vld [vmem:[%s1 + $0x2ec] sm:$0xf]
    %v217 = vld [vmem:[%s1 + $0x2f0] sm:$0xf]
    %v218 = vld [vmem:[%s1 + $0x2f4] sm:$0xf]
    %v219 = vld [vmem:[%s1 + $0x2f8] sm:$0xf]
    %v220 = vld [vmem:[%s1 + $0x2fc] sm:$0xf]
    %v221 = vld [vmem:[%s1 + $0x300] sm:$0xf]
    %v222 = vld [vmem:[%s1 + $0x304] sm:$0xf]
    %v223 = vld [vmem:[%s1 + $0x308] sm:$0xf]
    %v224 = vld [vmem:[%s1 + $0x30c] sm:$0xf]
    %v225 = vld [vmem:[%s1 + $0x310] sm:$0xf]
    %v226 = vld [vmem:[%s1 + $0x314] sm:$0xf]
    %v227 = vld [vmem:[%s1 + $0x318] sm:$0xf]
    %v228 = vld [vmem:[%s1 + $0x31c] sm:$0xf]
    %v229 = vld [vmem:[%s1 + $0x320] sm:$0xf]
    %v230 = vld [vmem:[%s1 + $0x324] sm:$0xf]
    %v231 = vld [vmem:[%s1 + $0x328] sm:$0xf]
    %v232 = vld [vmem:[%s1 + $0x32c] sm:$0xf]
    %v233 = vld [vmem:[%s1 + $0x330] sm:$0xf]
    %v234 = vld [vmem:[%s1 + $0x334] sm:$0xf]
    %v235 = vld [vmem:[%s1 + $0x338] sm:$0xf]
    %v236 = vld [vmem:[%s1 + $0x33c] sm:$0xf]
    %v237 = vld [vmem:[%s1 + $0x340] sm:$0xf]
    %v238 = vld [vmem:[%s1 + $0x344] sm:$0xf]
    %v239 = vld [vmem:[%s1 + $0x348] sm:$0xf]
    %v240 = vld [vmem:[%s1 + $0x34c] sm:$0xf]
    %v241 = vld [vmem:[%s1 + $0x350] sm:$0xf]
    %v242 = vld [vmem:[%s1 + $0x354] sm:$0xf]
    %v243 = vld [vmem:[%s1 + $0x358] sm:$0xf]
    %v244 = vld [vmem:[%s1 + $0x35c] sm:$0xf]
    %v245 = vld [vmem:[%s1 + $0x360] sm:$0xf]
    %v246 = vld [vmem:[%s1 + $0x364] sm:$0xf]
    %v247 = vld [vmem:[%s1 + $0x368] sm:$0xf]
    %v248 = vld [vmem:[%s1 + $0x36c] sm:$0xf]
    %v249 = vld [vmem:[%s1 + $0x370] sm:$0xf]
    %v250 = vld [vmem:[%s1 + $0x374] sm:$0xf]
    %v251 = vld [vmem:[%s1 + $0x378] sm:$0xf]
    %v252 = vld [vmem:[%s1 + $0x37c] sm:$0xf]
    %v253 = vld [vmem:[%s1 + $0x380] sm:$0xf]
    %v254 = vld [vmem:[%s1 + $0x384] sm:$0xf]
    %v255 = vld [vmem:[%s1 + $0x388] sm:$0xf]
    %v256 = vld [vmem:[%s1 + $0x38c] sm:$0xf]
    %v257 = vld [vmem:[%s1 + $0x390] sm:$0xf]
    %v258 = vld [vmem:[%s1 + $0x394] sm:$0xf]
    %v259 = vld [vmem:[%s1 + $0x398] sm:$0xf]
    %v260 = vld [vmem:[%s1 + $0x39c] sm:$0xf]
    %v261 = vld [vmem:[%s1 + $0x3a0] sm:$0xf]
    %v262 = vld [vmem:[%s1 + $0x3a4] sm:$0xf]
    %v263 = vld [vmem:[%s1 + $0x3a8] sm:$0xf]
    %v264 = vld [vmem:[%s1 + $0x3ac] sm:$0xf]
    %v265 = vld [vmem:[%s1 + $0x3b0] sm:$0xf]
    %v266 = vld [vmem:[%s1 + $0x3b4] sm:$0xf]
    %v267 = vld [vmem:[%s1 + $0x3b8] sm:$0xf]
    %v268 = vld [vmem:[%s1 + $0x3bc] sm:$0xf]
    %v269 = vld [vmem:[%s1 + $0x3c0] sm:$0xf]
    %v270 = vld [vmem:[%s1 + $0x3c4] sm:$0xf]
    %v271 = vld [vmem:[%s1 + $0x3c8] sm:$0xf]
    %v272 = vld [vmem:[%s1 + $0x3cc] sm:$0xf]
    %v273 = vld [vmem:[%s1 + $0x3d0] sm:$0xf]
    %v274 = vld [vmem:[%s1 + $0x3d4] sm:$0xf]
    %v275 = vld [vmem:[%s1 + $0x3d8] sm:$0xf]
    %v276 = vld [vmem:[%s1 + $0x3dc] sm:$0xf]
    %v277 = vld [vmem:[%s1 + $0x3e0] sm:$0xf]
    %v278 = vld [vmem:[%s1 + $0x3e4] sm:$0xf]
    %v279 = vld [vmem:[%s1 + $0x3e8] sm:$0xf]
    %v280 = vld [vmem:[%s1 + $0x3ec] sm:$0xf]
    %v281 = vld [vmem:[%s1 + $0x3f0] sm:$0xf]
    %v282 = vld [vmem:[%s1 + $0x3f4] sm:$0xf]
    %v283 = vld [vmem:[%s1 + $0x3f8] sm:$0xf]
    %v284 = vld [vmem:[%s1 + $0x3fc] sm:$0xf]
    %v285 = vld [vmem:[%s1 + $0x400] sm:$0xf]
    %v286 = vld [vmem:[%s1 + $0x404] sm:$0xf]
    %v287 = vld [vmem:[%s1 + $0x408] sm:$0xf]
    %v288 = vld [vmem:[%s1 + $0x40c] sm:$0xf]
    %v289 = vld [vmem:[%s1 + $0x410] sm:$0xf]
    %v290 = vld [vmem:[%s1 + $0x414] sm:$0xf]
    %v291 = vld [vmem:[%s1 + $0x418] sm:$0xf]
    %v292 = vld [vmem:[%s1 + $0x41c] sm:$0xf]
    %v293 = vld [vmem:[%s1 + $0x420] sm:$0xf]
    %v294 = vld [vmem:[%s1 + $0x424] sm:$0xf]
    %v295 = vld [vmem:[%s1 + $0x428] sm:$0xf]
    %v296 = vld [vmem:[%s1 + $0x42c] sm:$0xf]
    %v297 = vld [vmem:[%s1 + $0x430] sm:$0xf]
    %v298 = vld [vmem:[%s1 + $0x434] sm:$0xf]
    %v299 = vld [vmem:[%s1 + $0x438] sm:$0xf]
    %v300 = vld [vmem:[%s1 + $0x43c] sm:$0xf]
    %v301 = vld [vmem:[%s1 + $0x440] sm:$0xf]
    %v302 = vld [vmem:[%s1 + $0x444] sm:$0xf]
    %v303 = vld [vmem:[%s1 + $0x448] sm:$0xf]
    %v304 = vld [vmem:[%s1 + $0x44c] sm:$0xf]
    %v305 = vld [vmem:[%s1 + $0x450] sm:$0xf]
    %v306 = vld [vmem:[%s1 + $0x454] sm:$0xf]
    %v307 = vld [vmem:[%s1 + $0x458] sm:$0xf]
    %v308 = vld [vmem:[%s1 + $0x45c] sm:$0xf]
    %v309 = vld [vmem:[%s1 + $0x460] sm:$0xf]
    %v310 = vld [vmem:[%s1 + $0x464] sm:$0xf]
    %v311 = vld [vmem:[%s1 + $0x468] sm:$0xf]
    %v312 = vld [vmem:[%s1 + $0x46c] sm:$0xf]
    %v313 = vld [vmem:[%s1 + $0x470] sm:$0xf]
    %v314 = vld [vmem:[%s1 + $0x474] sm:$0xf]
    %v315 = vld [vmem:[%s1 + $0x478] sm:$0xf]
    %v316 = vld [vmem:[%s1 + $0x47c] sm:$0xf]
    %v317 = vld [vmem:[%s1 + $0x480] sm:$0xf]
    %v318 = vld [vmem:[%s1 + $0x484] sm:$0xf]
    %v319 = vld [vmem:[%s1 + $0x488] sm:$0xf]
    %v320 = vld [vmem:[%s1 + $0x48c] sm:$0xf]
    %v321 = vld [vmem:[%s1 + $0x490] sm:$0xf]
    %v322 = vld [vmem:[%s1 + $0x494] sm:$0xf]
    %v323 = vld [vmem:[%s1 + $0x498] sm:$0xf]
    %v324 = vld [vmem:[%s1 + $0x49c] sm:$0xf]
    %v325 = vld [vmem:[%s1 + $0x4a0] sm:$0xf]
    %v326 = vld [vmem:[%s1 + $0x4a4] sm:$0xf]
    %v327 = vld [vmem:[%s1 + $0x4a8] sm:$0xf]
    %v328 = vld [vmem:[%s1 + $0x4ac] sm:$0xf]
    %v329 = vld [vmem:[%s1 + $0x4b0] sm:$0xf]
    %v330 = vld [vmem:[%s1 + $0x4b4] sm:$0xf]
    %v331 = vld [vmem:[%s1 + $0x4b8] sm:$0xf]
    %v332 = vld [vmem:[%s1 + $0x4bc] sm:$0xf]
    %v333 = vld [vmem:[%s1 + $0x4c0] sm:$0xf]
    %v334 = vld [vmem:[%s1 + $0x4c4] sm:$0xf]
    %v335 = vld [vmem:[%s1 + $0x4c8] sm:$0xf]
    %v336 = vld [vmem:[%s1 + $0x4cc] sm:$0xf]
    %v337 = vld [vmem:[%s1 + $0x4d0] sm:$0xf]
    %v338 = vld [vmem:[%s1 + $0x4d4] sm:$0xf]
    %v339 = vld [vmem:[%s1 + $0x4d8] sm:$0xf]
    %v340 = vld [vmem:[%s1 + $0x4dc] sm:$0xf]
    %v341 = vld [vmem:[%s1 + $0x4e0] sm:$0xf]
    %v342 = vld [vmem:[%s1 + $0x4e4] sm:$0xf]
    %v343 = vld [vmem:[%s1 + $0x4e8] sm:$0xf]
    %v344 = vld [vmem:[%s1 + $0x4ec] sm:$0xf]
    %v345 = vld [vmem:[%s1 + $0x4f0] sm:$0xf]
    %v346 = vld [vmem:[%s1 + $0x4f4] sm:$0xf]
    %v347 = vld [vmem:[%s1 + $0x4f8] sm:$0xf]
    %v348 = vld [vmem:[%s1 + $0x4fc] sm:$0xf]
    %v349 = vld [vmem:[%s1 + $0x500] sm:$0xf]
    %v350 = vld [vmem:[%s1 + $0x504] sm:$0xf]
    %v351 = vld [vmem:[%s1 + $0x508] sm:$0xf]
    %v352 = vld [vmem:[%s1 + $0x50c] sm:$0xf]
    %v353 = vld [vmem:[%s1 + $0x510] sm:$0xf]
    %v354 = vld [vmem:[%s1 + $0x514] sm:$0xf]
    %v355 = vld [vmem:[%s1 + $0x518] sm:$0xf]
    %v356 = vld [vmem:[%s1 + $0x51c] sm:$0xf]
    %v357 = vld [vmem:[%s1 + $0x520] sm:$0xf]
    %v358 = vld [vmem:[%s1 + $0x524] sm:$0xf]
    %v359 = vld [vmem:[%s1 + $0x528] sm:$0xf]
    %v360 = vld [vmem:[%s1 + $0x52c] sm:$0xf]
    %v361 = vld [vmem:[%s1 + $0x530] sm:$0xf]
    %v362 = vld [vmem:[%s1 + $0x534] sm:$0xf]
    %v363 = vld [vmem:[%s1 + $0x538] sm:$0xf]
    %v364 = vld [vmem:[%s1 + $0x53c] sm:$0xf]
    %v365 = vld [vmem:[%s1 + $0x540] sm:$0xf]
    %v366 = vld [vmem:[%s1 + $0x544] sm:$0xf]
    %v367 = vld [vmem:[%s1 + $0x548] sm:$0xf]
    %v368 = vld [vmem:[%s1 + $0x54c] sm:$0xf]
    %v369 = vld [vmem:[%s1 + $0x550] sm:$0xf]
    %v370 = vld [vmem:[%s1 + $0x554] sm:$0xf]
    %v371 = vld [vmem:[%s1 + $0x558] sm:$0xf]
    %v372 = vld [vmem:[%s1 + $0x55c] sm:$0xf]
    %v373 = vld [vmem:[%s1 + $0x560] sm:$0xf]
    %v374 = vld [vmem:[%s1 + $0x564] sm:$0xf]
    %v375 = vld [vmem:[%s1 + $0x568] sm:$0xf]
    %v376 = vld [vmem:[%s1 + $0x56c] sm:$0xf]
    %v377 = vld [vmem:[%s1 + $0x570] sm:$0xf]
    %v378 = vld [vmem:[%s1 + $0x574] sm:$0xf]
    %v379 = vld [vmem:[%s1 + $0x578] sm:$0xf]
    %v380 = vld [vmem:[%s1 + $0x57c] sm:$0xf]
    %v381 = vld [vmem:[%s1 + $0x580] sm:$0xf]
    %v382 = vld [vmem:[%s1 + $0x584] sm:$0xf]
    %v383 = vld [vmem:[%s1 + $0x588] sm:$0xf]
    %v384 = vld [vmem:[%s1 + $0x58c] sm:$0xf]
    %v385 = vld [vmem:[%s1 + $0x590] sm:$0xf]
    %v386 = vld [vmem:[%s1 + $0x594] sm:$0xf]
    %v387 = vld [vmem:[%s1 + $0x598] sm:$0xf]
    %v388 = vld [vmem:[%s1 + $0x59c] sm:$0xf]
    %v389 = vld [vmem:[%s1 + $0x5a0] sm:$0xf]
    %v390 = vld [vmem:[%s1 + $0x5a4] sm:$0xf]
    %v391 = vld [vmem:[%s1 + $0x5a8] sm:$0xf]
    %v392 = vld [vmem:[%s1 + $0x5ac] sm:$0xf]
    %v393 = vld [vmem:[%s1 + $0x5b0] sm:$0xf]
    %v394 = vld [vmem:[%s1 + $0x5b4] sm:$0xf]
    %v395 = vld [vmem:[%s1 + $0x5b8] sm:$0xf]
    %v396 = vld [vmem:[%s1 + $0x5bc] sm:$0xf]
    %v397 = vld [vmem:[%s1 + $0x5c0] sm:$0xf]
    %v398 = vld [vmem:[%s1 + $0x5c4] sm:$0xf]
    %v399 = vld [vmem:[%s1 + $0x5c8] sm:$0xf]
    %v400 = vld [vmem:[%s1 + $0x5cc] sm:$0xf]
    %v401 = vld [vmem:[%s1 + $0x5d0] sm:$0xf]
    %v402 = vld [vmem:[%s1 + $0x5d4] sm:$0xf]
    %v403 = vld [vmem:[%s1 + $0x5d8] sm:$0xf]
    %v404 = vld [vmem:[%s1 + $0x5dc] sm:$0xf]
    %v405 = vld [vmem:[%s1 + $0x5e0] sm:$0xf]
    %v406 = vld [vmem:[%s1 + $0x5e4] sm:$0xf]
    %v407 = vld [vmem:[%s1 + $0x5e8] sm:$0xf]
    %v408 = vld [vmem:[%s1 + $0x5ec] sm:$0xf]
    %v409 = vld [vmem:[%s1 + $0x5f0] sm:$0xf]
    %v410 = vld [vmem:[%s1 + $0x5f4] sm:$0xf]
    %v411 = vld [vmem:[%s1 + $0x5f8] sm:$0xf]
    %v412 = vld [vmem:[%s1 + $0x5fc] sm:$0xf]
    %v413 = vld [vmem:[%s1 + $0x600] sm:$0xf]
    %v414 = vld [vmem:[%s1 + $0x604] sm:$0xf]
    %v415 = vld [vmem:[%s1 + $0x608] sm:$0xf]
    %v416 = vld [vmem:[%s1 + $0x60c] sm:$0xf]
    %v417 = vld [vmem:[%s1 + $0x610] sm:$0xf]
    %v418 = vld [vmem:[%s1 + $0x614] sm:$0xf]
    %v419 = vld [vmem:[%s1 + $0x618] sm:$0xf]
    %v420 = vld [vmem:[%s1 + $0x61c] sm:$0xf]
    %v421 = vld [vmem:[%s1 + $0x620] sm:$0xf]
    %v422 = vld [vmem:[%s1 + $0x624] sm:$0xf]
    %v423 = vld [vmem:[%s1 + $0x628] sm:$0xf]
    %v424 = vld [vmem:[%s1 + $0x62c] sm:$0xf]
    %v425 = vld [vmem:[%s1 + $0x630] sm:$0xf]
    %v426 = vld [vmem:[%s1 + $0x634] sm:$0xf]
    %v427 = vld [vmem:[%s1 + $0x638] sm:$0xf]
    %v428 = vld [vmem:[%s1 + $0x63c] sm:$0xf]
    %v429 = vld [vmem:[%s1 + $0x640] sm:$0xf]
    %v430 = vld [vmem:[%s1 + $0x644] sm:$0xf]
    %v431 = vld [vmem:[%s1 + $0x648] sm:$0xf]
    %v432 = vld [vmem:[%s1 + $0x64c] sm:$0xf]
    %v433 = vld [vmem:[%s1 + $0x650] sm:$0xf]
    %v434 = vld [vmem:[%s1 + $0x654] sm:$0xf]
    %v435 = vld [vmem:[%s1 + $0x658] sm:$0xf]
    %v436 = vld [vmem:[%s1 + $0x65c] sm:$0xf]
    %v437 = vld [vmem:[%s1 + $0x660] sm:$0xf]
    %v438 = vld [vmem:[%s1 + $0x664] sm:$0xf]
    %v439 = vld [vmem:[%s1 + $0x668] sm:$0xf]
    %v440 = vld [vmem:[%s1 + $0x66c] sm:$0xf]
    %v441 = vld [vmem:[%s1 + $0x670] sm:$0xf]
    %v442 = vld [vmem:[%s1 + $0x674] sm:$0xf]
    %v443 = vld [vmem:[%s1 + $0x678] sm:$0xf]
    %v444 = vld [vmem:[%s1 + $0x67c] sm:$0xf]
    %v445 = vld [vmem:[%s1 + $0x680] sm:$0xf]
    %v446 = vld [vmem:[%s1 + $0x684] sm:$0xf]
    %v447 = vld [vmem:[%s1 + $0x688] sm:$0xf]
    %v448 = vld [vmem:[%s1 + $0x68c] sm:$0xf]
    %v449 = vld [vmem:[%s1 + $0x690] sm:$0xf]
    %v450 = vld [vmem:[%s1 + $0x694] sm:$0xf]
    %v451 = vld [vmem:[%s1 + $0x698] sm:$0xf]
    %v452 = vld [vmem:[%s1 + $0x69c] sm:$0xf]
    %v453 = vld [vmem:[%s1 + $0x6a0] sm:$0xf]
    %v454 = vld [vmem:[%s1 + $0x6a4] sm:$0xf]
    %v455 = vld [vmem:[%s1 + $0x6a8] sm:$0xf]
    %v456 = vld [vmem:[%s1 + $0x6ac] sm:$0xf]
    %v457 = vld [vmem:[%s1 + $0x6b0] sm:$0xf]
    %v458 = vld [vmem:[%s1 + $0x6b4] sm:$0xf]
    %v459 = vld [vmem:[%s1 + $0x6b8] sm:$0xf]
    %v460 = vld [vmem:[%s1 + $0x6bc] sm:$0xf]
    %v461 = vld [vmem:[%s1 + $0x6c0] sm:$0xf]
    %v462 = vld [vmem:[%s1 + $0x6c4] sm:$0xf]
    %v463 = vld [vmem:[%s1 + $0x6c8] sm:$0xf]
    %v464 = vld [vmem:[%s1 + $0x6cc] sm:$0xf]
    %v465 = vld [vmem:[%s1 + $0x6d0] sm:$0xf]
    %v466 = vld [vmem:[%s1 + $0x6d4] sm:$0xf]
    %v467 = vld [vmem:[%s1 + $0x6d8] sm:$0xf]
    %v468 = vld [vmem:[%s1 + $0x6dc] sm:$0xf]
    %v469 = vld [vmem:[%s1 + $0x6e0] sm:$0xf]
    %v470 = vld [vmem:[%s1 + $0x6e4] sm:$0xf]
    %v471 = vld [vmem:[%s1 + $0x6e8] sm:$0xf]
    %v472 = vld [vmem:[%s1 + $0x6ec] sm:$0xf]
    %v473 = vld [vmem:[%s1 + $0x6f0] sm:$0xf]
    %v474 = vld [vmem:[%s1 + $0x6f4] sm:$0xf]
    %v475 = vld [vmem:[%s1 + $0x6f8] sm:$0xf]
    %v476 = vld [vmem:[%s1 + $0x6fc] sm:$0xf]
    %v477 = vld [vmem:[%s1 + $0x700] sm:$0xf]
    %v478 = vld [vmem:[%s1 + $0x704] sm:$0xf]
    %v479 = vld [vmem:[%s1 + $0x708] sm:$0xf]
    %v480 = vld [vmem:[%s1 + $0x70c] sm:$0xf]
    %v481 = vld [vmem:[%s1 + $0x710] sm:$0xf]
    %v482 = vld [vmem:[%s1 + $0x714] sm:$0xf]
    %v483 = vld [vmem:[%s1 + $0x718] sm:$0xf]
    %v484 = vld [vmem:[%s1 + $0x71c] sm:$0xf]
    %v485 = vld [vmem:[%s1 + $0x720] sm:$0xf]
    %v486 = vld [vmem:[%s1 + $0x724] sm:$0xf]
    %v487 = vld [vmem:[%s1 + $0x728] sm:$0xf]
    %v488 = vld [vmem:[%s1 + $0x72c] sm:$0xf]
    %v489 = vld [vmem:[%s1 + $0x730] sm:$0xf]
    %v490 = vld [vmem:[%s1 + $0x734] sm:$0xf]
    %v491 = vld [vmem:[%s1 + $0x738] sm:$0xf]
    %v492 = vld [vmem:[%s1 + $0x73c] sm:$0xf]
    %v493 = vld [vmem:[%s1 + $0x740] sm:$0xf]
    %v494 = vld [vmem:[%s1 + $0x744] sm:$0xf]
    %v495 = vld [vmem:[%s1 + $0x748] sm:$0xf]
    %v496 = vld [vmem:[%s1 + $0x74c] sm:$0xf]
    %v497 = vld [vmem:[%s1 + $0x750] sm:$0xf]
    %v498 = vld [vmem:[%s1 + $0x754] sm:$0xf]
    %v499 = vld [vmem:[%s1 + $0x758] sm:$0xf]
    %v500 = vld [vmem:[%s1 + $0x75c] sm:$0xf]
    %v501 = vld [vmem:[%s1 + $0x760] sm:$0xf]
    %v502 = vld [vmem:[%s1 + $0x764] sm:$0xf]
    %v503 = vld [vmem:[%s1 + $0x768] sm:$0xf]
    %v504 = vld [vmem:[%s1 + $0x76c] sm:$0xf]
    %v505 = vld [vmem:[%s1 + $0x770] sm:$0xf]
    %v506 = vld [vmem:[%s1 + $0x774] sm:$0xf]
    %v507 = vld [vmem:[%s1 + $0x778] sm:$0xf]
    %v508 = vld [vmem:[%s1 + $0x77c] sm:$0xf]
    %v509 = vld [vmem:[%s1 + $0x780] sm:$0xf]
    %v510 = vld [vmem:[%s1 + $0x784] sm:$0xf]
    %v511 = vld [vmem:[%s1 + $0x788] sm:$0xf]
    %v512 = vld [vmem:[%s1 + $0x78c] sm:$0xf]
    %v513 = vld [vmem:[%s1 + $0x790] sm:$0xf]
    %v514 = vld [vmem:[%s1 + $0x794] sm:$0xf]
    %v515 = vld [vmem:[%s1 + $0x798] sm:$0xf]
    %v516 = vld [vmem:[%s1 + $0x79c] sm:$0xf]
    %v517 = vld [vmem:[%s1 + $0x7a0] sm:$0xf]
    %v518 = vld [vmem:[%s1 + $0x7a4] sm:$0xf]
    %v519 = vld [vmem:[%s1 + $0x7a8] sm:$0xf]
    %v520 = vld [vmem:[%s1 + $0x7ac] sm:$0xf]
    %v521 = vld [vmem:[%s1 + $0x7b0] sm:$0xf]
    %v522 = vld [vmem:[%s1 + $0x7b4] sm:$0xf]
    %v523 = vld [vmem:[%s1 + $0x7b8] sm:$0xf]
    %v524 = vld [vmem:[%s1 + $0x7bc] sm:$0xf]
    %v525 = vld [vmem:[%s1 + $0x7c0] sm:$0xf]
    %v526 = vld [vmem:[%s1 + $0x7c4] sm:$0xf]
    %v527 = vld [vmem:[%s1 + $0x7c8] sm:$0xf]
    %v528 = vld [vmem:[%s1 + $0x7cc] sm:$0xf]
    %v529 = vld [vmem:[%s1 + $0x7d0] sm:$0xf]
    %v530 = vld [vmem:[%s1 + $0x7d4] sm:$0xf]
    %v531 = vld [vmem:[%s1 + $0x7d8] sm:$0xf]
    %v532 = vld [vmem:[%s1 + $0x7dc] sm:$0xf]
    %v533 = vld [vmem:[%s1 + $0x7e0] sm:$0xf]
    %v534 = vld [vmem:[%s1 + $0x7e4] sm:$0xf]
    %v535 = vld [vmem:[%s1 + $0x7e8] sm:$0xf]
    %v536 = vld [vmem:[%s1 + $0x7ec] sm:$0xf]
    %v537 = vld [vmem:[%s1 + $0x7f0] sm:$0xf]
    %v538 = vld [vmem:[%s1 + $0x7f4] sm:$0xf]
    %v539 = vld [vmem:[%s1 + $0x7f8] sm:$0xf]
    %v540 = vld [vmem:[%s1 + $0x7fc] sm:$0xf]
    %v541 = vld [vmem:[%s1 + $0x800] sm:$0xf]
    %v542 = vld [vmem:[%s1 + $0x804] sm:$0xf]
    %v543 = vld [vmem:[%s1 + $0x808] sm:$0xf]
    %v544 = vld [vmem:[%s1 + $0x80c] sm:$0xf]
    %v545 = vld [vmem:[%s1 + $0x810] sm:$0xf]
    %v546 = vld [vmem:[%s1 + $0x814] sm:$0xf]
    %v547 = vld [vmem:[%s1 + $0x818] sm:$0xf]
    %v548 = vld [vmem:[%s1 + $0x81c] sm:$0xf]
    %v549 = vld [vmem:[%s1 + $0x820] sm:$0xf]
    %v550 = vld [vmem:[%s1 + $0x824] sm:$0xf]
    %v551 = vld [vmem:[%s1 + $0x828] sm:$0xf]
    %v552 = vld [vmem:[%s1 + $0x82c] sm:$0xf]
    %v553 = vld [vmem:[%s1 + $0x830] sm:$0xf]
    %v554 = vld [vmem:[%s1 + $0x834] sm:$0xf]
    %v555 = vld [vmem:[%s1 + $0x838] sm:$0xf]
    %v556 = vld [vmem:[%s1 + $0x83c] sm:$0xf]
    %v557 = vld [vmem:[%s1 + $0x840] sm:$0xf]
    %v558 = vld [vmem:[%s1 + $0x844] sm:$0xf]
    %v559 = vld [vmem:[%s1 + $0x848] sm:$0xf]
    %v560 = vld [vmem:[%s1 + $0x84c] sm:$0xf]
    %v561 = vld [vmem:[%s1 + $0x850] sm:$0xf]
    %v562 = vld [vmem:[%s1 + $0x854] sm:$0xf]
    %v563 = vld [vmem:[%s1 + $0x858] sm:$0xf]
    %v564 = vld [vmem:[%s1 + $0x85c] sm:$0xf]
    %v565 = vld [vmem:[%s1 + $0x860] sm:$0xf]
    %v566 = vld [vmem:[%s1 + $0x864] sm:$0xf]
    %v567 = vld [vmem:[%s1 + $0x868] sm:$0xf]
    %v568 = vld [vmem:[%s1 + $0x86c] sm:$0xf]
    %v569 = vld [vmem:[%s1 + $0x870] sm:$0xf]
    %v570 = vld [vmem:[%s1 + $0x874] sm:$0xf]
    %v571 = vld [vmem:[%s1 + $0x878] sm:$0xf]
    %v572 = vld [vmem:[%s1 + $0x87c] sm:$0xf]
    %v573 = vld [vmem:[%s1 + $0x880] sm:$0xf]
    %v574 = vld [vmem:[%s1 + $0x884] sm:$0xf]
    %v575 = vld [vmem:[%s1 + $0x888] sm:$0xf]
    %v576 = vld [vmem:[%s1 + $0x88c] sm:$0xf]
    %v577 = vld [vmem:[%s1 + $0x890] sm:$0xf]
    %v578 = vld [vmem:[%s1 + $0x894] sm:$0xf]
    %v579 = vld [vmem:[%s1 + $0x898] sm:$0xf]
    %v580 = vld [vmem:[%s1 + $0x89c] sm:$0xf]
    %v581 = vld [vmem:[%s1 + $0x8a0] sm:$0xf]
    %v582 = vld [vmem:[%s1 + $0x8a4] sm:$0xf]
    %v583 = vld [vmem:[%s1 + $0x8a8] sm:$0xf]
    %v584 = vld [vmem:[%s1 + $0x8ac] sm:$0xf]
    %v585 = vld [vmem:[%s1 + $0x8b0] sm:$0xf]
    %v586 = vld [vmem:[%s1 + $0x8b4] sm:$0xf]
    %v587 = vld [vmem:[%s1 + $0x8b8] sm:$0xf]
    %v588 = vld [vmem:[%s1 + $0x8bc] sm:$0xf]
    %v589 = vld [vmem:[%s1 + $0x8c0] sm:$0xf]
    %v590 = vld [vmem:[%s1 + $0x8c4] sm:$0xf]
    %v591 = vld [vmem:[%s1 + $0x8c8] sm:$0xf]
    %v592 = vld [vmem:[%s1 + $0x8cc] sm:$0xf]
    %v593 = vld [vmem:[%s1 + $0x8d0] sm:$0xf]
    %v594 = vld [vmem:[%s1 + $0x8d4] sm:$0xf]
    %v595 = vld [vmem:[%s1 + $0x8d8] sm:$0xf]
    %v596 = vld [vmem:[%s1 + $0x8dc] sm:$0xf]
    %v597 = vld [vmem:[%s1 + $0x8e0] sm:$0xf]
    %v598 = vld [vmem:[%s1 + $0x8e4] sm:$0xf]
    %v599 = vld [vmem:[%s1 + $0x8e8] sm:$0xf]
    %v600 = vld [vmem:[%s1 + $0x8ec] sm:$0xf]
    %v601 = vld [vmem:[%s1 + $0x8f0] sm:$0xf]
    %v602 = vld [vmem:[%s1 + $0x8f4] sm:$0xf]
    %v603 = vld [vmem:[%s1 + $0x8f8] sm:$0xf]
    %v604 = vld [vmem:[%s1 + $0x8fc] sm:$0xf]
    %v605 = vld [vmem:[%s1 + $0x900] sm:$0xf]
    %v606 = vld [vmem:[%s1 + $0x904] sm:$0xf]
    %v607 = vld [vmem:[%s1 + $0x908] sm:$0xf]
    %v608 = vld [vmem:[%s1 + $0x90c] sm:$0xf]
    %v609 = vld [vmem:[%s1 + $0x910] sm:$0xf]
    %v610 = vld [vmem:[%s1 + $0x914] sm:$0xf]
    %v611 = vld [vmem:[%s1 + $0x918] sm:$0xf]
    %v612 = vld [vmem:[%s1 + $0x91c] sm:$0xf]
    %v613 = vld [vmem:[%s1 + $0x920] sm:$0xf]
    %v614 = vld [vmem:[%s1 + $0x924] sm:$0xf]
    %v615 = vld [vmem:[%s1 + $0x928] sm:$0xf]
    %v616 = vld [vmem:[%s1 + $0x92c] sm:$0xf]
    %v617 = vld [vmem:[%s1 + $0x930] sm:$0xf]
    %v618 = vld [vmem:[%s1 + $0x934] sm:$0xf]
    %v619 = vld [vmem:[%s1 + $0x938] sm:$0xf]
    %v620 = vld [vmem:[%s1 + $0x93c] sm:$0xf]
    %v621 = vld [vmem:[%s1 + $0x940] sm:$0xf]
    %v622 = vld [vmem:[%s1 + $0x944] sm:$0xf]
    %v623 = vld [vmem:[%s1 + $0x948] sm:$0xf]
    %v624 = vld [vmem:[%s1 + $0x94c] sm:$0xf]
    %v625 = vld [vmem:[%s1 + $0x950] sm:$0xf]
    %v626 = vld [vmem:[%s1 + $0x954] sm:$0xf]
    %v627 = vld [vmem:[%s1 + $0x958] sm:$0xf]
    %v628 = vld [vmem:[%s1 + $0x95c] sm:$0xf]
    %v629 = vld [vmem:[%s1 + $0x960] sm:$0xf]
    %v630 = vld [vmem:[%s1 + $0x964] sm:$0xf]
    %v631 = vld [vmem:[%s1 + $0x968] sm:$0xf]
    %v632 = vld [vmem:[%s1 + $0x96c] sm:$0xf]
    %v633 = vld [vmem:[%s1 + $0x970] sm:$0xf]
    %v634 = vld [vmem:[%s1 + $0x974] sm:$0xf]
    %v635 = vld [vmem:[%s1 + $0x978] sm:$0xf]
    %v636 = vld [vmem:[%s1 + $0x97c] sm:$0xf]
    %v637 = vld [vmem:[%s1 + $0x980] sm:$0xf]
    %v638 = vld [vmem:[%s1 + $0x984] sm:$0xf]
    %v639 = vld [vmem:[%s1 + $0x988] sm:$0xf]
    %v640 = vld [vmem:[%s1 + $0x98c] sm:$0xf]
    %v641 = vld [vmem:[%s1 + $0x990] sm:$0xf]
    %v642 = vld [vmem:[%s1 + $0x994] sm:$0xf]
    %v643 = vld [vmem:[%s1 + $0x998] sm:$0xf]
    %v644 = vld [vmem:[%s1 + $0x99c] sm:$0xf]
    %v645 = vld [vmem:[%s1 + $0x9a0] sm:$0xf]
    %v646 = vld [vmem:[%s1 + $0x9a4] sm:$0xf]
    %v647 = vld [vmem:[%s1 + $0x9a8] sm:$0xf]
    %v648 = vld [vmem:[%s1 + $0x9ac] sm:$0xf]
    %v649 = vld [vmem:[%s1 + $0x9b0] sm:$0xf]
    %v650 = vld [vmem:[%s1 + $0x9b4] sm:$0xf]
    %v651 = vld [vmem:[%s1 + $0x9b8] sm:$0xf]
    %v652 = vld [vmem:[%s1 + $0x9bc] sm:$0xf]
    %v653 = vld [vmem:[%s1 + $0x9c0] sm:$0xf]
    %v654 = vld [vmem:[%s1 + $0x9c4] sm:$0xf]
    %v655 = vld [vmem:[%s1 + $0x9c8] sm:$0xf]
    %v656 = vld [vmem:[%s1 + $0x9cc] sm:$0xf]
    %v657 = vld [vmem:[%s1 + $0x9d0] sm:$0xf]
    %v658 = vld [vmem:[%s1 + $0x9d4] sm:$0xf]
    %v659 = vld [vmem:[%s1 + $0x9d8] sm:$0xf]
    %v660 = vld [vmem:[%s1 + $0x9dc] sm:$0xf]
    %v661 = vld [vmem:[%s1 + $0x9e0] sm:$0xf]
    %v662 = vld [vmem:[%s1 + $0x9e4] sm:$0xf]
    %v663 = vld [vmem:[%s1 + $0x9e8] sm:$0xf]
    %v664 = vld [vmem:[%s1 + $0x9ec] sm:$0xf]
    %v665 = vld [vmem:[%s1 + $0x9f0] sm:$0xf]
    %v666 = vld [vmem:[%s1 + $0x9f4] sm:$0xf]
    %v667 = vld [vmem:[%s1 + $0x9f8] sm:$0xf]
    %v668 = vld [vmem:[%s1 + $0x9fc] sm:$0xf]
    %v669 = vld [vmem:[%s1 + $0xa00] sm:$0xf]
    %v670 = vld [vmem:[%s1 + $0xa04] sm:$0xf]
    %v671 = vld [vmem:[%s1 + $0xa08] sm:$0xf]
    %v672 = vld [vmem:[%s1 + $0xa0c] sm:$0xf]
    %v673 = vld [vmem:[%s1 + $0xa10] sm:$0xf]
    %v674 = vld [vmem:[%s1 + $0xa14] sm:$0xf]
    %v675 = vld [vmem:[%s1 + $0xa18] sm:$0xf]
    %v676 = vld [vmem:[%s1 + $0xa1c] sm:$0xf]
    %v677 = vld [vmem:[%s1 + $0xa20] sm:$0xf]
    %v678 = vld [vmem:[%s1 + $0xa24] sm:$0xf]
    %v679 = vld [vmem:[%s1 + $0xa28] sm:$0xf]
    %v680 = vld [vmem:[%s1 + $0xa2c] sm:$0xf]
    %v681 = vld [vmem:[%s1 + $0xa30] sm:$0xf]
    %v682 = vld [vmem:[%s1 + $0xa34] sm:$0xf]
    %v683 = vld [vmem:[%s1 + $0xa38] sm:$0xf]
    %v684 = vld [vmem:[%s1 + $0xa3c] sm:$0xf]
    %v685 = vld [vmem:[%s1 + $0xa40] sm:$0xf]
    %v686 = vld [vmem:[%s1 + $0xa44] sm:$0xf]
    %v687 = vld [vmem:[%s1 + $0xa48] sm:$0xf]
    %v688 = vld [vmem:[%s1 + $0xa4c] sm:$0xf]
    %v689 = vld [vmem:[%s1 + $0xa50] sm:$0xf]
    %v690 = vld [vmem:[%s1 + $0xa54] sm:$0xf]
    %v691 = vld [vmem:[%s1 + $0xa58] sm:$0xf]
    %v692 = vld [vmem:[%s1 + $0xa5c] sm:$0xf]
    %v693 = vld [vmem:[%s1 + $0xa60] sm:$0xf]
    %v694 = vld [vmem:[%s1 + $0xa64] sm:$0xf]
    %v695 = vld [vmem:[%s1 + $0xa68] sm:$0xf]
    %v696 = vld [vmem:[%s1 + $0xa6c] sm:$0xf]
    %v697 = vld [vmem:[%s1 + $0xa70] sm:$0xf]
    %v698 = vld [vmem:[%s1 + $0xa74] sm:$0xf]
    %v699 = vld [vmem:[%s1 + $0xa78] sm:$0xf]
    %v700 = vld [vmem:[%s1 + $0xa7c] sm:$0xf]
    %v701 = vld [vmem:[%s1 + $0xa80] sm:$0xf]
    %v702 = vld [vmem:[%s1 + $0xa84] sm:$0xf]
    %v703 = vld [vmem:[%s1 + $0xa88] sm:$0xf]
    %v704 = vld [vmem:[%s1 + $0xa8c] sm:$0xf]
    %v705 = vld [vmem:[%s1 + $0xa90] sm:$0xf]
    %v706 = vld [vmem:[%s1 + $0xa94] sm:$0xf]
    %v707 = vld [vmem:[%s1 + $0xa98] sm:$0xf]
    %v708 = vld [vmem:[%s1 + $0xa9c] sm:$0xf]
    %v709 = vld [vmem:[%s1 + $0xaa0] sm:$0xf]
    %v710 = vld [vmem:[%s1 + $0xaa4] sm:$0xf]
    %v711 = vld [vmem:[%s1 + $0xaa8] sm:$0xf]
    %v712 = vld [vmem:[%s1 + $0xaac] sm:$0xf]
    %v713 = vld [vmem:[%s1 + $0xab0] sm:$0xf]
    %v714 = vld [vmem:[%s1 + $0xab4] sm:$0xf]
    %v715 = vld [vmem:[%s1 + $0xab8] sm:$0xf]
    %v716 = vld [vmem:[%s1 + $0xabc] sm:$0xf]
    %v717 = vld [vmem:[%s1 + $0xac0] sm:$0xf]
    %v718 = vld [vmem:[%s1 + $0xac4] sm:$0xf]
    %v719 = vld [vmem:[%s1 + $0xac8] sm:$0xf]
    %v720 = vld [vmem:[%s1 + $0xacc] sm:$0xf]
    %v721 = vld [vmem:[%s1 + $0xad0] sm:$0xf]
    %v722 = vld [vmem:[%s1 + $0xad4] sm:$0xf]
    %v723 = vld [vmem:[%s1 + $0xad8] sm:$0xf]
    %v724 = vld [vmem:[%s1 + $0xadc] sm:$0xf]
    %v725 = vld [vmem:[%s1 + $0xae0] sm:$0xf]
    %v726 = vld [vmem:[%s1 + $0xae4] sm:$0xf]
    %v727 = vld [vmem:[%s1 + $0xae8] sm:$0xf]
    %v728 = vld [vmem:[%s1 + $0xaec] sm:$0xf]
    %v729 = vld [vmem:[%s1 + $0xaf0] sm:$0xf]
    %v730 = vld [vmem:[%s1 + $0xaf4] sm:$0xf]
    %v731 = vld [vmem:[%s1 + $0xaf8] sm:$0xf]
    %v732 = vld [vmem:[%s1 + $0xafc] sm:$0xf]
    %v733 = vld [vmem:[%s1 + $0xb00] sm:$0xf]
    %v734 = vld [vmem:[%s1 + $0xb04] sm:$0xf]
    %v735 = vld [vmem:[%s1 + $0xb08] sm:$0xf]
    %v736 = vld [vmem:[%s1 + $0xb0c] sm:$0xf]
    %v737 = vld [vmem:[%s1 + $0xb10] sm:$0xf]
    %v738 = vld [vmem:[%s1 + $0xb14] sm:$0xf]
    %v739 = vld [vmem:[%s1 + $0xb18] sm:$0xf]
    %v740 = vld [vmem:[%s1 + $0xb1c] sm:$0xf]
    %v741 = vld [vmem:[%s1 + $0xb20] sm:$0xf]
    %v742 = vld [vmem:[%s1 + $0xb24] sm:$0xf]
    %v743 = vld [vmem:[%s1 + $0xb28] sm:$0xf]
    %v744 = vld [vmem:[%s1 + $0xb2c] sm:$0xf]
    %v745 = vld [vmem:[%s1 + $0xb30] sm:$0xf]
    %v746 = vld [vmem:[%s1 + $0xb34] sm:$0xf]
    %v747 = vld [vmem:[%s1 + $0xb38] sm:$0xf]
    %v748 = vld [vmem:[%s1 + $0xb3c] sm:$0xf]
    %v749 = vld [vmem:[%s1 + $0xb40] sm:$0xf]
    %v750 = vld [vmem:[%s1 + $0xb44] sm:$0xf]
    %v751 = vld [vmem:[%s1 + $0xb48] sm:$0xf]
    %v752 = vld [vmem:[%s1 + $0xb4c] sm:$0xf]
    %v753 = vld [vmem:[%s1 + $0xb50] sm:$0xf]
    %v754 = vld [vmem:[%s1 + $0xb54] sm:$0xf]
    %v755 = vld [vmem:[%s1 + $0xb58] sm:$0xf]
    %v756 = vld [vmem:[%s1 + $0xb5c] sm:$0xf]
    %v757 = vld [vmem:[%s1 + $0xb60] sm:$0xf]
    %v758 = vld [vmem:[%s1 + $0xb64] sm:$0xf]
    %v759 = vld [vmem:[%s1 + $0xb68] sm:$0xf]
    %v760 = vld [vmem:[%s1 + $0xb6c] sm:$0xf]
    %v761 = vld [vmem:[%s1 + $0xb70] sm:$0xf]
    %v762 = vld [vmem:[%s1 + $0xb74] sm:$0xf]
    %v763 = vld [vmem:[%s1 + $0xb78] sm:$0xf]
    %v764 = vld [vmem:[%s1 + $0xb7c] sm:$0xf]
    %v765 = vld [vmem:[%s1 + $0xb80] sm:$0xf]
    %v766 = vld [vmem:[%s1 + $0xb84] sm:$0xf]
    %v767 = vld [vmem:[%s1 + $0xb88] sm:$0xf]
    %v768 = vld [vmem:[%s1 + $0xb8c] sm:$0xf]
    %v769 = vld [vmem:[%s1 + $0xb90] sm:$0xf]
    %v770 = vld [vmem:[%s1 + $0xb94] sm:$0xf]
    %v771 = vld [vmem:[%s1 + $0xb98] sm:$0xf]
    %v772 = vld [vmem:[%s1 + $0xb9c] sm:$0xf]
    %v773 = vld [vmem:[%s1 + $0xba0] sm:$0xf]
    %v774 = vld [vmem:[%s1 + $0xba4] sm:$0xf]
    %v775 = vld [vmem:[%s1 + $0xba8] sm:$0xf]
    %v776 = vld [vmem:[%s1 + $0xbac] sm:$0xf]
    %v777 = vld [vmem:[%s1 + $0xbb0] sm:$0xf]
    %v778 = vld [vmem:[%s1 + $0xbb4] sm:$0xf]
    %v779 = vld [vmem:[%s1 + $0xbb8] sm:$0xf]
    %v780 = vld [vmem:[%s1 + $0xbbc] sm:$0xf]
    %v781 = vld [vmem:[%s1 + $0xbc0] sm:$0xf]
    %v782 = vld [vmem:[%s1 + $0xbc4] sm:$0xf]
    %v783 = vld [vmem:[%s1 + $0xbc8] sm:$0xf]
    %v784 = vld [vmem:[%s1 + $0xbcc] sm:$0xf]
    %v785 = vld [vmem:[%s1 + $0xbd0] sm:$0xf]
    %v786 = vld [vmem:[%s1 + $0xbd4] sm:$0xf]
    %v787 = vld [vmem:[%s1 + $0xbd8] sm:$0xf]
    %v788 = vld [vmem:[%s1 + $0xbdc] sm:$0xf]
    %v789 = vld [vmem:[%s1 + $0xbe0] sm:$0xf]
    %v790 = vld [vmem:[%s1 + $0xbe4] sm:$0xf]
    %v791 = vld [vmem:[%s1 + $0xbe8] sm:$0xf]
    %v792 = vld [vmem:[%s1 + $0xbec] sm:$0xf]
    %v793 = vld [vmem:[%s1 + $0xbf0] sm:$0xf]
    %v794 = vld [vmem:[%s1 + $0xbf4] sm:$0xf]
    %v795 = vld [vmem:[%s1 + $0xbf8] sm:$0xf]
    %v796 = vld [vmem:[%s1 + $0xbfc] sm:$0xf]
    %v797 = vld [vmem:[%s1 + $0xc00] sm:$0xf]
    %v798 = vld [vmem:[%s1 + $0xc04] sm:$0xf]
    %v799 = vld [vmem:[%s1 + $0xc08] sm:$0xf]
    %v800 = vld [vmem:[%s1 + $0xc0c] sm:$0xf]
    %v801 = vld [vmem:[%s1 + $0xc10] sm:$0xf]
    %v802 = vld [vmem:[%s1 + $0xc14] sm:$0xf]
    %v803 = vld [vmem:[%s1 + $0xc18] sm:$0xf]
    %v804 = vld [vmem:[%s1 + $0xc1c] sm:$0xf]
    %v805 = vld [vmem:[%s1 + $0xc20] sm:$0xf]
    %v806 = vld [vmem:[%s1 + $0xc24] sm:$0xf]
    %v807 = vld [vmem:[%s1 + $0xc28] sm:$0xf]
    %v808 = vld [vmem:[%s1 + $0xc2c] sm:$0xf]
    %v809 = vld [vmem:[%s1 + $0xc30] sm:$0xf]
    %v810 = vld [vmem:[%s1 + $0xc34] sm:$0xf]
    %v811 = vld [vmem:[%s1 + $0xc38] sm:$0xf]
    %v812 = vld [vmem:[%s1 + $0xc3c] sm:$0xf]
    %v813 = vld [vmem:[%s1 + $0xc40] sm:$0xf]
    %v814 = vld [vmem:[%s1 + $0xc44] sm:$0xf]
    %v815 = vld [vmem:[%s1 + $0xc48] sm:$0xf]
    %v816 = vld [vmem:[%s1 + $0xc4c] sm:$0xf]
    %v817 = vld [vmem:[%s1 + $0xc50] sm:$0xf]
    %v818 = vld [vmem:[%s1 + $0xc54] sm:$0xf]
    %v819 = vld [vmem:[%s1 + $0xc58] sm:$0xf]
    %v820 = vld [vmem:[%s1 + $0xc5c] sm:$0xf]
    %v821 = vld [vmem:[%s1 + $0xc60] sm:$0xf]
    %v822 = vld [vmem:[%s1 + $0xc64] sm:$0xf]
    %v823 = vld [vmem:[%s1 + $0xc68] sm:$0xf]
    %v824 = vld [vmem:[%s1 + $0xc6c] sm:$0xf]
    %v825 = vld [vmem:[%s1 + $0xc70] sm:$0xf]
    %v826 = vld [vmem:[%s1 + $0xc74] sm:$0xf]
    %v827 = vld [vmem:[%s1 + $0xc78] sm:$0xf]
    %v828 = vld [vmem:[%s1 + $0xc7c] sm:$0xf]
    %v829 = vld [vmem:[%s1 + $0xc80] sm:$0xf]
    %v830 = vld [vmem:[%s1 + $0xc84] sm:$0xf]
    %v831 = vld [vmem:[%s1 + $0xc88] sm:$0xf]
    %v832 = vld [vmem:[%s1 + $0xc8c] sm:$0xf]
    %v833 = vld [vmem:[%s1 + $0xc90] sm:$0xf]
    %v834 = vld [vmem:[%s1 + $0xc94] sm:$0xf]
    %v835 = vld [vmem:[%s1 + $0xc98] sm:$0xf]
    %v836 = vld [vmem:[%s1 + $0xc9c] sm:$0xf]
    %v837 = vld [vmem:[%s1 + $0xca0] sm:$0xf]
    %v838 = vld [vmem:[%s1 + $0xca4] sm:$0xf]
    %v839 = vld [vmem:[%s1 + $0xca8] sm:$0xf]
    %v840 = vld [vmem:[%s1 + $0xcac] sm:$0xf]
    %v841 = vld [vmem:[%s1 + $0xcb0] sm:$0xf]
    %v842 = vld [vmem:[%s1 + $0xcb4] sm:$0xf]
    %v843 = vld [vmem:[%s1 + $0xcb8] sm:$0xf]
    %v844 = vld [vmem:[%s1 + $0xcbc] sm:$0xf]
    %v845 = vld [vmem:[%s1 + $0xcc0] sm:$0xf]
    %v846 = vld [vmem:[%s1 + $0xcc4] sm:$0xf]
    %v847 = vld [vmem:[%s1 + $0xcc8] sm:$0xf]
    %v848 = vld [vmem:[%s1 + $0xccc] sm:$0xf]
    %v849 = vld [vmem:[%s1 + $0xcd0] sm:$0xf]
    %v850 = vld [vmem:[%s1 + $0xcd4] sm:$0xf]
    %v851 = vld [vmem:[%s1 + $0xcd8] sm:$0xf]
    %v852 = vld [vmem:[%s1 + $0xcdc] sm:$0xf]
    %v853 = vld [vmem:[%s1 + $0xce0] sm:$0xf]
    %v854 = vld [vmem:[%s1 + $0xce4] sm:$0xf]
    %v855 = vld [vmem:[%s1 + $0xce8] sm:$0xf]
    %v856 = vld [vmem:[%s1 + $0xcec] sm:$0xf]
    %v857 = vld [vmem:[%s1 + $0xcf0] sm:$0xf]
    %v858 = vld [vmem:[%s1 + $0xcf4] sm:$0xf]
    %v859 = vld [vmem:[%s1 + $0xcf8] sm:$0xf]
    %v860 = vld [vmem:[%s1 + $0xcfc] sm:$0xf]
    %v861 = vld [vmem:[%s1 + $0xd00] sm:$0xf]
    %v862 = vld [vmem:[%s1 + $0xd04] sm:$0xf]
    %v863 = vld [vmem:[%s1 + $0xd08] sm:$0xf]
    %v864 = vld [vmem:[%s1 + $0xd0c] sm:$0xf]
    %v865 = vld [vmem:[%s1 + $0xd10] sm:$0xf]
    %v866 = vld [vmem:[%s1 + $0xd14] sm:$0xf]
    %v867 = vld [vmem:[%s1 + $0xd18] sm:$0xf]
    %v868 = vld [vmem:[%s1 + $0xd1c] sm:$0xf]
    %v869 = vld [vmem:[%s1 + $0xd20] sm:$0xf]
    %v870 = vld [vmem:[%s1 + $0xd24] sm:$0xf]
    %v871 = vld [vmem:[%s1 + $0xd28] sm:$0xf]
    %v872 = vld [vmem:[%s1 + $0xd2c] sm:$0xf]
    %v873 = vld [vmem:[%s1 + $0xd30] sm:$0xf]
    %v874 = vld [vmem:[%s1 + $0xd34] sm:$0xf]
    %v875 = vld [vmem:[%s1 + $0xd38] sm:$0xf]
    %v876 = vld [vmem:[%s1 + $0xd3c] sm:$0xf]
    %v877 = vld [vmem:[%s1 + $0xd40] sm:$0xf]
    %v878 = vld [vmem:[%s1 + $0xd44] sm:$0xf]
    %v879 = vld [vmem:[%s1 + $0xd48] sm:$0xf]
    %v880 = vld [vmem:[%s1 + $0xd4c] sm:$0xf]
    %v881 = vld [vmem:[%s1 + $0xd50] sm:$0xf]
    %v882 = vld [vmem:[%s1 + $0xd54] sm:$0xf]
    %v883 = vld [vmem:[%s1 + $0xd58] sm:$0xf]
    %v884 = vld [vmem:[%s1 + $0xd5c] sm:$0xf]
    %v885 = vld [vmem:[%s1 + $0xd60] sm:$0xf]
    %v886 = vld [vmem:[%s1 + $0xd64] sm:$0xf]
    %v887 = vld [vmem:[%s1 + $0xd68] sm:$0xf]
    %v888 = vld [vmem:[%s1 + $0xd6c] sm:$0xf]
    %v889 = vld [vmem:[%s1 + $0xd70] sm:$0xf]
    %v890 = vld [vmem:[%s1 + $0xd74] sm:$0xf]
    %v891 = vld [vmem:[%s1 + $0xd78] sm:$0xf]
    %v892 = vld [vmem:[%s1 + $0xd7c] sm:$0xf]
    %v893 = vld [vmem:[%s1 + $0xd80] sm:$0xf]
    %v894 = vld [vmem:[%s1 + $0xd84] sm:$0xf]
    %v895 = vld [vmem:[%s1 + $0xd88] sm:$0xf]
    %v896 = vld [vmem:[%s1 + $0xd8c] sm:$0xf]
    %v897 = vld [vmem:[%s1 + $0xd90] sm:$0xf]
    %v898 = vld [vmem:[%s1 + $0xd94] sm:$0xf]
    %v899 = vld [vmem:[%s1 + $0xd98] sm:$0xf]
    %v900 = vld [vmem:[%s1 + $0xd9c] sm:$0xf]
    %v901 = vld [vmem:[%s1 + $0xda0] sm:$0xf]
    %v902 = vld [vmem:[%s1 + $0xda4] sm:$0xf]
    %v903 = vld [vmem:[%s1 + $0xda8] sm:$0xf]
    %v904 = vld [vmem:[%s1 + $0xdac] sm:$0xf]
    %v905 = vld [vmem:[%s1 + $0xdb0] sm:$0xf]
    %v906 = vld [vmem:[%s1 + $0xdb4] sm:$0xf]
    %v907 = vld [vmem:[%s1 + $0xdb8] sm:$0xf]
    %v908 = vld [vmem:[%s1 + $0xdbc] sm:$0xf]
    %v909 = vld [vmem:[%s1 + $0xdc0] sm:$0xf]
    %v910 = vld [vmem:[%s1 + $0xdc4] sm:$0xf]
    %v911 = vld [vmem:[%s1 + $0xdc8] sm:$0xf]
    %v912 = vld [vmem:[%s1 + $0xdcc] sm:$0xf]
    %v913 = vld [vmem:[%s1 + $0xdd0] sm:$0xf]
    %v914 = vld [vmem:[%s1 + $0xdd4] sm:$0xf]
    %v915 = vld [vmem:[%s1 + $0xdd8] sm:$0xf]
    %v916 = vld [vmem:[%s1 + $0xddc] sm:$0xf]
    %v917 = vld [vmem:[%s1 + $0xde0] sm:$0xf]
    %v918 = vld [vmem:[%s1 + $0xde4] sm:$0xf]
    %v919 = vld [vmem:[%s1 + $0xde8] sm:$0xf]
    %v920 = vld [vmem:[%s1 + $0xdec] sm:$0xf]
    %v921 = vld [vmem:[%s1 + $0xdf0] sm:$0xf]
    %v922 = vld [vmem:[%s1 + $0xdf4] sm:$0xf]
    %v923 = vld [vmem:[%s1 + $0xdf8] sm:$0xf]
    %v924 = vld [vmem:[%s1 + $0xdfc] sm:$0xf]
    %v925 = vld [vmem:[%s1 + $0xe00] sm:$0xf]
    %v926 = vld [vmem:[%s1 + $0xe04] sm:$0xf]
    %v927 = vld [vmem:[%s1 + $0xe08] sm:$0xf]
    %v928 = vld [vmem:[%s1 + $0xe0c] sm:$0xf]
    %v929 = vld [vmem:[%s1 + $0xe10] sm:$0xf]
    %v930 = vld [vmem:[%s1 + $0xe14] sm:$0xf]
    %v931 = vld [vmem:[%s1 + $0xe18] sm:$0xf]
    %v932 = vld [vmem:[%s1 + $0xe1c] sm:$0xf]
    %v933 = vld [vmem:[%s1 + $0xe20] sm:$0xf]
    %v934 = vld [vmem:[%s1 + $0xe24] sm:$0xf]
    %v935 = vld [vmem:[%s1 + $0xe28] sm:$0xf]
    %v936 = vld [vmem:[%s1 + $0xe2c] sm:$0xf]
    %v937 = vld [vmem:[%s1 + $0xe30] sm:$0xf]
    %v938 = vld [vmem:[%s1 + $0xe34] sm:$0xf]
    %v939 = vld [vmem:[%s1 + $0xe38] sm:$0xf]
    %v940 = vld [vmem:[%s1 + $0xe3c] sm:$0xf]
    %v941 = vld [vmem:[%s1 + $0xe40] sm:$0xf]
    %v942 = vld [vmem:[%s1 + $0xe44] sm:$0xf]
    %v943 = vld [vmem:[%s1 + $0xe48] sm:$0xf]
    %v944 = vld [vmem:[%s1 + $0xe4c] sm:$0xf]
    %v945 = vld [vmem:[%s1 + $0xe50] sm:$0xf]
    %v946 = vld [vmem:[%s1 + $0xe54] sm:$0xf]
    %v947 = vld [vmem:[%s1 + $0xe58] sm:$0xf]
    %v948 = vld [vmem:[%s1 + $0xe5c] sm:$0xf]
    %v949 = vld [vmem:[%s1 + $0xe60] sm:$0xf]
    %v950 = vld [vmem:[%s1 + $0xe64] sm:$0xf]
    %v951 = vld [vmem:[%s1 + $0xe68] sm:$0xf]
    %v952 = vld [vmem:[%s1 + $0xe6c] sm:$0xf]
    %v953 = vld [vmem:[%s1 + $0xe70] sm:$0xf]
    %v954 = vld [vmem:[%s1 + $0xe74] sm:$0xf]
    %v955 = vld [vmem:[%s1 + $0xe78] sm:$0xf]
    %v956 = vld [vmem:[%s1 + $0xe7c] sm:$0xf]
    %v957 = vld [vmem:[%s1 + $0xe80] sm:$0xf]
    %v958 = vld [vmem:[%s1 + $0xe84] sm:$0xf]
    %v959 = vld [vmem:[%s1 + $0xe88] sm:$0xf]
    %v960 = vld [vmem:[%s1 + $0xe8c] sm:$0xf]
    %v961 = vld [vmem:[%s1 + $0xe90] sm:$0xf]
    %v962 = vld [vmem:[%s1 + $0xe94] sm:$0xf]
    %v963 = vld [vmem:[%s1 + $0xe98] sm:$0xf]
    %v964 = vld [vmem:[%s1 + $0xe9c] sm:$0xf]
    %v965 = vld [vmem:[%s1 + $0xea0] sm:$0xf]
    %v966 = vld [vmem:[%s1 + $0xea4] sm:$0xf]
    %v967 = vld [vmem:[%s1 + $0xea8] sm:$0xf]
    %v968 = vld [vmem:[%s1 + $0xeac] sm:$0xf]
    %v969 = vld [vmem:[%s1 + $0xeb0] sm:$0xf]
    %v970 = vld [vmem:[%s1 + $0xeb4] sm:$0xf]
    %v971 = vld [vmem:[%s1 + $0xeb8] sm:$0xf]
    %v972 = vld [vmem:[%s1 + $0xebc] sm:$0xf]
    %v973 = vld [vmem:[%s1 + $0xec0] sm:$0xf]
    %v974 = vld [vmem:[%s1 + $0xec4] sm:$0xf]
    %v975 = vld [vmem:[%s1 + $0xec8] sm:$0xf]
    %v976 = vld [vmem:[%s1 + $0xecc] sm:$0xf]
    %v977 = vld [vmem:[%s1 + $0xed0] sm:$0xf]
    %v978 = vld [vmem:[%s1 + $0xed4] sm:$0xf]
    %v979 = vld [vmem:[%s1 + $0xed8] sm:$0xf]
    %v980 = vld [vmem:[%s1 + $0xedc] sm:$0xf]
    %v981 = vld [vmem:[%s1 + $0xee0] sm:$0xf]
    %v982 = vld [vmem:[%s1 + $0xee4] sm:$0xf]
    %v983 = vld [vmem:[%s1 + $0xee8] sm:$0xf]
    %v984 = vld [vmem:[%s1 + $0xeec] sm:$0xf]
    %v985 = vld [vmem:[%s1 + $0xef0] sm:$0xf]
    %v986 = vld [vmem:[%s1 + $0xef4] sm:$0xf]
    %v987 = vld [vmem:[%s1 + $0xef8] sm:$0xf]
    %v988 = vld [vmem:[%s1 + $0xefc] sm:$0xf]
    %v989 = vld [vmem:[%s1 + $0xf00] sm:$0xf]
    %v990 = vld [vmem:[%s1 + $0xf04] sm:$0xf]
    %v991 = vld [vmem:[%s1 + $0xf08] sm:$0xf]
    %v992 = vld [vmem:[%s1 + $0xf0c] sm:$0xf]
    %v993 = vld [vmem:[%s1 + $0xf10] sm:$0xf]
    %v994 = vld [vmem:[%s1 + $0xf14] sm:$0xf]
    %v995 = vld [vmem:[%s1 + $0xf18] sm:$0xf]
    %v996 = vld [vmem:[%s1 + $0xf1c] sm:$0xf]
    %v997 = vld [vmem:[%s1 + $0xf20] sm:$0xf]
    %v998 = vld [vmem:[%s1 + $0xf24] sm:$0xf]
    %v999 = vld [vmem:[%s1 + $0xf28] sm:$0xf]
    %v1000 = vld [vmem:[%s1 + $0xf2c] sm:$0xf]
    %v1001 = vld [vmem:[%s1 + $0xf30] sm:$0xf]
    %v1002 = vld [vmem:[%s1 + $0xf34] sm:$0xf]
    %v1003 = vld [vmem:[%s1 + $0xf38] sm:$0xf]
    %v1004 = vld [vmem:[%s1 + $0xf3c] sm:$0xf]
    %v1005 = vld [vmem:[%s1 + $0xf40] sm:$0xf]
    %v1006 = vld [vmem:[%s1 + $0xf44] sm:$0xf]
    %v1007 = vld [vmem:[%s1 + $0xf48] sm:$0xf]
    %v1008 = vld [vmem:[%s1 + $0xf4c] sm:$0xf]
    %v1009 = vld [vmem:[%s1 + $0xf50] sm:$0xf]
    %v1010 = vld [vmem:[%s1 + $0xf54] sm:$0xf]
    %v1011 = vld [vmem:[%s1 + $0xf58] sm:$0xf]
    %v1012 = vld [vmem:[%s1 + $0xf5c] sm:$0xf]
    %v1013 = vld [vmem:[%s1 + $0xf60] sm:$0xf]
    %v1014 = vld [vmem:[%s1 + $0xf64] sm:$0xf]
    %v1015 = vld [vmem:[%s1 + $0xf68] sm:$0xf]
    %v1016 = vld [vmem:[%s1 + $0xf6c] sm:$0xf]
    %v1017 = vld [vmem:[%s1 + $0xf70] sm:$0xf]
    %v1018 = vld [vmem:[%s1 + $0xf74] sm:$0xf]
    %v1019 = vld [vmem:[%s1 + $0xf78] sm:$0xf]
    %v1020 = vld [vmem:[%s1 + $0xf7c] sm:$0xf]
    %v1021 = vld [vmem:[%s1 + $0xf80] sm:$0xf]
    %v1022 = vld [vmem:[%s1 + $0xf84] sm:$0xf]
    %v1023 = vld [vmem:[%s1 + $0xf88] sm:$0xf]
    %v1024 = vld [vmem:[%s1 + $0xf8c] sm:$0xf]
    %v1025 = vld [vmem:[%s1 + $0xf90] sm:$0xf]
    %v1026 = vld [vmem:[%s1 + $0xf94] sm:$0xf]
    %v1027 = vld [vmem:[%s1 + $0xf98] sm:$0xf]
    %v1028 = vld [vmem:[%s1 + $0xf9c] sm:$0xf]
    %v1029 = vld [vmem:[%s1 + $0xfa0] sm:$0xf]
    %v1030 = vld [vmem:[%s1 + $0xfa4] sm:$0xf]
    %v1031 = vld [vmem:[%s1 + $0xfa8] sm:$0xf]
    %v1032 = vld [vmem:[%s1 + $0xfac] sm:$0xf]
    %v1033 = vld [vmem:[%s1 + $0xfb0] sm:$0xf]
    %v1034 = vld [vmem:[%s1 + $0xfb4] sm:$0xf]
    %v1035 = vld [vmem:[%s1 + $0xfb8] sm:$0xf]
    %v1036 = vld [vmem:[%s1 + $0xfbc] sm:$0xf]
    %v1037 = vld [vmem:[%s1 + $0xfc0] sm:$0xf]
    %v1038 = vld [vmem:[%s1 + $0xfc4] sm:$0xf]
    %v1039 = vld [vmem:[%s1 + $0xfc8] sm:$0xf]
    %v1040 = vld [vmem:[%s1 + $0xfcc] sm:$0xf]
    %v1041 = vld [vmem:[%s1 + $0xfd0] sm:$0xf]
    %v1042 = vld [vmem:[%s1 + $0xfd4] sm:$0xf]
    %v1043 = vld [vmem:[%s1 + $0xfd8] sm:$0xf]
    %v1044 = vld [vmem:[%s1 + $0xfdc] sm:$0xf]
    %v1045 = vld [vmem:[%s1 + $0xfe0] sm:$0xf]
    %v1046 = vld [vmem:[%s1 + $0xfe4] sm:$0xf]
    %v1047 = vld [vmem:[%s1 + $0xfe8] sm:$0xf]
    %v1048 = vld [vmem:[%s1 + $0xfec] sm:$0xf]
    %v1049 = vld [vmem:[%s1 + $0xff0] sm:$0xf]
    %v1050 = vld [vmem:[%s1 + $0xff4] sm:$0xf]
    %v1051 = vld [vmem:[%s1 + $0xff8] sm:$0xf]
    %v1052 = vld [vmem:[%s1 + $0xffc] sm:$0xf]
    %v1053 = vld [vmem:[%s2] sm:$0x1]
    %v1055 = vperm.slane %v1053, 0
    %1058 = vst [vmem:[#allocation1] ss:$9 sm:$0xff] %v21
    %v1059 = vld [vmem:[#allocation1] sm:$0xff]
    %v1060 = vld [vmem:[#allocation1 + $0x9] sm:$0xff]
    %v1061 = vld [vmem:[#allocation1 + $0x12] sm:$0xff]
    %v1062 = vld [vmem:[#allocation1 + $0x1b] sm:$0xff]
    %v1063 = vld [vmem:[#allocation1 + $0x24] sm:$0xff]
    %v1064 = vld [vmem:[#allocation1 + $0x2d] sm:$0xff]
    %v1065 = vld [vmem:[#allocation1 + $0x36] sm:$0xff]
    %v1066 = vld [vmem:[#allocation1 + $0x3f] sm:$0xff]
    %1068 = vst [vmem:[#allocation1] ss:$9 sm:$0xff] %v22
    %v1069 = vld [vmem:[#allocation1] sm:$0xff]
    %v1070 = vld [vmem:[#allocation1 + $0x9] sm:$0xff]
    %v1071 = vld [vmem:[#allocation1 + $0x12] sm:$0xff]
    %v1072 = vld [vmem:[#allocation1 + $0x1b] sm:$0xff]
    %v1073 = vld [vmem:[#allocation1 + $0x24] sm:$0xff]
    %v1074 = vld [vmem:[#allocation1 + $0x2d] sm:$0xff]
    %v1075 = vld [vmem:[#allocation1 + $0x36] sm:$0xff]
    %v1076 = vld [vmem:[#allocation1 + $0x3f] sm:$0xff]
    %1078 = vst [vmem:[#allocation1] ss:$9 sm:$0xff] %v23
    %v1079 = vld [vmem:[#allocation1] sm:$0xff]
    %v1080 = vld [vmem:[#allocation1 + $0x9] sm:$0xff]
    %v1081 = vld [vmem:[#allocation1 + $0x12] sm:$0xff]
    %v1082 = vld [vmem:[#allocation1 + $0x1b] sm:$0xff]
    %v1083 = vld [vmem:[#allocation1 + $0x24] sm:$0xff]
    %v1084 = vld [vmem:[#allocation1 + $0x2d] sm:$0xff]
    %v1085 = vld [vmem:[#allocation1 + $0x36] sm:$0xff]
    %v1086 = vld [vmem:[#allocation1 + $0x3f] sm:$0xff]
    %1088 = vst [vmem:[#allocation1] ss:$9 sm:$0xff] %v24
    %v1089 = vld [vmem:[#allocation1] sm:$0xff]
    %v1090 = vld [vmem:[#allocation1 + $0x9] sm:$0xff]
    %v1091 = vld [vmem:[#allocation1 + $0x12] sm:$0xff]
    %v1092 = vld [vmem:[#allocation1 + $0x1b] sm:$0xff]
    %v1093 = vld [vmem:[#allocation1 + $0x24] sm:$0xff]
    %v1094 = vld [vmem:[#allocation1 + $0x2d] sm:$0xff]
    %v1095 = vld [vmem:[#allocation1 + $0x36] sm:$0xff]
    %v1096 = vld [vmem:[#allocation1 + $0x3f] sm:$0xff]
    %1098 = vst [vmem:[#allocation1] ss:$9 sm:$0xff] %v25
    %v1099 = vld [vmem:[#allocation1] sm:$0xff]
    %v1100 = vld [vmem:[#allocation1 + $0x9] sm:$0xff]
    %v1101 = vld [vmem:[#allocation1 + $0x12] sm:$0xff]
    %v1102 = vld [vmem:[#allocation1 + $0x1b] sm:$0xff]
    %v1103 = vld [vmem:[#allocation1 + $0x24] sm:$0xff]
    %v1104 = vld [vmem:[#allocation1 + $0x2d] sm:$0xff]
    %v1105 = vld [vmem:[#allocation1 + $0x36] sm:$0xff]
    %v1106 = vld [vmem:[#allocation1 + $0x3f] sm:$0xff]
    %1108 = vst [vmem:[#allocation1] ss:$9 sm:$0xff] %v26
    %v1109 = vld [vmem:[#allocation1] sm:$0xff]
    %v1110 = vld [vmem:[#allocation1 + $0x9] sm:$0xff]
    %v1111 = vld [vmem:[#allocation1 + $0x12] sm:$0xff]
    %v1112 = vld [vmem:[#allocation1 + $0x1b] sm:$0xff]
    %v1113 = vld [vmem:[#allocation1 + $0x24] sm:$0xff]
    %v1114 = vld [vmem:[#allocation1 + $0x2d] sm:$0xff]
    %v1115 = vld [vmem:[#allocation1 + $0x36] sm:$0xff]
    %v1116 = vld [vmem:[#allocation1 + $0x3f] sm:$0xff]
    %1118 = vst [vmem:[#allocation1] ss:$9 sm:$0xff] %v27
    %v1119 = vld [vmem:[#allocation1] sm:$0xff]
    %v1120 = vld [vmem:[#allocation1 + $0x9] sm:$0xff]
    %v1121 = vld [vmem:[#allocation1 + $0x12] sm:$0xff]
    %v1122 = vld [vmem:[#allocation1 + $0x1b] sm:$0xff]
    %v1123 = vld [vmem:[#allocation1 + $0x24] sm:$0xff]
    %v1124 = vld [vmem:[#allocation1 + $0x2d] sm:$0xff]
    %v1125 = vld [vmem:[#allocation1 + $0x36] sm:$0xff]
    %v1126 = vld [vmem:[#allocation1 + $0x3f] sm:$0xff]
    %1128 = vst [vmem:[#allocation1] ss:$9 sm:$0xff] %v28
    %v1129 = vld [vmem:[#allocation1] sm:$0xff]
    %v1130 = vld [vmem:[#allocation1 + $0x9] sm:$0xff]
    %v1131 = vld [vmem:[#allocation1 + $0x12] sm:$0xff]
    %v1132 = vld [vmem:[#allocation1 + $0x1b] sm:$0xff]
    %v1133 = vld [vmem:[#allocation1 + $0x24] sm:$0xff]
    %v1134 = vld [vmem:[#allocation1 + $0x2d] sm:$0xff]
    %v1135 = vld [vmem:[#allocation1 + $0x36] sm:$0xff]
    %v1136 = vld [vmem:[#allocation1 + $0x3f] sm:$0xff]
    %v2225 = vunpack.c.l.b16 %v29
    %v2226 = vunpack.c.l.b16 %v30
    %v2227 = vunpack.c.l.b16 %v31
    %v2228 = vunpack.c.l.b16 %v32
    %v2229 = vunpack.c.l.b16 %v33
    %v2230 = vunpack.c.l.b16 %v34
    %v2231 = vunpack.c.l.b16 %v35
    %v2232 = vunpack.c.l.b16 %v36
    %v2233 = vunpack.c.l.b16 %v37
    %v2234 = vunpack.c.l.b16 %v38
    %v2235 = vunpack.c.l.b16 %v39
    %v2236 = vunpack.c.l.b16 %v40
    %v2237 = vunpack.c.l.b16 %v41
    %v2238 = vunpack.c.l.b16 %v42
    %v2239 = vunpack.c.l.b16 %v43
    %v2240 = vunpack.c.l.b16 %v44
    %v2241 = vunpack.c.l.b16 %v45
    %v2242 = vunpack.c.l.b16 %v46
    %v2243 = vunpack.c.l.b16 %v47
    %v2244 = vunpack.c.l.b16 %v48
    %v2245 = vunpack.c.l.b16 %v49
    %v2246 = vunpack.c.l.b16 %v50
    %v2247 = vunpack.c.l.b16 %v51
    %v2248 = vunpack.c.l.b16 %v52
    %v2249 = vunpack.c.l.b16 %v53
    %v2250 = vunpack.c.l.b16 %v54
    %v2251 = vunpack.c.l.b16 %v55
    %v2252 = vunpack.c.l.b16 %v56
    %v2253 = vunpack.c.l.b16 %v57
    %v2254 = vunpack.c.l.b16 %v58
    %v2255 = vunpack.c.l.b16 %v59
    %v2256 = vunpack.c.l.b16 %v60
    %v2257 = vunpack.c.l.b16 %v61
    %v2258 = vunpack.c.l.b16 %v62
    %v2259 = vunpack.c.l.b16 %v63
    %v2260 = vunpack.c.l.b16 %v64
    %v2261 = vunpack.c.l.b16 %v65
    %v2262 = vunpack.c.l.b16 %v66
    %v2263 = vunpack.c.l.b16 %v67
    %v2264 = vunpack.c.l.b16 %v68
    %v2265 = vunpack.c.l.b16 %v69
    %v2266 = vunpack.c.l.b16 %v70
    %v2267 = vunpack.c.l.b16 %v71
    %v2268 = vunpack.c.l.b16 %v72
    %v2269 = vunpack.c.l.b16 %v73
    %v2270 = vunpack.c.l.b16 %v74
    %v2271 = vunpack.c.l.b16 %v75
    %v2272 = vunpack.c.l.b16 %v76
    %v2273 = vunpack.c.l.b16 %v77
    %v2274 = vunpack.c.l.b16 %v78
    %v2275 = vunpack.c.l.b16 %v79
    %v2276 = vunpack.c.l.b16 %v80
    %v2277 = vunpack.c.l.b16 %v81
    %v2278 = vunpack.c.l.b16 %v82
    %v2279 = vunpack.c.l.b16 %v83
    %v2280 = vunpack.c.l.b16 %v84
    %v2281 = vunpack.c.l.b16 %v85
    %v2282 = vunpack.c.l.b16 %v86
    %v2283 = vunpack.c.l.b16 %v87
    %v2284 = vunpack.c.l.b16 %v88
    %v2285 = vunpack.c.l.b16 %v89
    %v2286 = vunpack.c.l.b16 %v90
    %v2287 = vunpack.c.l.b16 %v91
    %v2288 = vunpack.c.l.b16 %v92
    %v2289 = vunpack.c.l.b16 %v93
    %v2290 = vunpack.c.l.b16 %v94
    %v2291 = vunpack.c.l.b16 %v95
    %v2292 = vunpack.c.l.b16 %v96
    %v2293 = vunpack.c.l.b16 %v97
    %v2294 = vunpack.c.l.b16 %v98
    %v2295 = vunpack.c.l.b16 %v99
    %v2296 = vunpack.c.l.b16 %v100
    %v2297 = vunpack.c.l.b16 %v101
    %v2298 = vunpack.c.l.b16 %v102
    %v2299 = vunpack.c.l.b16 %v103
    %v2300 = vunpack.c.l.b16 %v104
    %v2301 = vunpack.c.l.b16 %v105
    %v2302 = vunpack.c.l.b16 %v106
    %v2303 = vunpack.c.l.b16 %v107
    %v2304 = vunpack.c.l.b16 %v108
    %v2305 = vunpack.c.l.b16 %v109
    %v2306 = vunpack.c.l.b16 %v110
    %v2307 = vunpack.c.l.b16 %v111
    %v2308 = vunpack.c.l.b16 %v112
    %v2309 = vunpack.c.l.b16 %v113
    %v2310 = vunpack.c.l.b16 %v114
    %v2311 = vunpack.c.l.b16 %v115
    %v2312 = vunpack.c.l.b16 %v116
    %v2313 = vunpack.c.l.b16 %v117
    %v2314 = vunpack.c.l.b16 %v118
    %v2315 = vunpack.c.l.b16 %v119
    %v2316 = vunpack.c.l.b16 %v120
    %v2317 = vunpack.c.l.b16 %v121
    %v2318 = vunpack.c.l.b16 %v122
    %v2319 = vunpack.c.l.b16 %v123
    %v2320 = vunpack.c.l.b16 %v124
    %v2321 = vunpack.c.l.b16 %v125
    %v2322 = vunpack.c.l.b16 %v126
    %v2323 = vunpack.c.l.b16 %v127
    %v2324 = vunpack.c.l.b16 %v128
    %v2325 = vunpack.c.l.b16 %v129
    %v2326 = vunpack.c.l.b16 %v130
    %v2327 = vunpack.c.l.b16 %v131
    %v2328 = vunpack.c.l.b16 %v132
    %v2329 = vunpack.c.l.b16 %v133
    %v2330 = vunpack.c.l.b16 %v134
    %v2331 = vunpack.c.l.b16 %v135
    %v2332 = vunpack.c.l.b16 %v136
    %v2333 = vunpack.c.l.b16 %v137
    %v2334 = vunpack.c.l.b16 %v138
    %v2335 = vunpack.c.l.b16 %v139
    %v2336 = vunpack.c.l.b16 %v140
    %v2337 = vunpack.c.l.b16 %v141
    %v2338 = vunpack.c.l.b16 %v142
    %v2339 = vunpack.c.l.b16 %v143
    %v2340 = vunpack.c.l.b16 %v144
    %v2341 = vunpack.c.l.b16 %v145
    %v2342 = vunpack.c.l.b16 %v146
    %v2343 = vunpack.c.l.b16 %v147
    %v2344 = vunpack.c.l.b16 %v148
    %v2345 = vunpack.c.l.b16 %v149
    %v2346 = vunpack.c.l.b16 %v150
    %v2347 = vunpack.c.l.b16 %v151
    %v2348 = vunpack.c.l.b16 %v152
    %v2349 = vunpack.c.l.b16 %v153
    %v2350 = vunpack.c.l.b16 %v154
    %v2351 = vunpack.c.l.b16 %v155
    %v2352 = vunpack.c.l.b16 %v156
    %v2353 = vunpack.c.l.b16 %v157
    %v2354 = vunpack.c.l.b16 %v158
    %v2355 = vunpack.c.l.b16 %v159
    %v2356 = vunpack.c.l.b16 %v160
    %v2357 = vunpack.c.l.b16 %v161
    %v2358 = vunpack.c.l.b16 %v162
    %v2359 = vunpack.c.l.b16 %v163
    %v2360 = vunpack.c.l.b16 %v164
    %v2361 = vunpack.c.l.b16 %v165
    %v2362 = vunpack.c.l.b16 %v166
    %v2363 = vunpack.c.l.b16 %v167
    %v2364 = vunpack.c.l.b16 %v168
    %v2365 = vunpack.c.l.b16 %v169
    %v2366 = vunpack.c.l.b16 %v170
    %v2367 = vunpack.c.l.b16 %v171
    %v2368 = vunpack.c.l.b16 %v172
    %v2369 = vunpack.c.l.b16 %v173
    %v2370 = vunpack.c.l.b16 %v174
    %v2371 = vunpack.c.l.b16 %v175
    %v2372 = vunpack.c.l.b16 %v176
    %v2373 = vunpack.c.l.b16 %v177
    %v2374 = vunpack.c.l.b16 %v178
    %v2375 = vunpack.c.l.b16 %v179
    %v2376 = vunpack.c.l.b16 %v180
    %v2377 = vunpack.c.l.b16 %v181
    %v2378 = vunpack.c.l.b16 %v182
    %v2379 = vunpack.c.l.b16 %v183
    %v2380 = vunpack.c.l.b16 %v184
    %v2381 = vunpack.c.l.b16 %v185
    %v2382 = vunpack.c.l.b16 %v186
    %v2383 = vunpack.c.l.b16 %v187
    %v2384 = vunpack.c.l.b16 %v188
    %v2385 = vunpack.c.l.b16 %v189
    %v2386 = vunpack.c.l.b16 %v190
    %v2387 = vunpack.c.l.b16 %v191
    %v2388 = vunpack.c.l.b16 %v192
    %v2389 = vunpack.c.l.b16 %v193
    %v2390 = vunpack.c.l.b16 %v194
    %v2391 = vunpack.c.l.b16 %v195
    %v2392 = vunpack.c.l.b16 %v196
    %v2393 = vunpack.c.l.b16 %v197
    %v2394 = vunpack.c.l.b16 %v198
    %v2395 = vunpack.c.l.b16 %v199
    %v2396 = vunpack.c.l.b16 %v200
    %v2397 = vunpack.c.l.b16 %v201
    %v2398 = vunpack.c.l.b16 %v202
    %v2399 = vunpack.c.l.b16 %v203
    %v2400 = vunpack.c.l.b16 %v204
    %v2401 = vunpack.c.l.b16 %v205
    %v2402 = vunpack.c.l.b16 %v206
    %v2403 = vunpack.c.l.b16 %v207
    %v2404 = vunpack.c.l.b16 %v208
    %v2405 = vunpack.c.l.b16 %v209
    %v2406 = vunpack.c.l.b16 %v210
    %v2407 = vunpack.c.l.b16 %v211
    %v2408 = vunpack.c.l.b16 %v212
    %v2409 = vunpack.c.l.b16 %v213
    %v2410 = vunpack.c.l.b16 %v214
    %v2411 = vunpack.c.l.b16 %v215
    %v2412 = vunpack.c.l.b16 %v216
    %v2413 = vunpack.c.l.b16 %v217
    %v2414 = vunpack.c.l.b16 %v218
    %v2415 = vunpack.c.l.b16 %v219
    %v2416 = vunpack.c.l.b16 %v220
    %v2417 = vunpack.c.l.b16 %v221
    %v2418 = vunpack.c.l.b16 %v222
    %v2419 = vunpack.c.l.b16 %v223
    %v2420 = vunpack.c.l.b16 %v224
    %v2421 = vunpack.c.l.b16 %v225
    %v2422 = vunpack.c.l.b16 %v226
    %v2423 = vunpack.c.l.b16 %v227
    %v2424 = vunpack.c.l.b16 %v228
    %v2425 = vunpack.c.l.b16 %v229
    %v2426 = vunpack.c.l.b16 %v230
    %v2427 = vunpack.c.l.b16 %v231
    %v2428 = vunpack.c.l.b16 %v232
    %v2429 = vunpack.c.l.b16 %v233
    %v2430 = vunpack.c.l.b16 %v234
    %v2431 = vunpack.c.l.b16 %v235
    %v2432 = vunpack.c.l.b16 %v236
    %v2433 = vunpack.c.l.b16 %v237
    %v2434 = vunpack.c.l.b16 %v238
    %v2435 = vunpack.c.l.b16 %v239
    %v2436 = vunpack.c.l.b16 %v240
    %v2437 = vunpack.c.l.b16 %v241
    %v2438 = vunpack.c.l.b16 %v242
    %v2439 = vunpack.c.l.b16 %v243
    %v2440 = vunpack.c.l.b16 %v244
    %v2441 = vunpack.c.l.b16 %v245
    %v2442 = vunpack.c.l.b16 %v246
    %v2443 = vunpack.c.l.b16 %v247
    %v2444 = vunpack.c.l.b16 %v248
    %v2445 = vunpack.c.l.b16 %v249
    %v2446 = vunpack.c.l.b16 %v250
    %v2447 = vunpack.c.l.b16 %v251
    %v2448 = vunpack.c.l.b16 %v252
    %v2449 = vunpack.c.l.b16 %v253
    %v2450 = vunpack.c.l.b16 %v254
    %v2451 = vunpack.c.l.b16 %v255
    %v2452 = vunpack.c.l.b16 %v256
    %v2453 = vunpack.c.l.b16 %v257
    %v2454 = vunpack.c.l.b16 %v258
    %v2455 = vunpack.c.l.b16 %v259
    %v2456 = vunpack.c.l.b16 %v260
    %v2457 = vunpack.c.l.b16 %v261
    %v2458 = vunpack.c.l.b16 %v262
    %v2459 = vunpack.c.l.b16 %v263
    %v2460 = vunpack.c.l.b16 %v264
    %v2461 = vunpack.c.l.b16 %v265
    %v2462 = vunpack.c.l.b16 %v266
    %v2463 = vunpack.c.l.b16 %v267
    %v2464 = vunpack.c.l.b16 %v268
    %v2465 = vunpack.c.l.b16 %v269
    %v2466 = vunpack.c.l.b16 %v270
    %v2467 = vunpack.c.l.b16 %v271
    %v2468 = vunpack.c.l.b16 %v272
    %v2469 = vunpack.c.l.b16 %v273
    %v2470 = vunpack.c.l.b16 %v274
    %v2471 = vunpack.c.l.b16 %v275
    %v2472 = vunpack.c.l.b16 %v276
    %v2473 = vunpack.c.l.b16 %v277
    %v2474 = vunpack.c.l.b16 %v278
    %v2475 = vunpack.c.l.b16 %v279
    %v2476 = vunpack.c.l.b16 %v280
    %v2477 = vunpack.c.l.b16 %v281
    %v2478 = vunpack.c.l.b16 %v282
    %v2479 = vunpack.c.l.b16 %v283
    %v2480 = vunpack.c.l.b16 %v284
    %v2481 = vunpack.c.l.b16 %v285
    %v2482 = vunpack.c.l.b16 %v286
    %v2483 = vunpack.c.l.b16 %v287
    %v2484 = vunpack.c.l.b16 %v288
    %v2485 = vunpack.c.l.b16 %v289
    %v2486 = vunpack.c.l.b16 %v290
    %v2487 = vunpack.c.l.b16 %v291
    %v2488 = vunpack.c.l.b16 %v292
    %v2489 = vunpack.c.l.b16 %v293
    %v2490 = vunpack.c.l.b16 %v294
    %v2491 = vunpack.c.l.b16 %v295
    %v2492 = vunpack.c.l.b16 %v296
    %v2493 = vunpack.c.l.b16 %v297
    %v2494 = vunpack.c.l.b16 %v298
    %v2495 = vunpack.c.l.b16 %v299
    %v2496 = vunpack.c.l.b16 %v300
    %v2497 = vunpack.c.l.b16 %v301
    %v2498 = vunpack.c.l.b16 %v302
    %v2499 = vunpack.c.l.b16 %v303
    %v2500 = vunpack.c.l.b16 %v304
    %v2501 = vunpack.c.l.b16 %v305
    %v2502 = vunpack.c.l.b16 %v306
    %v2503 = vunpack.c.l.b16 %v307
    %v2504 = vunpack.c.l.b16 %v308
    %v2505 = vunpack.c.l.b16 %v309
    %v2506 = vunpack.c.l.b16 %v310
    %v2507 = vunpack.c.l.b16 %v311
    %v2508 = vunpack.c.l.b16 %v312
    %v2509 = vunpack.c.l.b16 %v313
    %v2510 = vunpack.c.l.b16 %v314
    %v2511 = vunpack.c.l.b16 %v315
    %v2512 = vunpack.c.l.b16 %v316
    %v2513 = vunpack.c.l.b16 %v317
    %v2514 = vunpack.c.l.b16 %v318
    %v2515 = vunpack.c.l.b16 %v319
    %v2516 = vunpack.c.l.b16 %v320
    %v2517 = vunpack.c.l.b16 %v321
    %v2518 = vunpack.c.l.b16 %v322
    %v2519 = vunpack.c.l.b16 %v323
    %v2520 = vunpack.c.l.b16 %v324
    %v2521 = vunpack.c.l.b16 %v325
    %v2522 = vunpack.c.l.b16 %v326
    %v2523 = vunpack.c.l.b16 %v327
    %v2524 = vunpack.c.l.b16 %v328
    %v2525 = vunpack.c.l.b16 %v329
    %v2526 = vunpack.c.l.b16 %v330
    %v2527 = vunpack.c.l.b16 %v331
    %v2528 = vunpack.c.l.b16 %v332
    %v2529 = vunpack.c.l.b16 %v333
    %v2530 = vunpack.c.l.b16 %v334
    %v2531 = vunpack.c.l.b16 %v335
    %v2532 = vunpack.c.l.b16 %v336
    %v2533 = vunpack.c.l.b16 %v337
    %v2534 = vunpack.c.l.b16 %v338
    %v2535 = vunpack.c.l.b16 %v339
    %v2536 = vunpack.c.l.b16 %v340
    %v2537 = vunpack.c.l.b16 %v341
    %v2538 = vunpack.c.l.b16 %v342
    %v2539 = vunpack.c.l.b16 %v343
    %v2540 = vunpack.c.l.b16 %v344
    %v2541 = vunpack.c.l.b16 %v345
    %v2542 = vunpack.c.l.b16 %v346
    %v2543 = vunpack.c.l.b16 %v347
    %v2544 = vunpack.c.l.b16 %v348
    %v2545 = vunpack.c.l.b16 %v349
    %v2546 = vunpack.c.l.b16 %v350
    %v2547 = vunpack.c.l.b16 %v351
    %v2548 = vunpack.c.l.b16 %v352
    %v2549 = vunpack.c.l.b16 %v353
    %v2550 = vunpack.c.l.b16 %v354
    %v2551 = vunpack.c.l.b16 %v355
    %v2552 = vunpack.c.l.b16 %v356
    %v2553 = vunpack.c.l.b16 %v357
    %v2554 = vunpack.c.l.b16 %v358
    %v2555 = vunpack.c.l.b16 %v359
    %v2556 = vunpack.c.l.b16 %v360
    %v2557 = vunpack.c.l.b16 %v361
    %v2558 = vunpack.c.l.b16 %v362
    %v2559 = vunpack.c.l.b16 %v363
    %v2560 = vunpack.c.l.b16 %v364
    %v2561 = vunpack.c.l.b16 %v365
    %v2562 = vunpack.c.l.b16 %v366
    %v2563 = vunpack.c.l.b16 %v367
    %v2564 = vunpack.c.l.b16 %v368
    %v2565 = vunpack.c.l.b16 %v369
    %v2566 = vunpack.c.l.b16 %v370
    %v2567 = vunpack.c.l.b16 %v371
    %v2568 = vunpack.c.l.b16 %v372
    %v2569 = vunpack.c.l.b16 %v373
    %v2570 = vunpack.c.l.b16 %v374
    %v2571 = vunpack.c.l.b16 %v375
    %v2572 = vunpack.c.l.b16 %v376
    %v2573 = vunpack.c.l.b16 %v377
    %v2574 = vunpack.c.l.b16 %v378
    %v2575 = vunpack.c.l.b16 %v379
    %v2576 = vunpack.c.l.b16 %v380
    %v2577 = vunpack.c.l.b16 %v381
    %v2578 = vunpack.c.l.b16 %v382
    %v2579 = vunpack.c.l.b16 %v383
    %v2580 = vunpack.c.l.b16 %v384
    %v2581 = vunpack.c.l.b16 %v385
    %v2582 = vunpack.c.l.b16 %v386
    %v2583 = vunpack.c.l.b16 %v387
    %v2584 = vunpack.c.l.b16 %v388
    %v2585 = vunpack.c.l.b16 %v389
    %v2586 = vunpack.c.l.b16 %v390
    %v2587 = vunpack.c.l.b16 %v391
    %v2588 = vunpack.c.l.b16 %v392
    %v2589 = vunpack.c.l.b16 %v393
    %v2590 = vunpack.c.l.b16 %v394
    %v2591 = vunpack.c.l.b16 %v395
    %v2592 = vunpack.c.l.b16 %v396
    %v2593 = vunpack.c.l.b16 %v397
    %v2594 = vunpack.c.l.b16 %v398
    %v2595 = vunpack.c.l.b16 %v399
    %v2596 = vunpack.c.l.b16 %v400
    %v2597 = vunpack.c.l.b16 %v401
    %v2598 = vunpack.c.l.b16 %v402
    %v2599 = vunpack.c.l.b16 %v403
    %v2600 = vunpack.c.l.b16 %v404
    %v2601 = vunpack.c.l.b16 %v405
    %v2602 = vunpack.c.l.b16 %v406
    %v2603 = vunpack.c.l.b16 %v407
    %v2604 = vunpack.c.l.b16 %v408
    %v2605 = vunpack.c.l.b16 %v409
    %v2606 = vunpack.c.l.b16 %v410
    %v2607 = vunpack.c.l.b16 %v411
    %v2608 = vunpack.c.l.b16 %v412
    %v2609 = vunpack.c.l.b16 %v413
    %v2610 = vunpack.c.l.b16 %v414
    %v2611 = vunpack.c.l.b16 %v415
    %v2612 = vunpack.c.l.b16 %v416
    %v2613 = vunpack.c.l.b16 %v417
    %v2614 = vunpack.c.l.b16 %v418
    %v2615 = vunpack.c.l.b16 %v419
    %v2616 = vunpack.c.l.b16 %v420
    %v2617 = vunpack.c.l.b16 %v421
    %v2618 = vunpack.c.l.b16 %v422
    %v2619 = vunpack.c.l.b16 %v423
    %v2620 = vunpack.c.l.b16 %v424
    %v2621 = vunpack.c.l.b16 %v425
    %v2622 = vunpack.c.l.b16 %v426
    %v2623 = vunpack.c.l.b16 %v427
    %v2624 = vunpack.c.l.b16 %v428
    %v2625 = vunpack.c.l.b16 %v429
    %v2626 = vunpack.c.l.b16 %v430
    %v2627 = vunpack.c.l.b16 %v431
    %v2628 = vunpack.c.l.b16 %v432
    %v2629 = vunpack.c.l.b16 %v433
    %v2630 = vunpack.c.l.b16 %v434
    %v2631 = vunpack.c.l.b16 %v435
    %v2632 = vunpack.c.l.b16 %v436
    %v2633 = vunpack.c.l.b16 %v437
    %v2634 = vunpack.c.l.b16 %v438
    %v2635 = vunpack.c.l.b16 %v439
    %v2636 = vunpack.c.l.b16 %v440
    %v2637 = vunpack.c.l.b16 %v441
    %v2638 = vunpack.c.l.b16 %v442
    %v2639 = vunpack.c.l.b16 %v443
    %v2640 = vunpack.c.l.b16 %v444
    %v2641 = vunpack.c.l.b16 %v445
    %v2642 = vunpack.c.l.b16 %v446
    %v2643 = vunpack.c.l.b16 %v447
    %v2644 = vunpack.c.l.b16 %v448
    %v2645 = vunpack.c.l.b16 %v449
    %v2646 = vunpack.c.l.b16 %v450
    %v2647 = vunpack.c.l.b16 %v451
    %v2648 = vunpack.c.l.b16 %v452
    %v2649 = vunpack.c.l.b16 %v453
    %v2650 = vunpack.c.l.b16 %v454
    %v2651 = vunpack.c.l.b16 %v455
    %v2652 = vunpack.c.l.b16 %v456
    %v2653 = vunpack.c.l.b16 %v457
    %v2654 = vunpack.c.l.b16 %v458
    %v2655 = vunpack.c.l.b16 %v459
    %v2656 = vunpack.c.l.b16 %v460
    %v2657 = vunpack.c.l.b16 %v461
    %v2658 = vunpack.c.l.b16 %v462
    %v2659 = vunpack.c.l.b16 %v463
    %v2660 = vunpack.c.l.b16 %v464
    %v2661 = vunpack.c.l.b16 %v465
    %v2662 = vunpack.c.l.b16 %v466
    %v2663 = vunpack.c.l.b16 %v467
    %v2664 = vunpack.c.l.b16 %v468
    %v2665 = vunpack.c.l.b16 %v469
    %v2666 = vunpack.c.l.b16 %v470
    %v2667 = vunpack.c.l.b16 %v471
    %v2668 = vunpack.c.l.b16 %v472
    %v2669 = vunpack.c.l.b16 %v473
    %v2670 = vunpack.c.l.b16 %v474
    %v2671 = vunpack.c.l.b16 %v475
    %v2672 = vunpack.c.l.b16 %v476
    %v2673 = vunpack.c.l.b16 %v477
    %v2674 = vunpack.c.l.b16 %v478
    %v2675 = vunpack.c.l.b16 %v479
    %v2676 = vunpack.c.l.b16 %v480
    %v2677 = vunpack.c.l.b16 %v481
    %v2678 = vunpack.c.l.b16 %v482
    %v2679 = vunpack.c.l.b16 %v483
    %v2680 = vunpack.c.l.b16 %v484
    %v2681 = vunpack.c.l.b16 %v485
    %v2682 = vunpack.c.l.b16 %v486
    %v2683 = vunpack.c.l.b16 %v487
    %v2684 = vunpack.c.l.b16 %v488
    %v2685 = vunpack.c.l.b16 %v489
    %v2686 = vunpack.c.l.b16 %v490
    %v2687 = vunpack.c.l.b16 %v491
    %v2688 = vunpack.c.l.b16 %v492
    %v2689 = vunpack.c.l.b16 %v493
    %v2690 = vunpack.c.l.b16 %v494
    %v2691 = vunpack.c.l.b16 %v495
    %v2692 = vunpack.c.l.b16 %v496
    %v2693 = vunpack.c.l.b16 %v497
    %v2694 = vunpack.c.l.b16 %v498
    %v2695 = vunpack.c.l.b16 %v499
    %v2696 = vunpack.c.l.b16 %v500
    %v2697 = vunpack.c.l.b16 %v501
    %v2698 = vunpack.c.l.b16 %v502
    %v2699 = vunpack.c.l.b16 %v503
    %v2700 = vunpack.c.l.b16 %v504
    %v2701 = vunpack.c.l.b16 %v505
    %v2702 = vunpack.c.l.b16 %v506
    %v2703 = vunpack.c.l.b16 %v507
    %v2704 = vunpack.c.l.b16 %v508
    %v2705 = vunpack.c.l.b16 %v509
    %v2706 = vunpack.c.l.b16 %v510
    %v2707 = vunpack.c.l.b16 %v511
    %v2708 = vunpack.c.l.b16 %v512
    %v2709 = vunpack.c.l.b16 %v513
    %v2710 = vunpack.c.l.b16 %v514
    %v2711 = vunpack.c.l.b16 %v515
    %v2712 = vunpack.c.l.b16 %v516
    %v2713 = vunpack.c.l.b16 %v517
    %v2714 = vunpack.c.l.b16 %v518
    %v2715 = vunpack.c.l.b16 %v519
    %v2716 = vunpack.c.l.b16 %v520
    %v2717 = vunpack.c.l.b16 %v521
    %v2718 = vunpack.c.l.b16 %v522
    %v2719 = vunpack.c.l.b16 %v523
    %v2720 = vunpack.c.l.b16 %v524
    %v2721 = vunpack.c.l.b16 %v525
    %v2722 = vunpack.c.l.b16 %v526
    %v2723 = vunpack.c.l.b16 %v527
    %v2724 = vunpack.c.l.b16 %v528
    %v2725 = vunpack.c.l.b16 %v529
    %v2726 = vunpack.c.l.b16 %v530
    %v2727 = vunpack.c.l.b16 %v531
    %v2728 = vunpack.c.l.b16 %v532
    %v2729 = vunpack.c.l.b16 %v533
    %v2730 = vunpack.c.l.b16 %v534
    %v2731 = vunpack.c.l.b16 %v535
    %v2732 = vunpack.c.l.b16 %v536
    %v2733 = vunpack.c.l.b16 %v537
    %v2734 = vunpack.c.l.b16 %v538
    %v2735 = vunpack.c.l.b16 %v539
    %v2736 = vunpack.c.l.b16 %v540
    %v2737 = vunpack.c.l.b16 %v541
    %v2738 = vunpack.c.l.b16 %v542
    %v2739 = vunpack.c.l.b16 %v543
    %v2740 = vunpack.c.l.b16 %v544
    %v2741 = vunpack.c.l.b16 %v545
    %v2742 = vunpack.c.l.b16 %v546
    %v2743 = vunpack.c.l.b16 %v547
    %v2744 = vunpack.c.l.b16 %v548
    %v2745 = vunpack.c.l.b16 %v549
    %v2746 = vunpack.c.l.b16 %v550
    %v2747 = vunpack.c.l.b16 %v551
    %v2748 = vunpack.c.l.b16 %v552
    %v2749 = vunpack.c.l.b16 %v553
    %v2750 = vunpack.c.l.b16 %v554
    %v2751 = vunpack.c.l.b16 %v555
    %v2752 = vunpack.c.l.b16 %v556
    %v2753 = vunpack.c.l.b16 %v557
    %v2754 = vunpack.c.l.b16 %v558
    %v2755 = vunpack.c.l.b16 %v559
    %v2756 = vunpack.c.l.b16 %v560
    %v2757 = vunpack.c.l.b16 %v561
    %v2758 = vunpack.c.l.b16 %v562
    %v2759 = vunpack.c.l.b16 %v563
    %v2760 = vunpack.c.l.b16 %v564
    %v2761 = vunpack.c.l.b16 %v565
    %v2762 = vunpack.c.l.b16 %v566
    %v2763 = vunpack.c.l.b16 %v567
    %v2764 = vunpack.c.l.b16 %v568
    %v2765 = vunpack.c.l.b16 %v569
    %v2766 = vunpack.c.l.b16 %v570
    %v2767 = vunpack.c.l.b16 %v571
    %v2768 = vunpack.c.l.b16 %v572
    %v2769 = vunpack.c.l.b16 %v573
    %v2770 = vunpack.c.l.b16 %v574
    %v2771 = vunpack.c.l.b16 %v575
    %v2772 = vunpack.c.l.b16 %v576
    %v2773 = vunpack.c.l.b16 %v577
    %v2774 = vunpack.c.l.b16 %v578
    %v2775 = vunpack.c.l.b16 %v579
    %v2776 = vunpack.c.l.b16 %v580
    %v2777 = vunpack.c.l.b16 %v581
    %v2778 = vunpack.c.l.b16 %v582
    %v2779 = vunpack.c.l.b16 %v583
    %v2780 = vunpack.c.l.b16 %v584
    %v2781 = vunpack.c.l.b16 %v585
    %v2782 = vunpack.c.l.b16 %v586
    %v2783 = vunpack.c.l.b16 %v587
    %v2784 = vunpack.c.l.b16 %v588
    %v2785 = vunpack.c.l.b16 %v589
    %v2786 = vunpack.c.l.b16 %v590
    %v2787 = vunpack.c.l.b16 %v591
    %v2788 = vunpack.c.l.b16 %v592
    %v2789 = vunpack.c.l.b16 %v593
    %v2790 = vunpack.c.l.b16 %v594
    %v2791 = vunpack.c.l.b16 %v595
    %v2792 = vunpack.c.l.b16 %v596
    %v2793 = vunpack.c.l.b16 %v597
    %v2794 = vunpack.c.l.b16 %v598
    %v2795 = vunpack.c.l.b16 %v599
    %v2796 = vunpack.c.l.b16 %v600
    %v2797 = vunpack.c.l.b16 %v601
    %v2798 = vunpack.c.l.b16 %v602
    %v2799 = vunpack.c.l.b16 %v603
    %v2800 = vunpack.c.l.b16 %v604
    %v2801 = vunpack.c.l.b16 %v605
    %v2802 = vunpack.c.l.b16 %v606
    %v2803 = vunpack.c.l.b16 %v607
    %v2804 = vunpack.c.l.b16 %v608
    %v2805 = vunpack.c.l.b16 %v609
    %v2806 = vunpack.c.l.b16 %v610
    %v2807 = vunpack.c.l.b16 %v611
    %v2808 = vunpack.c.l.b16 %v612
    %v2809 = vunpack.c.l.b16 %v613
    %v2810 = vunpack.c.l.b16 %v614
    %v2811 = vunpack.c.l.b16 %v615
    %v2812 = vunpack.c.l.b16 %v616
    %v2813 = vunpack.c.l.b16 %v617
    %v2814 = vunpack.c.l.b16 %v618
    %v2815 = vunpack.c.l.b16 %v619
    %v2816 = vunpack.c.l.b16 %v620
    %v2817 = vunpack.c.l.b16 %v621
    %v2818 = vunpack.c.l.b16 %v622
    %v2819 = vunpack.c.l.b16 %v623
    %v2820 = vunpack.c.l.b16 %v624
    %v2821 = vunpack.c.l.b16 %v625
    %v2822 = vunpack.c.l.b16 %v626
    %v2823 = vunpack.c.l.b16 %v627
    %v2824 = vunpack.c.l.b16 %v628
    %v2825 = vunpack.c.l.b16 %v629
    %v2826 = vunpack.c.l.b16 %v630
    %v2827 = vunpack.c.l.b16 %v631
    %v2828 = vunpack.c.l.b16 %v632
    %v2829 = vunpack.c.l.b16 %v633
    %v2830 = vunpack.c.l.b16 %v634
    %v2831 = vunpack.c.l.b16 %v635
    %v2832 = vunpack.c.l.b16 %v636
    %v2833 = vunpack.c.l.b16 %v637
    %v2834 = vunpack.c.l.b16 %v638
    %v2835 = vunpack.c.l.b16 %v639
    %v2836 = vunpack.c.l.b16 %v640
    %v2837 = vunpack.c.l.b16 %v641
    %v2838 = vunpack.c.l.b16 %v642
    %v2839 = vunpack.c.l.b16 %v643
    %v2840 = vunpack.c.l.b16 %v644
    %v2841 = vunpack.c.l.b16 %v645
    %v2842 = vunpack.c.l.b16 %v646
    %v2843 = vunpack.c.l.b16 %v647
    %v2844 = vunpack.c.l.b16 %v648
    %v2845 = vunpack.c.l.b16 %v649
    %v2846 = vunpack.c.l.b16 %v650
    %v2847 = vunpack.c.l.b16 %v651
    %v2848 = vunpack.c.l.b16 %v652
    %v2849 = vunpack.c.l.b16 %v653
    %v2850 = vunpack.c.l.b16 %v654
    %v2851 = vunpack.c.l.b16 %v655
    %v2852 = vunpack.c.l.b16 %v656
    %v2853 = vunpack.c.l.b16 %v657
    %v2854 = vunpack.c.l.b16 %v658
    %v2855 = vunpack.c.l.b16 %v659
    %v2856 = vunpack.c.l.b16 %v660
    %v2857 = vunpack.c.l.b16 %v661
    %v2858 = vunpack.c.l.b16 %v662
    %v2859 = vunpack.c.l.b16 %v663
    %v2860 = vunpack.c.l.b16 %v664
    %v2861 = vunpack.c.l.b16 %v665
    %v2862 = vunpack.c.l.b16 %v666
    %v2863 = vunpack.c.l.b16 %v667
    %v2864 = vunpack.c.l.b16 %v668
    %v2865 = vunpack.c.l.b16 %v669
    %v2866 = vunpack.c.l.b16 %v670
    %v2867 = vunpack.c.l.b16 %v671
    %v2868 = vunpack.c.l.b16 %v672
    %v2869 = vunpack.c.l.b16 %v673
    %v2870 = vunpack.c.l.b16 %v674
    %v2871 = vunpack.c.l.b16 %v675
    %v2872 = vunpack.c.l.b16 %v676
    %v2873 = vunpack.c.l.b16 %v677
    %v2874 = vunpack.c.l.b16 %v678
    %v2875 = vunpack.c.l.b16 %v679
    %v2876 = vunpack.c.l.b16 %v680
    %v2877 = vunpack.c.l.b16 %v681
    %v2878 = vunpack.c.l.b16 %v682
    %v2879 = vunpack.c.l.b16 %v683
    %v2880 = vunpack.c.l.b16 %v684
    %v2881 = vunpack.c.l.b16 %v685
    %v2882 = vunpack.c.l.b16 %v686
    %v2883 = vunpack.c.l.b16 %v687
    %v2884 = vunpack.c.l.b16 %v688
    %v2885 = vunpack.c.l.b16 %v689
    %v2886 = vunpack.c.l.b16 %v690
    %v2887 = vunpack.c.l.b16 %v691
    %v2888 = vunpack.c.l.b16 %v692
    %v2889 = vunpack.c.l.b16 %v693
    %v2890 = vunpack.c.l.b16 %v694
    %v2891 = vunpack.c.l.b16 %v695
    %v2892 = vunpack.c.l.b16 %v696
    %v2893 = vunpack.c.l.b16 %v697
    %v2894 = vunpack.c.l.b16 %v698
    %v2895 = vunpack.c.l.b16 %v699
    %v2896 = vunpack.c.l.b16 %v700
    %v2897 = vunpack.c.l.b16 %v701
    %v2898 = vunpack.c.l.b16 %v702
    %v2899 = vunpack.c.l.b16 %v703
    %v2900 = vunpack.c.l.b16 %v704
    %v2901 = vunpack.c.l.b16 %v705
    %v2902 = vunpack.c.l.b16 %v706
    %v2903 = vunpack.c.l.b16 %v707
    %v2904 = vunpack.c.l.b16 %v708
    %v2905 = vunpack.c.l.b16 %v709
    %v2906 = vunpack.c.l.b16 %v710
    %v2907 = vunpack.c.l.b16 %v711
    %v2908 = vunpack.c.l.b16 %v712
    %v2909 = vunpack.c.l.b16 %v713
    %v2910 = vunpack.c.l.b16 %v714
    %v2911 = vunpack.c.l.b16 %v715
    %v2912 = vunpack.c.l.b16 %v716
    %v2913 = vunpack.c.l.b16 %v717
    %v2914 = vunpack.c.l.b16 %v718
    %v2915 = vunpack.c.l.b16 %v719
    %v2916 = vunpack.c.l.b16 %v720
    %v2917 = vunpack.c.l.b16 %v721
    %v2918 = vunpack.c.l.b16 %v722
    %v2919 = vunpack.c.l.b16 %v723
    %v2920 = vunpack.c.l.b16 %v724
    %v2921 = vunpack.c.l.b16 %v725
    %v2922 = vunpack.c.l.b16 %v726
    %v2923 = vunpack.c.l.b16 %v727
    %v2924 = vunpack.c.l.b16 %v728
    %v2925 = vunpack.c.l.b16 %v729
    %v2926 = vunpack.c.l.b16 %v730
    %v2927 = vunpack.c.l.b16 %v731
    %v2928 = vunpack.c.l.b16 %v732
    %v2929 = vunpack.c.l.b16 %v733
    %v2930 = vunpack.c.l.b16 %v734
    %v2931 = vunpack.c.l.b16 %v735
    %v2932 = vunpack.c.l.b16 %v736
    %v2933 = vunpack.c.l.b16 %v737
    %v2934 = vunpack.c.l.b16 %v738
    %v2935 = vunpack.c.l.b16 %v739
    %v2936 = vunpack.c.l.b16 %v740
    %v2937 = vunpack.c.l.b16 %v741
    %v2938 = vunpack.c.l.b16 %v742
    %v2939 = vunpack.c.l.b16 %v743
    %v2940 = vunpack.c.l.b16 %v744
    %v2941 = vunpack.c.l.b16 %v745
    %v2942 = vunpack.c.l.b16 %v746
    %v2943 = vunpack.c.l.b16 %v747
    %v2944 = vunpack.c.l.b16 %v748
    %v2945 = vunpack.c.l.b16 %v749
    %v2946 = vunpack.c.l.b16 %v750
    %v2947 = vunpack.c.l.b16 %v751
    %v2948 = vunpack.c.l.b16 %v752
    %v2949 = vunpack.c.l.b16 %v753
    %v2950 = vunpack.c.l.b16 %v754
    %v2951 = vunpack.c.l.b16 %v755
    %v2952 = vunpack.c.l.b16 %v756
    %v2953 = vunpack.c.l.b16 %v757
    %v2954 = vunpack.c.l.b16 %v758
    %v2955 = vunpack.c.l.b16 %v759
    %v2956 = vunpack.c.l.b16 %v760
    %v2957 = vunpack.c.l.b16 %v761
    %v2958 = vunpack.c.l.b16 %v762
    %v2959 = vunpack.c.l.b16 %v763
    %v2960 = vunpack.c.l.b16 %v764
    %v2961 = vunpack.c.l.b16 %v765
    %v2962 = vunpack.c.l.b16 %v766
    %v2963 = vunpack.c.l.b16 %v767
    %v2964 = vunpack.c.l.b16 %v768
    %v2965 = vunpack.c.l.b16 %v769
    %v2966 = vunpack.c.l.b16 %v770
    %v2967 = vunpack.c.l.b16 %v771
    %v2968 = vunpack.c.l.b16 %v772
    %v2969 = vunpack.c.l.b16 %v773
    %v2970 = vunpack.c.l.b16 %v774
    %v2971 = vunpack.c.l.b16 %v775
    %v2972 = vunpack.c.l.b16 %v776
    %v2973 = vunpack.c.l.b16 %v777
    %v2974 = vunpack.c.l.b16 %v778
    %v2975 = vunpack.c.l.b16 %v779
    %v2976 = vunpack.c.l.b16 %v780
    %v2977 = vunpack.c.l.b16 %v781
    %v2978 = vunpack.c.l.b16 %v782
    %v2979 = vunpack.c.l.b16 %v783
    %v2980 = vunpack.c.l.b16 %v784
    %v2981 = vunpack.c.l.b16 %v785
    %v2982 = vunpack.c.l.b16 %v786
    %v2983 = vunpack.c.l.b16 %v787
    %v2984 = vunpack.c.l.b16 %v788
    %v2985 = vunpack.c.l.b16 %v789
    %v2986 = vunpack.c.l.b16 %v790
    %v2987 = vunpack.c.l.b16 %v791
    %v2988 = vunpack.c.l.b16 %v792
    %v2989 = vunpack.c.l.b16 %v793
    %v2990 = vunpack.c.l.b16 %v794
    %v2991 = vunpack.c.l.b16 %v795
    %v2992 = vunpack.c.l.b16 %v796
    %v2993 = vunpack.c.l.b16 %v797
    %v2994 = vunpack.c.l.b16 %v798
    %v2995 = vunpack.c.l.b16 %v799
    %v2996 = vunpack.c.l.b16 %v800
    %v2997 = vunpack.c.l.b16 %v801
    %v2998 = vunpack.c.l.b16 %v802
    %v2999 = vunpack.c.l.b16 %v803
    %v3000 = vunpack.c.l.b16 %v804
    %v3001 = vunpack.c.l.b16 %v805
    %v3002 = vunpack.c.l.b16 %v806
    %v3003 = vunpack.c.l.b16 %v807
    %v3004 = vunpack.c.l.b16 %v808
    %v3005 = vunpack.c.l.b16 %v809
    %v3006 = vunpack.c.l.b16 %v810
    %v3007 = vunpack.c.l.b16 %v811
    %v3008 = vunpack.c.l.b16 %v812
    %v3009 = vunpack.c.l.b16 %v813
    %v3010 = vunpack.c.l.b16 %v814
    %v3011 = vunpack.c.l.b16 %v815
    %v3012 = vunpack.c.l.b16 %v816
    %v3013 = vunpack.c.l.b16 %v817
    %v3014 = vunpack.c.l.b16 %v818
    %v3015 = vunpack.c.l.b16 %v819
    %v3016 = vunpack.c.l.b16 %v820
    %v3017 = vunpack.c.l.b16 %v821
    %v3018 = vunpack.c.l.b16 %v822
    %v3019 = vunpack.c.l.b16 %v823
    %v3020 = vunpack.c.l.b16 %v824
    %v3021 = vunpack.c.l.b16 %v825
    %v3022 = vunpack.c.l.b16 %v826
    %v3023 = vunpack.c.l.b16 %v827
    %v3024 = vunpack.c.l.b16 %v828
    %v3025 = vunpack.c.l.b16 %v829
    %v3026 = vunpack.c.l.b16 %v830
    %v3027 = vunpack.c.l.b16 %v831
    %v3028 = vunpack.c.l.b16 %v832
    %v3029 = vunpack.c.l.b16 %v833
    %v3030 = vunpack.c.l.b16 %v834
    %v3031 = vunpack.c.l.b16 %v835
    %v3032 = vunpack.c.l.b16 %v836
    %v3033 = vunpack.c.l.b16 %v837
    %v3034 = vunpack.c.l.b16 %v838
    %v3035 = vunpack.c.l.b16 %v839
    %v3036 = vunpack.c.l.b16 %v840
    %v3037 = vunpack.c.l.b16 %v841
    %v3038 = vunpack.c.l.b16 %v842
    %v3039 = vunpack.c.l.b16 %v843
    %v3040 = vunpack.c.l.b16 %v844
    %v3041 = vunpack.c.l.b16 %v845
    %v3042 = vunpack.c.l.b16 %v846
    %v3043 = vunpack.c.l.b16 %v847
    %v3044 = vunpack.c.l.b16 %v848
    %v3045 = vunpack.c.l.b16 %v849
    %v3046 = vunpack.c.l.b16 %v850
    %v3047 = vunpack.c.l.b16 %v851
    %v3048 = vunpack.c.l.b16 %v852
    %v3049 = vunpack.c.l.b16 %v853
    %v3050 = vunpack.c.l.b16 %v854
    %v3051 = vunpack.c.l.b16 %v855
    %v3052 = vunpack.c.l.b16 %v856
    %v3053 = vunpack.c.l.b16 %v857
    %v3054 = vunpack.c.l.b16 %v858
    %v3055 = vunpack.c.l.b16 %v859
    %v3056 = vunpack.c.l.b16 %v860
    %v3057 = vunpack.c.l.b16 %v861
    %v3058 = vunpack.c.l.b16 %v862
    %v3059 = vunpack.c.l.b16 %v863
    %v3060 = vunpack.c.l.b16 %v864
    %v3061 = vunpack.c.l.b16 %v865
    %v3062 = vunpack.c.l.b16 %v866
    %v3063 = vunpack.c.l.b16 %v867
    %v3064 = vunpack.c.l.b16 %v868
    %v3065 = vunpack.c.l.b16 %v869
    %v3066 = vunpack.c.l.b16 %v870
    %v3067 = vunpack.c.l.b16 %v871
    %v3068 = vunpack.c.l.b16 %v872
    %v3069 = vunpack.c.l.b16 %v873
    %v3070 = vunpack.c.l.b16 %v874
    %v3071 = vunpack.c.l.b16 %v875
    %v3072 = vunpack.c.l.b16 %v876
    %v3073 = vunpack.c.l.b16 %v877
    %v3074 = vunpack.c.l.b16 %v878
    %v3075 = vunpack.c.l.b16 %v879
    %v3076 = vunpack.c.l.b16 %v880
    %v3077 = vunpack.c.l.b16 %v881
    %v3078 = vunpack.c.l.b16 %v882
    %v3079 = vunpack.c.l.b16 %v883
    %v3080 = vunpack.c.l.b16 %v884
    %v3081 = vunpack.c.l.b16 %v885
    %v3082 = vunpack.c.l.b16 %v886
    %v3083 = vunpack.c.l.b16 %v887
    %v3084 = vunpack.c.l.b16 %v888
    %v3085 = vunpack.c.l.b16 %v889
    %v3086 = vunpack.c.l.b16 %v890
    %v3087 = vunpack.c.l.b16 %v891
    %v3088 = vunpack.c.l.b16 %v892
    %v3089 = vunpack.c.l.b16 %v893
    %v3090 = vunpack.c.l.b16 %v894
    %v3091 = vunpack.c.l.b16 %v895
    %v3092 = vunpack.c.l.b16 %v896
    %v3093 = vunpack.c.l.b16 %v897
    %v3094 = vunpack.c.l.b16 %v898
    %v3095 = vunpack.c.l.b16 %v899
    %v3096 = vunpack.c.l.b16 %v900
    %v3097 = vunpack.c.l.b16 %v901
    %v3098 = vunpack.c.l.b16 %v902
    %v3099 = vunpack.c.l.b16 %v903
    %v3100 = vunpack.c.l.b16 %v904
    %v3101 = vunpack.c.l.b16 %v905
    %v3102 = vunpack.c.l.b16 %v906
    %v3103 = vunpack.c.l.b16 %v907
    %v3104 = vunpack.c.l.b16 %v908
    %v3105 = vunpack.c.l.b16 %v909
    %v3106 = vunpack.c.l.b16 %v910
    %v3107 = vunpack.c.l.b16 %v911
    %v3108 = vunpack.c.l.b16 %v912
    %v3109 = vunpack.c.l.b16 %v913
    %v3110 = vunpack.c.l.b16 %v914
    %v3111 = vunpack.c.l.b16 %v915
    %v3112 = vunpack.c.l.b16 %v916
    %v3113 = vunpack.c.l.b16 %v917
    %v3114 = vunpack.c.l.b16 %v918
    %v3115 = vunpack.c.l.b16 %v919
    %v3116 = vunpack.c.l.b16 %v920
    %v3117 = vunpack.c.l.b16 %v921
    %v3118 = vunpack.c.l.b16 %v922
    %v3119 = vunpack.c.l.b16 %v923
    %v3120 = vunpack.c.l.b16 %v924
    %v3121 = vunpack.c.l.b16 %v925
    %v3122 = vunpack.c.l.b16 %v926
    %v3123 = vunpack.c.l.b16 %v927
    %v3124 = vunpack.c.l.b16 %v928
    %v3125 = vunpack.c.l.b16 %v929
    %v3126 = vunpack.c.l.b16 %v930
    %v3127 = vunpack.c.l.b16 %v931
    %v3128 = vunpack.c.l.b16 %v932
    %v3129 = vunpack.c.l.b16 %v933
    %v3130 = vunpack.c.l.b16 %v934
    %v3131 = vunpack.c.l.b16 %v935
    %v3132 = vunpack.c.l.b16 %v936
    %v3133 = vunpack.c.l.b16 %v937
    %v3134 = vunpack.c.l.b16 %v938
    %v3135 = vunpack.c.l.b16 %v939
    %v3136 = vunpack.c.l.b16 %v940
    %v3137 = vunpack.c.l.b16 %v941
    %v3138 = vunpack.c.l.b16 %v942
    %v3139 = vunpack.c.l.b16 %v943
    %v3140 = vunpack.c.l.b16 %v944
    %v3141 = vunpack.c.l.b16 %v945
    %v3142 = vunpack.c.l.b16 %v946
    %v3143 = vunpack.c.l.b16 %v947
    %v3144 = vunpack.c.l.b16 %v948
    %v3145 = vunpack.c.l.b16 %v949
    %v3146 = vunpack.c.l.b16 %v950
    %v3147 = vunpack.c.l.b16 %v951
    %v3148 = vunpack.c.l.b16 %v952
    %v3149 = vunpack.c.l.b16 %v953
    %v3150 = vunpack.c.l.b16 %v954
    %v3151 = vunpack.c.l.b16 %v955
    %v3152 = vunpack.c.l.b16 %v956
    %v3153 = vunpack.c.l.b16 %v957
    %v3154 = vunpack.c.l.b16 %v958
    %v3155 = vunpack.c.l.b16 %v959
    %v3156 = vunpack.c.l.b16 %v960
    %v3157 = vunpack.c.l.b16 %v961
    %v3158 = vunpack.c.l.b16 %v962
    %v3159 = vunpack.c.l.b16 %v963
    %v3160 = vunpack.c.l.b16 %v964
    %v3161 = vunpack.c.l.b16 %v965
    %v3162 = vunpack.c.l.b16 %v966
    %v3163 = vunpack.c.l.b16 %v967
    %v3164 = vunpack.c.l.b16 %v968
    %v3165 = vunpack.c.l.b16 %v969
    %v3166 = vunpack.c.l.b16 %v970
    %v3167 = vunpack.c.l.b16 %v971
    %v3168 = vunpack.c.l.b16 %v972
    %v3169 = vunpack.c.l.b16 %v973
    %v3170 = vunpack.c.l.b16 %v974
    %v3171 = vunpack.c.l.b16 %v975
    %v3172 = vunpack.c.l.b16 %v976
    %v3173 = vunpack.c.l.b16 %v977
    %v3174 = vunpack.c.l.b16 %v978
    %v3175 = vunpack.c.l.b16 %v979
    %v3176 = vunpack.c.l.b16 %v980
    %v3177 = vunpack.c.l.b16 %v981
    %v3178 = vunpack.c.l.b16 %v982
    %v3179 = vunpack.c.l.b16 %v983
    %v3180 = vunpack.c.l.b16 %v984
    %v3181 = vunpack.c.l.b16 %v985
    %v3182 = vunpack.c.l.b16 %v986
    %v3183 = vunpack.c.l.b16 %v987
    %v3184 = vunpack.c.l.b16 %v988
    %v3185 = vunpack.c.l.b16 %v989
    %v3186 = vunpack.c.l.b16 %v990
    %v3187 = vunpack.c.l.b16 %v991
    %v3188 = vunpack.c.l.b16 %v992
    %v3189 = vunpack.c.l.b16 %v993
    %v3190 = vunpack.c.l.b16 %v994
    %v3191 = vunpack.c.l.b16 %v995
    %v3192 = vunpack.c.l.b16 %v996
    %v3193 = vunpack.c.l.b16 %v997
    %v3194 = vunpack.c.l.b16 %v998
    %v3195 = vunpack.c.l.b16 %v999
    %v3196 = vunpack.c.l.b16 %v1000
    %v3197 = vunpack.c.l.b16 %v1001
    %v3198 = vunpack.c.l.b16 %v1002
    %v3199 = vunpack.c.l.b16 %v1003
    %v3200 = vunpack.c.l.b16 %v1004
    %v3201 = vunpack.c.l.b16 %v1005
    %v3202 = vunpack.c.l.b16 %v1006
    %v3203 = vunpack.c.l.b16 %v1007
    %v3204 = vunpack.c.l.b16 %v1008
    %v3205 = vunpack.c.l.b16 %v1009
    %v3206 = vunpack.c.l.b16 %v1010
    %v3207 = vunpack.c.l.b16 %v1011
    %v3208 = vunpack.c.l.b16 %v1012
    %v3209 = vunpack.c.l.b16 %v1013
    %v3210 = vunpack.c.l.b16 %v1014
    %v3211 = vunpack.c.l.b16 %v1015
    %v3212 = vunpack.c.l.b16 %v1016
    %v3213 = vunpack.c.l.b16 %v1017
    %v3214 = vunpack.c.l.b16 %v1018
    %v3215 = vunpack.c.l.b16 %v1019
    %v3216 = vunpack.c.l.b16 %v1020
    %v3217 = vunpack.c.l.b16 %v1021
    %v3218 = vunpack.c.l.b16 %v1022
    %v3219 = vunpack.c.l.b16 %v1023
    %v3220 = vunpack.c.l.b16 %v1024
    %v3221 = vunpack.c.l.b16 %v1025
    %v3222 = vunpack.c.l.b16 %v1026
    %v3223 = vunpack.c.l.b16 %v1027
    %v3224 = vunpack.c.l.b16 %v1028
    %v3225 = vunpack.c.l.b16 %v1029
    %v3226 = vunpack.c.l.b16 %v1030
    %v3227 = vunpack.c.l.b16 %v1031
    %v3228 = vunpack.c.l.b16 %v1032
    %v3229 = vunpack.c.l.b16 %v1033
    %v3230 = vunpack.c.l.b16 %v1034
    %v3231 = vunpack.c.l.b16 %v1035
    %v3232 = vunpack.c.l.b16 %v1036
    %v3233 = vunpack.c.l.b16 %v1037
    %v3234 = vunpack.c.l.b16 %v1038
    %v3235 = vunpack.c.l.b16 %v1039
    %v3236 = vunpack.c.l.b16 %v1040
    %v3237 = vunpack.c.l.b16 %v1041
    %v3238 = vunpack.c.l.b16 %v1042
    %v3239 = vunpack.c.l.b16 %v1043
    %v3240 = vunpack.c.l.b16 %v1044
    %v3241 = vunpack.c.l.b16 %v1045
    %v3242 = vunpack.c.l.b16 %v1046
    %v3243 = vunpack.c.l.b16 %v1047
    %v3244 = vunpack.c.l.b16 %v1048
    %v3245 = vunpack.c.l.b16 %v1049
    %v3246 = vunpack.c.l.b16 %v1050
    %v3247 = vunpack.c.l.b16 %v1051
    %v3248 = vunpack.c.l.b16 %v1052
    %v3249 = vpack.c.b16 %v2226, %v2225
    %v3250 = vpack.c.b16 %v2228, %v2227
    %v3251 = vpack.c.b16 %v2230, %v2229
    %v3252 = vpack.c.b16 %v2232, %v2231
    %v3253 = vpack.c.b16 %v2234, %v2233
    %v3254 = vpack.c.b16 %v2236, %v2235
    %v3255 = vpack.c.b16 %v2238, %v2237
    %v3256 = vpack.c.b16 %v2240, %v2239
    %v3257 = vpack.c.b16 %v2242, %v2241
    %v3258 = vpack.c.b16 %v2244, %v2243
    %v3259 = vpack.c.b16 %v2246, %v2245
    %v3260 = vpack.c.b16 %v2248, %v2247
    %v3261 = vpack.c.b16 %v2250, %v2249
    %v3262 = vpack.c.b16 %v2252, %v2251
    %v3263 = vpack.c.b16 %v2254, %v2253
    %v3264 = vpack.c.b16 %v2256, %v2255
    %v3265 = vpack.c.b16 %v2258, %v2257
    %v3266 = vpack.c.b16 %v2260, %v2259
    %v3267 = vpack.c.b16 %v2262, %v2261
    %v3268 = vpack.c.b16 %v2264, %v2263
    %v3269 = vpack.c.b16 %v2266, %v2265
    %v3270 = vpack.c.b16 %v2268, %v2267
    %v3271 = vpack.c.b16 %v2270, %v2269
    %v3272 = vpack.c.b16 %v2272, %v2271
    %v3273 = vpack.c.b16 %v2274, %v2273
    %v3274 = vpack.c.b16 %v2276, %v2275
    %v3275 = vpack.c.b16 %v2278, %v2277
    %v3276 = vpack.c.b16 %v2280, %v2279
    %v3277 = vpack.c.b16 %v2282, %v2281
    %v3278 = vpack.c.b16 %v2284, %v2283
    %v3279 = vpack.c.b16 %v2286, %v2285
    %v3280 = vpack.c.b16 %v2288, %v2287
    %v3281 = vpack.c.b16 %v2290, %v2289
    %v3282 = vpack.c.b16 %v2292, %v2291
    %v3283 = vpack.c.b16 %v2294, %v2293
    %v3284 = vpack.c.b16 %v2296, %v2295
    %v3285 = vpack.c.b16 %v2298, %v2297
    %v3286 = vpack.c.b16 %v2300, %v2299
    %v3287 = vpack.c.b16 %v2302, %v2301
    %v3288 = vpack.c.b16 %v2304, %v2303
    %v3289 = vpack.c.b16 %v2306, %v2305
    %v3290 = vpack.c.b16 %v2308, %v2307
    %v3291 = vpack.c.b16 %v2310, %v2309
    %v3292 = vpack.c.b16 %v2312, %v2311
    %v3293 = vpack.c.b16 %v2314, %v2313
    %v3294 = vpack.c.b16 %v2316, %v2315
    %v3295 = vpack.c.b16 %v2318, %v2317
    %v3296 = vpack.c.b16 %v2320, %v2319
    %v3297 = vpack.c.b16 %v2322, %v2321
    %v3298 = vpack.c.b16 %v2324, %v2323
    %v3299 = vpack.c.b16 %v2326, %v2325
    %v3300 = vpack.c.b16 %v2328, %v2327
    %v3301 = vpack.c.b16 %v2330, %v2329
    %v3302 = vpack.c.b16 %v2332, %v2331
    %v3303 = vpack.c.b16 %v2334, %v2333
    %v3304 = vpack.c.b16 %v2336, %v2335
    %v3305 = vpack.c.b16 %v2338, %v2337
    %v3306 = vpack.c.b16 %v2340, %v2339
    %v3307 = vpack.c.b16 %v2342, %v2341
    %v3308 = vpack.c.b16 %v2344, %v2343
    %v3309 = vpack.c.b16 %v2346, %v2345
    %v3310 = vpack.c.b16 %v2348, %v2347
    %v3311 = vpack.c.b16 %v2350, %v2349
    %v3312 = vpack.c.b16 %v2352, %v2351
    %v3313 = vpack.c.b16 %v2354, %v2353
    %v3314 = vpack.c.b16 %v2356, %v2355
    %v3315 = vpack.c.b16 %v2358, %v2357
    %v3316 = vpack.c.b16 %v2360, %v2359
    %v3317 = vpack.c.b16 %v2362, %v2361
    %v3318 = vpack.c.b16 %v2364, %v2363
    %v3319 = vpack.c.b16 %v2366, %v2365
    %v3320 = vpack.c.b16 %v2368, %v2367
    %v3321 = vpack.c.b16 %v2370, %v2369
    %v3322 = vpack.c.b16 %v2372, %v2371
    %v3323 = vpack.c.b16 %v2374, %v2373
    %v3324 = vpack.c.b16 %v2376, %v2375
    %v3325 = vpack.c.b16 %v2378, %v2377
    %v3326 = vpack.c.b16 %v2380, %v2379
    %v3327 = vpack.c.b16 %v2382, %v2381
    %v3328 = vpack.c.b16 %v2384, %v2383
    %v3329 = vpack.c.b16 %v2386, %v2385
    %v3330 = vpack.c.b16 %v2388, %v2387
    %v3331 = vpack.c.b16 %v2390, %v2389
    %v3332 = vpack.c.b16 %v2392, %v2391
    %v3333 = vpack.c.b16 %v2394, %v2393
    %v3334 = vpack.c.b16 %v2396, %v2395
    %v3335 = vpack.c.b16 %v2398, %v2397
    %v3336 = vpack.c.b16 %v2400, %v2399
    %v3337 = vpack.c.b16 %v2402, %v2401
    %v3338 = vpack.c.b16 %v2404, %v2403
    %v3339 = vpack.c.b16 %v2406, %v2405
    %v3340 = vpack.c.b16 %v2408, %v2407
    %v3341 = vpack.c.b16 %v2410, %v2409
    %v3342 = vpack.c.b16 %v2412, %v2411
    %v3343 = vpack.c.b16 %v2414, %v2413
    %v3344 = vpack.c.b16 %v2416, %v2415
    %v3345 = vpack.c.b16 %v2418, %v2417
    %v3346 = vpack.c.b16 %v2420, %v2419
    %v3347 = vpack.c.b16 %v2422, %v2421
    %v3348 = vpack.c.b16 %v2424, %v2423
    %v3349 = vpack.c.b16 %v2426, %v2425
    %v3350 = vpack.c.b16 %v2428, %v2427
    %v3351 = vpack.c.b16 %v2430, %v2429
    %v3352 = vpack.c.b16 %v2432, %v2431
    %v3353 = vpack.c.b16 %v2434, %v2433
    %v3354 = vpack.c.b16 %v2436, %v2435
    %v3355 = vpack.c.b16 %v2438, %v2437
    %v3356 = vpack.c.b16 %v2440, %v2439
    %v3357 = vpack.c.b16 %v2442, %v2441
    %v3358 = vpack.c.b16 %v2444, %v2443
    %v3359 = vpack.c.b16 %v2446, %v2445
    %v3360 = vpack.c.b16 %v2448, %v2447
    %v3361 = vpack.c.b16 %v2450, %v2449
    %v3362 = vpack.c.b16 %v2452, %v2451
    %v3363 = vpack.c.b16 %v2454, %v2453
    %v3364 = vpack.c.b16 %v2456, %v2455
    %v3365 = vpack.c.b16 %v2458, %v2457
    %v3366 = vpack.c.b16 %v2460, %v2459
    %v3367 = vpack.c.b16 %v2462, %v2461
    %v3368 = vpack.c.b16 %v2464, %v2463
    %v3369 = vpack.c.b16 %v2466, %v2465
    %v3370 = vpack.c.b16 %v2468, %v2467
    %v3371 = vpack.c.b16 %v2470, %v2469
    %v3372 = vpack.c.b16 %v2472, %v2471
    %v3373 = vpack.c.b16 %v2474, %v2473
    %v3374 = vpack.c.b16 %v2476, %v2475
    %v3375 = vpack.c.b16 %v2478, %v2477
    %v3376 = vpack.c.b16 %v2480, %v2479
    %v3377 = vpack.c.b16 %v2482, %v2481
    %v3378 = vpack.c.b16 %v2484, %v2483
    %v3379 = vpack.c.b16 %v2486, %v2485
    %v3380 = vpack.c.b16 %v2488, %v2487
    %v3381 = vpack.c.b16 %v2490, %v2489
    %v3382 = vpack.c.b16 %v2492, %v2491
    %v3383 = vpack.c.b16 %v2494, %v2493
    %v3384 = vpack.c.b16 %v2496, %v2495
    %v3385 = vpack.c.b16 %v2498, %v2497
    %v3386 = vpack.c.b16 %v2500, %v2499
    %v3387 = vpack.c.b16 %v2502, %v2501
    %v3388 = vpack.c.b16 %v2504, %v2503
    %v3389 = vpack.c.b16 %v2506, %v2505
    %v3390 = vpack.c.b16 %v2508, %v2507
    %v3391 = vpack.c.b16 %v2510, %v2509
    %v3392 = vpack.c.b16 %v2512, %v2511
    %v3393 = vpack.c.b16 %v2514, %v2513
    %v3394 = vpack.c.b16 %v2516, %v2515
    %v3395 = vpack.c.b16 %v2518, %v2517
    %v3396 = vpack.c.b16 %v2520, %v2519
    %v3397 = vpack.c.b16 %v2522, %v2521
    %v3398 = vpack.c.b16 %v2524, %v2523
    %v3399 = vpack.c.b16 %v2526, %v2525
    %v3400 = vpack.c.b16 %v2528, %v2527
    %v3401 = vpack.c.b16 %v2530, %v2529
    %v3402 = vpack.c.b16 %v2532, %v2531
    %v3403 = vpack.c.b16 %v2534, %v2533
    %v3404 = vpack.c.b16 %v2536, %v2535
    %v3405 = vpack.c.b16 %v2538, %v2537
    %v3406 = vpack.c.b16 %v2540, %v2539
    %v3407 = vpack.c.b16 %v2542, %v2541
    %v3408 = vpack.c.b16 %v2544, %v2543
    %v3409 = vpack.c.b16 %v2546, %v2545
    %v3410 = vpack.c.b16 %v2548, %v2547
    %v3411 = vpack.c.b16 %v2550, %v2549
    %v3412 = vpack.c.b16 %v2552, %v2551
    %v3413 = vpack.c.b16 %v2554, %v2553
    %v3414 = vpack.c.b16 %v2556, %v2555
    %v3415 = vpack.c.b16 %v2558, %v2557
    %v3416 = vpack.c.b16 %v2560, %v2559
    %v3417 = vpack.c.b16 %v2562, %v2561
    %v3418 = vpack.c.b16 %v2564, %v2563
    %v3419 = vpack.c.b16 %v2566, %v2565
    %v3420 = vpack.c.b16 %v2568, %v2567
    %v3421 = vpack.c.b16 %v2570, %v2569
    %v3422 = vpack.c.b16 %v2572, %v2571
    %v3423 = vpack.c.b16 %v2574, %v2573
    %v3424 = vpack.c.b16 %v2576, %v2575
    %v3425 = vpack.c.b16 %v2578, %v2577
    %v3426 = vpack.c.b16 %v2580, %v2579
    %v3427 = vpack.c.b16 %v2582, %v2581
    %v3428 = vpack.c.b16 %v2584, %v2583
    %v3429 = vpack.c.b16 %v2586, %v2585
    %v3430 = vpack.c.b16 %v2588, %v2587
    %v3431 = vpack.c.b16 %v2590, %v2589
    %v3432 = vpack.c.b16 %v2592, %v2591
    %v3433 = vpack.c.b16 %v2594, %v2593
    %v3434 = vpack.c.b16 %v2596, %v2595
    %v3435 = vpack.c.b16 %v2598, %v2597
    %v3436 = vpack.c.b16 %v2600, %v2599
    %v3437 = vpack.c.b16 %v2602, %v2601
    %v3438 = vpack.c.b16 %v2604, %v2603
    %v3439 = vpack.c.b16 %v2606, %v2605
    %v3440 = vpack.c.b16 %v2608, %v2607
    %v3441 = vpack.c.b16 %v2610, %v2609
    %v3442 = vpack.c.b16 %v2612, %v2611
    %v3443 = vpack.c.b16 %v2614, %v2613
    %v3444 = vpack.c.b16 %v2616, %v2615
    %v3445 = vpack.c.b16 %v2618, %v2617
    %v3446 = vpack.c.b16 %v2620, %v2619
    %v3447 = vpack.c.b16 %v2622, %v2621
    %v3448 = vpack.c.b16 %v2624, %v2623
    %v3449 = vpack.c.b16 %v2626, %v2625
    %v3450 = vpack.c.b16 %v2628, %v2627
    %v3451 = vpack.c.b16 %v2630, %v2629
    %v3452 = vpack.c.b16 %v2632, %v2631
    %v3453 = vpack.c.b16 %v2634, %v2633
    %v3454 = vpack.c.b16 %v2636, %v2635
    %v3455 = vpack.c.b16 %v2638, %v2637
    %v3456 = vpack.c.b16 %v2640, %v2639
    %v3457 = vpack.c.b16 %v2642, %v2641
    %v3458 = vpack.c.b16 %v2644, %v2643
    %v3459 = vpack.c.b16 %v2646, %v2645
    %v3460 = vpack.c.b16 %v2648, %v2647
    %v3461 = vpack.c.b16 %v2650, %v2649
    %v3462 = vpack.c.b16 %v2652, %v2651
    %v3463 = vpack.c.b16 %v2654, %v2653
    %v3464 = vpack.c.b16 %v2656, %v2655
    %v3465 = vpack.c.b16 %v2658, %v2657
    %v3466 = vpack.c.b16 %v2660, %v2659
    %v3467 = vpack.c.b16 %v2662, %v2661
    %v3468 = vpack.c.b16 %v2664, %v2663
    %v3469 = vpack.c.b16 %v2666, %v2665
    %v3470 = vpack.c.b16 %v2668, %v2667
    %v3471 = vpack.c.b16 %v2670, %v2669
    %v3472 = vpack.c.b16 %v2672, %v2671
    %v3473 = vpack.c.b16 %v2674, %v2673
    %v3474 = vpack.c.b16 %v2676, %v2675
    %v3475 = vpack.c.b16 %v2678, %v2677
    %v3476 = vpack.c.b16 %v2680, %v2679
    %v3477 = vpack.c.b16 %v2682, %v2681
    %v3478 = vpack.c.b16 %v2684, %v2683
    %v3479 = vpack.c.b16 %v2686, %v2685
    %v3480 = vpack.c.b16 %v2688, %v2687
    %v3481 = vpack.c.b16 %v2690, %v2689
    %v3482 = vpack.c.b16 %v2692, %v2691
    %v3483 = vpack.c.b16 %v2694, %v2693
    %v3484 = vpack.c.b16 %v2696, %v2695
    %v3485 = vpack.c.b16 %v2698, %v2697
    %v3486 = vpack.c.b16 %v2700, %v2699
    %v3487 = vpack.c.b16 %v2702, %v2701
    %v3488 = vpack.c.b16 %v2704, %v2703
    %v3489 = vpack.c.b16 %v2706, %v2705
    %v3490 = vpack.c.b16 %v2708, %v2707
    %v3491 = vpack.c.b16 %v2710, %v2709
    %v3492 = vpack.c.b16 %v2712, %v2711
    %v3493 = vpack.c.b16 %v2714, %v2713
    %v3494 = vpack.c.b16 %v2716, %v2715
    %v3495 = vpack.c.b16 %v2718, %v2717
    %v3496 = vpack.c.b16 %v2720, %v2719
    %v3497 = vpack.c.b16 %v2722, %v2721
    %v3498 = vpack.c.b16 %v2724, %v2723
    %v3499 = vpack.c.b16 %v2726, %v2725
    %v3500 = vpack.c.b16 %v2728, %v2727
    %v3501 = vpack.c.b16 %v2730, %v2729
    %v3502 = vpack.c.b16 %v2732, %v2731
    %v3503 = vpack.c.b16 %v2734, %v2733
    %v3504 = vpack.c.b16 %v2736, %v2735
    %v3505 = vpack.c.b16 %v2738, %v2737
    %v3506 = vpack.c.b16 %v2740, %v2739
    %v3507 = vpack.c.b16 %v2742, %v2741
    %v3508 = vpack.c.b16 %v2744, %v2743
    %v3509 = vpack.c.b16 %v2746, %v2745
    %v3510 = vpack.c.b16 %v2748, %v2747
    %v3511 = vpack.c.b16 %v2750, %v2749
    %v3512 = vpack.c.b16 %v2752, %v2751
    %v3513 = vpack.c.b16 %v2754, %v2753
    %v3514 = vpack.c.b16 %v2756, %v2755
    %v3515 = vpack.c.b16 %v2758, %v2757
    %v3516 = vpack.c.b16 %v2760, %v2759
    %v3517 = vpack.c.b16 %v2762, %v2761
    %v3518 = vpack.c.b16 %v2764, %v2763
    %v3519 = vpack.c.b16 %v2766, %v2765
    %v3520 = vpack.c.b16 %v2768, %v2767
    %v3521 = vpack.c.b16 %v2770, %v2769
    %v3522 = vpack.c.b16 %v2772, %v2771
    %v3523 = vpack.c.b16 %v2774, %v2773
    %v3524 = vpack.c.b16 %v2776, %v2775
    %v3525 = vpack.c.b16 %v2778, %v2777
    %v3526 = vpack.c.b16 %v2780, %v2779
    %v3527 = vpack.c.b16 %v2782, %v2781
    %v3528 = vpack.c.b16 %v2784, %v2783
    %v3529 = vpack.c.b16 %v2786, %v2785
    %v3530 = vpack.c.b16 %v2788, %v2787
    %v3531 = vpack.c.b16 %v2790, %v2789
    %v3532 = vpack.c.b16 %v2792, %v2791
    %v3533 = vpack.c.b16 %v2794, %v2793
    %v3534 = vpack.c.b16 %v2796, %v2795
    %v3535 = vpack.c.b16 %v2798, %v2797
    %v3536 = vpack.c.b16 %v2800, %v2799
    %v3537 = vpack.c.b16 %v2802, %v2801
    %v3538 = vpack.c.b16 %v2804, %v2803
    %v3539 = vpack.c.b16 %v2806, %v2805
    %v3540 = vpack.c.b16 %v2808, %v2807
    %v3541 = vpack.c.b16 %v2810, %v2809
    %v3542 = vpack.c.b16 %v2812, %v2811
    %v3543 = vpack.c.b16 %v2814, %v2813
    %v3544 = vpack.c.b16 %v2816, %v2815
    %v3545 = vpack.c.b16 %v2818, %v2817
    %v3546 = vpack.c.b16 %v2820, %v2819
    %v3547 = vpack.c.b16 %v2822, %v2821
    %v3548 = vpack.c.b16 %v2824, %v2823
    %v3549 = vpack.c.b16 %v2826, %v2825
    %v3550 = vpack.c.b16 %v2828, %v2827
    %v3551 = vpack.c.b16 %v2830, %v2829
    %v3552 = vpack.c.b16 %v2832, %v2831
    %v3553 = vpack.c.b16 %v2834, %v2833
    %v3554 = vpack.c.b16 %v2836, %v2835
    %v3555 = vpack.c.b16 %v2838, %v2837
    %v3556 = vpack.c.b16 %v2840, %v2839
    %v3557 = vpack.c.b16 %v2842, %v2841
    %v3558 = vpack.c.b16 %v2844, %v2843
    %v3559 = vpack.c.b16 %v2846, %v2845
    %v3560 = vpack.c.b16 %v2848, %v2847
    %v3561 = vpack.c.b16 %v2850, %v2849
    %v3562 = vpack.c.b16 %v2852, %v2851
    %v3563 = vpack.c.b16 %v2854, %v2853
    %v3564 = vpack.c.b16 %v2856, %v2855
    %v3565 = vpack.c.b16 %v2858, %v2857
    %v3566 = vpack.c.b16 %v2860, %v2859
    %v3567 = vpack.c.b16 %v2862, %v2861
    %v3568 = vpack.c.b16 %v2864, %v2863
    %v3569 = vpack.c.b16 %v2866, %v2865
    %v3570 = vpack.c.b16 %v2868, %v2867
    %v3571 = vpack.c.b16 %v2870, %v2869
    %v3572 = vpack.c.b16 %v2872, %v2871
    %v3573 = vpack.c.b16 %v2874, %v2873
    %v3574 = vpack.c.b16 %v2876, %v2875
    %v3575 = vpack.c.b16 %v2878, %v2877
    %v3576 = vpack.c.b16 %v2880, %v2879
    %v3577 = vpack.c.b16 %v2882, %v2881
    %v3578 = vpack.c.b16 %v2884, %v2883
    %v3579 = vpack.c.b16 %v2886, %v2885
    %v3580 = vpack.c.b16 %v2888, %v2887
    %v3581 = vpack.c.b16 %v2890, %v2889
    %v3582 = vpack.c.b16 %v2892, %v2891
    %v3583 = vpack.c.b16 %v2894, %v2893
    %v3584 = vpack.c.b16 %v2896, %v2895
    %v3585 = vpack.c.b16 %v2898, %v2897
    %v3586 = vpack.c.b16 %v2900, %v2899
    %v3587 = vpack.c.b16 %v2902, %v2901
    %v3588 = vpack.c.b16 %v2904, %v2903
    %v3589 = vpack.c.b16 %v2906, %v2905
    %v3590 = vpack.c.b16 %v2908, %v2907
    %v3591 = vpack.c.b16 %v2910, %v2909
    %v3592 = vpack.c.b16 %v2912, %v2911
    %v3593 = vpack.c.b16 %v2914, %v2913
    %v3594 = vpack.c.b16 %v2916, %v2915
    %v3595 = vpack.c.b16 %v2918, %v2917
    %v3596 = vpack.c.b16 %v2920, %v2919
    %v3597 = vpack.c.b16 %v2922, %v2921
    %v3598 = vpack.c.b16 %v2924, %v2923
    %v3599 = vpack.c.b16 %v2926, %v2925
    %v3600 = vpack.c.b16 %v2928, %v2927
    %v3601 = vpack.c.b16 %v2930, %v2929
    %v3602 = vpack.c.b16 %v2932, %v2931
    %v3603 = vpack.c.b16 %v2934, %v2933
    %v3604 = vpack.c.b16 %v2936, %v2935
    %v3605 = vpack.c.b16 %v2938, %v2937
    %v3606 = vpack.c.b16 %v2940, %v2939
    %v3607 = vpack.c.b16 %v2942, %v2941
    %v3608 = vpack.c.b16 %v2944, %v2943
    %v3609 = vpack.c.b16 %v2946, %v2945
    %v3610 = vpack.c.b16 %v2948, %v2947
    %v3611 = vpack.c.b16 %v2950, %v2949
    %v3612 = vpack.c.b16 %v2952, %v2951
    %v3613 = vpack.c.b16 %v2954, %v2953
    %v3614 = vpack.c.b16 %v2956, %v2955
    %v3615 = vpack.c.b16 %v2958, %v2957
    %v3616 = vpack.c.b16 %v2960, %v2959
    %v3617 = vpack.c.b16 %v2962, %v2961
    %v3618 = vpack.c.b16 %v2964, %v2963
    %v3619 = vpack.c.b16 %v2966, %v2965
    %v3620 = vpack.c.b16 %v2968, %v2967
    %v3621 = vpack.c.b16 %v2970, %v2969
    %v3622 = vpack.c.b16 %v2972, %v2971
    %v3623 = vpack.c.b16 %v2974, %v2973
    %v3624 = vpack.c.b16 %v2976, %v2975
    %v3625 = vpack.c.b16 %v2978, %v2977
    %v3626 = vpack.c.b16 %v2980, %v2979
    %v3627 = vpack.c.b16 %v2982, %v2981
    %v3628 = vpack.c.b16 %v2984, %v2983
    %v3629 = vpack.c.b16 %v2986, %v2985
    %v3630 = vpack.c.b16 %v2988, %v2987
    %v3631 = vpack.c.b16 %v2990, %v2989
    %v3632 = vpack.c.b16 %v2992, %v2991
    %v3633 = vpack.c.b16 %v2994, %v2993
    %v3634 = vpack.c.b16 %v2996, %v2995
    %v3635 = vpack.c.b16 %v2998, %v2997
    %v3636 = vpack.c.b16 %v3000, %v2999
    %v3637 = vpack.c.b16 %v3002, %v3001
    %v3638 = vpack.c.b16 %v3004, %v3003
    %v3639 = vpack.c.b16 %v3006, %v3005
    %v3640 = vpack.c.b16 %v3008, %v3007
    %v3641 = vpack.c.b16 %v3010, %v3009
    %v3642 = vpack.c.b16 %v3012, %v3011
    %v3643 = vpack.c.b16 %v3014, %v3013
    %v3644 = vpack.c.b16 %v3016, %v3015
    %v3645 = vpack.c.b16 %v3018, %v3017
    %v3646 = vpack.c.b16 %v3020, %v3019
    %v3647 = vpack.c.b16 %v3022, %v3021
    %v3648 = vpack.c.b16 %v3024, %v3023
    %v3649 = vpack.c.b16 %v3026, %v3025
    %v3650 = vpack.c.b16 %v3028, %v3027
    %v3651 = vpack.c.b16 %v3030, %v3029
    %v3652 = vpack.c.b16 %v3032, %v3031
    %v3653 = vpack.c.b16 %v3034, %v3033
    %v3654 = vpack.c.b16 %v3036, %v3035
    %v3655 = vpack.c.b16 %v3038, %v3037
    %v3656 = vpack.c.b16 %v3040, %v3039
    %v3657 = vpack.c.b16 %v3042, %v3041
    %v3658 = vpack.c.b16 %v3044, %v3043
    %v3659 = vpack.c.b16 %v3046, %v3045
    %v3660 = vpack.c.b16 %v3048, %v3047
    %v3661 = vpack.c.b16 %v3050, %v3049
    %v3662 = vpack.c.b16 %v3052, %v3051
    %v3663 = vpack.c.b16 %v3054, %v3053
    %v3664 = vpack.c.b16 %v3056, %v3055
    %v3665 = vpack.c.b16 %v3058, %v3057
    %v3666 = vpack.c.b16 %v3060, %v3059
    %v3667 = vpack.c.b16 %v3062, %v3061
    %v3668 = vpack.c.b16 %v3064, %v3063
    %v3669 = vpack.c.b16 %v3066, %v3065
    %v3670 = vpack.c.b16 %v3068, %v3067
    %v3671 = vpack.c.b16 %v3070, %v3069
    %v3672 = vpack.c.b16 %v3072, %v3071
    %v3673 = vpack.c.b16 %v3074, %v3073
    %v3674 = vpack.c.b16 %v3076, %v3075
    %v3675 = vpack.c.b16 %v3078, %v3077
    %v3676 = vpack.c.b16 %v3080, %v3079
    %v3677 = vpack.c.b16 %v3082, %v3081
    %v3678 = vpack.c.b16 %v3084, %v3083
    %v3679 = vpack.c.b16 %v3086, %v3085
    %v3680 = vpack.c.b16 %v3088, %v3087
    %v3681 = vpack.c.b16 %v3090, %v3089
    %v3682 = vpack.c.b16 %v3092, %v3091
    %v3683 = vpack.c.b16 %v3094, %v3093
    %v3684 = vpack.c.b16 %v3096, %v3095
    %v3685 = vpack.c.b16 %v3098, %v3097
    %v3686 = vpack.c.b16 %v3100, %v3099
    %v3687 = vpack.c.b16 %v3102, %v3101
    %v3688 = vpack.c.b16 %v3104, %v3103
    %v3689 = vpack.c.b16 %v3106, %v3105
    %v3690 = vpack.c.b16 %v3108, %v3107
    %v3691 = vpack.c.b16 %v3110, %v3109
    %v3692 = vpack.c.b16 %v3112, %v3111
    %v3693 = vpack.c.b16 %v3114, %v3113
    %v3694 = vpack.c.b16 %v3116, %v3115
    %v3695 = vpack.c.b16 %v3118, %v3117
    %v3696 = vpack.c.b16 %v3120, %v3119
    %v3697 = vpack.c.b16 %v3122, %v3121
    %v3698 = vpack.c.b16 %v3124, %v3123
    %v3699 = vpack.c.b16 %v3126, %v3125
    %v3700 = vpack.c.b16 %v3128, %v3127
    %v3701 = vpack.c.b16 %v3130, %v3129
    %v3702 = vpack.c.b16 %v3132, %v3131
    %v3703 = vpack.c.b16 %v3134, %v3133
    %v3704 = vpack.c.b16 %v3136, %v3135
    %v3705 = vpack.c.b16 %v3138, %v3137
    %v3706 = vpack.c.b16 %v3140, %v3139
    %v3707 = vpack.c.b16 %v3142, %v3141
    %v3708 = vpack.c.b16 %v3144, %v3143
    %v3709 = vpack.c.b16 %v3146, %v3145
    %v3710 = vpack.c.b16 %v3148, %v3147
    %v3711 = vpack.c.b16 %v3150, %v3149
    %v3712 = vpack.c.b16 %v3152, %v3151
    %v3713 = vpack.c.b16 %v3154, %v3153
    %v3714 = vpack.c.b16 %v3156, %v3155
    %v3715 = vpack.c.b16 %v3158, %v3157
    %v3716 = vpack.c.b16 %v3160, %v3159
    %v3717 = vpack.c.b16 %v3162, %v3161
    %v3718 = vpack.c.b16 %v3164, %v3163
    %v3719 = vpack.c.b16 %v3166, %v3165
    %v3720 = vpack.c.b16 %v3168, %v3167
    %v3721 = vpack.c.b16 %v3170, %v3169
    %v3722 = vpack.c.b16 %v3172, %v3171
    %v3723 = vpack.c.b16 %v3174, %v3173
    %v3724 = vpack.c.b16 %v3176, %v3175
    %v3725 = vpack.c.b16 %v3178, %v3177
    %v3726 = vpack.c.b16 %v3180, %v3179
    %v3727 = vpack.c.b16 %v3182, %v3181
    %v3728 = vpack.c.b16 %v3184, %v3183
    %v3729 = vpack.c.b16 %v3186, %v3185
    %v3730 = vpack.c.b16 %v3188, %v3187
    %v3731 = vpack.c.b16 %v3190, %v3189
    %v3732 = vpack.c.b16 %v3192, %v3191
    %v3733 = vpack.c.b16 %v3194, %v3193
    %v3734 = vpack.c.b16 %v3196, %v3195
    %v3735 = vpack.c.b16 %v3198, %v3197
    %v3736 = vpack.c.b16 %v3200, %v3199
    %v3737 = vpack.c.b16 %v3202, %v3201
    %v3738 = vpack.c.b16 %v3204, %v3203
    %v3739 = vpack.c.b16 %v3206, %v3205
    %v3740 = vpack.c.b16 %v3208, %v3207
    %v3741 = vpack.c.b16 %v3210, %v3209
    %v3742 = vpack.c.b16 %v3212, %v3211
    %v3743 = vpack.c.b16 %v3214, %v3213
    %v3744 = vpack.c.b16 %v3216, %v3215
    %v3745 = vpack.c.b16 %v3218, %v3217
    %v3746 = vpack.c.b16 %v3220, %v3219
    %v3747 = vpack.c.b16 %v3222, %v3221
    %v3748 = vpack.c.b16 %v3224, %v3223
    %v3749 = vpack.c.b16 %v3226, %v3225
    %v3750 = vpack.c.b16 %v3228, %v3227
    %v3751 = vpack.c.b16 %v3230, %v3229
    %v3752 = vpack.c.b16 %v3232, %v3231
    %v3753 = vpack.c.b16 %v3234, %v3233
    %v3754 = vpack.c.b16 %v3236, %v3235
    %v3755 = vpack.c.b16 %v3238, %v3237
    %v3756 = vpack.c.b16 %v3240, %v3239
    %v3757 = vpack.c.b16 %v3242, %v3241
    %v3758 = vpack.c.b16 %v3244, %v3243
    %v3759 = vpack.c.b16 %v3246, %v3245
    %v3760 = vpack.c.b16 %v3248, %v3247
    %4273 = vmatpush.bf16.msra.mxu0 %v3256
    %4274 = vmatpush.bf16.msra.mxu0 %v3255
    %4275 = vmatpush.bf16.msra.mxu0 %v3254
    %4276 = vmatpush.bf16.msra.mxu0 %v3253
    %4277 = vmatpush.bf16.msra.mxu0 %v3252
    %4278 = vmatpush.bf16.msra.mxu0 %v3251
    %4279 = vmatpush.bf16.msra.mxu0 %v3250
    %4280 = vmatpush.bf16.msra.mxu0 %v3249
    %4281 = vmatmul.bf16.gmra.mxu0 %v1059
    %v4282 = vpop.f32.mrf.mxu0
    %v4283 = vadd.f32 %v1055, %v4282
    %v4284 = vpop.f32.mrf.mxu0
    %4285 = vdwg.mxu0
    %4286 = vmatpush.bf16.msra.mxu0 %v3264
    %4287 = vmatpush.bf16.msra.mxu0 %v3263
    %4288 = vmatpush.bf16.msra.mxu0 %v3262
    %4289 = vmatpush.bf16.msra.mxu0 %v3261
    %4290 = vmatpush.bf16.msra.mxu0 %v3260
    %4291 = vmatpush.bf16.msra.mxu0 %v3259
    %4292 = vmatpush.bf16.msra.mxu0 %v3258
    %4293 = vmatpush.bf16.msra.mxu0 %v3257
    %4294 = vmatmul.bf16.gmra.mxu0 %v1060
    %v4295 = vpop.f32.mrf.mxu0
    %v4296 = vadd.f32 %v4283, %v4295
    %v4297 = vpop.f32.mrf.mxu0
    %4298 = vdwg.mxu0
    %4299 = vmatpush.bf16.msra.mxu0 %v3272
    %4300 = vmatpush.bf16.msra.mxu0 %v3271
    %4301 = vmatpush.bf16.msra.mxu0 %v3270
    %4302 = vmatpush.bf16.msra.mxu0 %v3269
    %4303 = vmatpush.bf16.msra.mxu0 %v3268
    %4304 = vmatpush.bf16.msra.mxu0 %v3267
    %4305 = vmatpush.bf16.msra.mxu0 %v3266
    %4306 = vmatpush.bf16.msra.mxu0 %v3265
    %4307 = vmatmul.bf16.gmra.mxu0 %v1061
    %v4308 = vpop.f32.mrf.mxu0
    %v4309 = vadd.f32 %v4296, %v4308
    %v4310 = vpop.f32.mrf.mxu0
    %4311 = vdwg.mxu0
    %4312 = vmatpush.bf16.msra.mxu0 %v3280
    %4313 = vmatpush.bf16.msra.mxu0 %v3279
    %4314 = vmatpush.bf16.msra.mxu0 %v3278
    %4315 = vmatpush.bf16.msra.mxu0 %v3277
    %4316 = vmatpush.bf16.msra.mxu0 %v3276
    %4317 = vmatpush.bf16.msra.mxu0 %v3275
    %4318 = vmatpush.bf16.msra.mxu0 %v3274
    %4319 = vmatpush.bf16.msra.mxu0 %v3273
    %4320 = vmatmul.bf16.gmra.mxu0 %v1062
    %v4321 = vpop.f32.mrf.mxu0
    %v4322 = vadd.f32 %v4309, %v4321
    %v4323 = vpop.f32.mrf.mxu0
    %4324 = vdwg.mxu0
    %4325 = vmatpush.bf16.msra.mxu0 %v3288
    %4326 = vmatpush.bf16.msra.mxu0 %v3287
    %4327 = vmatpush.bf16.msra.mxu0 %v3286
    %4328 = vmatpush.bf16.msra.mxu0 %v3285
    %4329 = vmatpush.bf16.msra.mxu0 %v3284
    %4330 = vmatpush.bf16.msra.mxu0 %v3283
    %4331 = vmatpush.bf16.msra.mxu0 %v3282
    %4332 = vmatpush.bf16.msra.mxu0 %v3281
    %4333 = vmatmul.bf16.gmra.mxu0 %v1063
    %v4334 = vpop.f32.mrf.mxu0
    %v4335 = vadd.f32 %v4322, %v4334
    %v4336 = vpop.f32.mrf.mxu0
    %4337 = vdwg.mxu0
    %4338 = vmatpush.bf16.msra.mxu0 %v3296
    %4339 = vmatpush.bf16.msra.mxu0 %v3295
    %4340 = vmatpush.bf16.msra.mxu0 %v3294
    %4341 = vmatpush.bf16.msra.mxu0 %v3293
    %4342 = vmatpush.bf16.msra.mxu0 %v3292
    %4343 = vmatpush.bf16.msra.mxu0 %v3291
    %4344 = vmatpush.bf16.msra.mxu0 %v3290
    %4345 = vmatpush.bf16.msra.mxu0 %v3289
    %4346 = vmatmul.bf16.gmra.mxu0 %v1064
    %v4347 = vpop.f32.mrf.mxu0
    %v4348 = vadd.f32 %v4335, %v4347
    %v4349 = vpop.f32.mrf.mxu0
    %4350 = vdwg.mxu0
    %4351 = vmatpush.bf16.msra.mxu0 %v3304
    %4352 = vmatpush.bf16.msra.mxu0 %v3303
    %4353 = vmatpush.bf16.msra.mxu0 %v3302
    %4354 = vmatpush.bf16.msra.mxu0 %v3301
    %4355 = vmatpush.bf16.msra.mxu0 %v3300
    %4356 = vmatpush.bf16.msra.mxu0 %v3299
    %4357 = vmatpush.bf16.msra.mxu0 %v3298
    %4358 = vmatpush.bf16.msra.mxu0 %v3297
    %4359 = vmatmul.bf16.gmra.mxu0 %v1065
    %v4360 = vpop.f32.mrf.mxu0
    %v4361 = vadd.f32 %v4348, %v4360
    %v4362 = vpop.f32.mrf.mxu0
    %4363 = vdwg.mxu0
    %4364 = vmatpush.bf16.msra.mxu0 %v3312
    %4365 = vmatpush.bf16.msra.mxu0 %v3311
    %4366 = vmatpush.bf16.msra.mxu0 %v3310
    %4367 = vmatpush.bf16.msra.mxu0 %v3309
    %4368 = vmatpush.bf16.msra.mxu0 %v3308
    %4369 = vmatpush.bf16.msra.mxu0 %v3307
    %4370 = vmatpush.bf16.msra.mxu0 %v3306
    %4371 = vmatpush.bf16.msra.mxu0 %v3305
    %4372 = vmatmul.bf16.gmra.mxu0 %v1066
    %v4373 = vpop.f32.mrf.mxu0
    %v4374 = vadd.f32 %v4361, %v4373
    %v4375 = vpop.f32.mrf.mxu0
    %4376 = vdwg.mxu0
    %4377 = vmatpush.bf16.msra.mxu0 %v3320
    %4378 = vmatpush.bf16.msra.mxu0 %v3319
    %4379 = vmatpush.bf16.msra.mxu0 %v3318
    %4380 = vmatpush.bf16.msra.mxu0 %v3317
    %4381 = vmatpush.bf16.msra.mxu0 %v3316
    %4382 = vmatpush.bf16.msra.mxu0 %v3315
    %4383 = vmatpush.bf16.msra.mxu0 %v3314
    %4384 = vmatpush.bf16.msra.mxu0 %v3313
    %4385 = vmatmul.bf16.gmra.mxu0 %v1069
    %v4386 = vpop.f32.mrf.mxu0
    %v4387 = vadd.f32 %v4374, %v4386
    %v4388 = vpop.f32.mrf.mxu0
    %4389 = vdwg.mxu0
    %4390 = vmatpush.bf16.msra.mxu0 %v3328
    %4391 = vmatpush.bf16.msra.mxu0 %v3327
    %4392 = vmatpush.bf16.msra.mxu0 %v3326
    %4393 = vmatpush.bf16.msra.mxu0 %v3325
    %4394 = vmatpush.bf16.msra.mxu0 %v3324
    %4395 = vmatpush.bf16.msra.mxu0 %v3323
    %4396 = vmatpush.bf16.msra.mxu0 %v3322
    %4397 = vmatpush.bf16.msra.mxu0 %v3321
    %4398 = vmatmul.bf16.gmra.mxu0 %v1070
    %v4399 = vpop.f32.mrf.mxu0
    %v4400 = vadd.f32 %v4387, %v4399
    %v4401 = vpop.f32.mrf.mxu0
    %4402 = vdwg.mxu0
    %4403 = vmatpush.bf16.msra.mxu0 %v3336
    %4404 = vmatpush.bf16.msra.mxu0 %v3335
    %4405 = vmatpush.bf16.msra.mxu0 %v3334
    %4406 = vmatpush.bf16.msra.mxu0 %v3333
    %4407 = vmatpush.bf16.msra.mxu0 %v3332
    %4408 = vmatpush.bf16.msra.mxu0 %v3331
    %4409 = vmatpush.bf16.msra.mxu0 %v3330
    %4410 = vmatpush.bf16.msra.mxu0 %v3329
    %4411 = vmatmul.bf16.gmra.mxu0 %v1071
    %v4412 = vpop.f32.mrf.mxu0
    %v4413 = vadd.f32 %v4400, %v4412
    %v4414 = vpop.f32.mrf.mxu0
    %4415 = vdwg.mxu0
    %4416 = vmatpush.bf16.msra.mxu0 %v3344
    %4417 = vmatpush.bf16.msra.mxu0 %v3343
    %4418 = vmatpush.bf16.msra.mxu0 %v3342
    %4419 = vmatpush.bf16.msra.mxu0 %v3341
    %4420 = vmatpush.bf16.msra.mxu0 %v3340
    %4421 = vmatpush.bf16.msra.mxu0 %v3339
    %4422 = vmatpush.bf16.msra.mxu0 %v3338
    %4423 = vmatpush.bf16.msra.mxu0 %v3337
    %4424 = vmatmul.bf16.gmra.mxu0 %v1072
    %v4425 = vpop.f32.mrf.mxu0
    %v4426 = vadd.f32 %v4413, %v4425
    %v4427 = vpop.f32.mrf.mxu0
    %4428 = vdwg.mxu0
    %4429 = vmatpush.bf16.msra.mxu0 %v3352
    %4430 = vmatpush.bf16.msra.mxu0 %v3351
    %4431 = vmatpush.bf16.msra.mxu0 %v3350
    %4432 = vmatpush.bf16.msra.mxu0 %v3349
    %4433 = vmatpush.bf16.msra.mxu0 %v3348
    %4434 = vmatpush.bf16.msra.mxu0 %v3347
    %4435 = vmatpush.bf16.msra.mxu0 %v3346
    %4436 = vmatpush.bf16.msra.mxu0 %v3345
    %4437 = vmatmul.bf16.gmra.mxu0 %v1073
    %v4438 = vpop.f32.mrf.mxu0
    %v4439 = vadd.f32 %v4426, %v4438
    %v4440 = vpop.f32.mrf.mxu0
    %4441 = vdwg.mxu0
    %4442 = vmatpush.bf16.msra.mxu0 %v3360
    %4443 = vmatpush.bf16.msra.mxu0 %v3359
    %4444 = vmatpush.bf16.msra.mxu0 %v3358
    %4445 = vmatpush.bf16.msra.mxu0 %v3357
    %4446 = vmatpush.bf16.msra.mxu0 %v3356
    %4447 = vmatpush.bf16.msra.mxu0 %v3355
    %4448 = vmatpush.bf16.msra.mxu0 %v3354
    %4449 = vmatpush.bf16.msra.mxu0 %v3353
    %4450 = vmatmul.bf16.gmra.mxu0 %v1074
    %v4451 = vpop.f32.mrf.mxu0
    %v4452 = vadd.f32 %v4439, %v4451
    %v4453 = vpop.f32.mrf.mxu0
    %4454 = vdwg.mxu0
    %4455 = vmatpush.bf16.msra.mxu0 %v3368
    %4456 = vmatpush.bf16.msra.mxu0 %v3367
    %4457 = vmatpush.bf16.msra.mxu0 %v3366
    %4458 = vmatpush.bf16.msra.mxu0 %v3365
    %4459 = vmatpush.bf16.msra.mxu0 %v3364
    %4460 = vmatpush.bf16.msra.mxu0 %v3363
    %4461 = vmatpush.bf16.msra.mxu0 %v3362
    %4462 = vmatpush.bf16.msra.mxu0 %v3361
    %4463 = vmatmul.bf16.gmra.mxu0 %v1075
    %v4464 = vpop.f32.mrf.mxu0
    %v4465 = vadd.f32 %v4452, %v4464
    %v4466 = vpop.f32.mrf.mxu0
    %4467 = vdwg.mxu0
    %4468 = vmatpush.bf16.msra.mxu0 %v3376
    %4469 = vmatpush.bf16.msra.mxu0 %v3375
    %4470 = vmatpush.bf16.msra.mxu0 %v3374
    %4471 = vmatpush.bf16.msra.mxu0 %v3373
    %4472 = vmatpush.bf16.msra.mxu0 %v3372
    %4473 = vmatpush.bf16.msra.mxu0 %v3371
    %4474 = vmatpush.bf16.msra.mxu0 %v3370
    %4475 = vmatpush.bf16.msra.mxu0 %v3369
    %4476 = vmatmul.bf16.gmra.mxu0 %v1076
    %v4477 = vpop.f32.mrf.mxu0
    %v4478 = vadd.f32 %v4465, %v4477
    %v4479 = vpop.f32.mrf.mxu0
    %4480 = vdwg.mxu0
    %4481 = vmatpush.bf16.msra.mxu0 %v3384
    %4482 = vmatpush.bf16.msra.mxu0 %v3383
    %4483 = vmatpush.bf16.msra.mxu0 %v3382
    %4484 = vmatpush.bf16.msra.mxu0 %v3381
    %4485 = vmatpush.bf16.msra.mxu0 %v3380
    %4486 = vmatpush.bf16.msra.mxu0 %v3379
    %4487 = vmatpush.bf16.msra.mxu0 %v3378
    %4488 = vmatpush.bf16.msra.mxu0 %v3377
    %4489 = vmatmul.bf16.gmra.mxu0 %v1079
    %v4490 = vpop.f32.mrf.mxu0
    %v4491 = vadd.f32 %v4478, %v4490
    %v4492 = vpop.f32.mrf.mxu0
    %4493 = vdwg.mxu0
    %4494 = vmatpush.bf16.msra.mxu0 %v3392
    %4495 = vmatpush.bf16.msra.mxu0 %v3391
    %4496 = vmatpush.bf16.msra.mxu0 %v3390
    %4497 = vmatpush.bf16.msra.mxu0 %v3389
    %4498 = vmatpush.bf16.msra.mxu0 %v3388
    %4499 = vmatpush.bf16.msra.mxu0 %v3387
    %4500 = vmatpush.bf16.msra.mxu0 %v3386
    %4501 = vmatpush.bf16.msra.mxu0 %v3385
    %4502 = vmatmul.bf16.gmra.mxu0 %v1080
    %v4503 = vpop.f32.mrf.mxu0
    %v4504 = vadd.f32 %v4491, %v4503
    %v4505 = vpop.f32.mrf.mxu0
    %4506 = vdwg.mxu0
    %4507 = vmatpush.bf16.msra.mxu0 %v3400
    %4508 = vmatpush.bf16.msra.mxu0 %v3399
    %4509 = vmatpush.bf16.msra.mxu0 %v3398
    %4510 = vmatpush.bf16.msra.mxu0 %v3397
    %4511 = vmatpush.bf16.msra.mxu0 %v3396
    %4512 = vmatpush.bf16.msra.mxu0 %v3395
    %4513 = vmatpush.bf16.msra.mxu0 %v3394
    %4514 = vmatpush.bf16.msra.mxu0 %v3393
    %4515 = vmatmul.bf16.gmra.mxu0 %v1081
    %v4516 = vpop.f32.mrf.mxu0
    %v4517 = vadd.f32 %v4504, %v4516
    %v4518 = vpop.f32.mrf.mxu0
    %4519 = vdwg.mxu0
    %4520 = vmatpush.bf16.msra.mxu0 %v3408
    %4521 = vmatpush.bf16.msra.mxu0 %v3407
    %4522 = vmatpush.bf16.msra.mxu0 %v3406
    %4523 = vmatpush.bf16.msra.mxu0 %v3405
    %4524 = vmatpush.bf16.msra.mxu0 %v3404
    %4525 = vmatpush.bf16.msra.mxu0 %v3403
    %4526 = vmatpush.bf16.msra.mxu0 %v3402
    %4527 = vmatpush.bf16.msra.mxu0 %v3401
    %4528 = vmatmul.bf16.gmra.mxu0 %v1082
    %v4529 = vpop.f32.mrf.mxu0
    %v4530 = vadd.f32 %v4517, %v4529
    %v4531 = vpop.f32.mrf.mxu0
    %4532 = vdwg.mxu0
    %4533 = vmatpush.bf16.msra.mxu0 %v3416
    %4534 = vmatpush.bf16.msra.mxu0 %v3415
    %4535 = vmatpush.bf16.msra.mxu0 %v3414
    %4536 = vmatpush.bf16.msra.mxu0 %v3413
    %4537 = vmatpush.bf16.msra.mxu0 %v3412
    %4538 = vmatpush.bf16.msra.mxu0 %v3411
    %4539 = vmatpush.bf16.msra.mxu0 %v3410
    %4540 = vmatpush.bf16.msra.mxu0 %v3409
    %4541 = vmatmul.bf16.gmra.mxu0 %v1083
    %v4542 = vpop.f32.mrf.mxu0
    %v4543 = vadd.f32 %v4530, %v4542
    %v4544 = vpop.f32.mrf.mxu0
    %4545 = vdwg.mxu0
    %4546 = vmatpush.bf16.msra.mxu0 %v3424
    %4547 = vmatpush.bf16.msra.mxu0 %v3423
    %4548 = vmatpush.bf16.msra.mxu0 %v3422
    %4549 = vmatpush.bf16.msra.mxu0 %v3421
    %4550 = vmatpush.bf16.msra.mxu0 %v3420
    %4551 = vmatpush.bf16.msra.mxu0 %v3419
    %4552 = vmatpush.bf16.msra.mxu0 %v3418
    %4553 = vmatpush.bf16.msra.mxu0 %v3417
    %4554 = vmatmul.bf16.gmra.mxu0 %v1084
    %v4555 = vpop.f32.mrf.mxu0
    %v4556 = vadd.f32 %v4543, %v4555
    %v4557 = vpop.f32.mrf.mxu0
    %4558 = vdwg.mxu0
    %4559 = vmatpush.bf16.msra.mxu0 %v3432
    %4560 = vmatpush.bf16.msra.mxu0 %v3431
    %4561 = vmatpush.bf16.msra.mxu0 %v3430
    %4562 = vmatpush.bf16.msra.mxu0 %v3429
    %4563 = vmatpush.bf16.msra.mxu0 %v3428
    %4564 = vmatpush.bf16.msra.mxu0 %v3427
    %4565 = vmatpush.bf16.msra.mxu0 %v3426
    %4566 = vmatpush.bf16.msra.mxu0 %v3425
    %4567 = vmatmul.bf16.gmra.mxu0 %v1085
    %v4568 = vpop.f32.mrf.mxu0
    %v4569 = vadd.f32 %v4556, %v4568
    %v4570 = vpop.f32.mrf.mxu0
    %4571 = vdwg.mxu0
    %4572 = vmatpush.bf16.msra.mxu0 %v3440
    %4573 = vmatpush.bf16.msra.mxu0 %v3439
    %4574 = vmatpush.bf16.msra.mxu0 %v3438
    %4575 = vmatpush.bf16.msra.mxu0 %v3437
    %4576 = vmatpush.bf16.msra.mxu0 %v3436
    %4577 = vmatpush.bf16.msra.mxu0 %v3435
    %4578 = vmatpush.bf16.msra.mxu0 %v3434
    %4579 = vmatpush.bf16.msra.mxu0 %v3433
    %4580 = vmatmul.bf16.gmra.mxu0 %v1086
    %v4581 = vpop.f32.mrf.mxu0
    %v4582 = vadd.f32 %v4569, %v4581
    %v4583 = vpop.f32.mrf.mxu0
    %4584 = vdwg.mxu0
    %4585 = vmatpush.bf16.msra.mxu0 %v3448
    %4586 = vmatpush.bf16.msra.mxu0 %v3447
    %4587 = vmatpush.bf16.msra.mxu0 %v3446
    %4588 = vmatpush.bf16.msra.mxu0 %v3445
    %4589 = vmatpush.bf16.msra.mxu0 %v3444
    %4590 = vmatpush.bf16.msra.mxu0 %v3443
    %4591 = vmatpush.bf16.msra.mxu0 %v3442
    %4592 = vmatpush.bf16.msra.mxu0 %v3441
    %4593 = vmatmul.bf16.gmra.mxu0 %v1089
    %v4594 = vpop.f32.mrf.mxu0
    %v4595 = vadd.f32 %v4582, %v4594
    %v4596 = vpop.f32.mrf.mxu0
    %4597 = vdwg.mxu0
    %4598 = vmatpush.bf16.msra.mxu0 %v3456
    %4599 = vmatpush.bf16.msra.mxu0 %v3455
    %4600 = vmatpush.bf16.msra.mxu0 %v3454
    %4601 = vmatpush.bf16.msra.mxu0 %v3453
    %4602 = vmatpush.bf16.msra.mxu0 %v3452
    %4603 = vmatpush.bf16.msra.mxu0 %v3451
    %4604 = vmatpush.bf16.msra.mxu0 %v3450
    %4605 = vmatpush.bf16.msra.mxu0 %v3449
    %4606 = vmatmul.bf16.gmra.mxu0 %v1090
    %v4607 = vpop.f32.mrf.mxu0
    %v4608 = vadd.f32 %v4595, %v4607
    %v4609 = vpop.f32.mrf.mxu0
    %4610 = vdwg.mxu0
    %4611 = vmatpush.bf16.msra.mxu0 %v3464
    %4612 = vmatpush.bf16.msra.mxu0 %v3463
    %4613 = vmatpush.bf16.msra.mxu0 %v3462
    %4614 = vmatpush.bf16.msra.mxu0 %v3461
    %4615 = vmatpush.bf16.msra.mxu0 %v3460
    %4616 = vmatpush.bf16.msra.mxu0 %v3459
    %4617 = vmatpush.bf16.msra.mxu0 %v3458
    %4618 = vmatpush.bf16.msra.mxu0 %v3457
    %4619 = vmatmul.bf16.gmra.mxu0 %v1091
    %v4620 = vpop.f32.mrf.mxu0
    %v4621 = vadd.f32 %v4608, %v4620
    %v4622 = vpop.f32.mrf.mxu0
    %4623 = vdwg.mxu0
    %4624 = vmatpush.bf16.msra.mxu0 %v3472
    %4625 = vmatpush.bf16.msra.mxu0 %v3471
    %4626 = vmatpush.bf16.msra.mxu0 %v3470
    %4627 = vmatpush.bf16.msra.mxu0 %v3469
    %4628 = vmatpush.bf16.msra.mxu0 %v3468
    %4629 = vmatpush.bf16.msra.mxu0 %v3467
    %4630 = vmatpush.bf16.msra.mxu0 %v3466
    %4631 = vmatpush.bf16.msra.mxu0 %v3465
    %4632 = vmatmul.bf16.gmra.mxu0 %v1092
    %v4633 = vpop.f32.mrf.mxu0
    %v4634 = vadd.f32 %v4621, %v4633
    %v4635 = vpop.f32.mrf.mxu0
    %4636 = vdwg.mxu0
    %4637 = vmatpush.bf16.msra.mxu0 %v3480
    %4638 = vmatpush.bf16.msra.mxu0 %v3479
    %4639 = vmatpush.bf16.msra.mxu0 %v3478
    %4640 = vmatpush.bf16.msra.mxu0 %v3477
    %4641 = vmatpush.bf16.msra.mxu0 %v3476
    %4642 = vmatpush.bf16.msra.mxu0 %v3475
    %4643 = vmatpush.bf16.msra.mxu0 %v3474
    %4644 = vmatpush.bf16.msra.mxu0 %v3473
    %4645 = vmatmul.bf16.gmra.mxu0 %v1093
    %v4646 = vpop.f32.mrf.mxu0
    %v4647 = vadd.f32 %v4634, %v4646
    %v4648 = vpop.f32.mrf.mxu0
    %4649 = vdwg.mxu0
    %4650 = vmatpush.bf16.msra.mxu0 %v3488
    %4651 = vmatpush.bf16.msra.mxu0 %v3487
    %4652 = vmatpush.bf16.msra.mxu0 %v3486
    %4653 = vmatpush.bf16.msra.mxu0 %v3485
    %4654 = vmatpush.bf16.msra.mxu0 %v3484
    %4655 = vmatpush.bf16.msra.mxu0 %v3483
    %4656 = vmatpush.bf16.msra.mxu0 %v3482
    %4657 = vmatpush.bf16.msra.mxu0 %v3481
    %4658 = vmatmul.bf16.gmra.mxu0 %v1094
    %v4659 = vpop.f32.mrf.mxu0
    %v4660 = vadd.f32 %v4647, %v4659
    %v4661 = vpop.f32.mrf.mxu0
    %4662 = vdwg.mxu0
    %4663 = vmatpush.bf16.msra.mxu0 %v3496
    %4664 = vmatpush.bf16.msra.mxu0 %v3495
    %4665 = vmatpush.bf16.msra.mxu0 %v3494
    %4666 = vmatpush.bf16.msra.mxu0 %v3493
    %4667 = vmatpush.bf16.msra.mxu0 %v3492
    %4668 = vmatpush.bf16.msra.mxu0 %v3491
    %4669 = vmatpush.bf16.msra.mxu0 %v3490
    %4670 = vmatpush.bf16.msra.mxu0 %v3489
    %4671 = vmatmul.bf16.gmra.mxu0 %v1095
    %v4672 = vpop.f32.mrf.mxu0
    %v4673 = vadd.f32 %v4660, %v4672
    %v4674 = vpop.f32.mrf.mxu0
    %4675 = vdwg.mxu0
    %4676 = vmatpush.bf16.msra.mxu0 %v3504
    %4677 = vmatpush.bf16.msra.mxu0 %v3503
    %4678 = vmatpush.bf16.msra.mxu0 %v3502
    %4679 = vmatpush.bf16.msra.mxu0 %v3501
    %4680 = vmatpush.bf16.msra.mxu0 %v3500
    %4681 = vmatpush.bf16.msra.mxu0 %v3499
    %4682 = vmatpush.bf16.msra.mxu0 %v3498
    %4683 = vmatpush.bf16.msra.mxu0 %v3497
    %4684 = vmatmul.bf16.gmra.mxu0 %v1096
    %v4685 = vpop.f32.mrf.mxu0
    %v4686 = vadd.f32 %v4673, %v4685
    %v4687 = vpop.f32.mrf.mxu0
    %4688 = vdwg.mxu0
    %4689 = vmatpush.bf16.msra.mxu0 %v3512
    %4690 = vmatpush.bf16.msra.mxu0 %v3511
    %4691 = vmatpush.bf16.msra.mxu0 %v3510
    %4692 = vmatpush.bf16.msra.mxu0 %v3509
    %4693 = vmatpush.bf16.msra.mxu0 %v3508
    %4694 = vmatpush.bf16.msra.mxu0 %v3507
    %4695 = vmatpush.bf16.msra.mxu0 %v3506
    %4696 = vmatpush.bf16.msra.mxu0 %v3505
    %4697 = vmatmul.bf16.gmra.mxu0 %v1099
    %v4698 = vpop.f32.mrf.mxu0
    %v4699 = vadd.f32 %v4686, %v4698
    %v4700 = vpop.f32.mrf.mxu0
    %4701 = vdwg.mxu0
    %4702 = vmatpush.bf16.msra.mxu0 %v3520
    %4703 = vmatpush.bf16.msra.mxu0 %v3519
    %4704 = vmatpush.bf16.msra.mxu0 %v3518
    %4705 = vmatpush.bf16.msra.mxu0 %v3517
    %4706 = vmatpush.bf16.msra.mxu0 %v3516
    %4707 = vmatpush.bf16.msra.mxu0 %v3515
    %4708 = vmatpush.bf16.msra.mxu0 %v3514
    %4709 = vmatpush.bf16.msra.mxu0 %v3513
    %4710 = vmatmul.bf16.gmra.mxu0 %v1100
    %v4711 = vpop.f32.mrf.mxu0
    %v4712 = vadd.f32 %v4699, %v4711
    %v4713 = vpop.f32.mrf.mxu0
    %4714 = vdwg.mxu0
    %4715 = vmatpush.bf16.msra.mxu0 %v3528
    %4716 = vmatpush.bf16.msra.mxu0 %v3527
    %4717 = vmatpush.bf16.msra.mxu0 %v3526
    %4718 = vmatpush.bf16.msra.mxu0 %v3525
    %4719 = vmatpush.bf16.msra.mxu0 %v3524
    %4720 = vmatpush.bf16.msra.mxu0 %v3523
    %4721 = vmatpush.bf16.msra.mxu0 %v3522
    %4722 = vmatpush.bf16.msra.mxu0 %v3521
    %4723 = vmatmul.bf16.gmra.mxu0 %v1101
    %v4724 = vpop.f32.mrf.mxu0
    %v4725 = vadd.f32 %v4712, %v4724
    %v4726 = vpop.f32.mrf.mxu0
    %4727 = vdwg.mxu0
    %4728 = vmatpush.bf16.msra.mxu0 %v3536
    %4729 = vmatpush.bf16.msra.mxu0 %v3535
    %4730 = vmatpush.bf16.msra.mxu0 %v3534
    %4731 = vmatpush.bf16.msra.mxu0 %v3533
    %4732 = vmatpush.bf16.msra.mxu0 %v3532
    %4733 = vmatpush.bf16.msra.mxu0 %v3531
    %4734 = vmatpush.bf16.msra.mxu0 %v3530
    %4735 = vmatpush.bf16.msra.mxu0 %v3529
    %4736 = vmatmul.bf16.gmra.mxu0 %v1102
    %v4737 = vpop.f32.mrf.mxu0
    %v4738 = vadd.f32 %v4725, %v4737
    %v4739 = vpop.f32.mrf.mxu0
    %4740 = vdwg.mxu0
    %4741 = vmatpush.bf16.msra.mxu0 %v3544
    %4742 = vmatpush.bf16.msra.mxu0 %v3543
    %4743 = vmatpush.bf16.msra.mxu0 %v3542
    %4744 = vmatpush.bf16.msra.mxu0 %v3541
    %4745 = vmatpush.bf16.msra.mxu0 %v3540
    %4746 = vmatpush.bf16.msra.mxu0 %v3539
    %4747 = vmatpush.bf16.msra.mxu0 %v3538
    %4748 = vmatpush.bf16.msra.mxu0 %v3537
    %4749 = vmatmul.bf16.gmra.mxu0 %v1103
    %v4750 = vpop.f32.mrf.mxu0
    %v4751 = vadd.f32 %v4738, %v4750
    %v4752 = vpop.f32.mrf.mxu0
    %4753 = vdwg.mxu0
    %4754 = vmatpush.bf16.msra.mxu0 %v3552
    %4755 = vmatpush.bf16.msra.mxu0 %v3551
    %4756 = vmatpush.bf16.msra.mxu0 %v3550
    %4757 = vmatpush.bf16.msra.mxu0 %v3549
    %4758 = vmatpush.bf16.msra.mxu0 %v3548
    %4759 = vmatpush.bf16.msra.mxu0 %v3547
    %4760 = vmatpush.bf16.msra.mxu0 %v3546
    %4761 = vmatpush.bf16.msra.mxu0 %v3545
    %4762 = vmatmul.bf16.gmra.mxu0 %v1104
    %v4763 = vpop.f32.mrf.mxu0
    %v4764 = vadd.f32 %v4751, %v4763
    %v4765 = vpop.f32.mrf.mxu0
    %4766 = vdwg.mxu0
    %4767 = vmatpush.bf16.msra.mxu0 %v3560
    %4768 = vmatpush.bf16.msra.mxu0 %v3559
    %4769 = vmatpush.bf16.msra.mxu0 %v3558
    %4770 = vmatpush.bf16.msra.mxu0 %v3557
    %4771 = vmatpush.bf16.msra.mxu0 %v3556
    %4772 = vmatpush.bf16.msra.mxu0 %v3555
    %4773 = vmatpush.bf16.msra.mxu0 %v3554
    %4774 = vmatpush.bf16.msra.mxu0 %v3553
    %4775 = vmatmul.bf16.gmra.mxu0 %v1105
    %v4776 = vpop.f32.mrf.mxu0
    %v4777 = vadd.f32 %v4764, %v4776
    %v4778 = vpop.f32.mrf.mxu0
    %4779 = vdwg.mxu0
    %4780 = vmatpush.bf16.msra.mxu0 %v3568
    %4781 = vmatpush.bf16.msra.mxu0 %v3567
    %4782 = vmatpush.bf16.msra.mxu0 %v3566
    %4783 = vmatpush.bf16.msra.mxu0 %v3565
    %4784 = vmatpush.bf16.msra.mxu0 %v3564
    %4785 = vmatpush.bf16.msra.mxu0 %v3563
    %4786 = vmatpush.bf16.msra.mxu0 %v3562
    %4787 = vmatpush.bf16.msra.mxu0 %v3561
    %4788 = vmatmul.bf16.gmra.mxu0 %v1106
    %v4789 = vpop.f32.mrf.mxu0
    %v4790 = vadd.f32 %v4777, %v4789
    %v4791 = vpop.f32.mrf.mxu0
    %4792 = vdwg.mxu0
    %4793 = vmatpush.bf16.msra.mxu0 %v3576
    %4794 = vmatpush.bf16.msra.mxu0 %v3575
    %4795 = vmatpush.bf16.msra.mxu0 %v3574
    %4796 = vmatpush.bf16.msra.mxu0 %v3573
    %4797 = vmatpush.bf16.msra.mxu0 %v3572
    %4798 = vmatpush.bf16.msra.mxu0 %v3571
    %4799 = vmatpush.bf16.msra.mxu0 %v3570
    %4800 = vmatpush.bf16.msra.mxu0 %v3569
    %4801 = vmatmul.bf16.gmra.mxu0 %v1109
    %v4802 = vpop.f32.mrf.mxu0
    %v4803 = vadd.f32 %v4790, %v4802
    %v4804 = vpop.f32.mrf.mxu0
    %4805 = vdwg.mxu0
    %4806 = vmatpush.bf16.msra.mxu0 %v3584
    %4807 = vmatpush.bf16.msra.mxu0 %v3583
    %4808 = vmatpush.bf16.msra.mxu0 %v3582
    %4809 = vmatpush.bf16.msra.mxu0 %v3581
    %4810 = vmatpush.bf16.msra.mxu0 %v3580
    %4811 = vmatpush.bf16.msra.mxu0 %v3579
    %4812 = vmatpush.bf16.msra.mxu0 %v3578
    %4813 = vmatpush.bf16.msra.mxu0 %v3577
    %4814 = vmatmul.bf16.gmra.mxu0 %v1110
    %v4815 = vpop.f32.mrf.mxu0
    %v4816 = vadd.f32 %v4803, %v4815
    %v4817 = vpop.f32.mrf.mxu0
    %4818 = vdwg.mxu0
    %4819 = vmatpush.bf16.msra.mxu0 %v3592
    %4820 = vmatpush.bf16.msra.mxu0 %v3591
    %4821 = vmatpush.bf16.msra.mxu0 %v3590
    %4822 = vmatpush.bf16.msra.mxu0 %v3589
    %4823 = vmatpush.bf16.msra.mxu0 %v3588
    %4824 = vmatpush.bf16.msra.mxu0 %v3587
    %4825 = vmatpush.bf16.msra.mxu0 %v3586
    %4826 = vmatpush.bf16.msra.mxu0 %v3585
    %4827 = vmatmul.bf16.gmra.mxu0 %v1111
    %v4828 = vpop.f32.mrf.mxu0
    %v4829 = vadd.f32 %v4816, %v4828
    %v4830 = vpop.f32.mrf.mxu0
    %4831 = vdwg.mxu0
    %4832 = vmatpush.bf16.msra.mxu0 %v3600
    %4833 = vmatpush.bf16.msra.mxu0 %v3599
    %4834 = vmatpush.bf16.msra.mxu0 %v3598
    %4835 = vmatpush.bf16.msra.mxu0 %v3597
    %4836 = vmatpush.bf16.msra.mxu0 %v3596
    %4837 = vmatpush.bf16.msra.mxu0 %v3595
    %4838 = vmatpush.bf16.msra.mxu0 %v3594
    %4839 = vmatpush.bf16.msra.mxu0 %v3593
    %4840 = vmatmul.bf16.gmra.mxu0 %v1112
    %v4841 = vpop.f32.mrf.mxu0
    %v4842 = vadd.f32 %v4829, %v4841
    %v4843 = vpop.f32.mrf.mxu0
    %4844 = vdwg.mxu0
    %4845 = vmatpush.bf16.msra.mxu0 %v3608
    %4846 = vmatpush.bf16.msra.mxu0 %v3607
    %4847 = vmatpush.bf16.msra.mxu0 %v3606
    %4848 = vmatpush.bf16.msra.mxu0 %v3605
    %4849 = vmatpush.bf16.msra.mxu0 %v3604
    %4850 = vmatpush.bf16.msra.mxu0 %v3603
    %4851 = vmatpush.bf16.msra.mxu0 %v3602
    %4852 = vmatpush.bf16.msra.mxu0 %v3601
    %4853 = vmatmul.bf16.gmra.mxu0 %v1113
    %v4854 = vpop.f32.mrf.mxu0
    %v4855 = vadd.f32 %v4842, %v4854
    %v4856 = vpop.f32.mrf.mxu0
    %4857 = vdwg.mxu0
    %4858 = vmatpush.bf16.msra.mxu0 %v3616
    %4859 = vmatpush.bf16.msra.mxu0 %v3615
    %4860 = vmatpush.bf16.msra.mxu0 %v3614
    %4861 = vmatpush.bf16.msra.mxu0 %v3613
    %4862 = vmatpush.bf16.msra.mxu0 %v3612
    %4863 = vmatpush.bf16.msra.mxu0 %v3611
    %4864 = vmatpush.bf16.msra.mxu0 %v3610
    %4865 = vmatpush.bf16.msra.mxu0 %v3609
    %4866 = vmatmul.bf16.gmra.mxu0 %v1114
    %v4867 = vpop.f32.mrf.mxu0
    %v4868 = vadd.f32 %v4855, %v4867
    %v4869 = vpop.f32.mrf.mxu0
    %4870 = vdwg.mxu0
    %4871 = vmatpush.bf16.msra.mxu0 %v3624
    %4872 = vmatpush.bf16.msra.mxu0 %v3623
    %4873 = vmatpush.bf16.msra.mxu0 %v3622
    %4874 = vmatpush.bf16.msra.mxu0 %v3621
    %4875 = vmatpush.bf16.msra.mxu0 %v3620
    %4876 = vmatpush.bf16.msra.mxu0 %v3619
    %4877 = vmatpush.bf16.msra.mxu0 %v3618
    %4878 = vmatpush.bf16.msra.mxu0 %v3617
    %4879 = vmatmul.bf16.gmra.mxu0 %v1115
    %v4880 = vpop.f32.mrf.mxu0
    %v4881 = vadd.f32 %v4868, %v4880
    %v4882 = vpop.f32.mrf.mxu0
    %4883 = vdwg.mxu0
    %4884 = vmatpush.bf16.msra.mxu0 %v3632
    %4885 = vmatpush.bf16.msra.mxu0 %v3631
    %4886 = vmatpush.bf16.msra.mxu0 %v3630
    %4887 = vmatpush.bf16.msra.mxu0 %v3629
    %4888 = vmatpush.bf16.msra.mxu0 %v3628
    %4889 = vmatpush.bf16.msra.mxu0 %v3627
    %4890 = vmatpush.bf16.msra.mxu0 %v3626
    %4891 = vmatpush.bf16.msra.mxu0 %v3625
    %4892 = vmatmul.bf16.gmra.mxu0 %v1116
    %v4893 = vpop.f32.mrf.mxu0
    %v4894 = vadd.f32 %v4881, %v4893
    %v4895 = vpop.f32.mrf.mxu0
    %4896 = vdwg.mxu0
    %4897 = vmatpush.bf16.msra.mxu0 %v3640
    %4898 = vmatpush.bf16.msra.mxu0 %v3639
    %4899 = vmatpush.bf16.msra.mxu0 %v3638
    %4900 = vmatpush.bf16.msra.mxu0 %v3637
    %4901 = vmatpush.bf16.msra.mxu0 %v3636
    %4902 = vmatpush.bf16.msra.mxu0 %v3635
    %4903 = vmatpush.bf16.msra.mxu0 %v3634
    %4904 = vmatpush.bf16.msra.mxu0 %v3633
    %4905 = vmatmul.bf16.gmra.mxu0 %v1119
    %v4906 = vpop.f32.mrf.mxu0
    %v4907 = vadd.f32 %v4894, %v4906
    %v4908 = vpop.f32.mrf.mxu0
    %4909 = vdwg.mxu0
    %4910 = vmatpush.bf16.msra.mxu0 %v3648
    %4911 = vmatpush.bf16.msra.mxu0 %v3647
    %4912 = vmatpush.bf16.msra.mxu0 %v3646
    %4913 = vmatpush.bf16.msra.mxu0 %v3645
    %4914 = vmatpush.bf16.msra.mxu0 %v3644
    %4915 = vmatpush.bf16.msra.mxu0 %v3643
    %4916 = vmatpush.bf16.msra.mxu0 %v3642
    %4917 = vmatpush.bf16.msra.mxu0 %v3641
    %4918 = vmatmul.bf16.gmra.mxu0 %v1120
    %v4919 = vpop.f32.mrf.mxu0
    %v4920 = vadd.f32 %v4907, %v4919
    %v4921 = vpop.f32.mrf.mxu0
    %4922 = vdwg.mxu0
    %4923 = vmatpush.bf16.msra.mxu0 %v3656
    %4924 = vmatpush.bf16.msra.mxu0 %v3655
    %4925 = vmatpush.bf16.msra.mxu0 %v3654
    %4926 = vmatpush.bf16.msra.mxu0 %v3653
    %4927 = vmatpush.bf16.msra.mxu0 %v3652
    %4928 = vmatpush.bf16.msra.mxu0 %v3651
    %4929 = vmatpush.bf16.msra.mxu0 %v3650
    %4930 = vmatpush.bf16.msra.mxu0 %v3649
    %4931 = vmatmul.bf16.gmra.mxu0 %v1121
    %v4932 = vpop.f32.mrf.mxu0
    %v4933 = vadd.f32 %v4920, %v4932
    %v4934 = vpop.f32.mrf.mxu0
    %4935 = vdwg.mxu0
    %4936 = vmatpush.bf16.msra.mxu0 %v3664
    %4937 = vmatpush.bf16.msra.mxu0 %v3663
    %4938 = vmatpush.bf16.msra.mxu0 %v3662
    %4939 = vmatpush.bf16.msra.mxu0 %v3661
    %4940 = vmatpush.bf16.msra.mxu0 %v3660
    %4941 = vmatpush.bf16.msra.mxu0 %v3659
    %4942 = vmatpush.bf16.msra.mxu0 %v3658
    %4943 = vmatpush.bf16.msra.mxu0 %v3657
    %4944 = vmatmul.bf16.gmra.mxu0 %v1122
    %v4945 = vpop.f32.mrf.mxu0
    %v4946 = vadd.f32 %v4933, %v4945
    %v4947 = vpop.f32.mrf.mxu0
    %4948 = vdwg.mxu0
    %4949 = vmatpush.bf16.msra.mxu0 %v3672
    %4950 = vmatpush.bf16.msra.mxu0 %v3671
    %4951 = vmatpush.bf16.msra.mxu0 %v3670
    %4952 = vmatpush.bf16.msra.mxu0 %v3669
    %4953 = vmatpush.bf16.msra.mxu0 %v3668
    %4954 = vmatpush.bf16.msra.mxu0 %v3667
    %4955 = vmatpush.bf16.msra.mxu0 %v3666
    %4956 = vmatpush.bf16.msra.mxu0 %v3665
    %4957 = vmatmul.bf16.gmra.mxu0 %v1123
    %v4958 = vpop.f32.mrf.mxu0
    %v4959 = vadd.f32 %v4946, %v4958
    %v4960 = vpop.f32.mrf.mxu0
    %4961 = vdwg.mxu0
    %4962 = vmatpush.bf16.msra.mxu0 %v3680
    %4963 = vmatpush.bf16.msra.mxu0 %v3679
    %4964 = vmatpush.bf16.msra.mxu0 %v3678
    %4965 = vmatpush.bf16.msra.mxu0 %v3677
    %4966 = vmatpush.bf16.msra.mxu0 %v3676
    %4967 = vmatpush.bf16.msra.mxu0 %v3675
    %4968 = vmatpush.bf16.msra.mxu0 %v3674
    %4969 = vmatpush.bf16.msra.mxu0 %v3673
    %4970 = vmatmul.bf16.gmra.mxu0 %v1124
    %v4971 = vpop.f32.mrf.mxu0
    %v4972 = vadd.f32 %v4959, %v4971
    %v4973 = vpop.f32.mrf.mxu0
    %4974 = vdwg.mxu0
    %4975 = vmatpush.bf16.msra.mxu0 %v3688
    %4976 = vmatpush.bf16.msra.mxu0 %v3687
    %4977 = vmatpush.bf16.msra.mxu0 %v3686
    %4978 = vmatpush.bf16.msra.mxu0 %v3685
    %4979 = vmatpush.bf16.msra.mxu0 %v3684
    %4980 = vmatpush.bf16.msra.mxu0 %v3683
    %4981 = vmatpush.bf16.msra.mxu0 %v3682
    %4982 = vmatpush.bf16.msra.mxu0 %v3681
    %4983 = vmatmul.bf16.gmra.mxu0 %v1125
    %v4984 = vpop.f32.mrf.mxu0
    %v4985 = vadd.f32 %v4972, %v4984
    %v4986 = vpop.f32.mrf.mxu0
    %4987 = vdwg.mxu0
    %4988 = vmatpush.bf16.msra.mxu0 %v3696
    %4989 = vmatpush.bf16.msra.mxu0 %v3695
    %4990 = vmatpush.bf16.msra.mxu0 %v3694
    %4991 = vmatpush.bf16.msra.mxu0 %v3693
    %4992 = vmatpush.bf16.msra.mxu0 %v3692
    %4993 = vmatpush.bf16.msra.mxu0 %v3691
    %4994 = vmatpush.bf16.msra.mxu0 %v3690
    %4995 = vmatpush.bf16.msra.mxu0 %v3689
    %4996 = vmatmul.bf16.gmra.mxu0 %v1126
    %v4997 = vpop.f32.mrf.mxu0
    %v4998 = vadd.f32 %v4985, %v4997
    %v4999 = vpop.f32.mrf.mxu0
    %5000 = vdwg.mxu0
    %5001 = vmatpush.bf16.msra.mxu0 %v3704
    %5002 = vmatpush.bf16.msra.mxu0 %v3703
    %5003 = vmatpush.bf16.msra.mxu0 %v3702
    %5004 = vmatpush.bf16.msra.mxu0 %v3701
    %5005 = vmatpush.bf16.msra.mxu0 %v3700
    %5006 = vmatpush.bf16.msra.mxu0 %v3699
    %5007 = vmatpush.bf16.msra.mxu0 %v3698
    %5008 = vmatpush.bf16.msra.mxu0 %v3697
    %5009 = vmatmul.bf16.gmra.mxu0 %v1129
    %v5010 = vpop.f32.mrf.mxu0
    %v5011 = vadd.f32 %v4998, %v5010
    %v5012 = vpop.f32.mrf.mxu0
    %5013 = vdwg.mxu0
    %5014 = vmatpush.bf16.msra.mxu0 %v3712
    %5015 = vmatpush.bf16.msra.mxu0 %v3711
    %5016 = vmatpush.bf16.msra.mxu0 %v3710
    %5017 = vmatpush.bf16.msra.mxu0 %v3709
    %5018 = vmatpush.bf16.msra.mxu0 %v3708
    %5019 = vmatpush.bf16.msra.mxu0 %v3707
    %5020 = vmatpush.bf16.msra.mxu0 %v3706
    %5021 = vmatpush.bf16.msra.mxu0 %v3705
    %5022 = vmatmul.bf16.gmra.mxu0 %v1130
    %v5023 = vpop.f32.mrf.mxu0
    %v5024 = vadd.f32 %v5011, %v5023
    %v5025 = vpop.f32.mrf.mxu0
    %5026 = vdwg.mxu0
    %5027 = vmatpush.bf16.msra.mxu0 %v3720
    %5028 = vmatpush.bf16.msra.mxu0 %v3719
    %5029 = vmatpush.bf16.msra.mxu0 %v3718
    %5030 = vmatpush.bf16.msra.mxu0 %v3717
    %5031 = vmatpush.bf16.msra.mxu0 %v3716
    %5032 = vmatpush.bf16.msra.mxu0 %v3715
    %5033 = vmatpush.bf16.msra.mxu0 %v3714
    %5034 = vmatpush.bf16.msra.mxu0 %v3713
    %5035 = vmatmul.bf16.gmra.mxu0 %v1131
    %v5036 = vpop.f32.mrf.mxu0
    %v5037 = vadd.f32 %v5024, %v5036
    %v5038 = vpop.f32.mrf.mxu0
    %5039 = vdwg.mxu0
    %5040 = vmatpush.bf16.msra.mxu0 %v3728
    %5041 = vmatpush.bf16.msra.mxu0 %v3727
    %5042 = vmatpush.bf16.msra.mxu0 %v3726
    %5043 = vmatpush.bf16.msra.mxu0 %v3725
    %5044 = vmatpush.bf16.msra.mxu0 %v3724
    %5045 = vmatpush.bf16.msra.mxu0 %v3723
    %5046 = vmatpush.bf16.msra.mxu0 %v3722
    %5047 = vmatpush.bf16.msra.mxu0 %v3721
    %5048 = vmatmul.bf16.gmra.mxu0 %v1132
    %v5049 = vpop.f32.mrf.mxu0
    %v5050 = vadd.f32 %v5037, %v5049
    %v5051 = vpop.f32.mrf.mxu0
    %5052 = vdwg.mxu0
    %5053 = vmatpush.bf16.msra.mxu0 %v3736
    %5054 = vmatpush.bf16.msra.mxu0 %v3735
    %5055 = vmatpush.bf16.msra.mxu0 %v3734
    %5056 = vmatpush.bf16.msra.mxu0 %v3733
    %5057 = vmatpush.bf16.msra.mxu0 %v3732
    %5058 = vmatpush.bf16.msra.mxu0 %v3731
    %5059 = vmatpush.bf16.msra.mxu0 %v3730
    %5060 = vmatpush.bf16.msra.mxu0 %v3729
    %5061 = vmatmul.bf16.gmra.mxu0 %v1133
    %v5062 = vpop.f32.mrf.mxu0
    %v5063 = vadd.f32 %v5050, %v5062
    %v5064 = vpop.f32.mrf.mxu0
    %5065 = vdwg.mxu0
    %5066 = vmatpush.bf16.msra.mxu0 %v3744
    %5067 = vmatpush.bf16.msra.mxu0 %v3743
    %5068 = vmatpush.bf16.msra.mxu0 %v3742
    %5069 = vmatpush.bf16.msra.mxu0 %v3741
    %5070 = vmatpush.bf16.msra.mxu0 %v3740
    %5071 = vmatpush.bf16.msra.mxu0 %v3739
    %5072 = vmatpush.bf16.msra.mxu0 %v3738
    %5073 = vmatpush.bf16.msra.mxu0 %v3737
    %5074 = vmatmul.bf16.gmra.mxu0 %v1134
    %v5075 = vpop.f32.mrf.mxu0
    %v5076 = vadd.f32 %v5063, %v5075
    %v5077 = vpop.f32.mrf.mxu0
    %5078 = vdwg.mxu0
    %5079 = vmatpush.bf16.msra.mxu0 %v3752
    %5080 = vmatpush.bf16.msra.mxu0 %v3751
    %5081 = vmatpush.bf16.msra.mxu0 %v3750
    %5082 = vmatpush.bf16.msra.mxu0 %v3749
    %5083 = vmatpush.bf16.msra.mxu0 %v3748
    %5084 = vmatpush.bf16.msra.mxu0 %v3747
    %5085 = vmatpush.bf16.msra.mxu0 %v3746
    %5086 = vmatpush.bf16.msra.mxu0 %v3745
    %5087 = vmatmul.bf16.gmra.mxu0 %v1135
    %v5088 = vpop.f32.mrf.mxu0
    %v5089 = vadd.f32 %v5076, %v5088
    %v5090 = vpop.f32.mrf.mxu0
    %5091 = vdwg.mxu0
    %5092 = vmatpush.bf16.msra.mxu0 %v3760
    %5093 = vmatpush.bf16.msra.mxu0 %v3759
    %5094 = vmatpush.bf16.msra.mxu0 %v3758
    %5095 = vmatpush.bf16.msra.mxu0 %v3757
    %5096 = vmatpush.bf16.msra.mxu0 %v3756
    %5097 = vmatpush.bf16.msra.mxu0 %v3755
    %5098 = vmatpush.bf16.msra.mxu0 %v3754
    %5099 = vmatpush.bf16.msra.mxu0 %v3753
    %5100 = vmatmul.bf16.gmra.mxu0 %v1136
    %v5101 = vpop.f32.mrf.mxu0
    %v5102 = vadd.f32 %v5089, %v5101
    %v5103 = vpop.f32.mrf.mxu0
    %5104 = vdwg.mxu0
    %v5105 = vmax.f32 %v5102, 0.0
    %v5106 = vpack.c.bf16 %v5105, %v5105
    %v5107 = vld [vmem:[%s3] sm:$0xf]
    %v5108 = vld [vmem:[%s3 + $0x4] sm:$0xf]
    %v5109 = vld [vmem:[%s3 + $0x8] sm:$0xf]
    %v5110 = vld [vmem:[%s3 + $0xc] sm:$0xf]
    %v5111 = vld [vmem:[%s3 + $0x10] sm:$0xf]
    %v5112 = vld [vmem:[%s3 + $0x14] sm:$0xf]
    %v5113 = vld [vmem:[%s3 + $0x18] sm:$0xf]
    %v5114 = vld [vmem:[%s3 + $0x1c] sm:$0xf]
    %v5115 = vld [vmem:[%s3 + $0x20] sm:$0xf]
    %v5116 = vld [vmem:[%s3 + $0x24] sm:$0xf]
    %v5117 = vld [vmem:[%s3 + $0x28] sm:$0xf]
    %v5118 = vld [vmem:[%s3 + $0x2c] sm:$0xf]
    %v5119 = vld [vmem:[%s3 + $0x30] sm:$0xf]
    %v5120 = vld [vmem:[%s3 + $0x34] sm:$0xf]
    %v5121 = vld [vmem:[%s3 + $0x38] sm:$0xf]
    %v5122 = vld [vmem:[%s3 + $0x3c] sm:$0xf]
    %v5123 = vld [vmem:[%s4] sm:$0x1]
    %v5125 = vperm.slane %v5123, 0
    %v5143 = vunpack.c.l.b16 %v5107
    %v5144 = vunpack.c.l.b16 %v5108
    %v5145 = vunpack.c.l.b16 %v5109
    %v5146 = vunpack.c.l.b16 %v5110
    %v5147 = vunpack.c.l.b16 %v5111
    %v5148 = vunpack.c.l.b16 %v5112
    %v5149 = vunpack.c.l.b16 %v5113
    %v5150 = vunpack.c.l.b16 %v5114
    %v5151 = vunpack.c.l.b16 %v5115
    %v5152 = vunpack.c.l.b16 %v5116
    %v5153 = vunpack.c.l.b16 %v5117
    %v5154 = vunpack.c.l.b16 %v5118
    %v5155 = vunpack.c.l.b16 %v5119
    %v5156 = vunpack.c.l.b16 %v5120
    %v5157 = vunpack.c.l.b16 %v5121
    %v5158 = vunpack.c.l.b16 %v5122
    %v5159 = vpack.c.b16 %v5144, %v5143
    %v5160 = vpack.c.b16 %v5146, %v5145
    %v5161 = vpack.c.b16 %v5148, %v5147
    %v5162 = vpack.c.b16 %v5150, %v5149
    %v5163 = vpack.c.b16 %v5152, %v5151
    %v5164 = vpack.c.b16 %v5154, %v5153
    %v5165 = vpack.c.b16 %v5156, %v5155
    %v5166 = vpack.c.b16 %v5158, %v5157
    %5175 = vmatpush.bf16.msra.mxu0 %v5166
    %5176 = vmatpush.bf16.msra.mxu0 %v5165
    %5177 = vmatpush.bf16.msra.mxu0 %v5164
    %5178 = vmatpush.bf16.msra.mxu0 %v5163
    %5179 = vmatpush.bf16.msra.mxu0 %v5162
    %5180 = vmatpush.bf16.msra.mxu0 %v5161
    %5181 = vmatpush.bf16.msra.mxu0 %v5160
    %5182 = vmatpush.bf16.msra.mxu0 %v5159
    %5183 = vmatmul.bf16.gmra.mxu0 %v5106
    %v5184 = vpop.f32.mrf.mxu0
    %v5185 = vadd.f32 %v5125, %v5184
    %v5186 = vpop.f32.mrf.mxu0
    %5187 = vdwg.mxu0
    %5188 = vst [vmem:[#allocation2] sm:$0x3] %v5185
    // Predicated region
    $region22: #{_lambda_.3} parent=1 // pred_check
      _
    $region23: #{_lambda_.3} parent=1 // pred_check_branch
      %5190 = sbr.rel (0) target = $region25
    $region24: #{_lambda_.3} parent=1 // pred_region
      %5192 = vsyncadd [#allocation3], 0
      %s5194 = sshll.u32 [#allocation2], 4
      %s5195 = int_to_ptr.vmem [resolvable:$true] %s5194
      %s5196 = sshll.u32 %s5, 4
      %s5197 = int_to_ptr.hbm [resolvable:$true] %s5196
      %5199 = dma.vmem_to_hbm [thread:$0]  %s5195, 32, %s5197, [#allocation3]
    $region25: #{_lambda_.3} parent=1 // pred_fallthru
      _
    // Predicated region
    $region26: #{_lambda_.3} parent=1 // pred_check
      _
    $region27: #{_lambda_.3} parent=1 // pred_check_branch
      %5201 = sbr.rel (0) target = $region29
    $region28: #{_lambda_.3} parent=1 // pred_region
      %5203 = dma.done [#allocation3], 32
    $region29: #{_lambda_.3} parent=1 // pred_fallthru
      _
    %5204 = vsyncpa [#allocation3], 1

</llo_original>
